<compile_context>
chip_gen: v5e
topology: v5e:2x2
jax: 0.10.0
libtpu: 0.0.40
codegen_flags: <defaults>
</compile_context>

<pallas_src>
import jax
import jax.numpy as jnp
import numpy as np
from jax import lax
from jax.experimental import pallas as pl
from jax.experimental.pallas import tpu as pltpu

EPS = 1e-5          # nn.BatchNorm2d default eps
NEG_SLOPE = 0.2     # nn.LeakyReLU(0.2)
K = 5               # conv kernel size (all three convs)
PAD = 2             # conv padding (all three convs)
LANES = 128         # TPU lane width; fc output is padded to this


# ---------------------------------------------------------------------------
# Single fused Pallas kernel: conv1 -> conv2 -> conv3 -> fc1, one image/step.
# ---------------------------------------------------------------------------
def classifier_kernel(p1_ref, w1_ref, a1_ref,
                      g2_ref, w2_ref, a2_ref,
                      g3_ref, w3_ref, a3_ref,
                      wfc_ref, bfc_ref, o_ref):
    f32 = jnp.float32

    def post(y, a_ref):
        # conv bias -> LeakyReLU(0.2) -> eval-mode BatchNorm folded scale/shift.
        y = y + a_ref[0]
        y = jnp.where(y >= 0.0, y, NEG_SLOPE * y)
        return y * a_ref[1] + a_ref[2]

    def conv_taps(x, g_ref, w_ref):
        # y[p, co] = sum_t (G_t @ x)[p, ci] * W_t[ci, co]
        # G_t is a 0/1 gather matrix selecting the input pixel of filter tap t
        # for every output position (zero rows encode spatial zero-padding).
        n_out, c_out = g_ref.shape[1], w_ref.shape[2]
        y = jnp.zeros((n_out, c_out), f32)
        for t in range(g_ref.shape[0]):                       # 25 taps, unrolled
            gx = jnp.dot(g_ref[t], x, preferred_element_type=f32)
            y = y + jnp.dot(gx, w_ref[t], preferred_element_type=f32)
        return y

    # conv1: im2col patch matrix (built in the wrapper, K padded 25->32) @ W1.
    y1 = post(jnp.dot(p1_ref[...], w1_ref[...], preferred_element_type=f32),
              a1_ref)                                         # [256, 32]
    # conv2 / conv3: in-kernel im2col via MXU gather matmuls.
    y2 = post(conv_taps(y1, g2_ref, w2_ref), a2_ref)          # [ 64, 64]
    y3 = post(conv_taps(y2, g3_ref, w3_ref), a3_ref)          # [ 16, 128]

    # fc1: contract both the 16 spatial rows and the 128 channels.  Weights are
    # pre-permuted so (row, channel) order matches torch's NCHW .view();
    # output is padded to 128 lanes for a lane-dense store.
    acc = bfc_ref[...]                                        # [1, 128] (bias)
    for r in range(wfc_ref.shape[0]):
        acc = acc + jnp.dot(y3[r:r + 1, :], wfc_ref[r],
                            preferred_element_type=f32)
    o_ref[...] = acc


# ---------------------------------------------------------------------------
# Compile-time helpers (run at trace time only).
# ---------------------------------------------------------------------------
def _gather_mats(h_in, w_in, h_out, w_out, k, s, p):
    """g[t, oy*w_out+ox, iy*w_in+ix] = 1 where (iy, ix) is the input pixel read
    by filter tap t = ki*k + kj at output (oy, ox); out-of-bounds taps stay 0."""
    g = np.zeros((k * k, h_out * w_out, h_in * w_in), np.float32)
    for ki in range(k):
        for kj in range(k):
            t = ki * k + kj
            for oy in range(h_out):
                iy = s * oy + ki - p
                if iy < 0 or iy >= h_in:
                    continue
                for ox in range(w_out):
                    ix = s * ox + kj - p
                    if ix < 0 or ix >= w_in:
                        continue
                    g[t, oy * w_out + ox, iy * w_in + ix] = 1.0
    return g


def _affine(bias, gamma, beta, rmean, rvar):
    """Stack (conv bias, BN scale, BN shift) as a [3, 1, C] array."""
    scale = gamma / jnp.sqrt(rvar + EPS)
    shift = beta - rmean * scale
    return jnp.stack([bias, scale, shift]).reshape(3, 1, bias.shape[0])


# ---------------------------------------------------------------------------
# Jitted forward: one XLA patch-extraction op + ONE fused pallas_call.
# ---------------------------------------------------------------------------
@jax.jit
def classifier_forward(x, params):
    B, Cin, H, W = x.shape
    w1, b1, ga1, be1, rm1, rv1 = params["block1"]
    w2, b2, ga2, be2, rm2, rv2 = params["block2"]
    w3, b3, ga3, be3, rm3, rv3 = params["block3"]
    fc_w, fc_b = params["fc_w"], params["fc_b"]
    C1, C2, C3 = w1.shape[0], w2.shape[0], w3.shape[0]
    cat = fc_w.shape[0]

    def out_hw(h, w, s):
        return (h + 2 * PAD - K) // s + 1, (w + 2 * PAD - K) // s + 1

    H1, W1 = out_hw(H, W, 4)        # 16 x 16
    H2, W2 = out_hw(H1, W1, 2)      #  8 x 8
    H3, W3 = out_hw(H2, W2, 2)      #  4 x 4
    N1, N2, N3 = H1 * W1, H2 * W2, H3 * W3

    # ---- layer-1 im2col: one XLA op; rows (oy,ox), features (ci,ki,kj);
    #      contraction dim zero-padded up to a multiple of 8 (25 -> 32).
    k1 = Cin * K * K
    k1p = -(-k1 // 8) * 8
    p1 = lax.conv_general_dilated_patches(
        x, (K, K), (4, 4), ((PAD, PAD), (PAD, PAD)),
        dimension_numbers=("NCHW", "OIHW", "NCHW"),
        precision=lax.Precision.HIGHEST)                      # [B, k1, H1, W1]
    p1 = p1.transpose(0, 2, 3, 1).reshape(B, N1, k1)
    p1 = jnp.pad(p1, ((0, 0), (0, 0), (0, k1p - k1)))         # [B, N1, k1p]

    # ---- weights in matmul layout; per-layer (bias, BN scale, BN shift).
    w1p = jnp.pad(w1.reshape(C1, k1).T, ((0, k1p - k1), (0, 0)))   # [k1p, C1]
    w2s = w2.transpose(2, 3, 1, 0).reshape(K * K, C1, C2)          # [25, C1, C2]
    w3s = w3.transpose(2, 3, 1, 0).reshape(K * K, C2, C3)          # [25, C2, C3]
    a1 = _affine(b1, ga1, be1, rm1, rv1)
    a2 = _affine(b2, ga2, be2, rm2, rv2)
    a3 = _affine(b3, ga3, be3, rm3, rv3)

    # ---- per-tap 0/1 gather matrices (compile-time constants).
    g2 = jnp.asarray(_gather_mats(H1, W1, H2, W2, K, 2, PAD))      # [25, N2, N1]
    g3 = jnp.asarray(_gather_mats(H2, W2, H3, W3, K, 2, PAD))      # [25, N3, N2]

    # ---- fc1: torch flattens NCHW (c, oy, ox); kernel rows are (oy*W3+ox, c).
    wfc = fc_w.reshape(cat, C3, N3).transpose(2, 1, 0)             # [N3, C3, cat]
    wfc = jnp.pad(wfc, ((0, 0), (0, 0), (0, LANES - cat)))         # [N3, C3, 128]
    bfc = jnp.pad(fc_b, (0, LANES - cat)).reshape(1, LANES)

    fixed = lambda nd: (lambda b: (0,) * nd)   # constant operands, any grid step
    out = pl.pallas_call(
        classifier_kernel,
        out_shape=jax.ShapeDtypeStruct((B, 1, LANES), jnp.float32),
        grid=(B,),
        in_specs=[
            pl.BlockSpec((None, N1, k1p), lambda b: (b, 0, 0)),    # patches (per image)
            pl.BlockSpec((k1p, C1), fixed(2)),                     # w1
            pl.BlockSpec((3, 1, C1), fixed(3)),                    # bias/scale/shift 1
            pl.BlockSpec((K * K, N2, N1), fixed(3)),               # gather 2
            pl.BlockSpec((K * K, C1, C2), fixed(3)),               # w2
            pl.BlockSpec((3, 1, C2), fixed(3)),                    # bias/scale/shift 2
            pl.BlockSpec((K * K, N3, N2), fixed(3)),               # gather 3
            pl.BlockSpec((K * K, C2, C3), fixed(3)),               # w3
            pl.BlockSpec((3, 1, C3), fixed(3)),                    # bias/scale/shift 3
            pl.BlockSpec((N3, C3, LANES), fixed(3)),               # fc weight
            pl.BlockSpec((1, LANES), fixed(2)),                    # fc bias (padded)
        ],
        out_specs=pl.BlockSpec((None, 1, LANES), lambda b: (b, 0, 0)),
        compiler_params=pltpu.CompilerParams(
            dimension_semantics=("parallel",),          # shard batch over TCs (v7x)
            vmem_limit_bytes=32 * 1024 * 1024),
    )(p1, w1p, a1, g2, w2s, a2, g3, w3s, a3, wfc, bfc)

    return out[:, 0, :cat]                                         # [B, cat_num]


# ---------------------------------------------------------------------------
# Deterministic parameter init + pure-JAX reference (for correctness check)
# ---------------------------------------------------------------------------
def init_params(key, cat_num=4):
    ks = jax.random.split(key, 20)

    def conv_p(k1, k2, cin, cout):
        w = 0.05 * jax.random.normal(k1, (cout, cin, 5, 5), jnp.float32)
        b = 0.05 * jax.random.normal(k2, (cout,), jnp.float32)
        return w, b

    def bn_p(k1, k2, k3, c):
        gamma = 1.0 + 0.1 * jax.random.normal(k1, (c,), jnp.float32)
        beta = 0.1 * jax.random.normal(k2, (c,), jnp.float32)
        rmean = 0.1 * jax.random.normal(k3, (c,), jnp.float32)
        rvar = jnp.ones((c,), jnp.float32)
        return gamma, beta, rmean, rvar

    w1, b1 = conv_p(ks[0], ks[1], 1, 32)
    w2, b2 = conv_p(ks[2], ks[3], 32, 64)
    w3, b3 = conv_p(ks[4], ks[5], 64, 128)
    bn1 = bn_p(ks[6], ks[7], ks[8], 32)
    bn2 = bn_p(ks[9], ks[10], ks[11], 64)
    bn3 = bn_p(ks[12], ks[13], ks[14], 128)
    fc_w = 0.05 * jax.random.normal(ks[15], (cat_num, 128 * 4 * 4), jnp.float32)
    fc_b = 0.05 * jax.random.normal(ks[16], (cat_num,), jnp.float32)
    return {
        "block1": (w1, b1, *bn1),
        "block2": (w2, b2, *bn2),
        "block3": (w3, b3, *bn3),
        "fc_w": fc_w,
        "fc_b": fc_b,
    }


def reference_forward(x, params):
    def block(x, w, b, gamma, beta, rmean, rvar, stride):
        y = lax.conv_general_dilated(
            x, w, (stride, stride), ((2, 2), (2, 2)),
            dimension_numbers=("NCHW", "OIHW", "NCHW"),
            precision=lax.Precision.HIGHEST,
        )
        y = y + b.reshape(1, -1, 1, 1)
        y = jnp.where(y >= 0.0, y, NEG_SLOPE * y)
        c = lambda v: v.reshape(1, -1, 1, 1)
        return (y - c(rmean)) / jnp.sqrt(c(rvar) + EPS) * c(gamma) + c(beta)

    x = block(x, *params["block1"], stride=4)
    x = block(x, *params["block2"], stride=2)
    x = block(x, *params["block3"], stride=2)
    x = x.reshape(x.shape[0], -1)
    return (
        jnp.dot(x, params["fc_w"].T, precision=lax.Precision.HIGHEST)
        + params["fc_b"]
    )


if __name__ == "__main__":
    key = jax.random.PRNGKey(0)
    pkey, xkey = jax.random.split(key)
    params = init_params(pkey, cat_num=4)
    # Input size implied by fc1 = Linear(128*4*4, cat_num): 1x64x64 images.
    x = jax.random.normal(xkey, (2, 1, 64, 64), jnp.float32)

    y = classifier_forward(x, params)
    y = jax.block_until_ready(y)

    y_ref = reference_forward(x, params)
    assert y.shape == (2, 4), y.shape
    err = float(jnp.max(jnp.abs(y - y_ref)))
    assert jnp.allclose(y, y_ref, atol=2e-3, rtol=2e-3), err
    print("KERNEL_OK")
</pallas_src>

<mosaic_0001>
module attributes {stable_mosaic.version = 11 : i64} {
  func.func @classifier_kernel(%arg0: i32, %arg1: memref<1x256x32xf32, #tpu.memory_space<vmem>>, %arg2: memref<32x32xf32, #tpu.memory_space<vmem>>, %arg3: memref<3x1x32xf32, #tpu.memory_space<vmem>>, %arg4: memref<25x64x256xf32, #tpu.memory_space<vmem>>, %arg5: memref<25x32x64xf32, #tpu.memory_space<vmem>>, %arg6: memref<3x1x64xf32, #tpu.memory_space<vmem>>, %arg7: memref<25x16x64xf32, #tpu.memory_space<vmem>>, %arg8: memref<25x64x128xf32, #tpu.memory_space<vmem>>, %arg9: memref<3x1x128xf32, #tpu.memory_space<vmem>>, %arg10: memref<16x128x128xf32, #tpu.memory_space<vmem>>, %arg11: memref<1x128xf32, #tpu.memory_space<vmem>>, %arg12: memref<1x1x128xf32, #tpu.memory_space<vmem>>) attributes {dimension_semantics = [#tpu.dimension_semantics<parallel>], iteration_bounds = array<i64: 2>, scalar_prefetch = 0 : i64, scratch_operands = 0 : i64, tpu.core_type = #tpu.core_type<tc>, window_params = [{transform_indices = @transform_0, window_bounds = array<i64: 1, 256, 32>}, {pipeline_mode = #tpu.pipeline_mode<synchronous>, transform_indices = @transform_1, window_bounds = array<i64: 32, 32>}, {pipeline_mode = #tpu.pipeline_mode<synchronous>, transform_indices = @transform_2, window_bounds = array<i64: 3, 1, 32>}, {pipeline_mode = #tpu.pipeline_mode<synchronous>, transform_indices = @transform_3, window_bounds = array<i64: 25, 64, 256>}, {pipeline_mode = #tpu.pipeline_mode<synchronous>, transform_indices = @transform_4, window_bounds = array<i64: 25, 32, 64>}, {pipeline_mode = #tpu.pipeline_mode<synchronous>, transform_indices = @transform_5, window_bounds = array<i64: 3, 1, 64>}, {pipeline_mode = #tpu.pipeline_mode<synchronous>, transform_indices = @transform_6, window_bounds = array<i64: 25, 16, 64>}, {pipeline_mode = #tpu.pipeline_mode<synchronous>, transform_indices = @transform_7, window_bounds = array<i64: 25, 64, 128>}, {pipeline_mode = #tpu.pipeline_mode<synchronous>, transform_indices = @transform_8, window_bounds = array<i64: 3, 1, 128>}, {pipeline_mode = #tpu.pipeline_mode<synchronous>, transform_indices = @transform_9, window_bounds = array<i64: 16, 128, 128>}, {pipeline_mode = #tpu.pipeline_mode<synchronous>, transform_indices = @transform_10, window_bounds = array<i64: 1, 128>}, {transform_indices = @transform_11, window_bounds = array<i64: 1, 1, 128>}]} {
    %c0 = arith.constant 0 : index
    %c0_0 = arith.constant 0 : index
    %c0_1 = arith.constant 0 : index
    %0 = vector.load %arg1[%c0, %c0_0, %c0_1] : memref<1x256x32xf32, #tpu.memory_space<vmem>>, vector<1x256x32xf32>
    %1 = vector.shape_cast %0 : vector<1x256x32xf32> to vector<256x32xf32>
    %c0_2 = arith.constant 0 : index
    %c0_3 = arith.constant 0 : index
    %2 = vector.load %arg2[%c0_2, %c0_3] : memref<32x32xf32, #tpu.memory_space<vmem>>, vector<32x32xf32>
    %cst = arith.constant dense<0.000000e+00> : vector<256x32xf32>
    %3 = tpu.matmul %1, %2, %cst {dimension_numbers = #tpu.dot_dimension_numbers<[1], [0], [0], [1], [0, 0, 1, 1], [], []>} : vector<256x32xf32>, vector<32x32xf32>, vector<256x32xf32> -> vector<256x32xf32>
    %c0_4 = arith.constant 0 : index
    %c0_5 = arith.constant 0 : index
    %c0_6 = arith.constant 0 : index
    %4 = vector.load %arg3[%c0_4, %c0_5, %c0_6] : memref<3x1x32xf32, #tpu.memory_space<vmem>>, vector<1x1x32xf32>
    %5 = vector.shape_cast %4 : vector<1x1x32xf32> to vector<1x32xf32>
    %6 = vector.broadcast %5 : vector<1x32xf32> to vector<256x32xf32>
    %7 = arith.addf %3, %6 : vector<256x32xf32>
    %cst_7 = arith.constant 0.000000e+00 : f32
    %8 = vector.broadcast %cst_7 : f32 to vector<256x32xf32>
    %9 = arith.cmpf oge, %7, %8 : vector<256x32xf32>
    %cst_8 = arith.constant 2.000000e-01 : f32
    %10 = vector.broadcast %cst_8 : f32 to vector<256x32xf32>
    %11 = arith.mulf %10, %7 : vector<256x32xf32>
    %12 = arith.select %9, %7, %11 : vector<256x32xi1>, vector<256x32xf32>
    %c1 = arith.constant 1 : index
    %c0_9 = arith.constant 0 : index
    %c0_10 = arith.constant 0 : index
    %13 = vector.load %arg3[%c1, %c0_9, %c0_10] : memref<3x1x32xf32, #tpu.memory_space<vmem>>, vector<1x1x32xf32>
    %14 = vector.shape_cast %13 : vector<1x1x32xf32> to vector<1x32xf32>
    %15 = vector.broadcast %14 : vector<1x32xf32> to vector<256x32xf32>
    %16 = arith.mulf %12, %15 : vector<256x32xf32>
    %c2 = arith.constant 2 : index
    %c0_11 = arith.constant 0 : index
    %c0_12 = arith.constant 0 : index
    %17 = vector.load %arg3[%c2, %c0_11, %c0_12] : memref<3x1x32xf32, #tpu.memory_space<vmem>>, vector<1x1x32xf32>
    %18 = vector.shape_cast %17 : vector<1x1x32xf32> to vector<1x32xf32>
    %19 = vector.broadcast %18 : vector<1x32xf32> to vector<256x32xf32>
    %20 = arith.addf %16, %19 : vector<256x32xf32>
    %cst_13 = arith.constant 0.000000e+00 : f32
    %21 = vector.broadcast %cst_13 : f32 to vector<64x64xf32>
    %c0_14 = arith.constant 0 : index
    %c0_15 = arith.constant 0 : index
    %c0_16 = arith.constant 0 : index
    %22 = vector.load %arg4[%c0_14, %c0_15, %c0_16] : memref<25x64x256xf32, #tpu.memory_space<vmem>>, vector<1x64x256xf32>
    %23 = vector.shape_cast %22 : vector<1x64x256xf32> to vector<64x256xf32>
    %cst_17 = arith.constant dense<0.000000e+00> : vector<64x32xf32>
    %24 = tpu.matmul %23, %20, %cst_17 {dimension_numbers = #tpu.dot_dimension_numbers<[1], [0], [0], [1], [0, 0, 1, 1], [], []>} : vector<64x256xf32>, vector<256x32xf32>, vector<64x32xf32> -> vector<64x32xf32>
    %c0_18 = arith.constant 0 : index
    %c0_19 = arith.constant 0 : index
    %c0_20 = arith.constant 0 : index
    %25 = vector.load %arg5[%c0_18, %c0_19, %c0_20] : memref<25x32x64xf32, #tpu.memory_space<vmem>>, vector<1x32x64xf32>
    %26 = vector.shape_cast %25 : vector<1x32x64xf32> to vector<32x64xf32>
    %cst_21 = arith.constant dense<0.000000e+00> : vector<64x64xf32>
    %27 = tpu.matmul %24, %26, %cst_21 {dimension_numbers = #tpu.dot_dimension_numbers<[1], [0], [0], [1], [0, 0, 1, 1], [], []>} : vector<64x32xf32>, vector<32x64xf32>, vector<64x64xf32> -> vector<64x64xf32>
    %28 = arith.addf %21, %27 : vector<64x64xf32>
    %c1_22 = arith.constant 1 : index
    %c0_23 = arith.constant 0 : index
    %c0_24 = arith.constant 0 : index
    %29 = vector.load %arg4[%c1_22, %c0_23, %c0_24] : memref<25x64x256xf32, #tpu.memory_space<vmem>>, vector<1x64x256xf32>
    %30 = vector.shape_cast %29 : vector<1x64x256xf32> to vector<64x256xf32>
    %cst_25 = arith.constant dense<0.000000e+00> : vector<64x32xf32>
    %31 = tpu.matmul %30, %20, %cst_25 {dimension_numbers = #tpu.dot_dimension_numbers<[1], [0], [0], [1], [0, 0, 1, 1], [], []>} : vector<64x256xf32>, vector<256x32xf32>, vector<64x32xf32> -> vector<64x32xf32>
    %c1_26 = arith.constant 1 : index
    %c0_27 = arith.constant 0 : index
    %c0_28 = arith.constant 0 : index
    %32 = vector.load %arg5[%c1_26, %c0_27, %c0_28] : memref<25x32x64xf32, #tpu.memory_space<vmem>>, vector<1x32x64xf32>
    %33 = vector.shape_cast %32 : vector<1x32x64xf32> to vector<32x64xf32>
    %cst_29 = arith.constant dense<0.000000e+00> : vector<64x64xf32>
    %34 = tpu.matmul %31, %33, %cst_29 {dimension_numbers = #tpu.dot_dimension_numbers<[1], [0], [0], [1], [0, 0, 1, 1], [], []>} : vector<64x32xf32>, vector<32x64xf32>, vector<64x64xf32> -> vector<64x64xf32>
    %35 = arith.addf %28, %34 : vector<64x64xf32>
    %c2_30 = arith.constant 2 : index
    %c0_31 = arith.constant 0 : index
    %c0_32 = arith.constant 0 : index
    %36 = vector.load %arg4[%c2_30, %c0_31, %c0_32] : memref<25x64x256xf32, #tpu.memory_space<vmem>>, vector<1x64x256xf32>
    %37 = vector.shape_cast %36 : vector<1x64x256xf32> to vector<64x256xf32>
    %cst_33 = arith.constant dense<0.000000e+00> : vector<64x32xf32>
    %38 = tpu.matmul %37, %20, %cst_33 {dimension_numbers = #tpu.dot_dimension_numbers<[1], [0], [0], [1], [0, 0, 1, 1], [], []>} : vector<64x256xf32>, vector<256x32xf32>, vector<64x32xf32> -> vector<64x32xf32>
    %c2_34 = arith.constant 2 : index
    %c0_35 = arith.constant 0 : index
    %c0_36 = arith.constant 0 : index
    %39 = vector.load %arg5[%c2_34, %c0_35, %c0_36] : memref<25x32x64xf32, #tpu.memory_space<vmem>>, vector<1x32x64xf32>
    %40 = vector.shape_cast %39 : vector<1x32x64xf32> to vector<32x64xf32>
    %cst_37 = arith.constant dense<0.000000e+00> : vector<64x64xf32>
    %41 = tpu.matmul %38, %40, %cst_37 {dimension_numbers = #tpu.dot_dimension_numbers<[1], [0], [0], [1], [0, 0, 1, 1], [], []>} : vector<64x32xf32>, vector<32x64xf32>, vector<64x64xf32> -> vector<64x64xf32>
    %42 = arith.addf %35, %41 : vector<64x64xf32>
    %c3 = arith.constant 3 : index
    %c0_38 = arith.constant 0 : index
    %c0_39 = arith.constant 0 : index
    %43 = vector.load %arg4[%c3, %c0_38, %c0_39] : memref<25x64x256xf32, #tpu.memory_space<vmem>>, vector<1x64x256xf32>
    %44 = vector.shape_cast %43 : vector<1x64x256xf32> to vector<64x256xf32>
    %cst_40 = arith.constant dense<0.000000e+00> : vector<64x32xf32>
    %45 = tpu.matmul %44, %20, %cst_40 {dimension_numbers = #tpu.dot_dimension_numbers<[1], [0], [0], [1], [0, 0, 1, 1], [], []>} : vector<64x256xf32>, vector<256x32xf32>, vector<64x32xf32> -> vector<64x32xf32>
    %c3_41 = arith.constant 3 : index
    %c0_42 = arith.constant 0 : index
    %c0_43 = arith.constant 0 : index
    %46 = vector.load %arg5[%c3_41, %c0_42, %c0_43] : memref<25x32x64xf32, #tpu.memory_space<vmem>>, vector<1x32x64xf32>
    %47 = vector.shape_cast %46 : vector<1x32x64xf32> to vector<32x64xf32>
    %cst_44 = arith.constant dense<0.000000e+00> : vector<64x64xf32>
    %48 = tpu.matmul %45, %47, %cst_44 {dimension_numbers = #tpu.dot_dimension_numbers<[1], [0], [0], [1], [0, 0, 1, 1], [], []>} : vector<64x32xf32>, vector<32x64xf32>, vector<64x64xf32> -> vector<64x64xf32>
    %49 = arith.addf %42, %48 : vector<64x64xf32>
    %c4 = arith.constant 4 : index
    %c0_45 = arith.constant 0 : index
    %c0_46 = arith.constant 0 : index
    %50 = vector.load %arg4[%c4, %c0_45, %c0_46] : memref<25x64x256xf32, #tpu.memory_space<vmem>>, vector<1x64x256xf32>
    %51 = vector.shape_cast %50 : vector<1x64x256xf32> to vector<64x256xf32>
    %cst_47 = arith.constant dense<0.000000e+00> : vector<64x32xf32>
    %52 = tpu.matmul %51, %20, %cst_47 {dimension_numbers = #tpu.dot_dimension_numbers<[1], [0], [0], [1], [0, 0, 1, 1], [], []>} : vector<64x256xf32>, vector<256x32xf32>, vector<64x32xf32> -> vector<64x32xf32>
    %c4_48 = arith.constant 4 : index
    %c0_49 = arith.constant 0 : index
    %c0_50 = arith.constant 0 : index
    %53 = vector.load %arg5[%c4_48, %c0_49, %c0_50] : memref<25x32x64xf32, #tpu.memory_space<vmem>>, vector<1x32x64xf32>
    %54 = vector.shape_cast %53 : vector<1x32x64xf32> to vector<32x64xf32>
    %cst_51 = arith.constant dense<0.000000e+00> : vector<64x64xf32>
    %55 = tpu.matmul %52, %54, %cst_51 {dimension_numbers = #tpu.dot_dimension_numbers<[1], [0], [0], [1], [0, 0, 1, 1], [], []>} : vector<64x32xf32>, vector<32x64xf32>, vector<64x64xf32> -> vector<64x64xf32>
    %56 = arith.addf %49, %55 : vector<64x64xf32>
    %c5 = arith.constant 5 : index
    %c0_52 = arith.constant 0 : index
    %c0_53 = arith.constant 0 : index
    %57 = vector.load %arg4[%c5, %c0_52, %c0_53] : memref<25x64x256xf32, #tpu.memory_space<vmem>>, vector<1x64x256xf32>
    %58 = vector.shape_cast %57 : vector<1x64x256xf32> to vector<64x256xf32>
    %cst_54 = arith.constant dense<0.000000e+00> : vector<64x32xf32>
    %59 = tpu.matmul %58, %20, %cst_54 {dimension_numbers = #tpu.dot_dimension_numbers<[1], [0], [0], [1], [0, 0, 1, 1], [], []>} : vector<64x256xf32>, vector<256x32xf32>, vector<64x32xf32> -> vector<64x32xf32>
    %c5_55 = arith.constant 5 : index
    %c0_56 = arith.constant 0 : index
    %c0_57 = arith.constant 0 : index
    %60 = vector.load %arg5[%c5_55, %c0_56, %c0_57] : memref<25x32x64xf32, #tpu.memory_space<vmem>>, vector<1x32x64xf32>
    %61 = vector.shape_cast %60 : vector<1x32x64xf32> to vector<32x64xf32>
    %cst_58 = arith.constant dense<0.000000e+00> : vector<64x64xf32>
    %62 = tpu.matmul %59, %61, %cst_58 {dimension_numbers = #tpu.dot_dimension_numbers<[1], [0], [0], [1], [0, 0, 1, 1], [], []>} : vector<64x32xf32>, vector<32x64xf32>, vector<64x64xf32> -> vector<64x64xf32>
    %63 = arith.addf %56, %62 : vector<64x64xf32>
    %c6 = arith.constant 6 : index
    %c0_59 = arith.constant 0 : index
    %c0_60 = arith.constant 0 : index
    %64 = vector.load %arg4[%c6, %c0_59, %c0_60] : memref<25x64x256xf32, #tpu.memory_space<vmem>>, vector<1x64x256xf32>
    %65 = vector.shape_cast %64 : vector<1x64x256xf32> to vector<64x256xf32>
    %cst_61 = arith.constant dense<0.000000e+00> : vector<64x32xf32>
    %66 = tpu.matmul %65, %20, %cst_61 {dimension_numbers = #tpu.dot_dimension_numbers<[1], [0], [0], [1], [0, 0, 1, 1], [], []>} : vector<64x256xf32>, vector<256x32xf32>, vector<64x32xf32> -> vector<64x32xf32>
    %c6_62 = arith.constant 6 : index
    %c0_63 = arith.constant 0 : index
    %c0_64 = arith.constant 0 : index
    %67 = vector.load %arg5[%c6_62, %c0_63, %c0_64] : memref<25x32x64xf32, #tpu.memory_space<vmem>>, vector<1x32x64xf32>
    %68 = vector.shape_cast %67 : vector<1x32x64xf32> to vector<32x64xf32>
    %cst_65 = arith.constant dense<0.000000e+00> : vector<64x64xf32>
    %69 = tpu.matmul %66, %68, %cst_65 {dimension_numbers = #tpu.dot_dimension_numbers<[1], [0], [0], [1], [0, 0, 1, 1], [], []>} : vector<64x32xf32>, vector<32x64xf32>, vector<64x64xf32> -> vector<64x64xf32>
    %70 = arith.addf %63, %69 : vector<64x64xf32>
    %c7 = arith.constant 7 : index
    %c0_66 = arith.constant 0 : index
    %c0_67 = arith.constant 0 : index
    %71 = vector.load %arg4[%c7, %c0_66, %c0_67] : memref<25x64x256xf32, #tpu.memory_space<vmem>>, vector<1x64x256xf32>
    %72 = vector.shape_cast %71 : vector<1x64x256xf32> to vector<64x256xf32>
    %cst_68 = arith.constant dense<0.000000e+00> : vector<64x32xf32>
    %73 = tpu.matmul %72, %20, %cst_68 {dimension_numbers = #tpu.dot_dimension_numbers<[1], [0], [0], [1], [0, 0, 1, 1], [], []>} : vector<64x256xf32>, vector<256x32xf32>, vector<64x32xf32> -> vector<64x32xf32>
    %c7_69 = arith.constant 7 : index
    %c0_70 = arith.constant 0 : index
    %c0_71 = arith.constant 0 : index
    %74 = vector.load %arg5[%c7_69, %c0_70, %c0_71] : memref<25x32x64xf32, #tpu.memory_space<vmem>>, vector<1x32x64xf32>
    %75 = vector.shape_cast %74 : vector<1x32x64xf32> to vector<32x64xf32>
    %cst_72 = arith.constant dense<0.000000e+00> : vector<64x64xf32>
    %76 = tpu.matmul %73, %75, %cst_72 {dimension_numbers = #tpu.dot_dimension_numbers<[1], [0], [0], [1], [0, 0, 1, 1], [], []>} : vector<64x32xf32>, vector<32x64xf32>, vector<64x64xf32> -> vector<64x64xf32>
    %77 = arith.addf %70, %76 : vector<64x64xf32>
    %c8 = arith.constant 8 : index
    %c0_73 = arith.constant 0 : index
    %c0_74 = arith.constant 0 : index
    %78 = vector.load %arg4[%c8, %c0_73, %c0_74] : memref<25x64x256xf32, #tpu.memory_space<vmem>>, vector<1x64x256xf32>
    %79 = vector.shape_cast %78 : vector<1x64x256xf32> to vector<64x256xf32>
    %cst_75 = arith.constant dense<0.000000e+00> : vector<64x32xf32>
    %80 = tpu.matmul %79, %20, %cst_75 {dimension_numbers = #tpu.dot_dimension_numbers<[1], [0], [0], [1], [0, 0, 1, 1], [], []>} : vector<64x256xf32>, vector<256x32xf32>, vector<64x32xf32> -> vector<64x32xf32>
    %c8_76 = arith.constant 8 : index
    %c0_77 = arith.constant 0 : index
    %c0_78 = arith.constant 0 : index
    %81 = vector.load %arg5[%c8_76, %c0_77, %c0_78] : memref<25x32x64xf32, #tpu.memory_space<vmem>>, vector<1x32x64xf32>
    %82 = vector.shape_cast %81 : vector<1x32x64xf32> to vector<32x64xf32>
    %cst_79 = arith.constant dense<0.000000e+00> : vector<64x64xf32>
    %83 = tpu.matmul %80, %82, %cst_79 {dimension_numbers = #tpu.dot_dimension_numbers<[1], [0], [0], [1], [0, 0, 1, 1], [], []>} : vector<64x32xf32>, vector<32x64xf32>, vector<64x64xf32> -> vector<64x64xf32>
    %84 = arith.addf %77, %83 : vector<64x64xf32>
    %c9 = arith.constant 9 : index
    %c0_80 = arith.constant 0 : index
    %c0_81 = arith.constant 0 : index
    %85 = vector.load %arg4[%c9, %c0_80, %c0_81] : memref<25x64x256xf32, #tpu.memory_space<vmem>>, vector<1x64x256xf32>
    %86 = vector.shape_cast %85 : vector<1x64x256xf32> to vector<64x256xf32>
    %cst_82 = arith.constant dense<0.000000e+00> : vector<64x32xf32>
    %87 = tpu.matmul %86, %20, %cst_82 {dimension_numbers = #tpu.dot_dimension_numbers<[1], [0], [0], [1], [0, 0, 1, 1], [], []>} : vector<64x256xf32>, vector<256x32xf32>, vector<64x32xf32> -> vector<64x32xf32>
    %c9_83 = arith.constant 9 : index
    %c0_84 = arith.constant 0 : index
    %c0_85 = arith.constant 0 : index
    %88 = vector.load %arg5[%c9_83, %c0_84, %c0_85] : memref<25x32x64xf32, #tpu.memory_space<vmem>>, vector<1x32x64xf32>
    %89 = vector.shape_cast %88 : vector<1x32x64xf32> to vector<32x64xf32>
    %cst_86 = arith.constant dense<0.000000e+00> : vector<64x64xf32>
    %90 = tpu.matmul %87, %89, %cst_86 {dimension_numbers = #tpu.dot_dimension_numbers<[1], [0], [0], [1], [0, 0, 1, 1], [], []>} : vector<64x32xf32>, vector<32x64xf32>, vector<64x64xf32> -> vector<64x64xf32>
    %91 = arith.addf %84, %90 : vector<64x64xf32>
    %c10 = arith.constant 10 : index
    %c0_87 = arith.constant 0 : index
    %c0_88 = arith.constant 0 : index
    %92 = vector.load %arg4[%c10, %c0_87, %c0_88] : memref<25x64x256xf32, #tpu.memory_space<vmem>>, vector<1x64x256xf32>
    %93 = vector.shape_cast %92 : vector<1x64x256xf32> to vector<64x256xf32>
    %cst_89 = arith.constant dense<0.000000e+00> : vector<64x32xf32>
    %94 = tpu.matmul %93, %20, %cst_89 {dimension_numbers = #tpu.dot_dimension_numbers<[1], [0], [0], [1], [0, 0, 1, 1], [], []>} : vector<64x256xf32>, vector<256x32xf32>, vector<64x32xf32> -> vector<64x32xf32>
    %c10_90 = arith.constant 10 : index
    %c0_91 = arith.constant 0 : index
    %c0_92 = arith.constant 0 : index
    %95 = vector.load %arg5[%c10_90, %c0_91, %c0_92] : memref<25x32x64xf32, #tpu.memory_space<vmem>>, vector<1x32x64xf32>
    %96 = vector.shape_cast %95 : vector<1x32x64xf32> to vector<32x64xf32>
    %cst_93 = arith.constant dense<0.000000e+00> : vector<64x64xf32>
    %97 = tpu.matmul %94, %96, %cst_93 {dimension_numbers = #tpu.dot_dimension_numbers<[1], [0], [0], [1], [0, 0, 1, 1], [], []>} : vector<64x32xf32>, vector<32x64xf32>, vector<64x64xf32> -> vector<64x64xf32>
    %98 = arith.addf %91, %97 : vector<64x64xf32>
    %c11 = arith.constant 11 : index
    %c0_94 = arith.constant 0 : index
    %c0_95 = arith.constant 0 : index
    %99 = vector.load %arg4[%c11, %c0_94, %c0_95] : memref<25x64x256xf32, #tpu.memory_space<vmem>>, vector<1x64x256xf32>
    %100 = vector.shape_cast %99 : vector<1x64x256xf32> to vector<64x256xf32>
    %cst_96 = arith.constant dense<0.000000e+00> : vector<64x32xf32>
    %101 = tpu.matmul %100, %20, %cst_96 {dimension_numbers = #tpu.dot_dimension_numbers<[1], [0], [0], [1], [0, 0, 1, 1], [], []>} : vector<64x256xf32>, vector<256x32xf32>, vector<64x32xf32> -> vector<64x32xf32>
    %c11_97 = arith.constant 11 : index
    %c0_98 = arith.constant 0 : index
    %c0_99 = arith.constant 0 : index
    %102 = vector.load %arg5[%c11_97, %c0_98, %c0_99] : memref<25x32x64xf32, #tpu.memory_space<vmem>>, vector<1x32x64xf32>
    %103 = vector.shape_cast %102 : vector<1x32x64xf32> to vector<32x64xf32>
    %cst_100 = arith.constant dense<0.000000e+00> : vector<64x64xf32>
    %104 = tpu.matmul %101, %103, %cst_100 {dimension_numbers = #tpu.dot_dimension_numbers<[1], [0], [0], [1], [0, 0, 1, 1], [], []>} : vector<64x32xf32>, vector<32x64xf32>, vector<64x64xf32> -> vector<64x64xf32>
    %105 = arith.addf %98, %104 : vector<64x64xf32>
    %c12 = arith.constant 12 : index
    %c0_101 = arith.constant 0 : index
    %c0_102 = arith.constant 0 : index
    %106 = vector.load %arg4[%c12, %c0_101, %c0_102] : memref<25x64x256xf32, #tpu.memory_space<vmem>>, vector<1x64x256xf32>
    %107 = vector.shape_cast %106 : vector<1x64x256xf32> to vector<64x256xf32>
    %cst_103 = arith.constant dense<0.000000e+00> : vector<64x32xf32>
    %108 = tpu.matmul %107, %20, %cst_103 {dimension_numbers = #tpu.dot_dimension_numbers<[1], [0], [0], [1], [0, 0, 1, 1], [], []>} : vector<64x256xf32>, vector<256x32xf32>, vector<64x32xf32> -> vector<64x32xf32>
    %c12_104 = arith.constant 12 : index
    %c0_105 = arith.constant 0 : index
    %c0_106 = arith.constant 0 : index
    %109 = vector.load %arg5[%c12_104, %c0_105, %c0_106] : memref<25x32x64xf32, #tpu.memory_space<vmem>>, vector<1x32x64xf32>
    %110 = vector.shape_cast %109 : vector<1x32x64xf32> to vector<32x64xf32>
    %cst_107 = arith.constant dense<0.000000e+00> : vector<64x64xf32>
    %111 = tpu.matmul %108, %110, %cst_107 {dimension_numbers = #tpu.dot_dimension_numbers<[1], [0], [0], [1], [0, 0, 1, 1], [], []>} : vector<64x32xf32>, vector<32x64xf32>, vector<64x64xf32> -> vector<64x64xf32>
    %112 = arith.addf %105, %111 : vector<64x64xf32>
    %c13 = arith.constant 13 : index
    %c0_108 = arith.constant 0 : index
    %c0_109 = arith.constant 0 : index
    %113 = vector.load %arg4[%c13, %c0_108, %c0_109] : memref<25x64x256xf32, #tpu.memory_space<vmem>>, vector<1x64x256xf32>
    %114 = vector.shape_cast %113 : vector<1x64x256xf32> to vector<64x256xf32>
    %cst_110 = arith.constant dense<0.000000e+00> : vector<64x32xf32>
    %115 = tpu.matmul %114, %20, %cst_110 {dimension_numbers = #tpu.dot_dimension_numbers<[1], [0], [0], [1], [0, 0, 1, 1], [], []>} : vector<64x256xf32>, vector<256x32xf32>, vector<64x32xf32> -> vector<64x32xf32>
    %c13_111 = arith.constant 13 : index
    %c0_112 = arith.constant 0 : index
    %c0_113 = arith.constant 0 : index
    %116 = vector.load %arg5[%c13_111, %c0_112, %c0_113] : memref<25x32x64xf32, #tpu.memory_space<vmem>>, vector<1x32x64xf32>
    %117 = vector.shape_cast %116 : vector<1x32x64xf32> to vector<32x64xf32>
    %cst_114 = arith.constant dense<0.000000e+00> : vector<64x64xf32>
    %118 = tpu.matmul %115, %117, %cst_114 {dimension_numbers = #tpu.dot_dimension_numbers<[1], [0], [0], [1], [0, 0, 1, 1], [], []>} : vector<64x32xf32>, vector<32x64xf32>, vector<64x64xf32> -> vector<64x64xf32>
    %119 = arith.addf %112, %118 : vector<64x64xf32>
    %c14 = arith.constant 14 : index
    %c0_115 = arith.constant 0 : index
    %c0_116 = arith.constant 0 : index
    %120 = vector.load %arg4[%c14, %c0_115, %c0_116] : memref<25x64x256xf32, #tpu.memory_space<vmem>>, vector<1x64x256xf32>
    %121 = vector.shape_cast %120 : vector<1x64x256xf32> to vector<64x256xf32>
    %cst_117 = arith.constant dense<0.000000e+00> : vector<64x32xf32>
    %122 = tpu.matmul %121, %20, %cst_117 {dimension_numbers = #tpu.dot_dimension_numbers<[1], [0], [0], [1], [0, 0, 1, 1], [], []>} : vector<64x256xf32>, vector<256x32xf32>, vector<64x32xf32> -> vector<64x32xf32>
    %c14_118 = arith.constant 14 : index
    %c0_119 = arith.constant 0 : index
    %c0_120 = arith.constant 0 : index
    %123 = vector.load %arg5[%c14_118, %c0_119, %c0_120] : memref<25x32x64xf32, #tpu.memory_space<vmem>>, vector<1x32x64xf32>
    %124 = vector.shape_cast %123 : vector<1x32x64xf32> to vector<32x64xf32>
    %cst_121 = arith.constant dense<0.000000e+00> : vector<64x64xf32>
    %125 = tpu.matmul %122, %124, %cst_121 {dimension_numbers = #tpu.dot_dimension_numbers<[1], [0], [0], [1], [0, 0, 1, 1], [], []>} : vector<64x32xf32>, vector<32x64xf32>, vector<64x64xf32> -> vector<64x64xf32>
    %126 = arith.addf %119, %125 : vector<64x64xf32>
    %c15 = arith.constant 15 : index
    %c0_122 = arith.constant 0 : index
    %c0_123 = arith.constant 0 : index
    %127 = vector.load %arg4[%c15, %c0_122, %c0_123] : memref<25x64x256xf32, #tpu.memory_space<vmem>>, vector<1x64x256xf32>
    %128 = vector.shape_cast %127 : vector<1x64x256xf32> to vector<64x256xf32>
    %cst_124 = arith.constant dense<0.000000e+00> : vector<64x32xf32>
    %129 = tpu.matmul %128, %20, %cst_124 {dimension_numbers = #tpu.dot_dimension_numbers<[1], [0], [0], [1], [0, 0, 1, 1], [], []>} : vector<64x256xf32>, vector<256x32xf32>, vector<64x32xf32> -> vector<64x32xf32>
    %c15_125 = arith.constant 15 : index
    %c0_126 = arith.constant 0 : index
    %c0_127 = arith.constant 0 : index
    %130 = vector.load %arg5[%c15_125, %c0_126, %c0_127] : memref<25x32x64xf32, #tpu.memory_space<vmem>>, vector<1x32x64xf32>
    %131 = vector.shape_cast %130 : vector<1x32x64xf32> to vector<32x64xf32>
    %cst_128 = arith.constant dense<0.000000e+00> : vector<64x64xf32>
    %132 = tpu.matmul %129, %131, %cst_128 {dimension_numbers = #tpu.dot_dimension_numbers<[1], [0], [0], [1], [0, 0, 1, 1], [], []>} : vector<64x32xf32>, vector<32x64xf32>, vector<64x64xf32> -> vector<64x64xf32>
    %133 = arith.addf %126, %132 : vector<64x64xf32>
    %c16 = arith.constant 16 : index
    %c0_129 = arith.constant 0 : index
    %c0_130 = arith.constant 0 : index
    %134 = vector.load %arg4[%c16, %c0_129, %c0_130] : memref<25x64x256xf32, #tpu.memory_space<vmem>>, vector<1x64x256xf32>
    %135 = vector.shape_cast %134 : vector<1x64x256xf32> to vector<64x256xf32>
    %cst_131 = arith.constant dense<0.000000e+00> : vector<64x32xf32>
    %136 = tpu.matmul %135, %20, %cst_131 {dimension_numbers = #tpu.dot_dimension_numbers<[1], [0], [0], [1], [0, 0, 1, 1], [], []>} : vector<64x256xf32>, vector<256x32xf32>, vector<64x32xf32> -> vector<64x32xf32>
    %c16_132 = arith.constant 16 : index
    %c0_133 = arith.constant 0 : index
    %c0_134 = arith.constant 0 : index
    %137 = vector.load %arg5[%c16_132, %c0_133, %c0_134] : memref<25x32x64xf32, #tpu.memory_space<vmem>>, vector<1x32x64xf32>
    %138 = vector.shape_cast %137 : vector<1x32x64xf32> to vector<32x64xf32>
    %cst_135 = arith.constant dense<0.000000e+00> : vector<64x64xf32>
    %139 = tpu.matmul %136, %138, %cst_135 {dimension_numbers = #tpu.dot_dimension_numbers<[1], [0], [0], [1], [0, 0, 1, 1], [], []>} : vector<64x32xf32>, vector<32x64xf32>, vector<64x64xf32> -> vector<64x64xf32>
    %140 = arith.addf %133, %139 : vector<64x64xf32>
    %c17 = arith.constant 17 : index
    %c0_136 = arith.constant 0 : index
    %c0_137 = arith.constant 0 : index
    %141 = vector.load %arg4[%c17, %c0_136, %c0_137] : memref<25x64x256xf32, #tpu.memory_space<vmem>>, vector<1x64x256xf32>
    %142 = vector.shape_cast %141 : vector<1x64x256xf32> to vector<64x256xf32>
    %cst_138 = arith.constant dense<0.000000e+00> : vector<64x32xf32>
    %143 = tpu.matmul %142, %20, %cst_138 {dimension_numbers = #tpu.dot_dimension_numbers<[1], [0], [0], [1], [0, 0, 1, 1], [], []>} : vector<64x256xf32>, vector<256x32xf32>, vector<64x32xf32> -> vector<64x32xf32>
    %c17_139 = arith.constant 17 : index
    %c0_140 = arith.constant 0 : index
    %c0_141 = arith.constant 0 : index
    %144 = vector.load %arg5[%c17_139, %c0_140, %c0_141] : memref<25x32x64xf32, #tpu.memory_space<vmem>>, vector<1x32x64xf32>
    %145 = vector.shape_cast %144 : vector<1x32x64xf32> to vector<32x64xf32>
    %cst_142 = arith.constant dense<0.000000e+00> : vector<64x64xf32>
    %146 = tpu.matmul %143, %145, %cst_142 {dimension_numbers = #tpu.dot_dimension_numbers<[1], [0], [0], [1], [0, 0, 1, 1], [], []>} : vector<64x32xf32>, vector<32x64xf32>, vector<64x64xf32> -> vector<64x64xf32>
    %147 = arith.addf %140, %146 : vector<64x64xf32>
    %c18 = arith.constant 18 : index
    %c0_143 = arith.constant 0 : index
    %c0_144 = arith.constant 0 : index
    %148 = vector.load %arg4[%c18, %c0_143, %c0_144] : memref<25x64x256xf32, #tpu.memory_space<vmem>>, vector<1x64x256xf32>
    %149 = vector.shape_cast %148 : vector<1x64x256xf32> to vector<64x256xf32>
    %cst_145 = arith.constant dense<0.000000e+00> : vector<64x32xf32>
    %150 = tpu.matmul %149, %20, %cst_145 {dimension_numbers = #tpu.dot_dimension_numbers<[1], [0], [0], [1], [0, 0, 1, 1], [], []>} : vector<64x256xf32>, vector<256x32xf32>, vector<64x32xf32> -> vector<64x32xf32>
    %c18_146 = arith.constant 18 : index
    %c0_147 = arith.constant 0 : index
    %c0_148 = arith.constant 0 : index
    %151 = vector.load %arg5[%c18_146, %c0_147, %c0_148] : memref<25x32x64xf32, #tpu.memory_space<vmem>>, vector<1x32x64xf32>
    %152 = vector.shape_cast %151 : vector<1x32x64xf32> to vector<32x64xf32>
    %cst_149 = arith.constant dense<0.000000e+00> : vector<64x64xf32>
    %153 = tpu.matmul %150, %152, %cst_149 {dimension_numbers = #tpu.dot_dimension_numbers<[1], [0], [0], [1], [0, 0, 1, 1], [], []>} : vector<64x32xf32>, vector<32x64xf32>, vector<64x64xf32> -> vector<64x64xf32>
    %154 = arith.addf %147, %153 : vector<64x64xf32>
    %c19 = arith.constant 19 : index
    %c0_150 = arith.constant 0 : index
    %c0_151 = arith.constant 0 : index
    %155 = vector.load %arg4[%c19, %c0_150, %c0_151] : memref<25x64x256xf32, #tpu.memory_space<vmem>>, vector<1x64x256xf32>
    %156 = vector.shape_cast %155 : vector<1x64x256xf32> to vector<64x256xf32>
    %cst_152 = arith.constant dense<0.000000e+00> : vector<64x32xf32>
    %157 = tpu.matmul %156, %20, %cst_152 {dimension_numbers = #tpu.dot_dimension_numbers<[1], [0], [0], [1], [0, 0, 1, 1], [], []>} : vector<64x256xf32>, vector<256x32xf32>, vector<64x32xf32> -> vector<64x32xf32>
    %c19_153 = arith.constant 19 : index
    %c0_154 = arith.constant 0 : index
    %c0_155 = arith.constant 0 : index
    %158 = vector.load %arg5[%c19_153, %c0_154, %c0_155] : memref<25x32x64xf32, #tpu.memory_space<vmem>>, vector<1x32x64xf32>
    %159 = vector.shape_cast %158 : vector<1x32x64xf32> to vector<32x64xf32>
    %cst_156 = arith.constant dense<0.000000e+00> : vector<64x64xf32>
    %160 = tpu.matmul %157, %159, %cst_156 {dimension_numbers = #tpu.dot_dimension_numbers<[1], [0], [0], [1], [0, 0, 1, 1], [], []>} : vector<64x32xf32>, vector<32x64xf32>, vector<64x64xf32> -> vector<64x64xf32>
    %161 = arith.addf %154, %160 : vector<64x64xf32>
    %c20 = arith.constant 20 : index
    %c0_157 = arith.constant 0 : index
    %c0_158 = arith.constant 0 : index
    %162 = vector.load %arg4[%c20, %c0_157, %c0_158] : memref<25x64x256xf32, #tpu.memory_space<vmem>>, vector<1x64x256xf32>
    %163 = vector.shape_cast %162 : vector<1x64x256xf32> to vector<64x256xf32>
    %cst_159 = arith.constant dense<0.000000e+00> : vector<64x32xf32>
    %164 = tpu.matmul %163, %20, %cst_159 {dimension_numbers = #tpu.dot_dimension_numbers<[1], [0], [0], [1], [0, 0, 1, 1], [], []>} : vector<64x256xf32>, vector<256x32xf32>, vector<64x32xf32> -> vector<64x32xf32>
    %c20_160 = arith.constant 20 : index
    %c0_161 = arith.constant 0 : index
    %c0_162 = arith.constant 0 : index
    %165 = vector.load %arg5[%c20_160, %c0_161, %c0_162] : memref<25x32x64xf32, #tpu.memory_space<vmem>>, vector<1x32x64xf32>
    %166 = vector.shape_cast %165 : vector<1x32x64xf32> to vector<32x64xf32>
    %cst_163 = arith.constant dense<0.000000e+00> : vector<64x64xf32>
    %167 = tpu.matmul %164, %166, %cst_163 {dimension_numbers = #tpu.dot_dimension_numbers<[1], [0], [0], [1], [0, 0, 1, 1], [], []>} : vector<64x32xf32>, vector<32x64xf32>, vector<64x64xf32> -> vector<64x64xf32>
    %168 = arith.addf %161, %167 : vector<64x64xf32>
    %c21 = arith.constant 21 : index
    %c0_164 = arith.constant 0 : index
    %c0_165 = arith.constant 0 : index
    %169 = vector.load %arg4[%c21, %c0_164, %c0_165] : memref<25x64x256xf32, #tpu.memory_space<vmem>>, vector<1x64x256xf32>
    %170 = vector.shape_cast %169 : vector<1x64x256xf32> to vector<64x256xf32>
    %cst_166 = arith.constant dense<0.000000e+00> : vector<64x32xf32>
    %171 = tpu.matmul %170, %20, %cst_166 {dimension_numbers = #tpu.dot_dimension_numbers<[1], [0], [0], [1], [0, 0, 1, 1], [], []>} : vector<64x256xf32>, vector<256x32xf32>, vector<64x32xf32> -> vector<64x32xf32>
    %c21_167 = arith.constant 21 : index
    %c0_168 = arith.constant 0 : index
    %c0_169 = arith.constant 0 : index
    %172 = vector.load %arg5[%c21_167, %c0_168, %c0_169] : memref<25x32x64xf32, #tpu.memory_space<vmem>>, vector<1x32x64xf32>
    %173 = vector.shape_cast %172 : vector<1x32x64xf32> to vector<32x64xf32>
    %cst_170 = arith.constant dense<0.000000e+00> : vector<64x64xf32>
    %174 = tpu.matmul %171, %173, %cst_170 {dimension_numbers = #tpu.dot_dimension_numbers<[1], [0], [0], [1], [0, 0, 1, 1], [], []>} : vector<64x32xf32>, vector<32x64xf32>, vector<64x64xf32> -> vector<64x64xf32>
    %175 = arith.addf %168, %174 : vector<64x64xf32>
    %c22 = arith.constant 22 : index
    %c0_171 = arith.constant 0 : index
    %c0_172 = arith.constant 0 : index
    %176 = vector.load %arg4[%c22, %c0_171, %c0_172] : memref<25x64x256xf32, #tpu.memory_space<vmem>>, vector<1x64x256xf32>
    %177 = vector.shape_cast %176 : vector<1x64x256xf32> to vector<64x256xf32>
    %cst_173 = arith.constant dense<0.000000e+00> : vector<64x32xf32>
    %178 = tpu.matmul %177, %20, %cst_173 {dimension_numbers = #tpu.dot_dimension_numbers<[1], [0], [0], [1], [0, 0, 1, 1], [], []>} : vector<64x256xf32>, vector<256x32xf32>, vector<64x32xf32> -> vector<64x32xf32>
    %c22_174 = arith.constant 22 : index
    %c0_175 = arith.constant 0 : index
    %c0_176 = arith.constant 0 : index
    %179 = vector.load %arg5[%c22_174, %c0_175, %c0_176] : memref<25x32x64xf32, #tpu.memory_space<vmem>>, vector<1x32x64xf32>
    %180 = vector.shape_cast %179 : vector<1x32x64xf32> to vector<32x64xf32>
    %cst_177 = arith.constant dense<0.000000e+00> : vector<64x64xf32>
    %181 = tpu.matmul %178, %180, %cst_177 {dimension_numbers = #tpu.dot_dimension_numbers<[1], [0], [0], [1], [0, 0, 1, 1], [], []>} : vector<64x32xf32>, vector<32x64xf32>, vector<64x64xf32> -> vector<64x64xf32>
    %182 = arith.addf %175, %181 : vector<64x64xf32>
    %c23 = arith.constant 23 : index
    %c0_178 = arith.constant 0 : index
    %c0_179 = arith.constant 0 : index
    %183 = vector.load %arg4[%c23, %c0_178, %c0_179] : memref<25x64x256xf32, #tpu.memory_space<vmem>>, vector<1x64x256xf32>
    %184 = vector.shape_cast %183 : vector<1x64x256xf32> to vector<64x256xf32>
    %cst_180 = arith.constant dense<0.000000e+00> : vector<64x32xf32>
    %185 = tpu.matmul %184, %20, %cst_180 {dimension_numbers = #tpu.dot_dimension_numbers<[1], [0], [0], [1], [0, 0, 1, 1], [], []>} : vector<64x256xf32>, vector<256x32xf32>, vector<64x32xf32> -> vector<64x32xf32>
    %c23_181 = arith.constant 23 : index
    %c0_182 = arith.constant 0 : index
    %c0_183 = arith.constant 0 : index
    %186 = vector.load %arg5[%c23_181, %c0_182, %c0_183] : memref<25x32x64xf32, #tpu.memory_space<vmem>>, vector<1x32x64xf32>
    %187 = vector.shape_cast %186 : vector<1x32x64xf32> to vector<32x64xf32>
    %cst_184 = arith.constant dense<0.000000e+00> : vector<64x64xf32>
    %188 = tpu.matmul %185, %187, %cst_184 {dimension_numbers = #tpu.dot_dimension_numbers<[1], [0], [0], [1], [0, 0, 1, 1], [], []>} : vector<64x32xf32>, vector<32x64xf32>, vector<64x64xf32> -> vector<64x64xf32>
    %189 = arith.addf %182, %188 : vector<64x64xf32>
    %c24 = arith.constant 24 : index
    %c0_185 = arith.constant 0 : index
    %c0_186 = arith.constant 0 : index
    %190 = vector.load %arg4[%c24, %c0_185, %c0_186] : memref<25x64x256xf32, #tpu.memory_space<vmem>>, vector<1x64x256xf32>
    %191 = vector.shape_cast %190 : vector<1x64x256xf32> to vector<64x256xf32>
    %cst_187 = arith.constant dense<0.000000e+00> : vector<64x32xf32>
    %192 = tpu.matmul %191, %20, %cst_187 {dimension_numbers = #tpu.dot_dimension_numbers<[1], [0], [0], [1], [0, 0, 1, 1], [], []>} : vector<64x256xf32>, vector<256x32xf32>, vector<64x32xf32> -> vector<64x32xf32>
    %c24_188 = arith.constant 24 : index
    %c0_189 = arith.constant 0 : index
    %c0_190 = arith.constant 0 : index
    %193 = vector.load %arg5[%c24_188, %c0_189, %c0_190] : memref<25x32x64xf32, #tpu.memory_space<vmem>>, vector<1x32x64xf32>
    %194 = vector.shape_cast %193 : vector<1x32x64xf32> to vector<32x64xf32>
    %cst_191 = arith.constant dense<0.000000e+00> : vector<64x64xf32>
    %195 = tpu.matmul %192, %194, %cst_191 {dimension_numbers = #tpu.dot_dimension_numbers<[1], [0], [0], [1], [0, 0, 1, 1], [], []>} : vector<64x32xf32>, vector<32x64xf32>, vector<64x64xf32> -> vector<64x64xf32>
    %196 = arith.addf %189, %195 : vector<64x64xf32>
    %c0_192 = arith.constant 0 : index
    %c0_193 = arith.constant 0 : index
    %c0_194 = arith.constant 0 : index
    %197 = vector.load %arg6[%c0_192, %c0_193, %c0_194] : memref<3x1x64xf32, #tpu.memory_space<vmem>>, vector<1x1x64xf32>
    %198 = vector.shape_cast %197 : vector<1x1x64xf32> to vector<1x64xf32>
    %199 = vector.broadcast %198 : vector<1x64xf32> to vector<64x64xf32>
    %200 = arith.addf %196, %199 : vector<64x64xf32>
    %cst_195 = arith.constant 0.000000e+00 : f32
    %201 = vector.broadcast %cst_195 : f32 to vector<64x64xf32>
    %202 = arith.cmpf oge, %200, %201 : vector<64x64xf32>
    %cst_196 = arith.constant 2.000000e-01 : f32
    %203 = vector.broadcast %cst_196 : f32 to vector<64x64xf32>
    %204 = arith.mulf %203, %200 : vector<64x64xf32>
    %205 = arith.select %202, %200, %204 : vector<64x64xi1>, vector<64x64xf32>
    %c1_197 = arith.constant 1 : index
    %c0_198 = arith.constant 0 : index
    %c0_199 = arith.constant 0 : index
    %206 = vector.load %arg6[%c1_197, %c0_198, %c0_199] : memref<3x1x64xf32, #tpu.memory_space<vmem>>, vector<1x1x64xf32>
    %207 = vector.shape_cast %206 : vector<1x1x64xf32> to vector<1x64xf32>
    %208 = vector.broadcast %207 : vector<1x64xf32> to vector<64x64xf32>
    %209 = arith.mulf %205, %208 : vector<64x64xf32>
    %c2_200 = arith.constant 2 : index
    %c0_201 = arith.constant 0 : index
    %c0_202 = arith.constant 0 : index
    %210 = vector.load %arg6[%c2_200, %c0_201, %c0_202] : memref<3x1x64xf32, #tpu.memory_space<vmem>>, vector<1x1x64xf32>
    %211 = vector.shape_cast %210 : vector<1x1x64xf32> to vector<1x64xf32>
    %212 = vector.broadcast %211 : vector<1x64xf32> to vector<64x64xf32>
    %213 = arith.addf %209, %212 : vector<64x64xf32>
    %cst_203 = arith.constant 0.000000e+00 : f32
    %214 = vector.broadcast %cst_203 : f32 to vector<16x128xf32>
    %c0_204 = arith.constant 0 : index
    %c0_205 = arith.constant 0 : index
    %c0_206 = arith.constant 0 : index
    %215 = vector.load %arg7[%c0_204, %c0_205, %c0_206] : memref<25x16x64xf32, #tpu.memory_space<vmem>>, vector<1x16x64xf32>
    %216 = vector.shape_cast %215 : vector<1x16x64xf32> to vector<16x64xf32>
    %cst_207 = arith.constant dense<0.000000e+00> : vector<16x64xf32>
    %217 = tpu.matmul %216, %213, %cst_207 {dimension_numbers = #tpu.dot_dimension_numbers<[1], [0], [0], [1], [0, 0, 1, 1], [], []>} : vector<16x64xf32>, vector<64x64xf32>, vector<16x64xf32> -> vector<16x64xf32>
    %c0_208 = arith.constant 0 : index
    %c0_209 = arith.constant 0 : index
    %c0_210 = arith.constant 0 : index
    %218 = vector.load %arg8[%c0_208, %c0_209, %c0_210] : memref<25x64x128xf32, #tpu.memory_space<vmem>>, vector<1x64x128xf32>
    %219 = vector.shape_cast %218 : vector<1x64x128xf32> to vector<64x128xf32>
    %cst_211 = arith.constant dense<0.000000e+00> : vector<16x128xf32>
    %220 = tpu.matmul %217, %219, %cst_211 {dimension_numbers = #tpu.dot_dimension_numbers<[1], [0], [0], [1], [0, 0, 1, 1], [], []>} : vector<16x64xf32>, vector<64x128xf32>, vector<16x128xf32> -> vector<16x128xf32>
    %221 = arith.addf %214, %220 : vector<16x128xf32>
    %c1_212 = arith.constant 1 : index
    %c0_213 = arith.constant 0 : index
    %c0_214 = arith.constant 0 : index
    %222 = vector.load %arg7[%c1_212, %c0_213, %c0_214] : memref<25x16x64xf32, #tpu.memory_space<vmem>>, vector<1x16x64xf32>
    %223 = vector.shape_cast %222 : vector<1x16x64xf32> to vector<16x64xf32>
    %cst_215 = arith.constant dense<0.000000e+00> : vector<16x64xf32>
    %224 = tpu.matmul %223, %213, %cst_215 {dimension_numbers = #tpu.dot_dimension_numbers<[1], [0], [0], [1], [0, 0, 1, 1], [], []>} : vector<16x64xf32>, vector<64x64xf32>, vector<16x64xf32> -> vector<16x64xf32>
    %c1_216 = arith.constant 1 : index
    %c0_217 = arith.constant 0 : index
    %c0_218 = arith.constant 0 : index
    %225 = vector.load %arg8[%c1_216, %c0_217, %c0_218] : memref<25x64x128xf32, #tpu.memory_space<vmem>>, vector<1x64x128xf32>
    %226 = vector.shape_cast %225 : vector<1x64x128xf32> to vector<64x128xf32>
    %cst_219 = arith.constant dense<0.000000e+00> : vector<16x128xf32>
    %227 = tpu.matmul %224, %226, %cst_219 {dimension_numbers = #tpu.dot_dimension_numbers<[1], [0], [0], [1], [0, 0, 1, 1], [], []>} : vector<16x64xf32>, vector<64x128xf32>, vector<16x128xf32> -> vector<16x128xf32>
    %228 = arith.addf %221, %227 : vector<16x128xf32>
    %c2_220 = arith.constant 2 : index
    %c0_221 = arith.constant 0 : index
    %c0_222 = arith.constant 0 : index
    %229 = vector.load %arg7[%c2_220, %c0_221, %c0_222] : memref<25x16x64xf32, #tpu.memory_space<vmem>>, vector<1x16x64xf32>
    %230 = vector.shape_cast %229 : vector<1x16x64xf32> to vector<16x64xf32>
    %cst_223 = arith.constant dense<0.000000e+00> : vector<16x64xf32>
    %231 = tpu.matmul %230, %213, %cst_223 {dimension_numbers = #tpu.dot_dimension_numbers<[1], [0], [0], [1], [0, 0, 1, 1], [], []>} : vector<16x64xf32>, vector<64x64xf32>, vector<16x64xf32> -> vector<16x64xf32>
    %c2_224 = arith.constant 2 : index
    %c0_225 = arith.constant 0 : index
    %c0_226 = arith.constant 0 : index
    %232 = vector.load %arg8[%c2_224, %c0_225, %c0_226] : memref<25x64x128xf32, #tpu.memory_space<vmem>>, vector<1x64x128xf32>
    %233 = vector.shape_cast %232 : vector<1x64x128xf32> to vector<64x128xf32>
    %cst_227 = arith.constant dense<0.000000e+00> : vector<16x128xf32>
    %234 = tpu.matmul %231, %233, %cst_227 {dimension_numbers = #tpu.dot_dimension_numbers<[1], [0], [0], [1], [0, 0, 1, 1], [], []>} : vector<16x64xf32>, vector<64x128xf32>, vector<16x128xf32> -> vector<16x128xf32>
    %235 = arith.addf %228, %234 : vector<16x128xf32>
    %c3_228 = arith.constant 3 : index
    %c0_229 = arith.constant 0 : index
    %c0_230 = arith.constant 0 : index
    %236 = vector.load %arg7[%c3_228, %c0_229, %c0_230] : memref<25x16x64xf32, #tpu.memory_space<vmem>>, vector<1x16x64xf32>
    %237 = vector.shape_cast %236 : vector<1x16x64xf32> to vector<16x64xf32>
    %cst_231 = arith.constant dense<0.000000e+00> : vector<16x64xf32>
    %238 = tpu.matmul %237, %213, %cst_231 {dimension_numbers = #tpu.dot_dimension_numbers<[1], [0], [0], [1], [0, 0, 1, 1], [], []>} : vector<16x64xf32>, vector<64x64xf32>, vector<16x64xf32> -> vector<16x64xf32>
    %c3_232 = arith.constant 3 : index
    %c0_233 = arith.constant 0 : index
    %c0_234 = arith.constant 0 : index
    %239 = vector.load %arg8[%c3_232, %c0_233, %c0_234] : memref<25x64x128xf32, #tpu.memory_space<vmem>>, vector<1x64x128xf32>
    %240 = vector.shape_cast %239 : vector<1x64x128xf32> to vector<64x128xf32>
    %cst_235 = arith.constant dense<0.000000e+00> : vector<16x128xf32>
    %241 = tpu.matmul %238, %240, %cst_235 {dimension_numbers = #tpu.dot_dimension_numbers<[1], [0], [0], [1], [0, 0, 1, 1], [], []>} : vector<16x64xf32>, vector<64x128xf32>, vector<16x128xf32> -> vector<16x128xf32>
    %242 = arith.addf %235, %241 : vector<16x128xf32>
    %c4_236 = arith.constant 4 : index
    %c0_237 = arith.constant 0 : index
    %c0_238 = arith.constant 0 : index
    %243 = vector.load %arg7[%c4_236, %c0_237, %c0_238] : memref<25x16x64xf32, #tpu.memory_space<vmem>>, vector<1x16x64xf32>
    %244 = vector.shape_cast %243 : vector<1x16x64xf32> to vector<16x64xf32>
    %cst_239 = arith.constant dense<0.000000e+00> : vector<16x64xf32>
    %245 = tpu.matmul %244, %213, %cst_239 {dimension_numbers = #tpu.dot_dimension_numbers<[1], [0], [0], [1], [0, 0, 1, 1], [], []>} : vector<16x64xf32>, vector<64x64xf32>, vector<16x64xf32> -> vector<16x64xf32>
    %c4_240 = arith.constant 4 : index
    %c0_241 = arith.constant 0 : index
    %c0_242 = arith.constant 0 : index
    %246 = vector.load %arg8[%c4_240, %c0_241, %c0_242] : memref<25x64x128xf32, #tpu.memory_space<vmem>>, vector<1x64x128xf32>
    %247 = vector.shape_cast %246 : vector<1x64x128xf32> to vector<64x128xf32>
    %cst_243 = arith.constant dense<0.000000e+00> : vector<16x128xf32>
    %248 = tpu.matmul %245, %247, %cst_243 {dimension_numbers = #tpu.dot_dimension_numbers<[1], [0], [0], [1], [0, 0, 1, 1], [], []>} : vector<16x64xf32>, vector<64x128xf32>, vector<16x128xf32> -> vector<16x128xf32>
    %249 = arith.addf %242, %248 : vector<16x128xf32>
    %c5_244 = arith.constant 5 : index
    %c0_245 = arith.constant 0 : index
    %c0_246 = arith.constant 0 : index
    %250 = vector.load %arg7[%c5_244, %c0_245, %c0_246] : memref<25x16x64xf32, #tpu.memory_space<vmem>>, vector<1x16x64xf32>
    %251 = vector.shape_cast %250 : vector<1x16x64xf32> to vector<16x64xf32>
    %cst_247 = arith.constant dense<0.000000e+00> : vector<16x64xf32>
    %252 = tpu.matmul %251, %213, %cst_247 {dimension_numbers = #tpu.dot_dimension_numbers<[1], [0], [0], [1], [0, 0, 1, 1], [], []>} : vector<16x64xf32>, vector<64x64xf32>, vector<16x64xf32> -> vector<16x64xf32>
    %c5_248 = arith.constant 5 : index
    %c0_249 = arith.constant 0 : index
    %c0_250 = arith.constant 0 : index
    %253 = vector.load %arg8[%c5_248, %c0_249, %c0_250] : memref<25x64x128xf32, #tpu.memory_space<vmem>>, vector<1x64x128xf32>
    %254 = vector.shape_cast %253 : vector<1x64x128xf32> to vector<64x128xf32>
    %cst_251 = arith.constant dense<0.000000e+00> : vector<16x128xf32>
    %255 = tpu.matmul %252, %254, %cst_251 {dimension_numbers = #tpu.dot_dimension_numbers<[1], [0], [0], [1], [0, 0, 1, 1], [], []>} : vector<16x64xf32>, vector<64x128xf32>, vector<16x128xf32> -> vector<16x128xf32>
    %256 = arith.addf %249, %255 : vector<16x128xf32>
    %c6_252 = arith.constant 6 : index
    %c0_253 = arith.constant 0 : index
    %c0_254 = arith.constant 0 : index
    %257 = vector.load %arg7[%c6_252, %c0_253, %c0_254] : memref<25x16x64xf32, #tpu.memory_space<vmem>>, vector<1x16x64xf32>
    %258 = vector.shape_cast %257 : vector<1x16x64xf32> to vector<16x64xf32>
    %cst_255 = arith.constant dense<0.000000e+00> : vector<16x64xf32>
    %259 = tpu.matmul %258, %213, %cst_255 {dimension_numbers = #tpu.dot_dimension_numbers<[1], [0], [0], [1], [0, 0, 1, 1], [], []>} : vector<16x64xf32>, vector<64x64xf32>, vector<16x64xf32> -> vector<16x64xf32>
    %c6_256 = arith.constant 6 : index
    %c0_257 = arith.constant 0 : index
    %c0_258 = arith.constant 0 : index
    %260 = vector.load %arg8[%c6_256, %c0_257, %c0_258] : memref<25x64x128xf32, #tpu.memory_space<vmem>>, vector<1x64x128xf32>
    %261 = vector.shape_cast %260 : vector<1x64x128xf32> to vector<64x128xf32>
    %cst_259 = arith.constant dense<0.000000e+00> : vector<16x128xf32>
    %262 = tpu.matmul %259, %261, %cst_259 {dimension_numbers = #tpu.dot_dimension_numbers<[1], [0], [0], [1], [0, 0, 1, 1], [], []>} : vector<16x64xf32>, vector<64x128xf32>, vector<16x128xf32> -> vector<16x128xf32>
    %263 = arith.addf %256, %262 : vector<16x128xf32>
    %c7_260 = arith.constant 7 : index
    %c0_261 = arith.constant 0 : index
    %c0_262 = arith.constant 0 : index
    %264 = vector.load %arg7[%c7_260, %c0_261, %c0_262] : memref<25x16x64xf32, #tpu.memory_space<vmem>>, vector<1x16x64xf32>
    %265 = vector.shape_cast %264 : vector<1x16x64xf32> to vector<16x64xf32>
    %cst_263 = arith.constant dense<0.000000e+00> : vector<16x64xf32>
    %266 = tpu.matmul %265, %213, %cst_263 {dimension_numbers = #tpu.dot_dimension_numbers<[1], [0], [0], [1], [0, 0, 1, 1], [], []>} : vector<16x64xf32>, vector<64x64xf32>, vector<16x64xf32> -> vector<16x64xf32>
    %c7_264 = arith.constant 7 : index
    %c0_265 = arith.constant 0 : index
    %c0_266 = arith.constant 0 : index
    %267 = vector.load %arg8[%c7_264, %c0_265, %c0_266] : memref<25x64x128xf32, #tpu.memory_space<vmem>>, vector<1x64x128xf32>
    %268 = vector.shape_cast %267 : vector<1x64x128xf32> to vector<64x128xf32>
    %cst_267 = arith.constant dense<0.000000e+00> : vector<16x128xf32>
    %269 = tpu.matmul %266, %268, %cst_267 {dimension_numbers = #tpu.dot_dimension_numbers<[1], [0], [0], [1], [0, 0, 1, 1], [], []>} : vector<16x64xf32>, vector<64x128xf32>, vector<16x128xf32> -> vector<16x128xf32>
    %270 = arith.addf %263, %269 : vector<16x128xf32>
    %c8_268 = arith.constant 8 : index
    %c0_269 = arith.constant 0 : index
    %c0_270 = arith.constant 0 : index
    %271 = vector.load %arg7[%c8_268, %c0_269, %c0_270] : memref<25x16x64xf32, #tpu.memory_space<vmem>>, vector<1x16x64xf32>
    %272 = vector.shape_cast %271 : vector<1x16x64xf32> to vector<16x64xf32>
    %cst_271 = arith.constant dense<0.000000e+00> : vector<16x64xf32>
    %273 = tpu.matmul %272, %213, %cst_271 {dimension_numbers = #tpu.dot_dimension_numbers<[1], [0], [0], [1], [0, 0, 1, 1], [], []>} : vector<16x64xf32>, vector<64x64xf32>, vector<16x64xf32> -> vector<16x64xf32>
    %c8_272 = arith.constant 8 : index
    %c0_273 = arith.constant 0 : index
    %c0_274 = arith.constant 0 : index
    %274 = vector.load %arg8[%c8_272, %c0_273, %c0_274] : memref<25x64x128xf32, #tpu.memory_space<vmem>>, vector<1x64x128xf32>
    %275 = vector.shape_cast %274 : vector<1x64x128xf32> to vector<64x128xf32>
    %cst_275 = arith.constant dense<0.000000e+00> : vector<16x128xf32>
    %276 = tpu.matmul %273, %275, %cst_275 {dimension_numbers = #tpu.dot_dimension_numbers<[1], [0], [0], [1], [0, 0, 1, 1], [], []>} : vector<16x64xf32>, vector<64x128xf32>, vector<16x128xf32> -> vector<16x128xf32>
    %277 = arith.addf %270, %276 : vector<16x128xf32>
    %c9_276 = arith.constant 9 : index
    %c0_277 = arith.constant 0 : index
    %c0_278 = arith.constant 0 : index
    %278 = vector.load %arg7[%c9_276, %c0_277, %c0_278] : memref<25x16x64xf32, #tpu.memory_space<vmem>>, vector<1x16x64xf32>
    %279 = vector.shape_cast %278 : vector<1x16x64xf32> to vector<16x64xf32>
    %cst_279 = arith.constant dense<0.000000e+00> : vector<16x64xf32>
    %280 = tpu.matmul %279, %213, %cst_279 {dimension_numbers = #tpu.dot_dimension_numbers<[1], [0], [0], [1], [0, 0, 1, 1], [], []>} : vector<16x64xf32>, vector<64x64xf32>, vector<16x64xf32> -> vector<16x64xf32>
    %c9_280 = arith.constant 9 : index
    %c0_281 = arith.constant 0 : index
    %c0_282 = arith.constant 0 : index
    %281 = vector.load %arg8[%c9_280, %c0_281, %c0_282] : memref<25x64x128xf32, #tpu.memory_space<vmem>>, vector<1x64x128xf32>
    %282 = vector.shape_cast %281 : vector<1x64x128xf32> to vector<64x128xf32>
    %cst_283 = arith.constant dense<0.000000e+00> : vector<16x128xf32>
    %283 = tpu.matmul %280, %282, %cst_283 {dimension_numbers = #tpu.dot_dimension_numbers<[1], [0], [0], [1], [0, 0, 1, 1], [], []>} : vector<16x64xf32>, vector<64x128xf32>, vector<16x128xf32> -> vector<16x128xf32>
    %284 = arith.addf %277, %283 : vector<16x128xf32>
    %c10_284 = arith.constant 10 : index
    %c0_285 = arith.constant 0 : index
    %c0_286 = arith.constant 0 : index
    %285 = vector.load %arg7[%c10_284, %c0_285, %c0_286] : memref<25x16x64xf32, #tpu.memory_space<vmem>>, vector<1x16x64xf32>
    %286 = vector.shape_cast %285 : vector<1x16x64xf32> to vector<16x64xf32>
    %cst_287 = arith.constant dense<0.000000e+00> : vector<16x64xf32>
    %287 = tpu.matmul %286, %213, %cst_287 {dimension_numbers = #tpu.dot_dimension_numbers<[1], [0], [0], [1], [0, 0, 1, 1], [], []>} : vector<16x64xf32>, vector<64x64xf32>, vector<16x64xf32> -> vector<16x64xf32>
    %c10_288 = arith.constant 10 : index
    %c0_289 = arith.constant 0 : index
    %c0_290 = arith.constant 0 : index
    %288 = vector.load %arg8[%c10_288, %c0_289, %c0_290] : memref<25x64x128xf32, #tpu.memory_space<vmem>>, vector<1x64x128xf32>
    %289 = vector.shape_cast %288 : vector<1x64x128xf32> to vector<64x128xf32>
    %cst_291 = arith.constant dense<0.000000e+00> : vector<16x128xf32>
    %290 = tpu.matmul %287, %289, %cst_291 {dimension_numbers = #tpu.dot_dimension_numbers<[1], [0], [0], [1], [0, 0, 1, 1], [], []>} : vector<16x64xf32>, vector<64x128xf32>, vector<16x128xf32> -> vector<16x128xf32>
    %291 = arith.addf %284, %290 : vector<16x128xf32>
    %c11_292 = arith.constant 11 : index
    %c0_293 = arith.constant 0 : index
    %c0_294 = arith.constant 0 : index
    %292 = vector.load %arg7[%c11_292, %c0_293, %c0_294] : memref<25x16x64xf32, #tpu.memory_space<vmem>>, vector<1x16x64xf32>
    %293 = vector.shape_cast %292 : vector<1x16x64xf32> to vector<16x64xf32>
    %cst_295 = arith.constant dense<0.000000e+00> : vector<16x64xf32>
    %294 = tpu.matmul %293, %213, %cst_295 {dimension_numbers = #tpu.dot_dimension_numbers<[1], [0], [0], [1], [0, 0, 1, 1], [], []>} : vector<16x64xf32>, vector<64x64xf32>, vector<16x64xf32> -> vector<16x64xf32>
    %c11_296 = arith.constant 11 : index
    %c0_297 = arith.constant 0 : index
    %c0_298 = arith.constant 0 : index
    %295 = vector.load %arg8[%c11_296, %c0_297, %c0_298] : memref<25x64x128xf32, #tpu.memory_space<vmem>>, vector<1x64x128xf32>
    %296 = vector.shape_cast %295 : vector<1x64x128xf32> to vector<64x128xf32>
    %cst_299 = arith.constant dense<0.000000e+00> : vector<16x128xf32>
    %297 = tpu.matmul %294, %296, %cst_299 {dimension_numbers = #tpu.dot_dimension_numbers<[1], [0], [0], [1], [0, 0, 1, 1], [], []>} : vector<16x64xf32>, vector<64x128xf32>, vector<16x128xf32> -> vector<16x128xf32>
    %298 = arith.addf %291, %297 : vector<16x128xf32>
    %c12_300 = arith.constant 12 : index
    %c0_301 = arith.constant 0 : index
    %c0_302 = arith.constant 0 : index
    %299 = vector.load %arg7[%c12_300, %c0_301, %c0_302] : memref<25x16x64xf32, #tpu.memory_space<vmem>>, vector<1x16x64xf32>
    %300 = vector.shape_cast %299 : vector<1x16x64xf32> to vector<16x64xf32>
    %cst_303 = arith.constant dense<0.000000e+00> : vector<16x64xf32>
    %301 = tpu.matmul %300, %213, %cst_303 {dimension_numbers = #tpu.dot_dimension_numbers<[1], [0], [0], [1], [0, 0, 1, 1], [], []>} : vector<16x64xf32>, vector<64x64xf32>, vector<16x64xf32> -> vector<16x64xf32>
    %c12_304 = arith.constant 12 : index
    %c0_305 = arith.constant 0 : index
    %c0_306 = arith.constant 0 : index
    %302 = vector.load %arg8[%c12_304, %c0_305, %c0_306] : memref<25x64x128xf32, #tpu.memory_space<vmem>>, vector<1x64x128xf32>
    %303 = vector.shape_cast %302 : vector<1x64x128xf32> to vector<64x128xf32>
    %cst_307 = arith.constant dense<0.000000e+00> : vector<16x128xf32>
    %304 = tpu.matmul %301, %303, %cst_307 {dimension_numbers = #tpu.dot_dimension_numbers<[1], [0], [0], [1], [0, 0, 1, 1], [], []>} : vector<16x64xf32>, vector<64x128xf32>, vector<16x128xf32> -> vector<16x128xf32>
    %305 = arith.addf %298, %304 : vector<16x128xf32>
    %c13_308 = arith.constant 13 : index
    %c0_309 = arith.constant 0 : index
    %c0_310 = arith.constant 0 : index
    %306 = vector.load %arg7[%c13_308, %c0_309, %c0_310] : memref<25x16x64xf32, #tpu.memory_space<vmem>>, vector<1x16x64xf32>
    %307 = vector.shape_cast %306 : vector<1x16x64xf32> to vector<16x64xf32>
    %cst_311 = arith.constant dense<0.000000e+00> : vector<16x64xf32>
    %308 = tpu.matmul %307, %213, %cst_311 {dimension_numbers = #tpu.dot_dimension_numbers<[1], [0], [0], [1], [0, 0, 1, 1], [], []>} : vector<16x64xf32>, vector<64x64xf32>, vector<16x64xf32> -> vector<16x64xf32>
    %c13_312 = arith.constant 13 : index
    %c0_313 = arith.constant 0 : index
    %c0_314 = arith.constant 0 : index
    %309 = vector.load %arg8[%c13_312, %c0_313, %c0_314] : memref<25x64x128xf32, #tpu.memory_space<vmem>>, vector<1x64x128xf32>
    %310 = vector.shape_cast %309 : vector<1x64x128xf32> to vector<64x128xf32>
    %cst_315 = arith.constant dense<0.000000e+00> : vector<16x128xf32>
    %311 = tpu.matmul %308, %310, %cst_315 {dimension_numbers = #tpu.dot_dimension_numbers<[1], [0], [0], [1], [0, 0, 1, 1], [], []>} : vector<16x64xf32>, vector<64x128xf32>, vector<16x128xf32> -> vector<16x128xf32>
    %312 = arith.addf %305, %311 : vector<16x128xf32>
    %c14_316 = arith.constant 14 : index
    %c0_317 = arith.constant 0 : index
    %c0_318 = arith.constant 0 : index
    %313 = vector.load %arg7[%c14_316, %c0_317, %c0_318] : memref<25x16x64xf32, #tpu.memory_space<vmem>>, vector<1x16x64xf32>
    %314 = vector.shape_cast %313 : vector<1x16x64xf32> to vector<16x64xf32>
    %cst_319 = arith.constant dense<0.000000e+00> : vector<16x64xf32>
    %315 = tpu.matmul %314, %213, %cst_319 {dimension_numbers = #tpu.dot_dimension_numbers<[1], [0], [0], [1], [0, 0, 1, 1], [], []>} : vector<16x64xf32>, vector<64x64xf32>, vector<16x64xf32> -> vector<16x64xf32>
    %c14_320 = arith.constant 14 : index
    %c0_321 = arith.constant 0 : index
    %c0_322 = arith.constant 0 : index
    %316 = vector.load %arg8[%c14_320, %c0_321, %c0_322] : memref<25x64x128xf32, #tpu.memory_space<vmem>>, vector<1x64x128xf32>
    %317 = vector.shape_cast %316 : vector<1x64x128xf32> to vector<64x128xf32>
    %cst_323 = arith.constant dense<0.000000e+00> : vector<16x128xf32>
    %318 = tpu.matmul %315, %317, %cst_323 {dimension_numbers = #tpu.dot_dimension_numbers<[1], [0], [0], [1], [0, 0, 1, 1], [], []>} : vector<16x64xf32>, vector<64x128xf32>, vector<16x128xf32> -> vector<16x128xf32>
    %319 = arith.addf %312, %318 : vector<16x128xf32>
    %c15_324 = arith.constant 15 : index
    %c0_325 = arith.constant 0 : index
    %c0_326 = arith.constant 0 : index
    %320 = vector.load %arg7[%c15_324, %c0_325, %c0_326] : memref<25x16x64xf32, #tpu.memory_space<vmem>>, vector<1x16x64xf32>
    %321 = vector.shape_cast %320 : vector<1x16x64xf32> to vector<16x64xf32>
    %cst_327 = arith.constant dense<0.000000e+00> : vector<16x64xf32>
    %322 = tpu.matmul %321, %213, %cst_327 {dimension_numbers = #tpu.dot_dimension_numbers<[1], [0], [0], [1], [0, 0, 1, 1], [], []>} : vector<16x64xf32>, vector<64x64xf32>, vector<16x64xf32> -> vector<16x64xf32>
    %c15_328 = arith.constant 15 : index
    %c0_329 = arith.constant 0 : index
    %c0_330 = arith.constant 0 : index
    %323 = vector.load %arg8[%c15_328, %c0_329, %c0_330] : memref<25x64x128xf32, #tpu.memory_space<vmem>>, vector<1x64x128xf32>
    %324 = vector.shape_cast %323 : vector<1x64x128xf32> to vector<64x128xf32>
    %cst_331 = arith.constant dense<0.000000e+00> : vector<16x128xf32>
    %325 = tpu.matmul %322, %324, %cst_331 {dimension_numbers = #tpu.dot_dimension_numbers<[1], [0], [0], [1], [0, 0, 1, 1], [], []>} : vector<16x64xf32>, vector<64x128xf32>, vector<16x128xf32> -> vector<16x128xf32>
    %326 = arith.addf %319, %325 : vector<16x128xf32>
    %c16_332 = arith.constant 16 : index
    %c0_333 = arith.constant 0 : index
    %c0_334 = arith.constant 0 : index
    %327 = vector.load %arg7[%c16_332, %c0_333, %c0_334] : memref<25x16x64xf32, #tpu.memory_space<vmem>>, vector<1x16x64xf32>
    %328 = vector.shape_cast %327 : vector<1x16x64xf32> to vector<16x64xf32>
    %cst_335 = arith.constant dense<0.000000e+00> : vector<16x64xf32>
    %329 = tpu.matmul %328, %213, %cst_335 {dimension_numbers = #tpu.dot_dimension_numbers<[1], [0], [0], [1], [0, 0, 1, 1], [], []>} : vector<16x64xf32>, vector<64x64xf32>, vector<16x64xf32> -> vector<16x64xf32>
    %c16_336 = arith.constant 16 : index
    %c0_337 = arith.constant 0 : index
    %c0_338 = arith.constant 0 : index
    %330 = vector.load %arg8[%c16_336, %c0_337, %c0_338] : memref<25x64x128xf32, #tpu.memory_space<vmem>>, vector<1x64x128xf32>
    %331 = vector.shape_cast %330 : vector<1x64x128xf32> to vector<64x128xf32>
    %cst_339 = arith.constant dense<0.000000e+00> : vector<16x128xf32>
    %332 = tpu.matmul %329, %331, %cst_339 {dimension_numbers = #tpu.dot_dimension_numbers<[1], [0], [0], [1], [0, 0, 1, 1], [], []>} : vector<16x64xf32>, vector<64x128xf32>, vector<16x128xf32> -> vector<16x128xf32>
    %333 = arith.addf %326, %332 : vector<16x128xf32>
    %c17_340 = arith.constant 17 : index
    %c0_341 = arith.constant 0 : index
    %c0_342 = arith.constant 0 : index
    %334 = vector.load %arg7[%c17_340, %c0_341, %c0_342] : memref<25x16x64xf32, #tpu.memory_space<vmem>>, vector<1x16x64xf32>
    %335 = vector.shape_cast %334 : vector<1x16x64xf32> to vector<16x64xf32>
    %cst_343 = arith.constant dense<0.000000e+00> : vector<16x64xf32>
    %336 = tpu.matmul %335, %213, %cst_343 {dimension_numbers = #tpu.dot_dimension_numbers<[1], [0], [0], [1], [0, 0, 1, 1], [], []>} : vector<16x64xf32>, vector<64x64xf32>, vector<16x64xf32> -> vector<16x64xf32>
    %c17_344 = arith.constant 17 : index
    %c0_345 = arith.constant 0 : index
    %c0_346 = arith.constant 0 : index
    %337 = vector.load %arg8[%c17_344, %c0_345, %c0_346] : memref<25x64x128xf32, #tpu.memory_space<vmem>>, vector<1x64x128xf32>
    %338 = vector.shape_cast %337 : vector<1x64x128xf32> to vector<64x128xf32>
    %cst_347 = arith.constant dense<0.000000e+00> : vector<16x128xf32>
    %339 = tpu.matmul %336, %338, %cst_347 {dimension_numbers = #tpu.dot_dimension_numbers<[1], [0], [0], [1], [0, 0, 1, 1], [], []>} : vector<16x64xf32>, vector<64x128xf32>, vector<16x128xf32> -> vector<16x128xf32>
    %340 = arith.addf %333, %339 : vector<16x128xf32>
    %c18_348 = arith.constant 18 : index
    %c0_349 = arith.constant 0 : index
    %c0_350 = arith.constant 0 : index
    %341 = vector.load %arg7[%c18_348, %c0_349, %c0_350] : memref<25x16x64xf32, #tpu.memory_space<vmem>>, vector<1x16x64xf32>
    %342 = vector.shape_cast %341 : vector<1x16x64xf32> to vector<16x64xf32>
    %cst_351 = arith.constant dense<0.000000e+00> : vector<16x64xf32>
    %343 = tpu.matmul %342, %213, %cst_351 {dimension_numbers = #tpu.dot_dimension_numbers<[1], [0], [0], [1], [0, 0, 1, 1], [], []>} : vector<16x64xf32>, vector<64x64xf32>, vector<16x64xf32> -> vector<16x64xf32>
    %c18_352 = arith.constant 18 : index
    %c0_353 = arith.constant 0 : index
    %c0_354 = arith.constant 0 : index
    %344 = vector.load %arg8[%c18_352, %c0_353, %c0_354] : memref<25x64x128xf32, #tpu.memory_space<vmem>>, vector<1x64x128xf32>
    %345 = vector.shape_cast %344 : vector<1x64x128xf32> to vector<64x128xf32>
    %cst_355 = arith.constant dense<0.000000e+00> : vector<16x128xf32>
    %346 = tpu.matmul %343, %345, %cst_355 {dimension_numbers = #tpu.dot_dimension_numbers<[1], [0], [0], [1], [0, 0, 1, 1], [], []>} : vector<16x64xf32>, vector<64x128xf32>, vector<16x128xf32> -> vector<16x128xf32>
    %347 = arith.addf %340, %346 : vector<16x128xf32>
    %c19_356 = arith.constant 19 : index
    %c0_357 = arith.constant 0 : index
    %c0_358 = arith.constant 0 : index
    %348 = vector.load %arg7[%c19_356, %c0_357, %c0_358] : memref<25x16x64xf32, #tpu.memory_space<vmem>>, vector<1x16x64xf32>
    %349 = vector.shape_cast %348 : vector<1x16x64xf32> to vector<16x64xf32>
    %cst_359 = arith.constant dense<0.000000e+00> : vector<16x64xf32>
    %350 = tpu.matmul %349, %213, %cst_359 {dimension_numbers = #tpu.dot_dimension_numbers<[1], [0], [0], [1], [0, 0, 1, 1], [], []>} : vector<16x64xf32>, vector<64x64xf32>, vector<16x64xf32> -> vector<16x64xf32>
    %c19_360 = arith.constant 19 : index
    %c0_361 = arith.constant 0 : index
    %c0_362 = arith.constant 0 : index
    %351 = vector.load %arg8[%c19_360, %c0_361, %c0_362] : memref<25x64x128xf32, #tpu.memory_space<vmem>>, vector<1x64x128xf32>
    %352 = vector.shape_cast %351 : vector<1x64x128xf32> to vector<64x128xf32>
    %cst_363 = arith.constant dense<0.000000e+00> : vector<16x128xf32>
    %353 = tpu.matmul %350, %352, %cst_363 {dimension_numbers = #tpu.dot_dimension_numbers<[1], [0], [0], [1], [0, 0, 1, 1], [], []>} : vector<16x64xf32>, vector<64x128xf32>, vector<16x128xf32> -> vector<16x128xf32>
    %354 = arith.addf %347, %353 : vector<16x128xf32>
    %c20_364 = arith.constant 20 : index
    %c0_365 = arith.constant 0 : index
    %c0_366 = arith.constant 0 : index
    %355 = vector.load %arg7[%c20_364, %c0_365, %c0_366] : memref<25x16x64xf32, #tpu.memory_space<vmem>>, vector<1x16x64xf32>
    %356 = vector.shape_cast %355 : vector<1x16x64xf32> to vector<16x64xf32>
    %cst_367 = arith.constant dense<0.000000e+00> : vector<16x64xf32>
    %357 = tpu.matmul %356, %213, %cst_367 {dimension_numbers = #tpu.dot_dimension_numbers<[1], [0], [0], [1], [0, 0, 1, 1], [], []>} : vector<16x64xf32>, vector<64x64xf32>, vector<16x64xf32> -> vector<16x64xf32>
    %c20_368 = arith.constant 20 : index
    %c0_369 = arith.constant 0 : index
    %c0_370 = arith.constant 0 : index
    %358 = vector.load %arg8[%c20_368, %c0_369, %c0_370] : memref<25x64x128xf32, #tpu.memory_space<vmem>>, vector<1x64x128xf32>
    %359 = vector.shape_cast %358 : vector<1x64x128xf32> to vector<64x128xf32>
    %cst_371 = arith.constant dense<0.000000e+00> : vector<16x128xf32>
    %360 = tpu.matmul %357, %359, %cst_371 {dimension_numbers = #tpu.dot_dimension_numbers<[1], [0], [0], [1], [0, 0, 1, 1], [], []>} : vector<16x64xf32>, vector<64x128xf32>, vector<16x128xf32> -> vector<16x128xf32>
    %361 = arith.addf %354, %360 : vector<16x128xf32>
    %c21_372 = arith.constant 21 : index
    %c0_373 = arith.constant 0 : index
    %c0_374 = arith.constant 0 : index
    %362 = vector.load %arg7[%c21_372, %c0_373, %c0_374] : memref<25x16x64xf32, #tpu.memory_space<vmem>>, vector<1x16x64xf32>
    %363 = vector.shape_cast %362 : vector<1x16x64xf32> to vector<16x64xf32>
    %cst_375 = arith.constant dense<0.000000e+00> : vector<16x64xf32>
    %364 = tpu.matmul %363, %213, %cst_375 {dimension_numbers = #tpu.dot_dimension_numbers<[1], [0], [0], [1], [0, 0, 1, 1], [], []>} : vector<16x64xf32>, vector<64x64xf32>, vector<16x64xf32> -> vector<16x64xf32>
    %c21_376 = arith.constant 21 : index
    %c0_377 = arith.constant 0 : index
    %c0_378 = arith.constant 0 : index
    %365 = vector.load %arg8[%c21_376, %c0_377, %c0_378] : memref<25x64x128xf32, #tpu.memory_space<vmem>>, vector<1x64x128xf32>
    %366 = vector.shape_cast %365 : vector<1x64x128xf32> to vector<64x128xf32>
    %cst_379 = arith.constant dense<0.000000e+00> : vector<16x128xf32>
    %367 = tpu.matmul %364, %366, %cst_379 {dimension_numbers = #tpu.dot_dimension_numbers<[1], [0], [0], [1], [0, 0, 1, 1], [], []>} : vector<16x64xf32>, vector<64x128xf32>, vector<16x128xf32> -> vector<16x128xf32>
    %368 = arith.addf %361, %367 : vector<16x128xf32>
    %c22_380 = arith.constant 22 : index
    %c0_381 = arith.constant 0 : index
    %c0_382 = arith.constant 0 : index
    %369 = vector.load %arg7[%c22_380, %c0_381, %c0_382] : memref<25x16x64xf32, #tpu.memory_space<vmem>>, vector<1x16x64xf32>
    %370 = vector.shape_cast %369 : vector<1x16x64xf32> to vector<16x64xf32>
    %cst_383 = arith.constant dense<0.000000e+00> : vector<16x64xf32>
    %371 = tpu.matmul %370, %213, %cst_383 {dimension_numbers = #tpu.dot_dimension_numbers<[1], [0], [0], [1], [0, 0, 1, 1], [], []>} : vector<16x64xf32>, vector<64x64xf32>, vector<16x64xf32> -> vector<16x64xf32>
    %c22_384 = arith.constant 22 : index
    %c0_385 = arith.constant 0 : index
    %c0_386 = arith.constant 0 : index
    %372 = vector.load %arg8[%c22_384, %c0_385, %c0_386] : memref<25x64x128xf32, #tpu.memory_space<vmem>>, vector<1x64x128xf32>
    %373 = vector.shape_cast %372 : vector<1x64x128xf32> to vector<64x128xf32>
    %cst_387 = arith.constant dense<0.000000e+00> : vector<16x128xf32>
    %374 = tpu.matmul %371, %373, %cst_387 {dimension_numbers = #tpu.dot_dimension_numbers<[1], [0], [0], [1], [0, 0, 1, 1], [], []>} : vector<16x64xf32>, vector<64x128xf32>, vector<16x128xf32> -> vector<16x128xf32>
    %375 = arith.addf %368, %374 : vector<16x128xf32>
    %c23_388 = arith.constant 23 : index
    %c0_389 = arith.constant 0 : index
    %c0_390 = arith.constant 0 : index
    %376 = vector.load %arg7[%c23_388, %c0_389, %c0_390] : memref<25x16x64xf32, #tpu.memory_space<vmem>>, vector<1x16x64xf32>
    %377 = vector.shape_cast %376 : vector<1x16x64xf32> to vector<16x64xf32>
    %cst_391 = arith.constant dense<0.000000e+00> : vector<16x64xf32>
    %378 = tpu.matmul %377, %213, %cst_391 {dimension_numbers = #tpu.dot_dimension_numbers<[1], [0], [0], [1], [0, 0, 1, 1], [], []>} : vector<16x64xf32>, vector<64x64xf32>, vector<16x64xf32> -> vector<16x64xf32>
    %c23_392 = arith.constant 23 : index
    %c0_393 = arith.constant 0 : index
    %c0_394 = arith.constant 0 : index
    %379 = vector.load %arg8[%c23_392, %c0_393, %c0_394] : memref<25x64x128xf32, #tpu.memory_space<vmem>>, vector<1x64x128xf32>
    %380 = vector.shape_cast %379 : vector<1x64x128xf32> to vector<64x128xf32>
    %cst_395 = arith.constant dense<0.000000e+00> : vector<16x128xf32>
    %381 = tpu.matmul %378, %380, %cst_395 {dimension_numbers = #tpu.dot_dimension_numbers<[1], [0], [0], [1], [0, 0, 1, 1], [], []>} : vector<16x64xf32>, vector<64x128xf32>, vector<16x128xf32> -> vector<16x128xf32>
    %382 = arith.addf %375, %381 : vector<16x128xf32>
    %c24_396 = arith.constant 24 : index
    %c0_397 = arith.constant 0 : index
    %c0_398 = arith.constant 0 : index
    %383 = vector.load %arg7[%c24_396, %c0_397, %c0_398] : memref<25x16x64xf32, #tpu.memory_space<vmem>>, vector<1x16x64xf32>
    %384 = vector.shape_cast %383 : vector<1x16x64xf32> to vector<16x64xf32>
    %cst_399 = arith.constant dense<0.000000e+00> : vector<16x64xf32>
    %385 = tpu.matmul %384, %213, %cst_399 {dimension_numbers = #tpu.dot_dimension_numbers<[1], [0], [0], [1], [0, 0, 1, 1], [], []>} : vector<16x64xf32>, vector<64x64xf32>, vector<16x64xf32> -> vector<16x64xf32>
    %c24_400 = arith.constant 24 : index
    %c0_401 = arith.constant 0 : index
    %c0_402 = arith.constant 0 : index
    %386 = vector.load %arg8[%c24_400, %c0_401, %c0_402] : memref<25x64x128xf32, #tpu.memory_space<vmem>>, vector<1x64x128xf32>
    %387 = vector.shape_cast %386 : vector<1x64x128xf32> to vector<64x128xf32>
    %cst_403 = arith.constant dense<0.000000e+00> : vector<16x128xf32>
    %388 = tpu.matmul %385, %387, %cst_403 {dimension_numbers = #tpu.dot_dimension_numbers<[1], [0], [0], [1], [0, 0, 1, 1], [], []>} : vector<16x64xf32>, vector<64x128xf32>, vector<16x128xf32> -> vector<16x128xf32>
    %389 = arith.addf %382, %388 : vector<16x128xf32>
    %c0_404 = arith.constant 0 : index
    %c0_405 = arith.constant 0 : index
    %c0_406 = arith.constant 0 : index
    %390 = vector.load %arg9[%c0_404, %c0_405, %c0_406] : memref<3x1x128xf32, #tpu.memory_space<vmem>>, vector<1x1x128xf32>
    %391 = vector.shape_cast %390 : vector<1x1x128xf32> to vector<1x128xf32>
    %392 = vector.broadcast %391 : vector<1x128xf32> to vector<16x128xf32>
    %393 = arith.addf %389, %392 : vector<16x128xf32>
    %cst_407 = arith.constant 0.000000e+00 : f32
    %394 = vector.broadcast %cst_407 : f32 to vector<16x128xf32>
    %395 = arith.cmpf oge, %393, %394 : vector<16x128xf32>
    %cst_408 = arith.constant 2.000000e-01 : f32
    %396 = vector.broadcast %cst_408 : f32 to vector<16x128xf32>
    %397 = arith.mulf %396, %393 : vector<16x128xf32>
    %398 = arith.select %395, %393, %397 : vector<16x128xi1>, vector<16x128xf32>
    %c1_409 = arith.constant 1 : index
    %c0_410 = arith.constant 0 : index
    %c0_411 = arith.constant 0 : index
    %399 = vector.load %arg9[%c1_409, %c0_410, %c0_411] : memref<3x1x128xf32, #tpu.memory_space<vmem>>, vector<1x1x128xf32>
    %400 = vector.shape_cast %399 : vector<1x1x128xf32> to vector<1x128xf32>
    %401 = vector.broadcast %400 : vector<1x128xf32> to vector<16x128xf32>
    %402 = arith.mulf %398, %401 : vector<16x128xf32>
    %c2_412 = arith.constant 2 : index
    %c0_413 = arith.constant 0 : index
    %c0_414 = arith.constant 0 : index
    %403 = vector.load %arg9[%c2_412, %c0_413, %c0_414] : memref<3x1x128xf32, #tpu.memory_space<vmem>>, vector<1x1x128xf32>
    %404 = vector.shape_cast %403 : vector<1x1x128xf32> to vector<1x128xf32>
    %405 = vector.broadcast %404 : vector<1x128xf32> to vector<16x128xf32>
    %406 = arith.addf %402, %405 : vector<16x128xf32>
    %c0_415 = arith.constant 0 : index
    %c0_416 = arith.constant 0 : index
    %407 = vector.load %arg11[%c0_415, %c0_416] : memref<1x128xf32, #tpu.memory_space<vmem>>, vector<1x128xf32>
    %408 = vector.extract_strided_slice %406 {offsets = [0, 0], sizes = [1, 128], strides = [1, 1]} : vector<16x128xf32> to vector<1x128xf32>
    %c0_417 = arith.constant 0 : index
    %c0_418 = arith.constant 0 : index
    %c0_419 = arith.constant 0 : index
    %409 = vector.load %arg10[%c0_417, %c0_418, %c0_419] : memref<16x128x128xf32, #tpu.memory_space<vmem>>, vector<1x128x128xf32>
    %410 = vector.shape_cast %409 : vector<1x128x128xf32> to vector<128x128xf32>
    %cst_420 = arith.constant dense<0.000000e+00> : vector<1x128xf32>
    %411 = tpu.matmul %408, %410, %cst_420 {dimension_numbers = #tpu.dot_dimension_numbers<[1], [0], [0], [1], [0, 0, 1, 1], [], []>} : vector<1x128xf32>, vector<128x128xf32>, vector<1x128xf32> -> vector<1x128xf32>
    %412 = arith.addf %407, %411 : vector<1x128xf32>
    %413 = vector.extract_strided_slice %406 {offsets = [1, 0], sizes = [1, 128], strides = [1, 1]} : vector<16x128xf32> to vector<1x128xf32>
    %c1_421 = arith.constant 1 : index
    %c0_422 = arith.constant 0 : index
    %c0_423 = arith.constant 0 : index
    %414 = vector.load %arg10[%c1_421, %c0_422, %c0_423] : memref<16x128x128xf32, #tpu.memory_space<vmem>>, vector<1x128x128xf32>
    %415 = vector.shape_cast %414 : vector<1x128x128xf32> to vector<128x128xf32>
    %cst_424 = arith.constant dense<0.000000e+00> : vector<1x128xf32>
    %416 = tpu.matmul %413, %415, %cst_424 {dimension_numbers = #tpu.dot_dimension_numbers<[1], [0], [0], [1], [0, 0, 1, 1], [], []>} : vector<1x128xf32>, vector<128x128xf32>, vector<1x128xf32> -> vector<1x128xf32>
    %417 = arith.addf %412, %416 : vector<1x128xf32>
    %418 = vector.extract_strided_slice %406 {offsets = [2, 0], sizes = [1, 128], strides = [1, 1]} : vector<16x128xf32> to vector<1x128xf32>
    %c2_425 = arith.constant 2 : index
    %c0_426 = arith.constant 0 : index
    %c0_427 = arith.constant 0 : index
    %419 = vector.load %arg10[%c2_425, %c0_426, %c0_427] : memref<16x128x128xf32, #tpu.memory_space<vmem>>, vector<1x128x128xf32>
    %420 = vector.shape_cast %419 : vector<1x128x128xf32> to vector<128x128xf32>
    %cst_428 = arith.constant dense<0.000000e+00> : vector<1x128xf32>
    %421 = tpu.matmul %418, %420, %cst_428 {dimension_numbers = #tpu.dot_dimension_numbers<[1], [0], [0], [1], [0, 0, 1, 1], [], []>} : vector<1x128xf32>, vector<128x128xf32>, vector<1x128xf32> -> vector<1x128xf32>
    %422 = arith.addf %417, %421 : vector<1x128xf32>
    %423 = vector.extract_strided_slice %406 {offsets = [3, 0], sizes = [1, 128], strides = [1, 1]} : vector<16x128xf32> to vector<1x128xf32>
    %c3_429 = arith.constant 3 : index
    %c0_430 = arith.constant 0 : index
    %c0_431 = arith.constant 0 : index
    %424 = vector.load %arg10[%c3_429, %c0_430, %c0_431] : memref<16x128x128xf32, #tpu.memory_space<vmem>>, vector<1x128x128xf32>
    %425 = vector.shape_cast %424 : vector<1x128x128xf32> to vector<128x128xf32>
    %cst_432 = arith.constant dense<0.000000e+00> : vector<1x128xf32>
    %426 = tpu.matmul %423, %425, %cst_432 {dimension_numbers = #tpu.dot_dimension_numbers<[1], [0], [0], [1], [0, 0, 1, 1], [], []>} : vector<1x128xf32>, vector<128x128xf32>, vector<1x128xf32> -> vector<1x128xf32>
    %427 = arith.addf %422, %426 : vector<1x128xf32>
    %428 = vector.extract_strided_slice %406 {offsets = [4, 0], sizes = [1, 128], strides = [1, 1]} : vector<16x128xf32> to vector<1x128xf32>
    %c4_433 = arith.constant 4 : index
    %c0_434 = arith.constant 0 : index
    %c0_435 = arith.constant 0 : index
    %429 = vector.load %arg10[%c4_433, %c0_434, %c0_435] : memref<16x128x128xf32, #tpu.memory_space<vmem>>, vector<1x128x128xf32>
    %430 = vector.shape_cast %429 : vector<1x128x128xf32> to vector<128x128xf32>
    %cst_436 = arith.constant dense<0.000000e+00> : vector<1x128xf32>
    %431 = tpu.matmul %428, %430, %cst_436 {dimension_numbers = #tpu.dot_dimension_numbers<[1], [0], [0], [1], [0, 0, 1, 1], [], []>} : vector<1x128xf32>, vector<128x128xf32>, vector<1x128xf32> -> vector<1x128xf32>
    %432 = arith.addf %427, %431 : vector<1x128xf32>
    %433 = vector.extract_strided_slice %406 {offsets = [5, 0], sizes = [1, 128], strides = [1, 1]} : vector<16x128xf32> to vector<1x128xf32>
    %c5_437 = arith.constant 5 : index
    %c0_438 = arith.constant 0 : index
    %c0_439 = arith.constant 0 : index
    %434 = vector.load %arg10[%c5_437, %c0_438, %c0_439] : memref<16x128x128xf32, #tpu.memory_space<vmem>>, vector<1x128x128xf32>
    %435 = vector.shape_cast %434 : vector<1x128x128xf32> to vector<128x128xf32>
    %cst_440 = arith.constant dense<0.000000e+00> : vector<1x128xf32>
    %436 = tpu.matmul %433, %435, %cst_440 {dimension_numbers = #tpu.dot_dimension_numbers<[1], [0], [0], [1], [0, 0, 1, 1], [], []>} : vector<1x128xf32>, vector<128x128xf32>, vector<1x128xf32> -> vector<1x128xf32>
    %437 = arith.addf %432, %436 : vector<1x128xf32>
    %438 = vector.extract_strided_slice %406 {offsets = [6, 0], sizes = [1, 128], strides = [1, 1]} : vector<16x128xf32> to vector<1x128xf32>
    %c6_441 = arith.constant 6 : index
    %c0_442 = arith.constant 0 : index
    %c0_443 = arith.constant 0 : index
    %439 = vector.load %arg10[%c6_441, %c0_442, %c0_443] : memref<16x128x128xf32, #tpu.memory_space<vmem>>, vector<1x128x128xf32>
    %440 = vector.shape_cast %439 : vector<1x128x128xf32> to vector<128x128xf32>
    %cst_444 = arith.constant dense<0.000000e+00> : vector<1x128xf32>
    %441 = tpu.matmul %438, %440, %cst_444 {dimension_numbers = #tpu.dot_dimension_numbers<[1], [0], [0], [1], [0, 0, 1, 1], [], []>} : vector<1x128xf32>, vector<128x128xf32>, vector<1x128xf32> -> vector<1x128xf32>
    %442 = arith.addf %437, %441 : vector<1x128xf32>
    %443 = vector.extract_strided_slice %406 {offsets = [7, 0], sizes = [1, 128], strides = [1, 1]} : vector<16x128xf32> to vector<1x128xf32>
    %c7_445 = arith.constant 7 : index
    %c0_446 = arith.constant 0 : index
    %c0_447 = arith.constant 0 : index
    %444 = vector.load %arg10[%c7_445, %c0_446, %c0_447] : memref<16x128x128xf32, #tpu.memory_space<vmem>>, vector<1x128x128xf32>
    %445 = vector.shape_cast %444 : vector<1x128x128xf32> to vector<128x128xf32>
    %cst_448 = arith.constant dense<0.000000e+00> : vector<1x128xf32>
    %446 = tpu.matmul %443, %445, %cst_448 {dimension_numbers = #tpu.dot_dimension_numbers<[1], [0], [0], [1], [0, 0, 1, 1], [], []>} : vector<1x128xf32>, vector<128x128xf32>, vector<1x128xf32> -> vector<1x128xf32>
    %447 = arith.addf %442, %446 : vector<1x128xf32>
    %448 = vector.extract_strided_slice %406 {offsets = [8, 0], sizes = [1, 128], strides = [1, 1]} : vector<16x128xf32> to vector<1x128xf32>
    %c8_449 = arith.constant 8 : index
    %c0_450 = arith.constant 0 : index
    %c0_451 = arith.constant 0 : index
    %449 = vector.load %arg10[%c8_449, %c0_450, %c0_451] : memref<16x128x128xf32, #tpu.memory_space<vmem>>, vector<1x128x128xf32>
    %450 = vector.shape_cast %449 : vector<1x128x128xf32> to vector<128x128xf32>
    %cst_452 = arith.constant dense<0.000000e+00> : vector<1x128xf32>
    %451 = tpu.matmul %448, %450, %cst_452 {dimension_numbers = #tpu.dot_dimension_numbers<[1], [0], [0], [1], [0, 0, 1, 1], [], []>} : vector<1x128xf32>, vector<128x128xf32>, vector<1x128xf32> -> vector<1x128xf32>
    %452 = arith.addf %447, %451 : vector<1x128xf32>
    %453 = vector.extract_strided_slice %406 {offsets = [9, 0], sizes = [1, 128], strides = [1, 1]} : vector<16x128xf32> to vector<1x128xf32>
    %c9_453 = arith.constant 9 : index
    %c0_454 = arith.constant 0 : index
    %c0_455 = arith.constant 0 : index
    %454 = vector.load %arg10[%c9_453, %c0_454, %c0_455] : memref<16x128x128xf32, #tpu.memory_space<vmem>>, vector<1x128x128xf32>
    %455 = vector.shape_cast %454 : vector<1x128x128xf32> to vector<128x128xf32>
    %cst_456 = arith.constant dense<0.000000e+00> : vector<1x128xf32>
    %456 = tpu.matmul %453, %455, %cst_456 {dimension_numbers = #tpu.dot_dimension_numbers<[1], [0], [0], [1], [0, 0, 1, 1], [], []>} : vector<1x128xf32>, vector<128x128xf32>, vector<1x128xf32> -> vector<1x128xf32>
    %457 = arith.addf %452, %456 : vector<1x128xf32>
    %458 = vector.extract_strided_slice %406 {offsets = [10, 0], sizes = [1, 128], strides = [1, 1]} : vector<16x128xf32> to vector<1x128xf32>
    %c10_457 = arith.constant 10 : index
    %c0_458 = arith.constant 0 : index
    %c0_459 = arith.constant 0 : index
    %459 = vector.load %arg10[%c10_457, %c0_458, %c0_459] : memref<16x128x128xf32, #tpu.memory_space<vmem>>, vector<1x128x128xf32>
    %460 = vector.shape_cast %459 : vector<1x128x128xf32> to vector<128x128xf32>
    %cst_460 = arith.constant dense<0.000000e+00> : vector<1x128xf32>
    %461 = tpu.matmul %458, %460, %cst_460 {dimension_numbers = #tpu.dot_dimension_numbers<[1], [0], [0], [1], [0, 0, 1, 1], [], []>} : vector<1x128xf32>, vector<128x128xf32>, vector<1x128xf32> -> vector<1x128xf32>
    %462 = arith.addf %457, %461 : vector<1x128xf32>
    %463 = vector.extract_strided_slice %406 {offsets = [11, 0], sizes = [1, 128], strides = [1, 1]} : vector<16x128xf32> to vector<1x128xf32>
    %c11_461 = arith.constant 11 : index
    %c0_462 = arith.constant 0 : index
    %c0_463 = arith.constant 0 : index
    %464 = vector.load %arg10[%c11_461, %c0_462, %c0_463] : memref<16x128x128xf32, #tpu.memory_space<vmem>>, vector<1x128x128xf32>
    %465 = vector.shape_cast %464 : vector<1x128x128xf32> to vector<128x128xf32>
    %cst_464 = arith.constant dense<0.000000e+00> : vector<1x128xf32>
    %466 = tpu.matmul %463, %465, %cst_464 {dimension_numbers = #tpu.dot_dimension_numbers<[1], [0], [0], [1], [0, 0, 1, 1], [], []>} : vector<1x128xf32>, vector<128x128xf32>, vector<1x128xf32> -> vector<1x128xf32>
    %467 = arith.addf %462, %466 : vector<1x128xf32>
    %468 = vector.extract_strided_slice %406 {offsets = [12, 0], sizes = [1, 128], strides = [1, 1]} : vector<16x128xf32> to vector<1x128xf32>
    %c12_465 = arith.constant 12 : index
    %c0_466 = arith.constant 0 : index
    %c0_467 = arith.constant 0 : index
    %469 = vector.load %arg10[%c12_465, %c0_466, %c0_467] : memref<16x128x128xf32, #tpu.memory_space<vmem>>, vector<1x128x128xf32>
    %470 = vector.shape_cast %469 : vector<1x128x128xf32> to vector<128x128xf32>
    %cst_468 = arith.constant dense<0.000000e+00> : vector<1x128xf32>
    %471 = tpu.matmul %468, %470, %cst_468 {dimension_numbers = #tpu.dot_dimension_numbers<[1], [0], [0], [1], [0, 0, 1, 1], [], []>} : vector<1x128xf32>, vector<128x128xf32>, vector<1x128xf32> -> vector<1x128xf32>
    %472 = arith.addf %467, %471 : vector<1x128xf32>
    %473 = vector.extract_strided_slice %406 {offsets = [13, 0], sizes = [1, 128], strides = [1, 1]} : vector<16x128xf32> to vector<1x128xf32>
    %c13_469 = arith.constant 13 : index
    %c0_470 = arith.constant 0 : index
    %c0_471 = arith.constant 0 : index
    %474 = vector.load %arg10[%c13_469, %c0_470, %c0_471] : memref<16x128x128xf32, #tpu.memory_space<vmem>>, vector<1x128x128xf32>
    %475 = vector.shape_cast %474 : vector<1x128x128xf32> to vector<128x128xf32>
    %cst_472 = arith.constant dense<0.000000e+00> : vector<1x128xf32>
    %476 = tpu.matmul %473, %475, %cst_472 {dimension_numbers = #tpu.dot_dimension_numbers<[1], [0], [0], [1], [0, 0, 1, 1], [], []>} : vector<1x128xf32>, vector<128x128xf32>, vector<1x128xf32> -> vector<1x128xf32>
    %477 = arith.addf %472, %476 : vector<1x128xf32>
    %478 = vector.extract_strided_slice %406 {offsets = [14, 0], sizes = [1, 128], strides = [1, 1]} : vector<16x128xf32> to vector<1x128xf32>
    %c14_473 = arith.constant 14 : index
    %c0_474 = arith.constant 0 : index
    %c0_475 = arith.constant 0 : index
    %479 = vector.load %arg10[%c14_473, %c0_474, %c0_475] : memref<16x128x128xf32, #tpu.memory_space<vmem>>, vector<1x128x128xf32>
    %480 = vector.shape_cast %479 : vector<1x128x128xf32> to vector<128x128xf32>
    %cst_476 = arith.constant dense<0.000000e+00> : vector<1x128xf32>
    %481 = tpu.matmul %478, %480, %cst_476 {dimension_numbers = #tpu.dot_dimension_numbers<[1], [0], [0], [1], [0, 0, 1, 1], [], []>} : vector<1x128xf32>, vector<128x128xf32>, vector<1x128xf32> -> vector<1x128xf32>
    %482 = arith.addf %477, %481 : vector<1x128xf32>
    %483 = vector.extract_strided_slice %406 {offsets = [15, 0], sizes = [1, 128], strides = [1, 1]} : vector<16x128xf32> to vector<1x128xf32>
    %c15_477 = arith.constant 15 : index
    %c0_478 = arith.constant 0 : index
    %c0_479 = arith.constant 0 : index
    %484 = vector.load %arg10[%c15_477, %c0_478, %c0_479] : memref<16x128x128xf32, #tpu.memory_space<vmem>>, vector<1x128x128xf32>
    %485 = vector.shape_cast %484 : vector<1x128x128xf32> to vector<128x128xf32>
    %cst_480 = arith.constant dense<0.000000e+00> : vector<1x128xf32>
    %486 = tpu.matmul %483, %485, %cst_480 {dimension_numbers = #tpu.dot_dimension_numbers<[1], [0], [0], [1], [0, 0, 1, 1], [], []>} : vector<1x128xf32>, vector<128x128xf32>, vector<1x128xf32> -> vector<1x128xf32>
    %487 = arith.addf %482, %486 : vector<1x128xf32>
    %c0_481 = arith.constant 0 : index
    %c0_482 = arith.constant 0 : index
    %c0_483 = arith.constant 0 : index
    %488 = vector.load %arg12[%c0_481, %c0_482, %c0_483] : memref<1x1x128xf32, #tpu.memory_space<vmem>>, vector<1x1x128xf32>
    %489 = vector.shape_cast %488 : vector<1x1x128xf32> to vector<1x128xf32>
    %490 = vector.shape_cast %487 : vector<1x128xf32> to vector<1x1x128xf32>
    tpu.vector_store %arg12[%c0_481, %c0_482, %c0_483], %490 {strides = array<i32>} : memref<1x1x128xf32, #tpu.memory_space<vmem>>, vector<1x1x128xf32>,
    return
  }
  func.func @transform_0(%arg0: i32) -> (i32, i32, i32) {
    %c0_i32 = arith.constant 0 : i32
    %c0_i32_0 = arith.constant 0 : i32
    %c0_i32_1 = arith.constant 0 : i32
    return %arg0, %c0_i32, %c0_i32_0 : i32, i32, i32
  }
  func.func @transform_1(%arg0: i32) -> (i32, i32) {
    %c0_i32 = arith.constant 0 : i32
    %c0_i32_0 = arith.constant 0 : i32
    %c0_i32_1 = arith.constant 0 : i32
    return %c0_i32, %c0_i32_0 : i32, i32
  }
  func.func @transform_2(%arg0: i32) -> (i32, i32, i32) {
    %c0_i32 = arith.constant 0 : i32
    %c0_i32_0 = arith.constant 0 : i32
    %c0_i32_1 = arith.constant 0 : i32
    %c0_i32_2 = arith.constant 0 : i32
    return %c0_i32, %c0_i32_0, %c0_i32_1 : i32, i32, i32
  }
  func.func @transform_3(%arg0: i32) -> (i32, i32, i32) {
    %c0_i32 = arith.constant 0 : i32
    %c0_i32_0 = arith.constant 0 : i32
    %c0_i32_1 = arith.constant 0 : i32
    %c0_i32_2 = arith.constant 0 : i32
    return %c0_i32, %c0_i32_0, %c0_i32_1 : i32, i32, i32
  }
  func.func @transform_4(%arg0: i32) -> (i32, i32, i32) {
    %c0_i32 = arith.constant 0 : i32
    %c0_i32_0 = arith.constant 0 : i32
    %c0_i32_1 = arith.constant 0 : i32
    %c0_i32_2 = arith.constant 0 : i32
    return %c0_i32, %c0_i32_0, %c0_i32_1 : i32, i32, i32
  }
  func.func @transform_5(%arg0: i32) -> (i32, i32, i32) {
    %c0_i32 = arith.constant 0 : i32
    %c0_i32_0 = arith.constant 0 : i32
    %c0_i32_1 = arith.constant 0 : i32
    %c0_i32_2 = arith.constant 0 : i32
    return %c0_i32, %c0_i32_0, %c0_i32_1 : i32, i32, i32
  }
  func.func @transform_6(%arg0: i32) -> (i32, i32, i32) {
    %c0_i32 = arith.constant 0 : i32
    %c0_i32_0 = arith.constant 0 : i32
    %c0_i32_1 = arith.constant 0 : i32
    %c0_i32_2 = arith.constant 0 : i32
    return %c0_i32, %c0_i32_0, %c0_i32_1 : i32, i32, i32
  }
  func.func @transform_7(%arg0: i32) -> (i32, i32, i32) {
    %c0_i32 = arith.constant 0 : i32
    %c0_i32_0 = arith.constant 0 : i32
    %c0_i32_1 = arith.constant 0 : i32
    %c0_i32_2 = arith.constant 0 : i32
    return %c0_i32, %c0_i32_0, %c0_i32_1 : i32, i32, i32
  }
  func.func @transform_8(%arg0: i32) -> (i32, i32, i32) {
    %c0_i32 = arith.constant 0 : i32
    %c0_i32_0 = arith.constant 0 : i32
    %c0_i32_1 = arith.constant 0 : i32
    %c0_i32_2 = arith.constant 0 : i32
    return %c0_i32, %c0_i32_0, %c0_i32_1 : i32, i32, i32
  }
  func.func @transform_9(%arg0: i32) -> (i32, i32, i32) {
    %c0_i32 = arith.constant 0 : i32
    %c0_i32_0 = arith.constant 0 : i32
    %c0_i32_1 = arith.constant 0 : i32
    %c0_i32_2 = arith.constant 0 : i32
    return %c0_i32, %c0_i32_0, %c0_i32_1 : i32, i32, i32
  }
  func.func @transform_10(%arg0: i32) -> (i32, i32) {
    %c0_i32 = arith.constant 0 : i32
    %c0_i32_0 = arith.constant 0 : i32
    %c0_i32_1 = arith.constant 0 : i32
    return %c0_i32, %c0_i32_0 : i32, i32
  }
  func.func @transform_11(%arg0: i32) -> (i32, i32, i32) {
    %c0_i32 = arith.constant 0 : i32
    %c0_i32_0 = arith.constant 0 : i32
    %c0_i32_1 = arith.constant 0 : i32
    return %arg0, %c0_i32, %c0_i32_0 : i32, i32, i32
  }
}

</mosaic_0001>

<llo_original>
// kernel: classifier_forward.1
$region0: #{classifier_forward.1}
  #allocation0 [shape = 'u32[]', space=smem, size = 0x4, offset = 0x4, fixed_abs, tag = 'smem constant byte address 0x4 - core index']
  #allocation1 [shape = 'u32[72,128]{1,0:T(1,128)}', space=vmem, size = 0x9000, scoped, tag = 'internal scratch']
  %s0 = inlined_call_operand.vmem [shape: f32[2,256,32], index: 0, kind: input, shape index: {}]
  %s1 = inlined_call_operand.vmem [shape: f32[32,32], index: 1, kind: input, shape index: {}]
  %s2 = inlined_call_operand.vmem [shape: f32[3,1,32], index: 2, kind: input, shape index: {}]
  %s3 = inlined_call_operand.vmem [shape: f32[25,64,256], index: 3, kind: input, shape index: {}]
  %s4 = inlined_call_operand.vmem [shape: f32[25,32,64], index: 4, kind: input, shape index: {}]
  %s5 = inlined_call_operand.vmem [shape: f32[3,1,64], index: 5, kind: input, shape index: {}]
  %s6 = inlined_call_operand.vmem [shape: f32[25,16,64], index: 6, kind: input, shape index: {}]
  %s7 = inlined_call_operand.vmem [shape: f32[25,64,128], index: 7, kind: input, shape index: {}]
  %s8 = inlined_call_operand.vmem [shape: f32[3,1,128], index: 8, kind: input, shape index: {}]
  %s9 = inlined_call_operand.vmem [shape: f32[16,128,128], index: 9, kind: input, shape index: {}]
  %s10 = inlined_call_operand.vmem [shape: f32[1,128], index: 10, kind: input, shape index: {}]
  %s11 = inlined_call_operand.hbm [shape: f32[2,1,128], index: 11, kind: output, shape index: {}]
  %s12 = sld [smem:[#allocation0]]
  $region77: #{classifier_forward.1} parent=0
    _
  %s14 = ssub.s32 1, %s12
  %s15 = scalar_select 0, %s14, %s12
  $region1: #{classifier_forward.1} parent=0
    #allocation2 [shape = 'u8[1024]{0}', space=vmem, size = 0x400, scoped, tag = 'output window, operand 0']
    #allocation3 [shape = 's32[2]{0}', space=sflag, size = 0x8, scoped, tag = 'scoped memory for classifier_forward.1']
    %16 = vsyncpa [#allocation3], 0
    %s17 = scalar_lea.sflag [#allocation3], 1
    %18 = vsyncpa %s17, 0
    loop: start=0, step=1, limit=4
    $region2: #{classifier_forward.1} parent=1 // loop_pre_header
      _
    $region3: #{classifier_forward.1} parent=1 // loop_header
      %s20 = sphi 0, %s24
      %p21 = scmp.ge.s32.totalorder %s20, 4
      %s30 = sphi 0, %s32
      %s33 = sphi 0, %s30
      %s34 = sphi 0, %s33
      %s50 = sphi 0, %s34
      %s54 = sphi 0, %s54
      %s56 = sphi 0, %s54
      %s57 = sphi 0, %s56
      %s71 = sphi 0, %s57
      %s75 = sphi 0, %s75
      %s77 = sphi 0, %s75
      %s78 = sphi 0, %s77
      %s92 = sphi 0, %s78
      %s96 = sphi 0, %s96
      %s98 = sphi 0, %s96
      %s99 = sphi 0, %s98
      %s113 = sphi 0, %s99
      %s117 = sphi 0, %s117
      %s119 = sphi 0, %s117
      %s120 = sphi 0, %s119
      %s134 = sphi 0, %s120
      %s138 = sphi 0, %s138
      %s140 = sphi 0, %s138
      %s141 = sphi 0, %s140
      %s155 = sphi 0, %s141
      %s159 = sphi 0, %s159
      %s161 = sphi 0, %s159
      %s162 = sphi 0, %s161
      %s176 = sphi 0, %s162
      %s180 = sphi 0, %s180
      %s182 = sphi 0, %s180
      %s183 = sphi 0, %s182
      %s197 = sphi 0, %s183
      %s201 = sphi 0, %s201
      %s203 = sphi 0, %s201
      %s204 = sphi 0, %s203
      %s218 = sphi 0, %s204
      %s222 = sphi 0, %s222
      %s224 = sphi 0, %s222
      %s225 = sphi 0, %s224
      %s239 = sphi 0, %s225
      %s243 = sphi 0, %s243
      %s245 = sphi 0, %s243
      %s246 = sphi 0, %s245
      %s260 = sphi 0, %s246
      %s266 = sphi 0, %s268
      %s269 = sphi 0, %s266
      %s270 = sphi 0, %s269
      %s286 = sphi 0, %s270
    $region4: #{classifier_forward.1} parent=1 // loop_header_branch
      %23 = sbr.rel (%p21) target = $region8
    $region5: #{classifier_forward.1} parent=1 // loop_body
      %s25 = ssub.s32 %s20, 1
      %s26 = ssub.s32 %s20, 2
      %s27 = sadd.s32 %s20, 1
      %s28 = ssub.s32 %s20, %s27
      %p29 = scmp.eq.s32.totalorder %s28, 0
      %s31 = sadd.s32 %s30, 1
      %s32 = scalar_select %p29, %s30, %s31
      %p35 = pneg %p29
      %p36 = scmp.eq.s32.totalorder %s20, 1
      %p37 = por %p35, %p36
      %p38 = scmp.ne.s32.totalorder %s30, %s33
      %p39 = scmp.eq.s32.totalorder %s20, 0
      %p40 = por %p38, %p39
      %p41 = scmp.ne.s32.totalorder %s30, %s33
      %p42 = scmp.eq.s32.totalorder %s25, 1
      %p43 = por %p41, %p42
      %p44 = scmp.ne.s32.totalorder %s33, %s34
      %p45 = scmp.eq.s32.totalorder %s25, 0
      %p46 = por %p44, %p45
      %p47 = scmp.ne.s32.totalorder %s33, %s34
      %p48 = scmp.eq.s32.totalorder %s26, 1
      %p49 = por %p47, %p48
      %p51 = scmp.ne.s32.totalorder %s34, %s50
      %p52 = scmp.eq.s32.totalorder %s26, 0
      %p53 = por %p51, %p52
      %s55 = sadd.s32 %s54, 1
      %p58 = scmp.eq.s32.totalorder %s20, 1
      %p59 = scmp.ne.s32.totalorder %s54, %s56
      %p60 = scmp.eq.s32.totalorder %s20, 0
      %p61 = por %p59, %p60
      %p62 = scmp.ne.s32.totalorder %s54, %s56
      %p63 = scmp.eq.s32.totalorder %s25, 1
      %p64 = por %p62, %p63
      %p65 = scmp.ne.s32.totalorder %s56, %s57
      %p66 = scmp.eq.s32.totalorder %s25, 0
      %p67 = por %p65, %p66
      %p68 = scmp.ne.s32.totalorder %s56, %s57
      %p69 = scmp.eq.s32.totalorder %s26, 1
      %p70 = por %p68, %p69
      %p72 = scmp.ne.s32.totalorder %s57, %s71
      %p73 = scmp.eq.s32.totalorder %s26, 0
      %p74 = por %p72, %p73
      %s76 = sadd.s32 %s75, 1
      %p79 = scmp.eq.s32.totalorder %s20, 1
      %p80 = scmp.ne.s32.totalorder %s75, %s77
      %p81 = scmp.eq.s32.totalorder %s20, 0
      %p82 = por %p80, %p81
      %p83 = scmp.ne.s32.totalorder %s75, %s77
      %p84 = scmp.eq.s32.totalorder %s25, 1
      %p85 = por %p83, %p84
      %p86 = scmp.ne.s32.totalorder %s77, %s78
      %p87 = scmp.eq.s32.totalorder %s25, 0
      %p88 = por %p86, %p87
      %p89 = scmp.ne.s32.totalorder %s77, %s78
      %p90 = scmp.eq.s32.totalorder %s26, 1
      %p91 = por %p89, %p90
      %p93 = scmp.ne.s32.totalorder %s78, %s92
      %p94 = scmp.eq.s32.totalorder %s26, 0
      %p95 = por %p93, %p94
      %s97 = sadd.s32 %s96, 1
      %p100 = scmp.eq.s32.totalorder %s20, 1
      %p101 = scmp.ne.s32.totalorder %s96, %s98
      %p102 = scmp.eq.s32.totalorder %s20, 0
      %p103 = por %p101, %p102
      %p104 = scmp.ne.s32.totalorder %s96, %s98
      %p105 = scmp.eq.s32.totalorder %s25, 1
      %p106 = por %p104, %p105
      %p107 = scmp.ne.s32.totalorder %s98, %s99
      %p108 = scmp.eq.s32.totalorder %s25, 0
      %p109 = por %p107, %p108
      %p110 = scmp.ne.s32.totalorder %s98, %s99
      %p111 = scmp.eq.s32.totalorder %s26, 1
      %p112 = por %p110, %p111
      %p114 = scmp.ne.s32.totalorder %s99, %s113
      %p115 = scmp.eq.s32.totalorder %s26, 0
      %p116 = por %p114, %p115
      %s118 = sadd.s32 %s117, 1
      %p121 = scmp.eq.s32.totalorder %s20, 1
      %p122 = scmp.ne.s32.totalorder %s117, %s119
      %p123 = scmp.eq.s32.totalorder %s20, 0
      %p124 = por %p122, %p123
      %p125 = scmp.ne.s32.totalorder %s117, %s119
      %p126 = scmp.eq.s32.totalorder %s25, 1
      %p127 = por %p125, %p126
      %p128 = scmp.ne.s32.totalorder %s119, %s120
      %p129 = scmp.eq.s32.totalorder %s25, 0
      %p130 = por %p128, %p129
      %p131 = scmp.ne.s32.totalorder %s119, %s120
      %p132 = scmp.eq.s32.totalorder %s26, 1
      %p133 = por %p131, %p132
      %p135 = scmp.ne.s32.totalorder %s120, %s134
      %p136 = scmp.eq.s32.totalorder %s26, 0
      %p137 = por %p135, %p136
      %s139 = sadd.s32 %s138, 1
      %p142 = scmp.eq.s32.totalorder %s20, 1
      %p143 = scmp.ne.s32.totalorder %s138, %s140
      %p144 = scmp.eq.s32.totalorder %s20, 0
      %p145 = por %p143, %p144
      %p146 = scmp.ne.s32.totalorder %s138, %s140
      %p147 = scmp.eq.s32.totalorder %s25, 1
      %p148 = por %p146, %p147
      %p149 = scmp.ne.s32.totalorder %s140, %s141
      %p150 = scmp.eq.s32.totalorder %s25, 0
      %p151 = por %p149, %p150
      %p152 = scmp.ne.s32.totalorder %s140, %s141
      %p153 = scmp.eq.s32.totalorder %s26, 1
      %p154 = por %p152, %p153
      %p156 = scmp.ne.s32.totalorder %s141, %s155
      %p157 = scmp.eq.s32.totalorder %s26, 0
      %p158 = por %p156, %p157
      %s160 = sadd.s32 %s159, 1
      %p163 = scmp.eq.s32.totalorder %s20, 1
      %p164 = scmp.ne.s32.totalorder %s159, %s161
      %p165 = scmp.eq.s32.totalorder %s20, 0
      %p166 = por %p164, %p165
      %p167 = scmp.ne.s32.totalorder %s159, %s161
      %p168 = scmp.eq.s32.totalorder %s25, 1
      %p169 = por %p167, %p168
      %p170 = scmp.ne.s32.totalorder %s161, %s162
      %p171 = scmp.eq.s32.totalorder %s25, 0
      %p172 = por %p170, %p171
      %p173 = scmp.ne.s32.totalorder %s161, %s162
      %p174 = scmp.eq.s32.totalorder %s26, 1
      %p175 = por %p173, %p174
      %p177 = scmp.ne.s32.totalorder %s162, %s176
      %p178 = scmp.eq.s32.totalorder %s26, 0
      %p179 = por %p177, %p178
      %s181 = sadd.s32 %s180, 1
      %p184 = scmp.eq.s32.totalorder %s20, 1
      %p185 = scmp.ne.s32.totalorder %s180, %s182
      %p186 = scmp.eq.s32.totalorder %s20, 0
      %p187 = por %p185, %p186
      %p188 = scmp.ne.s32.totalorder %s180, %s182
      %p189 = scmp.eq.s32.totalorder %s25, 1
      %p190 = por %p188, %p189
      %p191 = scmp.ne.s32.totalorder %s182, %s183
      %p192 = scmp.eq.s32.totalorder %s25, 0
      %p193 = por %p191, %p192
      %p194 = scmp.ne.s32.totalorder %s182, %s183
      %p195 = scmp.eq.s32.totalorder %s26, 1
      %p196 = por %p194, %p195
      %p198 = scmp.ne.s32.totalorder %s183, %s197
      %p199 = scmp.eq.s32.totalorder %s26, 0
      %p200 = por %p198, %p199
      %s202 = sadd.s32 %s201, 1
      %p205 = scmp.eq.s32.totalorder %s20, 1
      %p206 = scmp.ne.s32.totalorder %s201, %s203
      %p207 = scmp.eq.s32.totalorder %s20, 0
      %p208 = por %p206, %p207
      %p209 = scmp.ne.s32.totalorder %s201, %s203
      %p210 = scmp.eq.s32.totalorder %s25, 1
      %p211 = por %p209, %p210
      %p212 = scmp.ne.s32.totalorder %s203, %s204
      %p213 = scmp.eq.s32.totalorder %s25, 0
      %p214 = por %p212, %p213
      %p215 = scmp.ne.s32.totalorder %s203, %s204
      %p216 = scmp.eq.s32.totalorder %s26, 1
      %p217 = por %p215, %p216
      %p219 = scmp.ne.s32.totalorder %s204, %s218
      %p220 = scmp.eq.s32.totalorder %s26, 0
      %p221 = por %p219, %p220
      %s223 = sadd.s32 %s222, 1
      %p226 = scmp.eq.s32.totalorder %s20, 1
      %p227 = scmp.ne.s32.totalorder %s222, %s224
      %p228 = scmp.eq.s32.totalorder %s20, 0
      %p229 = por %p227, %p228
      %p230 = scmp.ne.s32.totalorder %s222, %s224
      %p231 = scmp.eq.s32.totalorder %s25, 1
      %p232 = por %p230, %p231
      %p233 = scmp.ne.s32.totalorder %s224, %s225
      %p234 = scmp.eq.s32.totalorder %s25, 0
      %p235 = por %p233, %p234
      %p236 = scmp.ne.s32.totalorder %s224, %s225
      %p237 = scmp.eq.s32.totalorder %s26, 1
      %p238 = por %p236, %p237
      %p240 = scmp.ne.s32.totalorder %s225, %s239
      %p241 = scmp.eq.s32.totalorder %s26, 0
      %p242 = por %p240, %p241
      %s244 = sadd.s32 %s243, 1
      %p247 = scmp.eq.s32.totalorder %s20, 1
      %p248 = scmp.ne.s32.totalorder %s243, %s245
      %p249 = scmp.eq.s32.totalorder %s20, 0
      %p250 = por %p248, %p249
      %p251 = scmp.ne.s32.totalorder %s243, %s245
      %p252 = scmp.eq.s32.totalorder %s25, 1
      %p253 = por %p251, %p252
      %p254 = scmp.ne.s32.totalorder %s245, %s246
      %p255 = scmp.eq.s32.totalorder %s25, 0
      %p256 = por %p254, %p255
      %p257 = scmp.ne.s32.totalorder %s245, %s246
      %p258 = scmp.eq.s32.totalorder %s26, 1
      %p259 = por %p257, %p258
      %p261 = scmp.ne.s32.totalorder %s246, %s260
      %p262 = scmp.eq.s32.totalorder %s26, 0
      %p263 = por %p261, %p262
      %s264 = ssub.s32 %s20, %s27
      %p265 = scmp.eq.s32.totalorder %s264, 0
      %s267 = sadd.s32 %s266, 1
      %s268 = scalar_select %p265, %s266, %s267
      %p271 = pneg %p265
      %p272 = scmp.eq.s32.totalorder %s20, 1
      %p273 = por %p271, %p272
      %p274 = scmp.ne.s32.totalorder %s266, %s269
      %p275 = scmp.eq.s32.totalorder %s20, 0
      %p276 = por %p274, %p275
      %p277 = scmp.ne.s32.totalorder %s266, %s269
      %p278 = scmp.eq.s32.totalorder %s25, 1
      %p279 = por %p277, %p278
      %p280 = scmp.ne.s32.totalorder %s269, %s270
      %p281 = scmp.eq.s32.totalorder %s25, 0
      %p282 = por %p280, %p281
      %p283 = scmp.ne.s32.totalorder %s269, %s270
      %p284 = scmp.eq.s32.totalorder %s26, 1
      %p285 = por %p283, %p284
      %p287 = scmp.ne.s32.totalorder %s270, %s286
      %p288 = scmp.eq.s32.totalorder %s26, 0
      %p289 = por %p287, %p288
      %p290 = scmp.le.s32.totalorder 1, %s20
      %p291 = scmp.lt.s32.totalorder %s20, 3
      %p292 = pnand %p290, %p291
      %p293 = pneg %p292
      // Predicated region
      $region9: #{classifier_forward.1} parent=5 // pred_check
        _
      $region10: #{classifier_forward.1} parent=5 // pred_check_branch
        %295 = sbr.rel (%p292) target = $region12
      $region11: #{classifier_forward.1} parent=5 // pred_region
        %s296 = ssub.s32 %s20, 1
        // Predicated region
        $region13: #{classifier_forward.1} parent=11 // pred_check
          %p297 = pneg %p67
        $region14: #{classifier_forward.1} parent=11 // pred_check_branch
          %299 = sbr.rel (%p297) target = $region16
        $region15: #{classifier_forward.1} parent=11 // pred_region
          _
        $region16: #{classifier_forward.1} parent=11 // pred_fallthru
          _
        // Predicated region
        $region17: #{classifier_forward.1} parent=11 // pred_check
          %p300 = pneg %p88
        $region18: #{classifier_forward.1} parent=11 // pred_check_branch
          %302 = sbr.rel (%p300) target = $region20
        $region19: #{classifier_forward.1} parent=11 // pred_region
          _
        $region20: #{classifier_forward.1} parent=11 // pred_fallthru
          _
        // Predicated region
        $region21: #{classifier_forward.1} parent=11 // pred_check
          %p303 = pneg %p109
        $region22: #{classifier_forward.1} parent=11 // pred_check_branch
          %305 = sbr.rel (%p303) target = $region24
        $region23: #{classifier_forward.1} parent=11 // pred_region
          _
        $region24: #{classifier_forward.1} parent=11 // pred_fallthru
          _
        // Predicated region
        $region25: #{classifier_forward.1} parent=11 // pred_check
          %p306 = pneg %p130
        $region26: #{classifier_forward.1} parent=11 // pred_check_branch
          %308 = sbr.rel (%p306) target = $region28
        $region27: #{classifier_forward.1} parent=11 // pred_region
          _
        $region28: #{classifier_forward.1} parent=11 // pred_fallthru
          _
        // Predicated region
        $region29: #{classifier_forward.1} parent=11 // pred_check
          %p309 = pneg %p151
        $region30: #{classifier_forward.1} parent=11 // pred_check_branch
          %311 = sbr.rel (%p309) target = $region32
        $region31: #{classifier_forward.1} parent=11 // pred_region
          _
        $region32: #{classifier_forward.1} parent=11 // pred_fallthru
          _
        // Predicated region
        $region33: #{classifier_forward.1} parent=11 // pred_check
          %p312 = pneg %p172
        $region34: #{classifier_forward.1} parent=11 // pred_check_branch
          %314 = sbr.rel (%p312) target = $region36
        $region35: #{classifier_forward.1} parent=11 // pred_region
          _
        $region36: #{classifier_forward.1} parent=11 // pred_fallthru
          _
        // Predicated region
        $region37: #{classifier_forward.1} parent=11 // pred_check
          %p315 = pneg %p193
        $region38: #{classifier_forward.1} parent=11 // pred_check_branch
          %317 = sbr.rel (%p315) target = $region40
        $region39: #{classifier_forward.1} parent=11 // pred_region
          _
        $region40: #{classifier_forward.1} parent=11 // pred_fallthru
          _
        // Predicated region
        $region41: #{classifier_forward.1} parent=11 // pred_check
          %p318 = pneg %p214
        $region42: #{classifier_forward.1} parent=11 // pred_check_branch
          %320 = sbr.rel (%p318) target = $region44
        $region43: #{classifier_forward.1} parent=11 // pred_region
          _
        $region44: #{classifier_forward.1} parent=11 // pred_fallthru
          _
        // Predicated region
        $region45: #{classifier_forward.1} parent=11 // pred_check
          %p321 = pneg %p235
        $region46: #{classifier_forward.1} parent=11 // pred_check_branch
          %323 = sbr.rel (%p321) target = $region48
        $region47: #{classifier_forward.1} parent=11 // pred_region
          _
        $region48: #{classifier_forward.1} parent=11 // pred_fallthru
          _
        // Predicated region
        $region49: #{classifier_forward.1} parent=11 // pred_check
          %p324 = pneg %p256
        $region50: #{classifier_forward.1} parent=11 // pred_check_branch
          %326 = sbr.rel (%p324) target = $region52
        $region51: #{classifier_forward.1} parent=11 // pred_region
          _
        $region52: #{classifier_forward.1} parent=11 // pred_fallthru
          _
      $region12: #{classifier_forward.1} parent=5 // pred_fallthru
        _
      %p327 = scmp.lt.s32.totalorder %s20, 2
      // Predicated region
      $region53: #{classifier_forward.1} parent=5 // pred_check
        %p328 = pneg %p327
      $region54: #{classifier_forward.1} parent=5 // pred_check_branch
        %330 = sbr.rel (%p328) target = $region56
      $region55: #{classifier_forward.1} parent=5 // pred_region
        // Predicated region
        $region57: #{classifier_forward.1} parent=55 // pred_check
          %p331 = pneg %p40
        $region58: #{classifier_forward.1} parent=55 // pred_check_branch
          %333 = sbr.rel (%p331) target = $region60
        $region59: #{classifier_forward.1} parent=55 // pred_region
          %p334 = scmp.lt.s32.totalorder %s20, 1
          %s335 = scalar_select %p334, %s20, 1
          %s336 = smul.addr %s335, 32
          %s337 = smul.addr %s336, 8
          %s338 = scalar_lea.vmem %s0, %s337
        $region60: #{classifier_forward.1} parent=55 // pred_fallthru
          _
      $region56: #{classifier_forward.1} parent=5 // pred_fallthru
        _
      %p339 = scmp.le.s32.totalorder 1, %s20
      %p340 = scmp.lt.s32.totalorder %s20, 3
      %p341 = pnand %p339, %p340
      %p342 = pneg %p341
      // Predicated region
      $region61: #{classifier_forward.1} parent=5 // pred_check
        _
      $region62: #{classifier_forward.1} parent=5 // pred_check_branch
        %344 = sbr.rel (%p341) target = $region64
      $region63: #{classifier_forward.1} parent=5 // pred_region
        %s345 = ssub.s32 %s20, 1
        %p346 = scmp.lt.s32.totalorder %s25, 1
        %s347 = scalar_select %p346, %s25, 1
        %s348 = smul.addr %s347, 32
        %s349 = smul.addr %s348, 8
        %s350 = scalar_lea.vmem %s0, %s349
        %p351 = pneg %p46
        %p352 = pneg %p43
        %p353 = pneg %p67
        %p354 = pneg %p64
        %p355 = pneg %p88
        %p356 = pneg %p85
        %p357 = pneg %p109
        %p358 = pneg %p106
        %p359 = pneg %p130
        %p360 = pneg %p127
        %p361 = pneg %p151
        %p362 = pneg %p148
        %p363 = pneg %p172
        %p364 = pneg %p169
        %p365 = pneg %p193
        %p366 = pneg %p190
        %p367 = pneg %p214
        %p368 = pneg %p211
        %p369 = pneg %p235
        %p370 = pneg %p232
        %p371 = pneg %p256
        %p372 = pneg %p253
        %p373 = pneg %p282
        %p374 = pneg %p279
        %s375 = sand.u32 %s269, 1
        %s376 = scalar_lea.sflag [#allocation3], %s375
        %s377 = sand.u32 %s269, 1
        %s378 = scalar_lea.vmem [#allocation2], %s377
        %p379 = scmp.lt.s32.totalorder %s25, 1
        %s380 = scalar_select %p379, %s25, 1
        %s381 = smul.addr %s380, 32
        %s382 = smul.addr %s381, 8
        %s383 = scalar_lea.vmem %s0, %s382
        %v384 = vld [vmem:[%s383] sm:$0xff]
        %v385 = vld [vmem:[%s383 + $0x8] sm:$0xff]
        %v386 = vld [vmem:[%s383 + $0x10] sm:$0xff]
        %v387 = vld [vmem:[%s383 + $0x18] sm:$0xff]
        %v388 = vld [vmem:[%s383 + $0x20] sm:$0xff]
        %v389 = vld [vmem:[%s383 + $0x28] sm:$0xff]
        %v390 = vld [vmem:[%s383 + $0x30] sm:$0xff]
        %v391 = vld [vmem:[%s383 + $0x38] sm:$0xff]
        %v392 = vld [vmem:[%s383 + $0x40] sm:$0xff]
        %v393 = vld [vmem:[%s383 + $0x48] sm:$0xff]
        %v394 = vld [vmem:[%s383 + $0x50] sm:$0xff]
        %v395 = vld [vmem:[%s383 + $0x58] sm:$0xff]
        %v396 = vld [vmem:[%s383 + $0x60] sm:$0xff]
        %v397 = vld [vmem:[%s383 + $0x68] sm:$0xff]
        %v398 = vld [vmem:[%s383 + $0x70] sm:$0xff]
        %v399 = vld [vmem:[%s383 + $0x78] sm:$0xff]
        %v400 = vld [vmem:[%s383 + $0x80] sm:$0xff]
        %v401 = vld [vmem:[%s383 + $0x88] sm:$0xff]
        %v402 = vld [vmem:[%s383 + $0x90] sm:$0xff]
        %v403 = vld [vmem:[%s383 + $0x98] sm:$0xff]
        %v404 = vld [vmem:[%s383 + $0xa0] sm:$0xff]
        %v405 = vld [vmem:[%s383 + $0xa8] sm:$0xff]
        %v406 = vld [vmem:[%s383 + $0xb0] sm:$0xff]
        %v407 = vld [vmem:[%s383 + $0xb8] sm:$0xff]
        %v408 = vld [vmem:[%s383 + $0xc0] sm:$0xff]
        %v409 = vld [vmem:[%s383 + $0xc8] sm:$0xff]
        %v410 = vld [vmem:[%s383 + $0xd0] sm:$0xff]
        %v411 = vld [vmem:[%s383 + $0xd8] sm:$0xff]
        %v412 = vld [vmem:[%s383 + $0xe0] sm:$0xff]
        %v413 = vld [vmem:[%s383 + $0xe8] sm:$0xff]
        %v414 = vld [vmem:[%s383 + $0xf0] sm:$0xff]
        %v415 = vld [vmem:[%s383 + $0xf8] sm:$0xff]
        %v416 = vld [vmem:[%s1] sm:$0xff]
        %v417 = vld [vmem:[%s1 + $0x8] sm:$0xff]
        %v418 = vld [vmem:[%s1 + $0x10] sm:$0xff]
        %v419 = vld [vmem:[%s1 + $0x18] sm:$0xff]
        %v420 = vld [vmem:[%s2] sm:$0x1]
        %v422 = vperm.slane %v420, 0
        %vm424 = vcmask 261120
        %v426 = vsel %vm424, %v384, 0
        %v429 = vsel %vm424, %v385, 0
        %v432 = vsel %vm424, %v386, 0
        %v435 = vsel %vm424, %v387, 0
        %v438 = vsel %vm424, %v388, 0
        %v441 = vsel %vm424, %v389, 0
        %v444 = vsel %vm424, %v390, 0
        %v447 = vsel %vm424, %v391, 0
        %v450 = vsel %vm424, %v392, 0
        %v453 = vsel %vm424, %v393, 0
        %v456 = vsel %vm424, %v394, 0
        %v459 = vsel %vm424, %v395, 0
        %v462 = vsel %vm424, %v396, 0
        %v465 = vsel %vm424, %v397, 0
        %v468 = vsel %vm424, %v398, 0
        %v471 = vsel %vm424, %v399, 0
        %v474 = vsel %vm424, %v400, 0
        %v477 = vsel %vm424, %v401, 0
        %v480 = vsel %vm424, %v402, 0
        %v483 = vsel %vm424, %v403, 0
        %v486 = vsel %vm424, %v404, 0
        %v489 = vsel %vm424, %v405, 0
        %v492 = vsel %vm424, %v406, 0
        %v495 = vsel %vm424, %v407, 0
        %v498 = vsel %vm424, %v408, 0
        %v501 = vsel %vm424, %v409, 0
        %v504 = vsel %vm424, %v410, 0
        %v507 = vsel %vm424, %v411, 0
        %v510 = vsel %vm424, %v412, 0
        %v513 = vsel %vm424, %v413, 0
        %v516 = vsel %vm424, %v414, 0
        %v519 = vsel %vm424, %v415, 0
        %521 = vmatpush.msra.mxu0 0.0
        %522 = vmatpush.msra.mxu0 0.0
        %523 = vmatpush.msra.mxu0 0.0
        %524 = vmatpush.msra.mxu0 0.0
        %525 = vmatpush.msra.mxu0 0.0
        %526 = vmatpush.msra.mxu0 0.0
        %527 = vmatpush.msra.mxu0 0.0
        %528 = vmatpush.msra.mxu0 0.0
        %529 = vmatpush.msra.mxu0 0.0
        %530 = vmatpush.msra.mxu0 0.0
        %531 = vmatpush.msra.mxu0 0.0
        %532 = vmatpush.msra.mxu0 0.0
        %533 = vmatpush.msra.mxu0 %v419
        %534 = vmatpush.msra.mxu0 %v418
        %535 = vmatpush.msra.mxu0 %v417
        %536 = vmatpush.msra.mxu0 %v416
        %537 = vmatmul.f32.gmra.mxu0 %v426
        %v538 = vpop.f32.mrf.mxu0
        %v539 = vadd.f32 %v422, %v538
        %540 = vmatmul.f32.gmra.mxu0 %v429
        %v541 = vpop.f32.mrf.mxu0
        %v542 = vadd.f32 %v422, %v541
        %543 = vmatmul.f32.gmra.mxu0 %v432
        %v544 = vpop.f32.mrf.mxu0
        %v545 = vadd.f32 %v422, %v544
        %546 = vmatmul.f32.gmra.mxu0 %v435
        %v547 = vpop.f32.mrf.mxu0
        %v548 = vadd.f32 %v422, %v547
        %549 = vmatmul.f32.gmra.mxu0 %v438
        %v550 = vpop.f32.mrf.mxu0
        %v551 = vadd.f32 %v422, %v550
        %552 = vmatmul.f32.gmra.mxu0 %v441
        %v553 = vpop.f32.mrf.mxu0
        %v554 = vadd.f32 %v422, %v553
        %555 = vmatmul.f32.gmra.mxu0 %v444
        %v556 = vpop.f32.mrf.mxu0
        %v557 = vadd.f32 %v422, %v556
        %558 = vmatmul.f32.gmra.mxu0 %v447
        %v559 = vpop.f32.mrf.mxu0
        %v560 = vadd.f32 %v422, %v559
        %561 = vmatmul.f32.gmra.mxu0 %v450
        %v562 = vpop.f32.mrf.mxu0
        %v563 = vadd.f32 %v422, %v562
        %564 = vmatmul.f32.gmra.mxu0 %v453
        %v565 = vpop.f32.mrf.mxu0
        %v566 = vadd.f32 %v422, %v565
        %567 = vmatmul.f32.gmra.mxu0 %v456
        %v568 = vpop.f32.mrf.mxu0
        %v569 = vadd.f32 %v422, %v568
        %570 = vmatmul.f32.gmra.mxu0 %v459
        %v571 = vpop.f32.mrf.mxu0
        %v572 = vadd.f32 %v422, %v571
        %573 = vmatmul.f32.gmra.mxu0 %v462
        %v574 = vpop.f32.mrf.mxu0
        %v575 = vadd.f32 %v422, %v574
        %576 = vmatmul.f32.gmra.mxu0 %v465
        %v577 = vpop.f32.mrf.mxu0
        %v578 = vadd.f32 %v422, %v577
        %579 = vmatmul.f32.gmra.mxu0 %v468
        %v580 = vpop.f32.mrf.mxu0
        %v581 = vadd.f32 %v422, %v580
        %582 = vmatmul.f32.gmra.mxu0 %v471
        %v583 = vpop.f32.mrf.mxu0
        %v584 = vadd.f32 %v422, %v583
        %585 = vmatmul.f32.gmra.mxu0 %v474
        %v586 = vpop.f32.mrf.mxu0
        %v587 = vadd.f32 %v422, %v586
        %588 = vmatmul.f32.gmra.mxu0 %v477
        %v589 = vpop.f32.mrf.mxu0
        %v590 = vadd.f32 %v422, %v589
        %591 = vmatmul.f32.gmra.mxu0 %v480
        %v592 = vpop.f32.mrf.mxu0
        %v593 = vadd.f32 %v422, %v592
        %594 = vmatmul.f32.gmra.mxu0 %v483
        %v595 = vpop.f32.mrf.mxu0
        %v596 = vadd.f32 %v422, %v595
        %597 = vmatmul.f32.gmra.mxu0 %v486
        %v598 = vpop.f32.mrf.mxu0
        %v599 = vadd.f32 %v422, %v598
        %600 = vmatmul.f32.gmra.mxu0 %v489
        %v601 = vpop.f32.mrf.mxu0
        %v602 = vadd.f32 %v422, %v601
        %603 = vmatmul.f32.gmra.mxu0 %v492
        %v604 = vpop.f32.mrf.mxu0
        %v605 = vadd.f32 %v422, %v604
        %606 = vmatmul.f32.gmra.mxu0 %v495
        %v607 = vpop.f32.mrf.mxu0
        %v608 = vadd.f32 %v422, %v607
        %609 = vmatmul.f32.gmra.mxu0 %v498
        %v610 = vpop.f32.mrf.mxu0
        %v611 = vadd.f32 %v422, %v610
        %612 = vmatmul.f32.gmra.mxu0 %v501
        %v613 = vpop.f32.mrf.mxu0
        %v614 = vadd.f32 %v422, %v613
        %615 = vmatmul.f32.gmra.mxu0 %v504
        %v616 = vpop.f32.mrf.mxu0
        %v617 = vadd.f32 %v422, %v616
        %618 = vmatmul.f32.gmra.mxu0 %v507
        %v619 = vpop.f32.mrf.mxu0
        %v620 = vadd.f32 %v422, %v619
        %621 = vmatmul.f32.gmra.mxu0 %v510
        %v622 = vpop.f32.mrf.mxu0
        %v623 = vadd.f32 %v422, %v622
        %624 = vmatmul.f32.gmra.mxu0 %v513
        %v625 = vpop.f32.mrf.mxu0
        %v626 = vadd.f32 %v422, %v625
        %627 = vmatmul.f32.gmra.mxu0 %v516
        %v628 = vpop.f32.mrf.mxu0
        %v629 = vadd.f32 %v422, %v628
        %630 = vmatmul.f32.gmra.mxu0 %v519
        %v631 = vpop.f32.mrf.mxu0
        %v632 = vadd.f32 %v422, %v631
        %633 = vdwg.mxu0
        %vm634 = vcmp.ge.f32.partialorder %v539, 0.0
        %vm635 = vcmp.ge.f32.partialorder %v542, 0.0
        %vm636 = vcmp.ge.f32.partialorder %v545, 0.0
        %vm637 = vcmp.ge.f32.partialorder %v548, 0.0
        %vm638 = vcmp.ge.f32.partialorder %v551, 0.0
        %vm639 = vcmp.ge.f32.partialorder %v554, 0.0
        %vm640 = vcmp.ge.f32.partialorder %v557, 0.0
        %vm641 = vcmp.ge.f32.partialorder %v560, 0.0
        %vm642 = vcmp.ge.f32.partialorder %v563, 0.0
        %vm643 = vcmp.ge.f32.partialorder %v566, 0.0
        %vm644 = vcmp.ge.f32.partialorder %v569, 0.0
        %vm645 = vcmp.ge.f32.partialorder %v572, 0.0
        %vm646 = vcmp.ge.f32.partialorder %v575, 0.0
        %vm647 = vcmp.ge.f32.partialorder %v578, 0.0
        %vm648 = vcmp.ge.f32.partialorder %v581, 0.0
        %vm649 = vcmp.ge.f32.partialorder %v584, 0.0
        %vm650 = vcmp.ge.f32.partialorder %v587, 0.0
        %vm651 = vcmp.ge.f32.partialorder %v590, 0.0
        %vm652 = vcmp.ge.f32.partialorder %v593, 0.0
        %vm653 = vcmp.ge.f32.partialorder %v596, 0.0
        %vm654 = vcmp.ge.f32.partialorder %v599, 0.0
        %vm655 = vcmp.ge.f32.partialorder %v602, 0.0
        %vm656 = vcmp.ge.f32.partialorder %v605, 0.0
        %vm657 = vcmp.ge.f32.partialorder %v608, 0.0
        %vm658 = vcmp.ge.f32.partialorder %v611, 0.0
        %vm659 = vcmp.ge.f32.partialorder %v614, 0.0
        %vm660 = vcmp.ge.f32.partialorder %v617, 0.0
        %vm661 = vcmp.ge.f32.partialorder %v620, 0.0
        %vm662 = vcmp.ge.f32.partialorder %v623, 0.0
        %vm663 = vcmp.ge.f32.partialorder %v626, 0.0
        %vm664 = vcmp.ge.f32.partialorder %v629, 0.0
        %vm665 = vcmp.ge.f32.partialorder %v632, 0.0
        %v666 = vmul.f32 %v539, 0.2
        %v667 = vmul.f32 %v542, 0.2
        %v668 = vmul.f32 %v545, 0.2
        %v669 = vmul.f32 %v548, 0.2
        %v670 = vmul.f32 %v551, 0.2
        %v671 = vmul.f32 %v554, 0.2
        %v672 = vmul.f32 %v557, 0.2
        %v673 = vmul.f32 %v560, 0.2
        %v674 = vmul.f32 %v563, 0.2
        %v675 = vmul.f32 %v566, 0.2
        %v676 = vmul.f32 %v569, 0.2
        %v677 = vmul.f32 %v572, 0.2
        %v678 = vmul.f32 %v575, 0.2
        %v679 = vmul.f32 %v578, 0.2
        %v680 = vmul.f32 %v581, 0.2
        %v681 = vmul.f32 %v584, 0.2
        %v682 = vmul.f32 %v587, 0.2
        %v683 = vmul.f32 %v590, 0.2
        %v684 = vmul.f32 %v593, 0.2
        %v685 = vmul.f32 %v596, 0.2
        %v686 = vmul.f32 %v599, 0.2
        %v687 = vmul.f32 %v602, 0.2
        %v688 = vmul.f32 %v605, 0.2
        %v689 = vmul.f32 %v608, 0.2
        %v690 = vmul.f32 %v611, 0.2
        %v691 = vmul.f32 %v614, 0.2
        %v692 = vmul.f32 %v617, 0.2
        %v693 = vmul.f32 %v620, 0.2
        %v694 = vmul.f32 %v623, 0.2
        %v695 = vmul.f32 %v626, 0.2
        %v696 = vmul.f32 %v629, 0.2
        %v697 = vmul.f32 %v632, 0.2
        %v698 = vsel %vm634, %v539, %v666
        %v699 = vsel %vm635, %v542, %v667
        %v700 = vsel %vm636, %v545, %v668
        %v701 = vsel %vm637, %v548, %v669
        %v702 = vsel %vm638, %v551, %v670
        %v703 = vsel %vm639, %v554, %v671
        %v704 = vsel %vm640, %v557, %v672
        %v705 = vsel %vm641, %v560, %v673
        %v706 = vsel %vm642, %v563, %v674
        %v707 = vsel %vm643, %v566, %v675
        %v708 = vsel %vm644, %v569, %v676
        %v709 = vsel %vm645, %v572, %v677
        %v710 = vsel %vm646, %v575, %v678
        %v711 = vsel %vm647, %v578, %v679
        %v712 = vsel %vm648, %v581, %v680
        %v713 = vsel %vm649, %v584, %v681
        %v714 = vsel %vm650, %v587, %v682
        %v715 = vsel %vm651, %v590, %v683
        %v716 = vsel %vm652, %v593, %v684
        %v717 = vsel %vm653, %v596, %v685
        %v718 = vsel %vm654, %v599, %v686
        %v719 = vsel %vm655, %v602, %v687
        %v720 = vsel %vm656, %v605, %v688
        %v721 = vsel %vm657, %v608, %v689
        %v722 = vsel %vm658, %v611, %v690
        %v723 = vsel %vm659, %v614, %v691
        %v724 = vsel %vm660, %v617, %v692
        %v725 = vsel %vm661, %v620, %v693
        %v726 = vsel %vm662, %v623, %v694
        %v727 = vsel %vm663, %v626, %v695
        %v728 = vsel %vm664, %v629, %v696
        %v729 = vsel %vm665, %v632, %v697
        %s730 = scalar_lea.vmem %s2, 1
        %v731 = vld [vmem:[%s730] sm:$0x1]
        %v733 = vperm.slane %v731, 0
        %v735 = vmul.f32 %v698, %v733
        %v736 = vmul.f32 %v699, %v733
        %v737 = vmul.f32 %v700, %v733
        %v738 = vmul.f32 %v701, %v733
        %v739 = vmul.f32 %v702, %v733
        %v740 = vmul.f32 %v703, %v733
        %v741 = vmul.f32 %v704, %v733
        %v742 = vmul.f32 %v705, %v733
        %v743 = vmul.f32 %v706, %v733
        %v744 = vmul.f32 %v707, %v733
        %v745 = vmul.f32 %v708, %v733
        %v746 = vmul.f32 %v709, %v733
        %v747 = vmul.f32 %v710, %v733
        %v748 = vmul.f32 %v711, %v733
        %v749 = vmul.f32 %v712, %v733
        %v750 = vmul.f32 %v713, %v733
        %v751 = vmul.f32 %v714, %v733
        %v752 = vmul.f32 %v715, %v733
        %v753 = vmul.f32 %v716, %v733
        %v754 = vmul.f32 %v717, %v733
        %v755 = vmul.f32 %v718, %v733
        %v756 = vmul.f32 %v719, %v733
        %v757 = vmul.f32 %v720, %v733
        %v758 = vmul.f32 %v721, %v733
        %v759 = vmul.f32 %v722, %v733
        %v760 = vmul.f32 %v723, %v733
        %v761 = vmul.f32 %v724, %v733
        %v762 = vmul.f32 %v725, %v733
        %v763 = vmul.f32 %v726, %v733
        %v764 = vmul.f32 %v727, %v733
        %v765 = vmul.f32 %v728, %v733
        %v766 = vmul.f32 %v729, %v733
        %s767 = scalar_lea.vmem %s2, 2
        %v768 = vld [vmem:[%s767] sm:$0x1]
        %v770 = vperm.slane %v768, 0
        %v772 = vadd.f32 %v735, %v770
        %v773 = vadd.f32 %v736, %v770
        %v774 = vadd.f32 %v737, %v770
        %v775 = vadd.f32 %v738, %v770
        %v776 = vadd.f32 %v739, %v770
        %v777 = vadd.f32 %v740, %v770
        %v778 = vadd.f32 %v741, %v770
        %v779 = vadd.f32 %v742, %v770
        %v780 = vadd.f32 %v743, %v770
        %v781 = vadd.f32 %v744, %v770
        %v782 = vadd.f32 %v745, %v770
        %v783 = vadd.f32 %v746, %v770
        %v784 = vadd.f32 %v747, %v770
        %v785 = vadd.f32 %v748, %v770
        %v786 = vadd.f32 %v749, %v770
        %v787 = vadd.f32 %v750, %v770
        %v788 = vadd.f32 %v751, %v770
        %v789 = vadd.f32 %v752, %v770
        %v790 = vadd.f32 %v753, %v770
        %v791 = vadd.f32 %v754, %v770
        %v792 = vadd.f32 %v755, %v770
        %v793 = vadd.f32 %v756, %v770
        %v794 = vadd.f32 %v757, %v770
        %v795 = vadd.f32 %v758, %v770
        %v796 = vadd.f32 %v759, %v770
        %v797 = vadd.f32 %v760, %v770
        %v798 = vadd.f32 %v761, %v770
        %v799 = vadd.f32 %v762, %v770
        %v800 = vadd.f32 %v763, %v770
        %v801 = vadd.f32 %v764, %v770
        %v802 = vadd.f32 %v765, %v770
        %v803 = vadd.f32 %v766, %v770
        %v804 = vld [vmem:[%s3] sm:$0xff]
        %v805 = vld [vmem:[%s3 + $0x8] sm:$0xff]
        %v806 = vld [vmem:[%s3 + $0x10] sm:$0xff]
        %v807 = vld [vmem:[%s3 + $0x18] sm:$0xff]
        %v808 = vld [vmem:[%s3 + $0x20] sm:$0xff]
        %v809 = vld [vmem:[%s3 + $0x28] sm:$0xff]
        %v810 = vld [vmem:[%s3 + $0x30] sm:$0xff]
        %v811 = vld [vmem:[%s3 + $0x38] sm:$0xff]
        %v812 = vld [vmem:[%s3 + $0x40] sm:$0xff]
        %v813 = vld [vmem:[%s3 + $0x48] sm:$0xff]
        %v814 = vld [vmem:[%s3 + $0x50] sm:$0xff]
        %v815 = vld [vmem:[%s3 + $0x58] sm:$0xff]
        %v816 = vld [vmem:[%s3 + $0x60] sm:$0xff]
        %v817 = vld [vmem:[%s3 + $0x68] sm:$0xff]
        %v818 = vld [vmem:[%s3 + $0x70] sm:$0xff]
        %v819 = vld [vmem:[%s3 + $0x78] sm:$0xff]
        %820 = vmatpush.msra.mxu0 %v787
        %821 = vmatpush.msra.mxu0 %v786
        %822 = vmatpush.msra.mxu0 %v785
        %823 = vmatpush.msra.mxu0 %v784
        %824 = vmatpush.msra.mxu0 %v783
        %825 = vmatpush.msra.mxu0 %v782
        %826 = vmatpush.msra.mxu0 %v781
        %827 = vmatpush.msra.mxu0 %v780
        %828 = vmatpush.msra.mxu0 %v779
        %829 = vmatpush.msra.mxu0 %v778
        %830 = vmatpush.msra.mxu0 %v777
        %831 = vmatpush.msra.mxu0 %v776
        %832 = vmatpush.msra.mxu0 %v775
        %833 = vmatpush.msra.mxu0 %v774
        %834 = vmatpush.msra.mxu0 %v773
        %835 = vmatpush.msra.mxu0 %v772
        %836 = vmatmul.f32.gmra.mxu0 %v804
        %v837 = vpop.f32.mrf.mxu0
        %v838 = vadd.f32 0.0, %v837
        %839 = vmatmul.f32.gmra.mxu0 %v806
        %v840 = vpop.f32.mrf.mxu0
        %v841 = vadd.f32 0.0, %v840
        %842 = vmatmul.f32.gmra.mxu0 %v808
        %v843 = vpop.f32.mrf.mxu0
        %v844 = vadd.f32 0.0, %v843
        %845 = vmatmul.f32.gmra.mxu0 %v810
        %v846 = vpop.f32.mrf.mxu0
        %v847 = vadd.f32 0.0, %v846
        %848 = vmatmul.f32.gmra.mxu0 %v812
        %v849 = vpop.f32.mrf.mxu0
        %v850 = vadd.f32 0.0, %v849
        %851 = vmatmul.f32.gmra.mxu0 %v814
        %v852 = vpop.f32.mrf.mxu0
        %v853 = vadd.f32 0.0, %v852
        %854 = vmatmul.f32.gmra.mxu0 %v816
        %v855 = vpop.f32.mrf.mxu0
        %v856 = vadd.f32 0.0, %v855
        %857 = vmatmul.f32.gmra.mxu0 %v818
        %v858 = vpop.f32.mrf.mxu0
        %v859 = vadd.f32 0.0, %v858
        %860 = vdwg.mxu0
        %861 = vmatpush.msra.mxu0 %v803
        %862 = vmatpush.msra.mxu0 %v802
        %863 = vmatpush.msra.mxu0 %v801
        %864 = vmatpush.msra.mxu0 %v800
        %865 = vmatpush.msra.mxu0 %v799
        %866 = vmatpush.msra.mxu0 %v798
        %867 = vmatpush.msra.mxu0 %v797
        %868 = vmatpush.msra.mxu0 %v796
        %869 = vmatpush.msra.mxu0 %v795
        %870 = vmatpush.msra.mxu0 %v794
        %871 = vmatpush.msra.mxu0 %v793
        %872 = vmatpush.msra.mxu0 %v792
        %873 = vmatpush.msra.mxu0 %v791
        %874 = vmatpush.msra.mxu0 %v790
        %875 = vmatpush.msra.mxu0 %v789
        %876 = vmatpush.msra.mxu0 %v788
        %877 = vmatmul.f32.gmra.mxu0 %v805
        %v878 = vpop.f32.mrf.mxu0
        %v879 = vadd.f32 %v838, %v878
        %880 = vmatmul.f32.gmra.mxu0 %v807
        %v881 = vpop.f32.mrf.mxu0
        %v882 = vadd.f32 %v841, %v881
        %883 = vmatmul.f32.gmra.mxu0 %v809
        %v884 = vpop.f32.mrf.mxu0
        %v885 = vadd.f32 %v844, %v884
        %886 = vmatmul.f32.gmra.mxu0 %v811
        %v887 = vpop.f32.mrf.mxu0
        %v888 = vadd.f32 %v847, %v887
        %889 = vmatmul.f32.gmra.mxu0 %v813
        %v890 = vpop.f32.mrf.mxu0
        %v891 = vadd.f32 %v850, %v890
        %892 = vmatmul.f32.gmra.mxu0 %v815
        %v893 = vpop.f32.mrf.mxu0
        %v894 = vadd.f32 %v853, %v893
        %895 = vmatmul.f32.gmra.mxu0 %v817
        %v896 = vpop.f32.mrf.mxu0
        %v897 = vadd.f32 %v856, %v896
        %898 = vmatmul.f32.gmra.mxu0 %v819
        %v899 = vpop.f32.mrf.mxu0
        %v900 = vadd.f32 %v859, %v899
        %901 = vdwg.mxu0
        %v902 = vld [vmem:[%s4] sm:$0xff]
        %v903 = vld [vmem:[%s4 + $0x8] sm:$0xff]
        %v904 = vld [vmem:[%s4 + $0x10] sm:$0xff]
        %v905 = vld [vmem:[%s4 + $0x18] sm:$0xff]
        %s906 = scalar_lea.vmem %s3, 128
        %v907 = vld [vmem:[%s906] sm:$0xff]
        %v908 = vld [vmem:[%s906 + $0x8] sm:$0xff]
        %v909 = vld [vmem:[%s906 + $0x10] sm:$0xff]
        %v910 = vld [vmem:[%s906 + $0x18] sm:$0xff]
        %v911 = vld [vmem:[%s906 + $0x20] sm:$0xff]
        %v912 = vld [vmem:[%s906 + $0x28] sm:$0xff]
        %v913 = vld [vmem:[%s906 + $0x30] sm:$0xff]
        %v914 = vld [vmem:[%s906 + $0x38] sm:$0xff]
        %v915 = vld [vmem:[%s906 + $0x40] sm:$0xff]
        %v916 = vld [vmem:[%s906 + $0x48] sm:$0xff]
        %v917 = vld [vmem:[%s906 + $0x50] sm:$0xff]
        %v918 = vld [vmem:[%s906 + $0x58] sm:$0xff]
        %v919 = vld [vmem:[%s906 + $0x60] sm:$0xff]
        %v920 = vld [vmem:[%s906 + $0x68] sm:$0xff]
        %v921 = vld [vmem:[%s906 + $0x70] sm:$0xff]
        %v922 = vld [vmem:[%s906 + $0x78] sm:$0xff]
        %923 = vmatpush.msra.mxu0 %v787
        %924 = vmatpush.msra.mxu0 %v786
        %925 = vmatpush.msra.mxu0 %v785
        %926 = vmatpush.msra.mxu0 %v784
        %927 = vmatpush.msra.mxu0 %v783
        %928 = vmatpush.msra.mxu0 %v782
        %929 = vmatpush.msra.mxu0 %v781
        %930 = vmatpush.msra.mxu0 %v780
        %931 = vmatpush.msra.mxu0 %v779
        %932 = vmatpush.msra.mxu0 %v778
        %933 = vmatpush.msra.mxu0 %v777
        %934 = vmatpush.msra.mxu0 %v776
        %935 = vmatpush.msra.mxu0 %v775
        %936 = vmatpush.msra.mxu0 %v774
        %937 = vmatpush.msra.mxu0 %v773
        %938 = vmatpush.msra.mxu0 %v772
        %939 = vmatmul.f32.gmra.mxu0 %v907
        %v940 = vpop.f32.mrf.mxu0
        %v941 = vadd.f32 0.0, %v940
        %942 = vmatmul.f32.gmra.mxu0 %v909
        %v943 = vpop.f32.mrf.mxu0
        %v944 = vadd.f32 0.0, %v943
        %945 = vmatmul.f32.gmra.mxu0 %v911
        %v946 = vpop.f32.mrf.mxu0
        %v947 = vadd.f32 0.0, %v946
        %948 = vmatmul.f32.gmra.mxu0 %v913
        %v949 = vpop.f32.mrf.mxu0
        %v950 = vadd.f32 0.0, %v949
        %951 = vmatmul.f32.gmra.mxu0 %v915
        %v952 = vpop.f32.mrf.mxu0
        %v953 = vadd.f32 0.0, %v952
        %954 = vmatmul.f32.gmra.mxu0 %v917
        %v955 = vpop.f32.mrf.mxu0
        %v956 = vadd.f32 0.0, %v955
        %957 = vmatmul.f32.gmra.mxu0 %v919
        %v958 = vpop.f32.mrf.mxu0
        %v959 = vadd.f32 0.0, %v958
        %960 = vmatmul.f32.gmra.mxu0 %v921
        %v961 = vpop.f32.mrf.mxu0
        %v962 = vadd.f32 0.0, %v961
        %963 = vdwg.mxu0
        %964 = vmatpush.msra.mxu0 %v803
        %965 = vmatpush.msra.mxu0 %v802
        %966 = vmatpush.msra.mxu0 %v801
        %967 = vmatpush.msra.mxu0 %v800
        %968 = vmatpush.msra.mxu0 %v799
        %969 = vmatpush.msra.mxu0 %v798
        %970 = vmatpush.msra.mxu0 %v797
        %971 = vmatpush.msra.mxu0 %v796
        %972 = vmatpush.msra.mxu0 %v795
        %973 = vmatpush.msra.mxu0 %v794
        %974 = vmatpush.msra.mxu0 %v793
        %975 = vmatpush.msra.mxu0 %v792
        %976 = vmatpush.msra.mxu0 %v791
        %977 = vmatpush.msra.mxu0 %v790
        %978 = vmatpush.msra.mxu0 %v789
        %979 = vmatpush.msra.mxu0 %v788
        %980 = vmatmul.f32.gmra.mxu0 %v908
        %v981 = vpop.f32.mrf.mxu0
        %v982 = vadd.f32 %v941, %v981
        %983 = vmatmul.f32.gmra.mxu0 %v910
        %v984 = vpop.f32.mrf.mxu0
        %v985 = vadd.f32 %v944, %v984
        %986 = vmatmul.f32.gmra.mxu0 %v912
        %v987 = vpop.f32.mrf.mxu0
        %v988 = vadd.f32 %v947, %v987
        %989 = vmatmul.f32.gmra.mxu0 %v914
        %v990 = vpop.f32.mrf.mxu0
        %v991 = vadd.f32 %v950, %v990
        %992 = vmatmul.f32.gmra.mxu0 %v916
        %v993 = vpop.f32.mrf.mxu0
        %v994 = vadd.f32 %v953, %v993
        %995 = vmatmul.f32.gmra.mxu0 %v918
        %v996 = vpop.f32.mrf.mxu0
        %v997 = vadd.f32 %v956, %v996
        %998 = vmatmul.f32.gmra.mxu0 %v920
        %v999 = vpop.f32.mrf.mxu0
        %v1000 = vadd.f32 %v959, %v999
        %1001 = vmatmul.f32.gmra.mxu0 %v922
        %v1002 = vpop.f32.mrf.mxu0
        %v1003 = vadd.f32 %v962, %v1002
        %1004 = vdwg.mxu0
        %s1005 = scalar_lea.vmem %s4, 32
        %v1006 = vld [vmem:[%s1005] sm:$0xff]
        %v1007 = vld [vmem:[%s1005 + $0x8] sm:$0xff]
        %v1008 = vld [vmem:[%s1005 + $0x10] sm:$0xff]
        %v1009 = vld [vmem:[%s1005 + $0x18] sm:$0xff]
        %v1011 = vsel %vm424, %v982, 0
        %v1014 = vsel %vm424, %v985, 0
        %v1017 = vsel %vm424, %v988, 0
        %v1020 = vsel %vm424, %v991, 0
        %v1023 = vsel %vm424, %v994, 0
        %v1026 = vsel %vm424, %v997, 0
        %v1029 = vsel %vm424, %v1000, 0
        %v1032 = vsel %vm424, %v1003, 0
        %1034 = vmatpush.msra.mxu0 0.0
        %1035 = vmatpush.msra.mxu0 0.0
        %1036 = vmatpush.msra.mxu0 0.0
        %1037 = vmatpush.msra.mxu0 0.0
        %1038 = vmatpush.msra.mxu0 0.0
        %1039 = vmatpush.msra.mxu0 0.0
        %1040 = vmatpush.msra.mxu0 0.0
        %1041 = vmatpush.msra.mxu0 0.0
        %1042 = vmatpush.msra.mxu0 0.0
        %1043 = vmatpush.msra.mxu0 0.0
        %1044 = vmatpush.msra.mxu0 0.0
        %1045 = vmatpush.msra.mxu0 0.0
        %1046 = vmatpush.msra.mxu0 %v1009
        %1047 = vmatpush.msra.mxu0 %v1008
        %1048 = vmatpush.msra.mxu0 %v1007
        %1049 = vmatpush.msra.mxu0 %v1006
        %1050 = vmatmul.f32.gmra.mxu0 %v1011
        %v1051 = vpop.f32.mrf.mxu0
        %v1052 = vadd.f32 0.0, %v1051
        %1053 = vmatmul.f32.gmra.mxu0 %v1014
        %v1054 = vpop.f32.mrf.mxu0
        %v1055 = vadd.f32 0.0, %v1054
        %1056 = vmatmul.f32.gmra.mxu0 %v1017
        %v1057 = vpop.f32.mrf.mxu0
        %v1058 = vadd.f32 0.0, %v1057
        %1059 = vmatmul.f32.gmra.mxu0 %v1020
        %v1060 = vpop.f32.mrf.mxu0
        %v1061 = vadd.f32 0.0, %v1060
        %1062 = vmatmul.f32.gmra.mxu0 %v1023
        %v1063 = vpop.f32.mrf.mxu0
        %v1064 = vadd.f32 0.0, %v1063
        %1065 = vmatmul.f32.gmra.mxu0 %v1026
        %v1066 = vpop.f32.mrf.mxu0
        %v1067 = vadd.f32 0.0, %v1066
        %1068 = vmatmul.f32.gmra.mxu0 %v1029
        %v1069 = vpop.f32.mrf.mxu0
        %v1070 = vadd.f32 0.0, %v1069
        %1071 = vmatmul.f32.gmra.mxu0 %v1032
        %v1072 = vpop.f32.mrf.mxu0
        %v1073 = vadd.f32 0.0, %v1072
        %1074 = vdwg.mxu0
        %v1076 = vsel %vm424, %v879, 0
        %v1079 = vsel %vm424, %v882, 0
        %v1082 = vsel %vm424, %v885, 0
        %v1085 = vsel %vm424, %v888, 0
        %v1088 = vsel %vm424, %v891, 0
        %v1091 = vsel %vm424, %v894, 0
        %v1094 = vsel %vm424, %v897, 0
        %v1097 = vsel %vm424, %v900, 0
        %1099 = vmatpush.msra.mxu0 0.0
        %1100 = vmatpush.msra.mxu0 0.0
        %1101 = vmatpush.msra.mxu0 0.0
        %1102 = vmatpush.msra.mxu0 0.0
        %1103 = vmatpush.msra.mxu0 0.0
        %1104 = vmatpush.msra.mxu0 0.0
        %1105 = vmatpush.msra.mxu0 0.0
        %1106 = vmatpush.msra.mxu0 0.0
        %1107 = vmatpush.msra.mxu0 0.0
        %1108 = vmatpush.msra.mxu0 0.0
        %1109 = vmatpush.msra.mxu0 0.0
        %1110 = vmatpush.msra.mxu0 0.0
        %1111 = vmatpush.msra.mxu0 %v905
        %1112 = vmatpush.msra.mxu0 %v904
        %1113 = vmatpush.msra.mxu0 %v903
        %1114 = vmatpush.msra.mxu0 %v902
        %1115 = vmatmul.f32.gmra.mxu0 %v1076
        %v1116 = vpop.f32.mrf.mxu0
        %v1117 = vadd.f32 %v1052, %v1116
        %1118 = vmatmul.f32.gmra.mxu0 %v1079
        %v1119 = vpop.f32.mrf.mxu0
        %v1120 = vadd.f32 %v1055, %v1119
        %1121 = vmatmul.f32.gmra.mxu0 %v1082
        %v1122 = vpop.f32.mrf.mxu0
        %v1123 = vadd.f32 %v1058, %v1122
        %1124 = vmatmul.f32.gmra.mxu0 %v1085
        %v1125 = vpop.f32.mrf.mxu0
        %v1126 = vadd.f32 %v1061, %v1125
        %1127 = vmatmul.f32.gmra.mxu0 %v1088
        %v1128 = vpop.f32.mrf.mxu0
        %v1129 = vadd.f32 %v1064, %v1128
        %1130 = vmatmul.f32.gmra.mxu0 %v1091
        %v1131 = vpop.f32.mrf.mxu0
        %v1132 = vadd.f32 %v1067, %v1131
        %1133 = vmatmul.f32.gmra.mxu0 %v1094
        %v1134 = vpop.f32.mrf.mxu0
        %v1135 = vadd.f32 %v1070, %v1134
        %1136 = vmatmul.f32.gmra.mxu0 %v1097
        %v1137 = vpop.f32.mrf.mxu0
        %v1138 = vadd.f32 %v1073, %v1137
        %1139 = vdwg.mxu0
        %s1140 = scalar_lea.vmem %s3, 256
        %v1141 = vld [vmem:[%s1140] sm:$0xff]
        %v1142 = vld [vmem:[%s1140 + $0x8] sm:$0xff]
        %v1143 = vld [vmem:[%s1140 + $0x10] sm:$0xff]
        %v1144 = vld [vmem:[%s1140 + $0x18] sm:$0xff]
        %v1145 = vld [vmem:[%s1140 + $0x20] sm:$0xff]
        %v1146 = vld [vmem:[%s1140 + $0x28] sm:$0xff]
        %v1147 = vld [vmem:[%s1140 + $0x30] sm:$0xff]
        %v1148 = vld [vmem:[%s1140 + $0x38] sm:$0xff]
        %v1149 = vld [vmem:[%s1140 + $0x40] sm:$0xff]
        %v1150 = vld [vmem:[%s1140 + $0x48] sm:$0xff]
        %v1151 = vld [vmem:[%s1140 + $0x50] sm:$0xff]
        %v1152 = vld [vmem:[%s1140 + $0x58] sm:$0xff]
        %v1153 = vld [vmem:[%s1140 + $0x60] sm:$0xff]
        %v1154 = vld [vmem:[%s1140 + $0x68] sm:$0xff]
        %v1155 = vld [vmem:[%s1140 + $0x70] sm:$0xff]
        %v1156 = vld [vmem:[%s1140 + $0x78] sm:$0xff]
        %1157 = vmatpush.msra.mxu0 %v787
        %1158 = vmatpush.msra.mxu0 %v786
        %1159 = vmatpush.msra.mxu0 %v785
        %1160 = vmatpush.msra.mxu0 %v784
        %1161 = vmatpush.msra.mxu0 %v783
        %1162 = vmatpush.msra.mxu0 %v782
        %1163 = vmatpush.msra.mxu0 %v781
        %1164 = vmatpush.msra.mxu0 %v780
        %1165 = vmatpush.msra.mxu0 %v779
        %1166 = vmatpush.msra.mxu0 %v778
        %1167 = vmatpush.msra.mxu0 %v777
        %1168 = vmatpush.msra.mxu0 %v776
        %1169 = vmatpush.msra.mxu0 %v775
        %1170 = vmatpush.msra.mxu0 %v774
        %1171 = vmatpush.msra.mxu0 %v773
        %1172 = vmatpush.msra.mxu0 %v772
        %1173 = vmatmul.f32.gmra.mxu0 %v1141
        %v1174 = vpop.f32.mrf.mxu0
        %v1175 = vadd.f32 0.0, %v1174
        %1176 = vmatmul.f32.gmra.mxu0 %v1143
        %v1177 = vpop.f32.mrf.mxu0
        %v1178 = vadd.f32 0.0, %v1177
        %1179 = vmatmul.f32.gmra.mxu0 %v1145
        %v1180 = vpop.f32.mrf.mxu0
        %v1181 = vadd.f32 0.0, %v1180
        %1182 = vmatmul.f32.gmra.mxu0 %v1147
        %v1183 = vpop.f32.mrf.mxu0
        %v1184 = vadd.f32 0.0, %v1183
        %1185 = vmatmul.f32.gmra.mxu0 %v1149
        %v1186 = vpop.f32.mrf.mxu0
        %v1187 = vadd.f32 0.0, %v1186
        %1188 = vmatmul.f32.gmra.mxu0 %v1151
        %v1189 = vpop.f32.mrf.mxu0
        %v1190 = vadd.f32 0.0, %v1189
        %1191 = vmatmul.f32.gmra.mxu0 %v1153
        %v1192 = vpop.f32.mrf.mxu0
        %v1193 = vadd.f32 0.0, %v1192
        %1194 = vmatmul.f32.gmra.mxu0 %v1155
        %v1195 = vpop.f32.mrf.mxu0
        %v1196 = vadd.f32 0.0, %v1195
        %1197 = vdwg.mxu0
        %1198 = vmatpush.msra.mxu0 %v803
        %1199 = vmatpush.msra.mxu0 %v802
        %1200 = vmatpush.msra.mxu0 %v801
        %1201 = vmatpush.msra.mxu0 %v800
        %1202 = vmatpush.msra.mxu0 %v799
        %1203 = vmatpush.msra.mxu0 %v798
        %1204 = vmatpush.msra.mxu0 %v797
        %1205 = vmatpush.msra.mxu0 %v796
        %1206 = vmatpush.msra.mxu0 %v795
        %1207 = vmatpush.msra.mxu0 %v794
        %1208 = vmatpush.msra.mxu0 %v793
        %1209 = vmatpush.msra.mxu0 %v792
        %1210 = vmatpush.msra.mxu0 %v791
        %1211 = vmatpush.msra.mxu0 %v790
        %1212 = vmatpush.msra.mxu0 %v789
        %1213 = vmatpush.msra.mxu0 %v788
        %1214 = vmatmul.f32.gmra.mxu0 %v1142
        %v1215 = vpop.f32.mrf.mxu0
        %v1216 = vadd.f32 %v1175, %v1215
        %1217 = vmatmul.f32.gmra.mxu0 %v1144
        %v1218 = vpop.f32.mrf.mxu0
        %v1219 = vadd.f32 %v1178, %v1218
        %1220 = vmatmul.f32.gmra.mxu0 %v1146
        %v1221 = vpop.f32.mrf.mxu0
        %v1222 = vadd.f32 %v1181, %v1221
        %1223 = vmatmul.f32.gmra.mxu0 %v1148
        %v1224 = vpop.f32.mrf.mxu0
        %v1225 = vadd.f32 %v1184, %v1224
        %1226 = vmatmul.f32.gmra.mxu0 %v1150
        %v1227 = vpop.f32.mrf.mxu0
        %v1228 = vadd.f32 %v1187, %v1227
        %1229 = vmatmul.f32.gmra.mxu0 %v1152
        %v1230 = vpop.f32.mrf.mxu0
        %v1231 = vadd.f32 %v1190, %v1230
        %1232 = vmatmul.f32.gmra.mxu0 %v1154
        %v1233 = vpop.f32.mrf.mxu0
        %v1234 = vadd.f32 %v1193, %v1233
        %1235 = vmatmul.f32.gmra.mxu0 %v1156
        %v1236 = vpop.f32.mrf.mxu0
        %v1237 = vadd.f32 %v1196, %v1236
        %1238 = vdwg.mxu0
        %s1239 = scalar_lea.vmem %s4, 64
        %v1240 = vld [vmem:[%s1239] sm:$0xff]
        %v1241 = vld [vmem:[%s1239 + $0x8] sm:$0xff]
        %v1242 = vld [vmem:[%s1239 + $0x10] sm:$0xff]
        %v1243 = vld [vmem:[%s1239 + $0x18] sm:$0xff]
        %v1245 = vsel %vm424, %v1216, 0
        %v1248 = vsel %vm424, %v1219, 0
        %v1251 = vsel %vm424, %v1222, 0
        %v1254 = vsel %vm424, %v1225, 0
        %v1257 = vsel %vm424, %v1228, 0
        %v1260 = vsel %vm424, %v1231, 0
        %v1263 = vsel %vm424, %v1234, 0
        %v1266 = vsel %vm424, %v1237, 0
        %1268 = vmatpush.msra.mxu0 0.0
        %1269 = vmatpush.msra.mxu0 0.0
        %1270 = vmatpush.msra.mxu0 0.0
        %1271 = vmatpush.msra.mxu0 0.0
        %1272 = vmatpush.msra.mxu0 0.0
        %1273 = vmatpush.msra.mxu0 0.0
        %1274 = vmatpush.msra.mxu0 0.0
        %1275 = vmatpush.msra.mxu0 0.0
        %1276 = vmatpush.msra.mxu0 0.0
        %1277 = vmatpush.msra.mxu0 0.0
        %1278 = vmatpush.msra.mxu0 0.0
        %1279 = vmatpush.msra.mxu0 0.0
        %1280 = vmatpush.msra.mxu0 %v1243
        %1281 = vmatpush.msra.mxu0 %v1242
        %1282 = vmatpush.msra.mxu0 %v1241
        %1283 = vmatpush.msra.mxu0 %v1240
        %1284 = vmatmul.f32.gmra.mxu0 %v1245
        %v1285 = vpop.f32.mrf.mxu0
        %v1286 = vadd.f32 0.0, %v1285
        %1287 = vmatmul.f32.gmra.mxu0 %v1248
        %v1288 = vpop.f32.mrf.mxu0
        %v1289 = vadd.f32 0.0, %v1288
        %1290 = vmatmul.f32.gmra.mxu0 %v1251
        %v1291 = vpop.f32.mrf.mxu0
        %v1292 = vadd.f32 0.0, %v1291
        %1293 = vmatmul.f32.gmra.mxu0 %v1254
        %v1294 = vpop.f32.mrf.mxu0
        %v1295 = vadd.f32 0.0, %v1294
        %1296 = vmatmul.f32.gmra.mxu0 %v1257
        %v1297 = vpop.f32.mrf.mxu0
        %v1298 = vadd.f32 0.0, %v1297
        %1299 = vmatmul.f32.gmra.mxu0 %v1260
        %v1300 = vpop.f32.mrf.mxu0
        %v1301 = vadd.f32 0.0, %v1300
        %1302 = vmatmul.f32.gmra.mxu0 %v1263
        %v1303 = vpop.f32.mrf.mxu0
        %v1304 = vadd.f32 0.0, %v1303
        %1305 = vmatmul.f32.gmra.mxu0 %v1266
        %v1306 = vpop.f32.mrf.mxu0
        %v1307 = vadd.f32 0.0, %v1306
        %1308 = vdwg.mxu0
        %v1309 = vadd.f32 %v1117, %v1286
        %v1310 = vadd.f32 %v1120, %v1289
        %v1311 = vadd.f32 %v1123, %v1292
        %v1312 = vadd.f32 %v1126, %v1295
        %v1313 = vadd.f32 %v1129, %v1298
        %v1314 = vadd.f32 %v1132, %v1301
        %v1315 = vadd.f32 %v1135, %v1304
        %v1316 = vadd.f32 %v1138, %v1307
        %s1317 = scalar_lea.vmem %s3, 384
        %v1318 = vld [vmem:[%s1317] sm:$0xff]
        %v1319 = vld [vmem:[%s1317 + $0x8] sm:$0xff]
        %v1320 = vld [vmem:[%s1317 + $0x10] sm:$0xff]
        %v1321 = vld [vmem:[%s1317 + $0x18] sm:$0xff]
        %v1322 = vld [vmem:[%s1317 + $0x20] sm:$0xff]
        %v1323 = vld [vmem:[%s1317 + $0x28] sm:$0xff]
        %v1324 = vld [vmem:[%s1317 + $0x30] sm:$0xff]
        %v1325 = vld [vmem:[%s1317 + $0x38] sm:$0xff]
        %v1326 = vld [vmem:[%s1317 + $0x40] sm:$0xff]
        %v1327 = vld [vmem:[%s1317 + $0x48] sm:$0xff]
        %v1328 = vld [vmem:[%s1317 + $0x50] sm:$0xff]
        %v1329 = vld [vmem:[%s1317 + $0x58] sm:$0xff]
        %v1330 = vld [vmem:[%s1317 + $0x60] sm:$0xff]
        %v1331 = vld [vmem:[%s1317 + $0x68] sm:$0xff]
        %v1332 = vld [vmem:[%s1317 + $0x70] sm:$0xff]
        %v1333 = vld [vmem:[%s1317 + $0x78] sm:$0xff]
        %1334 = vmatpush.msra.mxu0 %v787
        %1335 = vmatpush.msra.mxu0 %v786
        %1336 = vmatpush.msra.mxu0 %v785
        %1337 = vmatpush.msra.mxu0 %v784
        %1338 = vmatpush.msra.mxu0 %v783
        %1339 = vmatpush.msra.mxu0 %v782
        %1340 = vmatpush.msra.mxu0 %v781
        %1341 = vmatpush.msra.mxu0 %v780
        %1342 = vmatpush.msra.mxu0 %v779
        %1343 = vmatpush.msra.mxu0 %v778
        %1344 = vmatpush.msra.mxu0 %v777
        %1345 = vmatpush.msra.mxu0 %v776
        %1346 = vmatpush.msra.mxu0 %v775
        %1347 = vmatpush.msra.mxu0 %v774
        %1348 = vmatpush.msra.mxu0 %v773
        %1349 = vmatpush.msra.mxu0 %v772
        %1350 = vmatmul.f32.gmra.mxu0 %v1318
        %v1351 = vpop.f32.mrf.mxu0
        %v1352 = vadd.f32 0.0, %v1351
        %1353 = vmatmul.f32.gmra.mxu0 %v1320
        %v1354 = vpop.f32.mrf.mxu0
        %v1355 = vadd.f32 0.0, %v1354
        %1356 = vmatmul.f32.gmra.mxu0 %v1322
        %v1357 = vpop.f32.mrf.mxu0
        %v1358 = vadd.f32 0.0, %v1357
        %1359 = vmatmul.f32.gmra.mxu0 %v1324
        %v1360 = vpop.f32.mrf.mxu0
        %v1361 = vadd.f32 0.0, %v1360
        %1362 = vmatmul.f32.gmra.mxu0 %v1326
        %v1363 = vpop.f32.mrf.mxu0
        %v1364 = vadd.f32 0.0, %v1363
        %1365 = vmatmul.f32.gmra.mxu0 %v1328
        %v1366 = vpop.f32.mrf.mxu0
        %v1367 = vadd.f32 0.0, %v1366
        %1368 = vmatmul.f32.gmra.mxu0 %v1330
        %v1369 = vpop.f32.mrf.mxu0
        %v1370 = vadd.f32 0.0, %v1369
        %1371 = vmatmul.f32.gmra.mxu0 %v1332
        %v1372 = vpop.f32.mrf.mxu0
        %v1373 = vadd.f32 0.0, %v1372
        %1374 = vdwg.mxu0
        %1375 = vmatpush.msra.mxu0 %v803
        %1376 = vmatpush.msra.mxu0 %v802
        %1377 = vmatpush.msra.mxu0 %v801
        %1378 = vmatpush.msra.mxu0 %v800
        %1379 = vmatpush.msra.mxu0 %v799
        %1380 = vmatpush.msra.mxu0 %v798
        %1381 = vmatpush.msra.mxu0 %v797
        %1382 = vmatpush.msra.mxu0 %v796
        %1383 = vmatpush.msra.mxu0 %v795
        %1384 = vmatpush.msra.mxu0 %v794
        %1385 = vmatpush.msra.mxu0 %v793
        %1386 = vmatpush.msra.mxu0 %v792
        %1387 = vmatpush.msra.mxu0 %v791
        %1388 = vmatpush.msra.mxu0 %v790
        %1389 = vmatpush.msra.mxu0 %v789
        %1390 = vmatpush.msra.mxu0 %v788
        %1391 = vmatmul.f32.gmra.mxu0 %v1319
        %v1392 = vpop.f32.mrf.mxu0
        %v1393 = vadd.f32 %v1352, %v1392
        %1394 = vmatmul.f32.gmra.mxu0 %v1321
        %v1395 = vpop.f32.mrf.mxu0
        %v1396 = vadd.f32 %v1355, %v1395
        %1397 = vmatmul.f32.gmra.mxu0 %v1323
        %v1398 = vpop.f32.mrf.mxu0
        %v1399 = vadd.f32 %v1358, %v1398
        %1400 = vmatmul.f32.gmra.mxu0 %v1325
        %v1401 = vpop.f32.mrf.mxu0
        %v1402 = vadd.f32 %v1361, %v1401
        %1403 = vmatmul.f32.gmra.mxu0 %v1327
        %v1404 = vpop.f32.mrf.mxu0
        %v1405 = vadd.f32 %v1364, %v1404
        %1406 = vmatmul.f32.gmra.mxu0 %v1329
        %v1407 = vpop.f32.mrf.mxu0
        %v1408 = vadd.f32 %v1367, %v1407
        %1409 = vmatmul.f32.gmra.mxu0 %v1331
        %v1410 = vpop.f32.mrf.mxu0
        %v1411 = vadd.f32 %v1370, %v1410
        %1412 = vmatmul.f32.gmra.mxu0 %v1333
        %v1413 = vpop.f32.mrf.mxu0
        %v1414 = vadd.f32 %v1373, %v1413
        %1415 = vdwg.mxu0
        %s1416 = scalar_lea.vmem %s4, 96
        %v1417 = vld [vmem:[%s1416] sm:$0xff]
        %v1418 = vld [vmem:[%s1416 + $0x8] sm:$0xff]
        %v1419 = vld [vmem:[%s1416 + $0x10] sm:$0xff]
        %v1420 = vld [vmem:[%s1416 + $0x18] sm:$0xff]
        %v1422 = vsel %vm424, %v1393, 0
        %v1425 = vsel %vm424, %v1396, 0
        %v1428 = vsel %vm424, %v1399, 0
        %v1431 = vsel %vm424, %v1402, 0
        %v1434 = vsel %vm424, %v1405, 0
        %v1437 = vsel %vm424, %v1408, 0
        %v1440 = vsel %vm424, %v1411, 0
        %v1443 = vsel %vm424, %v1414, 0
        %1445 = vmatpush.msra.mxu0 0.0
        %1446 = vmatpush.msra.mxu0 0.0
        %1447 = vmatpush.msra.mxu0 0.0
        %1448 = vmatpush.msra.mxu0 0.0
        %1449 = vmatpush.msra.mxu0 0.0
        %1450 = vmatpush.msra.mxu0 0.0
        %1451 = vmatpush.msra.mxu0 0.0
        %1452 = vmatpush.msra.mxu0 0.0
        %1453 = vmatpush.msra.mxu0 0.0
        %1454 = vmatpush.msra.mxu0 0.0
        %1455 = vmatpush.msra.mxu0 0.0
        %1456 = vmatpush.msra.mxu0 0.0
        %1457 = vmatpush.msra.mxu0 %v1420
        %1458 = vmatpush.msra.mxu0 %v1419
        %1459 = vmatpush.msra.mxu0 %v1418
        %1460 = vmatpush.msra.mxu0 %v1417
        %1461 = vmatmul.f32.gmra.mxu0 %v1422
        %v1462 = vpop.f32.mrf.mxu0
        %v1463 = vadd.f32 0.0, %v1462
        %1464 = vmatmul.f32.gmra.mxu0 %v1425
        %v1465 = vpop.f32.mrf.mxu0
        %v1466 = vadd.f32 0.0, %v1465
        %1467 = vmatmul.f32.gmra.mxu0 %v1428
        %v1468 = vpop.f32.mrf.mxu0
        %v1469 = vadd.f32 0.0, %v1468
        %1470 = vmatmul.f32.gmra.mxu0 %v1431
        %v1471 = vpop.f32.mrf.mxu0
        %v1472 = vadd.f32 0.0, %v1471
        %1473 = vmatmul.f32.gmra.mxu0 %v1434
        %v1474 = vpop.f32.mrf.mxu0
        %v1475 = vadd.f32 0.0, %v1474
        %1476 = vmatmul.f32.gmra.mxu0 %v1437
        %v1477 = vpop.f32.mrf.mxu0
        %v1478 = vadd.f32 0.0, %v1477
        %1479 = vmatmul.f32.gmra.mxu0 %v1440
        %v1480 = vpop.f32.mrf.mxu0
        %v1481 = vadd.f32 0.0, %v1480
        %1482 = vmatmul.f32.gmra.mxu0 %v1443
        %v1483 = vpop.f32.mrf.mxu0
        %v1484 = vadd.f32 0.0, %v1483
        %1485 = vdwg.mxu0
        %v1486 = vadd.f32 %v1309, %v1463
        %v1487 = vadd.f32 %v1310, %v1466
        %v1488 = vadd.f32 %v1311, %v1469
        %v1489 = vadd.f32 %v1312, %v1472
        %v1490 = vadd.f32 %v1313, %v1475
        %v1491 = vadd.f32 %v1314, %v1478
        %v1492 = vadd.f32 %v1315, %v1481
        %v1493 = vadd.f32 %v1316, %v1484
        %s1494 = scalar_lea.vmem %s3, 512
        %v1495 = vld [vmem:[%s1494] sm:$0xff]
        %v1496 = vld [vmem:[%s1494 + $0x8] sm:$0xff]
        %v1497 = vld [vmem:[%s1494 + $0x10] sm:$0xff]
        %v1498 = vld [vmem:[%s1494 + $0x18] sm:$0xff]
        %v1499 = vld [vmem:[%s1494 + $0x20] sm:$0xff]
        %v1500 = vld [vmem:[%s1494 + $0x28] sm:$0xff]
        %v1501 = vld [vmem:[%s1494 + $0x30] sm:$0xff]
        %v1502 = vld [vmem:[%s1494 + $0x38] sm:$0xff]
        %v1503 = vld [vmem:[%s1494 + $0x40] sm:$0xff]
        %v1504 = vld [vmem:[%s1494 + $0x48] sm:$0xff]
        %v1505 = vld [vmem:[%s1494 + $0x50] sm:$0xff]
        %v1506 = vld [vmem:[%s1494 + $0x58] sm:$0xff]
        %v1507 = vld [vmem:[%s1494 + $0x60] sm:$0xff]
        %v1508 = vld [vmem:[%s1494 + $0x68] sm:$0xff]
        %v1509 = vld [vmem:[%s1494 + $0x70] sm:$0xff]
        %v1510 = vld [vmem:[%s1494 + $0x78] sm:$0xff]
        %1511 = vmatpush.msra.mxu0 %v787
        %1512 = vmatpush.msra.mxu0 %v786
        %1513 = vmatpush.msra.mxu0 %v785
        %1514 = vmatpush.msra.mxu0 %v784
        %1515 = vmatpush.msra.mxu0 %v783
        %1516 = vmatpush.msra.mxu0 %v782
        %1517 = vmatpush.msra.mxu0 %v781
        %1518 = vmatpush.msra.mxu0 %v780
        %1519 = vmatpush.msra.mxu0 %v779
        %1520 = vmatpush.msra.mxu0 %v778
        %1521 = vmatpush.msra.mxu0 %v777
        %1522 = vmatpush.msra.mxu0 %v776
        %1523 = vmatpush.msra.mxu0 %v775
        %1524 = vmatpush.msra.mxu0 %v774
        %1525 = vmatpush.msra.mxu0 %v773
        %1526 = vmatpush.msra.mxu0 %v772
        %1527 = vmatmul.f32.gmra.mxu0 %v1495
        %v1528 = vpop.f32.mrf.mxu0
        %v1529 = vadd.f32 0.0, %v1528
        %1530 = vmatmul.f32.gmra.mxu0 %v1497
        %v1531 = vpop.f32.mrf.mxu0
        %v1532 = vadd.f32 0.0, %v1531
        %1533 = vmatmul.f32.gmra.mxu0 %v1499
        %v1534 = vpop.f32.mrf.mxu0
        %v1535 = vadd.f32 0.0, %v1534
        %1536 = vmatmul.f32.gmra.mxu0 %v1501
        %v1537 = vpop.f32.mrf.mxu0
        %v1538 = vadd.f32 0.0, %v1537
        %1539 = vmatmul.f32.gmra.mxu0 %v1503
        %v1540 = vpop.f32.mrf.mxu0
        %v1541 = vadd.f32 0.0, %v1540
        %1542 = vmatmul.f32.gmra.mxu0 %v1505
        %v1543 = vpop.f32.mrf.mxu0
        %v1544 = vadd.f32 0.0, %v1543
        %1545 = vmatmul.f32.gmra.mxu0 %v1507
        %v1546 = vpop.f32.mrf.mxu0
        %v1547 = vadd.f32 0.0, %v1546
        %1548 = vmatmul.f32.gmra.mxu0 %v1509
        %v1549 = vpop.f32.mrf.mxu0
        %v1550 = vadd.f32 0.0, %v1549
        %1551 = vdwg.mxu0
        %1552 = vmatpush.msra.mxu0 %v803
        %1553 = vmatpush.msra.mxu0 %v802
        %1554 = vmatpush.msra.mxu0 %v801
        %1555 = vmatpush.msra.mxu0 %v800
        %1556 = vmatpush.msra.mxu0 %v799
        %1557 = vmatpush.msra.mxu0 %v798
        %1558 = vmatpush.msra.mxu0 %v797
        %1559 = vmatpush.msra.mxu0 %v796
        %1560 = vmatpush.msra.mxu0 %v795
        %1561 = vmatpush.msra.mxu0 %v794
        %1562 = vmatpush.msra.mxu0 %v793
        %1563 = vmatpush.msra.mxu0 %v792
        %1564 = vmatpush.msra.mxu0 %v791
        %1565 = vmatpush.msra.mxu0 %v790
        %1566 = vmatpush.msra.mxu0 %v789
        %1567 = vmatpush.msra.mxu0 %v788
        %1568 = vmatmul.f32.gmra.mxu0 %v1496
        %v1569 = vpop.f32.mrf.mxu0
        %v1570 = vadd.f32 %v1529, %v1569
        %1571 = vmatmul.f32.gmra.mxu0 %v1498
        %v1572 = vpop.f32.mrf.mxu0
        %v1573 = vadd.f32 %v1532, %v1572
        %1574 = vmatmul.f32.gmra.mxu0 %v1500
        %v1575 = vpop.f32.mrf.mxu0
        %v1576 = vadd.f32 %v1535, %v1575
        %1577 = vmatmul.f32.gmra.mxu0 %v1502
        %v1578 = vpop.f32.mrf.mxu0
        %v1579 = vadd.f32 %v1538, %v1578
        %1580 = vmatmul.f32.gmra.mxu0 %v1504
        %v1581 = vpop.f32.mrf.mxu0
        %v1582 = vadd.f32 %v1541, %v1581
        %1583 = vmatmul.f32.gmra.mxu0 %v1506
        %v1584 = vpop.f32.mrf.mxu0
        %v1585 = vadd.f32 %v1544, %v1584
        %1586 = vmatmul.f32.gmra.mxu0 %v1508
        %v1587 = vpop.f32.mrf.mxu0
        %v1588 = vadd.f32 %v1547, %v1587
        %1589 = vmatmul.f32.gmra.mxu0 %v1510
        %v1590 = vpop.f32.mrf.mxu0
        %v1591 = vadd.f32 %v1550, %v1590
        %1592 = vdwg.mxu0
        %s1593 = scalar_lea.vmem %s4, 128
        %v1594 = vld [vmem:[%s1593] sm:$0xff]
        %v1595 = vld [vmem:[%s1593 + $0x8] sm:$0xff]
        %v1596 = vld [vmem:[%s1593 + $0x10] sm:$0xff]
        %v1597 = vld [vmem:[%s1593 + $0x18] sm:$0xff]
        %v1599 = vsel %vm424, %v1570, 0
        %v1602 = vsel %vm424, %v1573, 0
        %v1605 = vsel %vm424, %v1576, 0
        %v1608 = vsel %vm424, %v1579, 0
        %v1611 = vsel %vm424, %v1582, 0
        %v1614 = vsel %vm424, %v1585, 0
        %v1617 = vsel %vm424, %v1588, 0
        %v1620 = vsel %vm424, %v1591, 0
        %1622 = vmatpush.msra.mxu0 0.0
        %1623 = vmatpush.msra.mxu0 0.0
        %1624 = vmatpush.msra.mxu0 0.0
        %1625 = vmatpush.msra.mxu0 0.0
        %1626 = vmatpush.msra.mxu0 0.0
        %1627 = vmatpush.msra.mxu0 0.0
        %1628 = vmatpush.msra.mxu0 0.0
        %1629 = vmatpush.msra.mxu0 0.0
        %1630 = vmatpush.msra.mxu0 0.0
        %1631 = vmatpush.msra.mxu0 0.0
        %1632 = vmatpush.msra.mxu0 0.0
        %1633 = vmatpush.msra.mxu0 0.0
        %1634 = vmatpush.msra.mxu0 %v1597
        %1635 = vmatpush.msra.mxu0 %v1596
        %1636 = vmatpush.msra.mxu0 %v1595
        %1637 = vmatpush.msra.mxu0 %v1594
        %1638 = vmatmul.f32.gmra.mxu0 %v1599
        %v1639 = vpop.f32.mrf.mxu0
        %v1640 = vadd.f32 0.0, %v1639
        %1641 = vmatmul.f32.gmra.mxu0 %v1602
        %v1642 = vpop.f32.mrf.mxu0
        %v1643 = vadd.f32 0.0, %v1642
        %1644 = vmatmul.f32.gmra.mxu0 %v1605
        %v1645 = vpop.f32.mrf.mxu0
        %v1646 = vadd.f32 0.0, %v1645
        %1647 = vmatmul.f32.gmra.mxu0 %v1608
        %v1648 = vpop.f32.mrf.mxu0
        %v1649 = vadd.f32 0.0, %v1648
        %1650 = vmatmul.f32.gmra.mxu0 %v1611
        %v1651 = vpop.f32.mrf.mxu0
        %v1652 = vadd.f32 0.0, %v1651
        %1653 = vmatmul.f32.gmra.mxu0 %v1614
        %v1654 = vpop.f32.mrf.mxu0
        %v1655 = vadd.f32 0.0, %v1654
        %1656 = vmatmul.f32.gmra.mxu0 %v1617
        %v1657 = vpop.f32.mrf.mxu0
        %v1658 = vadd.f32 0.0, %v1657
        %1659 = vmatmul.f32.gmra.mxu0 %v1620
        %v1660 = vpop.f32.mrf.mxu0
        %v1661 = vadd.f32 0.0, %v1660
        %1662 = vdwg.mxu0
        %v1663 = vadd.f32 %v1486, %v1640
        %v1664 = vadd.f32 %v1487, %v1643
        %v1665 = vadd.f32 %v1488, %v1646
        %v1666 = vadd.f32 %v1489, %v1649
        %v1667 = vadd.f32 %v1490, %v1652
        %v1668 = vadd.f32 %v1491, %v1655
        %v1669 = vadd.f32 %v1492, %v1658
        %v1670 = vadd.f32 %v1493, %v1661
        %s1671 = scalar_lea.vmem %s3, 640
        %v1672 = vld [vmem:[%s1671] sm:$0xff]
        %v1673 = vld [vmem:[%s1671 + $0x8] sm:$0xff]
        %v1674 = vld [vmem:[%s1671 + $0x10] sm:$0xff]
        %v1675 = vld [vmem:[%s1671 + $0x18] sm:$0xff]
        %v1676 = vld [vmem:[%s1671 + $0x20] sm:$0xff]
        %v1677 = vld [vmem:[%s1671 + $0x28] sm:$0xff]
        %v1678 = vld [vmem:[%s1671 + $0x30] sm:$0xff]
        %v1679 = vld [vmem:[%s1671 + $0x38] sm:$0xff]
        %v1680 = vld [vmem:[%s1671 + $0x40] sm:$0xff]
        %v1681 = vld [vmem:[%s1671 + $0x48] sm:$0xff]
        %v1682 = vld [vmem:[%s1671 + $0x50] sm:$0xff]
        %v1683 = vld [vmem:[%s1671 + $0x58] sm:$0xff]
        %v1684 = vld [vmem:[%s1671 + $0x60] sm:$0xff]
        %v1685 = vld [vmem:[%s1671 + $0x68] sm:$0xff]
        %v1686 = vld [vmem:[%s1671 + $0x70] sm:$0xff]
        %v1687 = vld [vmem:[%s1671 + $0x78] sm:$0xff]
        %1688 = vmatpush.msra.mxu0 %v787
        %1689 = vmatpush.msra.mxu0 %v786
        %1690 = vmatpush.msra.mxu0 %v785
        %1691 = vmatpush.msra.mxu0 %v784
        %1692 = vmatpush.msra.mxu0 %v783
        %1693 = vmatpush.msra.mxu0 %v782
        %1694 = vmatpush.msra.mxu0 %v781
        %1695 = vmatpush.msra.mxu0 %v780
        %1696 = vmatpush.msra.mxu0 %v779
        %1697 = vmatpush.msra.mxu0 %v778
        %1698 = vmatpush.msra.mxu0 %v777
        %1699 = vmatpush.msra.mxu0 %v776
        %1700 = vmatpush.msra.mxu0 %v775
        %1701 = vmatpush.msra.mxu0 %v774
        %1702 = vmatpush.msra.mxu0 %v773
        %1703 = vmatpush.msra.mxu0 %v772
        %1704 = vmatmul.f32.gmra.mxu0 %v1672
        %v1705 = vpop.f32.mrf.mxu0
        %v1706 = vadd.f32 0.0, %v1705
        %1707 = vmatmul.f32.gmra.mxu0 %v1674
        %v1708 = vpop.f32.mrf.mxu0
        %v1709 = vadd.f32 0.0, %v1708
        %1710 = vmatmul.f32.gmra.mxu0 %v1676
        %v1711 = vpop.f32.mrf.mxu0
        %v1712 = vadd.f32 0.0, %v1711
        %1713 = vmatmul.f32.gmra.mxu0 %v1678
        %v1714 = vpop.f32.mrf.mxu0
        %v1715 = vadd.f32 0.0, %v1714
        %1716 = vmatmul.f32.gmra.mxu0 %v1680
        %v1717 = vpop.f32.mrf.mxu0
        %v1718 = vadd.f32 0.0, %v1717
        %1719 = vmatmul.f32.gmra.mxu0 %v1682
        %v1720 = vpop.f32.mrf.mxu0
        %v1721 = vadd.f32 0.0, %v1720
        %1722 = vmatmul.f32.gmra.mxu0 %v1684
        %v1723 = vpop.f32.mrf.mxu0
        %v1724 = vadd.f32 0.0, %v1723
        %1725 = vmatmul.f32.gmra.mxu0 %v1686
        %v1726 = vpop.f32.mrf.mxu0
        %v1727 = vadd.f32 0.0, %v1726
        %1728 = vdwg.mxu0
        %1729 = vmatpush.msra.mxu0 %v803
        %1730 = vmatpush.msra.mxu0 %v802
        %1731 = vmatpush.msra.mxu0 %v801
        %1732 = vmatpush.msra.mxu0 %v800
        %1733 = vmatpush.msra.mxu0 %v799
        %1734 = vmatpush.msra.mxu0 %v798
        %1735 = vmatpush.msra.mxu0 %v797
        %1736 = vmatpush.msra.mxu0 %v796
        %1737 = vmatpush.msra.mxu0 %v795
        %1738 = vmatpush.msra.mxu0 %v794
        %1739 = vmatpush.msra.mxu0 %v793
        %1740 = vmatpush.msra.mxu0 %v792
        %1741 = vmatpush.msra.mxu0 %v791
        %1742 = vmatpush.msra.mxu0 %v790
        %1743 = vmatpush.msra.mxu0 %v789
        %1744 = vmatpush.msra.mxu0 %v788
        %1745 = vmatmul.f32.gmra.mxu0 %v1673
        %v1746 = vpop.f32.mrf.mxu0
        %v1747 = vadd.f32 %v1706, %v1746
        %1748 = vmatmul.f32.gmra.mxu0 %v1675
        %v1749 = vpop.f32.mrf.mxu0
        %v1750 = vadd.f32 %v1709, %v1749
        %1751 = vmatmul.f32.gmra.mxu0 %v1677
        %v1752 = vpop.f32.mrf.mxu0
        %v1753 = vadd.f32 %v1712, %v1752
        %1754 = vmatmul.f32.gmra.mxu0 %v1679
        %v1755 = vpop.f32.mrf.mxu0
        %v1756 = vadd.f32 %v1715, %v1755
        %1757 = vmatmul.f32.gmra.mxu0 %v1681
        %v1758 = vpop.f32.mrf.mxu0
        %v1759 = vadd.f32 %v1718, %v1758
        %1760 = vmatmul.f32.gmra.mxu0 %v1683
        %v1761 = vpop.f32.mrf.mxu0
        %v1762 = vadd.f32 %v1721, %v1761
        %1763 = vmatmul.f32.gmra.mxu0 %v1685
        %v1764 = vpop.f32.mrf.mxu0
        %v1765 = vadd.f32 %v1724, %v1764
        %1766 = vmatmul.f32.gmra.mxu0 %v1687
        %v1767 = vpop.f32.mrf.mxu0
        %v1768 = vadd.f32 %v1727, %v1767
        %1769 = vdwg.mxu0
        %s1770 = scalar_lea.vmem %s4, 160
        %v1771 = vld [vmem:[%s1770] sm:$0xff]
        %v1772 = vld [vmem:[%s1770 + $0x8] sm:$0xff]
        %v1773 = vld [vmem:[%s1770 + $0x10] sm:$0xff]
        %v1774 = vld [vmem:[%s1770 + $0x18] sm:$0xff]
        %v1776 = vsel %vm424, %v1747, 0
        %v1779 = vsel %vm424, %v1750, 0
        %v1782 = vsel %vm424, %v1753, 0
        %v1785 = vsel %vm424, %v1756, 0
        %v1788 = vsel %vm424, %v1759, 0
        %v1791 = vsel %vm424, %v1762, 0
        %v1794 = vsel %vm424, %v1765, 0
        %v1797 = vsel %vm424, %v1768, 0
        %1799 = vmatpush.msra.mxu0 0.0
        %1800 = vmatpush.msra.mxu0 0.0
        %1801 = vmatpush.msra.mxu0 0.0
        %1802 = vmatpush.msra.mxu0 0.0
        %1803 = vmatpush.msra.mxu0 0.0
        %1804 = vmatpush.msra.mxu0 0.0
        %1805 = vmatpush.msra.mxu0 0.0
        %1806 = vmatpush.msra.mxu0 0.0
        %1807 = vmatpush.msra.mxu0 0.0
        %1808 = vmatpush.msra.mxu0 0.0
        %1809 = vmatpush.msra.mxu0 0.0
        %1810 = vmatpush.msra.mxu0 0.0
        %1811 = vmatpush.msra.mxu0 %v1774
        %1812 = vmatpush.msra.mxu0 %v1773
        %1813 = vmatpush.msra.mxu0 %v1772
        %1814 = vmatpush.msra.mxu0 %v1771
        %1815 = vmatmul.f32.gmra.mxu0 %v1776
        %v1816 = vpop.f32.mrf.mxu0
        %v1817 = vadd.f32 0.0, %v1816
        %1818 = vmatmul.f32.gmra.mxu0 %v1779
        %v1819 = vpop.f32.mrf.mxu0
        %v1820 = vadd.f32 0.0, %v1819
        %1821 = vmatmul.f32.gmra.mxu0 %v1782
        %v1822 = vpop.f32.mrf.mxu0
        %v1823 = vadd.f32 0.0, %v1822
        %1824 = vmatmul.f32.gmra.mxu0 %v1785
        %v1825 = vpop.f32.mrf.mxu0
        %v1826 = vadd.f32 0.0, %v1825
        %1827 = vmatmul.f32.gmra.mxu0 %v1788
        %v1828 = vpop.f32.mrf.mxu0
        %v1829 = vadd.f32 0.0, %v1828
        %1830 = vmatmul.f32.gmra.mxu0 %v1791
        %v1831 = vpop.f32.mrf.mxu0
        %v1832 = vadd.f32 0.0, %v1831
        %1833 = vmatmul.f32.gmra.mxu0 %v1794
        %v1834 = vpop.f32.mrf.mxu0
        %v1835 = vadd.f32 0.0, %v1834
        %1836 = vmatmul.f32.gmra.mxu0 %v1797
        %v1837 = vpop.f32.mrf.mxu0
        %v1838 = vadd.f32 0.0, %v1837
        %1839 = vdwg.mxu0
        %v1840 = vadd.f32 %v1663, %v1817
        %v1841 = vadd.f32 %v1664, %v1820
        %v1842 = vadd.f32 %v1665, %v1823
        %v1843 = vadd.f32 %v1666, %v1826
        %v1844 = vadd.f32 %v1667, %v1829
        %v1845 = vadd.f32 %v1668, %v1832
        %v1846 = vadd.f32 %v1669, %v1835
        %v1847 = vadd.f32 %v1670, %v1838
        %s1848 = scalar_lea.vmem %s3, 768
        %v1849 = vld [vmem:[%s1848] sm:$0xff]
        %v1850 = vld [vmem:[%s1848 + $0x8] sm:$0xff]
        %v1851 = vld [vmem:[%s1848 + $0x10] sm:$0xff]
        %v1852 = vld [vmem:[%s1848 + $0x18] sm:$0xff]
        %v1853 = vld [vmem:[%s1848 + $0x20] sm:$0xff]
        %v1854 = vld [vmem:[%s1848 + $0x28] sm:$0xff]
        %v1855 = vld [vmem:[%s1848 + $0x30] sm:$0xff]
        %v1856 = vld [vmem:[%s1848 + $0x38] sm:$0xff]
        %v1857 = vld [vmem:[%s1848 + $0x40] sm:$0xff]
        %v1858 = vld [vmem:[%s1848 + $0x48] sm:$0xff]
        %v1859 = vld [vmem:[%s1848 + $0x50] sm:$0xff]
        %v1860 = vld [vmem:[%s1848 + $0x58] sm:$0xff]
        %v1861 = vld [vmem:[%s1848 + $0x60] sm:$0xff]
        %v1862 = vld [vmem:[%s1848 + $0x68] sm:$0xff]
        %v1863 = vld [vmem:[%s1848 + $0x70] sm:$0xff]
        %v1864 = vld [vmem:[%s1848 + $0x78] sm:$0xff]
        %1865 = vmatpush.msra.mxu0 %v787
        %1866 = vmatpush.msra.mxu0 %v786
        %1867 = vmatpush.msra.mxu0 %v785
        %1868 = vmatpush.msra.mxu0 %v784
        %1869 = vmatpush.msra.mxu0 %v783
        %1870 = vmatpush.msra.mxu0 %v782
        %1871 = vmatpush.msra.mxu0 %v781
        %1872 = vmatpush.msra.mxu0 %v780
        %1873 = vmatpush.msra.mxu0 %v779
        %1874 = vmatpush.msra.mxu0 %v778
        %1875 = vmatpush.msra.mxu0 %v777
        %1876 = vmatpush.msra.mxu0 %v776
        %1877 = vmatpush.msra.mxu0 %v775
        %1878 = vmatpush.msra.mxu0 %v774
        %1879 = vmatpush.msra.mxu0 %v773
        %1880 = vmatpush.msra.mxu0 %v772
        %1881 = vmatmul.f32.gmra.mxu0 %v1849
        %v1882 = vpop.f32.mrf.mxu0
        %v1883 = vadd.f32 0.0, %v1882
        %1884 = vmatmul.f32.gmra.mxu0 %v1851
        %v1885 = vpop.f32.mrf.mxu0
        %v1886 = vadd.f32 0.0, %v1885
        %1887 = vmatmul.f32.gmra.mxu0 %v1853
        %v1888 = vpop.f32.mrf.mxu0
        %v1889 = vadd.f32 0.0, %v1888
        %1890 = vmatmul.f32.gmra.mxu0 %v1855
        %v1891 = vpop.f32.mrf.mxu0
        %v1892 = vadd.f32 0.0, %v1891
        %1893 = vmatmul.f32.gmra.mxu0 %v1857
        %v1894 = vpop.f32.mrf.mxu0
        %v1895 = vadd.f32 0.0, %v1894
        %1896 = vmatmul.f32.gmra.mxu0 %v1859
        %v1897 = vpop.f32.mrf.mxu0
        %v1898 = vadd.f32 0.0, %v1897
        %1899 = vmatmul.f32.gmra.mxu0 %v1861
        %v1900 = vpop.f32.mrf.mxu0
        %v1901 = vadd.f32 0.0, %v1900
        %1902 = vmatmul.f32.gmra.mxu0 %v1863
        %v1903 = vpop.f32.mrf.mxu0
        %v1904 = vadd.f32 0.0, %v1903
        %1905 = vdwg.mxu0
        %1906 = vmatpush.msra.mxu0 %v803
        %1907 = vmatpush.msra.mxu0 %v802
        %1908 = vmatpush.msra.mxu0 %v801
        %1909 = vmatpush.msra.mxu0 %v800
        %1910 = vmatpush.msra.mxu0 %v799
        %1911 = vmatpush.msra.mxu0 %v798
        %1912 = vmatpush.msra.mxu0 %v797
        %1913 = vmatpush.msra.mxu0 %v796
        %1914 = vmatpush.msra.mxu0 %v795
        %1915 = vmatpush.msra.mxu0 %v794
        %1916 = vmatpush.msra.mxu0 %v793
        %1917 = vmatpush.msra.mxu0 %v792
        %1918 = vmatpush.msra.mxu0 %v791
        %1919 = vmatpush.msra.mxu0 %v790
        %1920 = vmatpush.msra.mxu0 %v789
        %1921 = vmatpush.msra.mxu0 %v788
        %1922 = vmatmul.f32.gmra.mxu0 %v1850
        %v1923 = vpop.f32.mrf.mxu0
        %v1924 = vadd.f32 %v1883, %v1923
        %1925 = vmatmul.f32.gmra.mxu0 %v1852
        %v1926 = vpop.f32.mrf.mxu0
        %v1927 = vadd.f32 %v1886, %v1926
        %1928 = vmatmul.f32.gmra.mxu0 %v1854
        %v1929 = vpop.f32.mrf.mxu0
        %v1930 = vadd.f32 %v1889, %v1929
        %1931 = vmatmul.f32.gmra.mxu0 %v1856
        %v1932 = vpop.f32.mrf.mxu0
        %v1933 = vadd.f32 %v1892, %v1932
        %1934 = vmatmul.f32.gmra.mxu0 %v1858
        %v1935 = vpop.f32.mrf.mxu0
        %v1936 = vadd.f32 %v1895, %v1935
        %1937 = vmatmul.f32.gmra.mxu0 %v1860
        %v1938 = vpop.f32.mrf.mxu0
        %v1939 = vadd.f32 %v1898, %v1938
        %1940 = vmatmul.f32.gmra.mxu0 %v1862
        %v1941 = vpop.f32.mrf.mxu0
        %v1942 = vadd.f32 %v1901, %v1941
        %1943 = vmatmul.f32.gmra.mxu0 %v1864
        %v1944 = vpop.f32.mrf.mxu0
        %v1945 = vadd.f32 %v1904, %v1944
        %1946 = vdwg.mxu0
        %s1947 = scalar_lea.vmem %s4, 192
        %v1948 = vld [vmem:[%s1947] sm:$0xff]
        %v1949 = vld [vmem:[%s1947 + $0x8] sm:$0xff]
        %v1950 = vld [vmem:[%s1947 + $0x10] sm:$0xff]
        %v1951 = vld [vmem:[%s1947 + $0x18] sm:$0xff]
        %v1953 = vsel %vm424, %v1924, 0
        %v1956 = vsel %vm424, %v1927, 0
        %v1959 = vsel %vm424, %v1930, 0
        %v1962 = vsel %vm424, %v1933, 0
        %v1965 = vsel %vm424, %v1936, 0
        %v1968 = vsel %vm424, %v1939, 0
        %v1971 = vsel %vm424, %v1942, 0
        %v1974 = vsel %vm424, %v1945, 0
        %1976 = vmatpush.msra.mxu0 0.0
        %1977 = vmatpush.msra.mxu0 0.0
        %1978 = vmatpush.msra.mxu0 0.0
        %1979 = vmatpush.msra.mxu0 0.0
        %1980 = vmatpush.msra.mxu0 0.0
        %1981 = vmatpush.msra.mxu0 0.0
        %1982 = vmatpush.msra.mxu0 0.0
        %1983 = vmatpush.msra.mxu0 0.0
        %1984 = vmatpush.msra.mxu0 0.0
        %1985 = vmatpush.msra.mxu0 0.0
        %1986 = vmatpush.msra.mxu0 0.0
        %1987 = vmatpush.msra.mxu0 0.0
        %1988 = vmatpush.msra.mxu0 %v1951
        %1989 = vmatpush.msra.mxu0 %v1950
        %1990 = vmatpush.msra.mxu0 %v1949
        %1991 = vmatpush.msra.mxu0 %v1948
        %1992 = vmatmul.f32.gmra.mxu0 %v1953
        %v1993 = vpop.f32.mrf.mxu0
        %v1994 = vadd.f32 0.0, %v1993
        %1995 = vmatmul.f32.gmra.mxu0 %v1956
        %v1996 = vpop.f32.mrf.mxu0
        %v1997 = vadd.f32 0.0, %v1996
        %1998 = vmatmul.f32.gmra.mxu0 %v1959
        %v1999 = vpop.f32.mrf.mxu0
        %v2000 = vadd.f32 0.0, %v1999
        %2001 = vmatmul.f32.gmra.mxu0 %v1962
        %v2002 = vpop.f32.mrf.mxu0
        %v2003 = vadd.f32 0.0, %v2002
        %2004 = vmatmul.f32.gmra.mxu0 %v1965
        %v2005 = vpop.f32.mrf.mxu0
        %v2006 = vadd.f32 0.0, %v2005
        %2007 = vmatmul.f32.gmra.mxu0 %v1968
        %v2008 = vpop.f32.mrf.mxu0
        %v2009 = vadd.f32 0.0, %v2008
        %2010 = vmatmul.f32.gmra.mxu0 %v1971
        %v2011 = vpop.f32.mrf.mxu0
        %v2012 = vadd.f32 0.0, %v2011
        %2013 = vmatmul.f32.gmra.mxu0 %v1974
        %v2014 = vpop.f32.mrf.mxu0
        %v2015 = vadd.f32 0.0, %v2014
        %2016 = vdwg.mxu0
        %v2017 = vadd.f32 %v1840, %v1994
        %v2018 = vadd.f32 %v1841, %v1997
        %v2019 = vadd.f32 %v1842, %v2000
        %v2020 = vadd.f32 %v1843, %v2003
        %v2021 = vadd.f32 %v1844, %v2006
        %v2022 = vadd.f32 %v1845, %v2009
        %v2023 = vadd.f32 %v1846, %v2012
        %v2024 = vadd.f32 %v1847, %v2015
        %s2025 = scalar_lea.vmem %s3, 896
        %v2026 = vld [vmem:[%s2025] sm:$0xff]
        %v2027 = vld [vmem:[%s2025 + $0x8] sm:$0xff]
        %v2028 = vld [vmem:[%s2025 + $0x10] sm:$0xff]
        %v2029 = vld [vmem:[%s2025 + $0x18] sm:$0xff]
        %v2030 = vld [vmem:[%s2025 + $0x20] sm:$0xff]
        %v2031 = vld [vmem:[%s2025 + $0x28] sm:$0xff]
        %v2032 = vld [vmem:[%s2025 + $0x30] sm:$0xff]
        %v2033 = vld [vmem:[%s2025 + $0x38] sm:$0xff]
        %v2034 = vld [vmem:[%s2025 + $0x40] sm:$0xff]
        %v2035 = vld [vmem:[%s2025 + $0x48] sm:$0xff]
        %v2036 = vld [vmem:[%s2025 + $0x50] sm:$0xff]
        %v2037 = vld [vmem:[%s2025 + $0x58] sm:$0xff]
        %v2038 = vld [vmem:[%s2025 + $0x60] sm:$0xff]
        %v2039 = vld [vmem:[%s2025 + $0x68] sm:$0xff]
        %v2040 = vld [vmem:[%s2025 + $0x70] sm:$0xff]
        %v2041 = vld [vmem:[%s2025 + $0x78] sm:$0xff]
        %2042 = vmatpush.msra.mxu0 %v787
        %2043 = vmatpush.msra.mxu0 %v786
        %2044 = vmatpush.msra.mxu0 %v785
        %2045 = vmatpush.msra.mxu0 %v784
        %2046 = vmatpush.msra.mxu0 %v783
        %2047 = vmatpush.msra.mxu0 %v782
        %2048 = vmatpush.msra.mxu0 %v781
        %2049 = vmatpush.msra.mxu0 %v780
        %2050 = vmatpush.msra.mxu0 %v779
        %2051 = vmatpush.msra.mxu0 %v778
        %2052 = vmatpush.msra.mxu0 %v777
        %2053 = vmatpush.msra.mxu0 %v776
        %2054 = vmatpush.msra.mxu0 %v775
        %2055 = vmatpush.msra.mxu0 %v774
        %2056 = vmatpush.msra.mxu0 %v773
        %2057 = vmatpush.msra.mxu0 %v772
        %2058 = vmatmul.f32.gmra.mxu0 %v2026
        %v2059 = vpop.f32.mrf.mxu0
        %v2060 = vadd.f32 0.0, %v2059
        %2061 = vmatmul.f32.gmra.mxu0 %v2028
        %v2062 = vpop.f32.mrf.mxu0
        %v2063 = vadd.f32 0.0, %v2062
        %2064 = vmatmul.f32.gmra.mxu0 %v2030
        %v2065 = vpop.f32.mrf.mxu0
        %v2066 = vadd.f32 0.0, %v2065
        %2067 = vmatmul.f32.gmra.mxu0 %v2032
        %v2068 = vpop.f32.mrf.mxu0
        %v2069 = vadd.f32 0.0, %v2068
        %2070 = vmatmul.f32.gmra.mxu0 %v2034
        %v2071 = vpop.f32.mrf.mxu0
        %v2072 = vadd.f32 0.0, %v2071
        %2073 = vmatmul.f32.gmra.mxu0 %v2036
        %v2074 = vpop.f32.mrf.mxu0
        %v2075 = vadd.f32 0.0, %v2074
        %2076 = vmatmul.f32.gmra.mxu0 %v2038
        %v2077 = vpop.f32.mrf.mxu0
        %v2078 = vadd.f32 0.0, %v2077
        %2079 = vmatmul.f32.gmra.mxu0 %v2040
        %v2080 = vpop.f32.mrf.mxu0
        %v2081 = vadd.f32 0.0, %v2080
        %2082 = vdwg.mxu0
        %2083 = vmatpush.msra.mxu0 %v803
        %2084 = vmatpush.msra.mxu0 %v802
        %2085 = vmatpush.msra.mxu0 %v801
        %2086 = vmatpush.msra.mxu0 %v800
        %2087 = vmatpush.msra.mxu0 %v799
        %2088 = vmatpush.msra.mxu0 %v798
        %2089 = vmatpush.msra.mxu0 %v797
        %2090 = vmatpush.msra.mxu0 %v796
        %2091 = vmatpush.msra.mxu0 %v795
        %2092 = vmatpush.msra.mxu0 %v794
        %2093 = vmatpush.msra.mxu0 %v793
        %2094 = vmatpush.msra.mxu0 %v792
        %2095 = vmatpush.msra.mxu0 %v791
        %2096 = vmatpush.msra.mxu0 %v790
        %2097 = vmatpush.msra.mxu0 %v789
        %2098 = vmatpush.msra.mxu0 %v788
        %2099 = vmatmul.f32.gmra.mxu0 %v2027
        %v2100 = vpop.f32.mrf.mxu0
        %v2101 = vadd.f32 %v2060, %v2100
        %2102 = vmatmul.f32.gmra.mxu0 %v2029
        %v2103 = vpop.f32.mrf.mxu0
        %v2104 = vadd.f32 %v2063, %v2103
        %2105 = vmatmul.f32.gmra.mxu0 %v2031
        %v2106 = vpop.f32.mrf.mxu0
        %v2107 = vadd.f32 %v2066, %v2106
        %2108 = vmatmul.f32.gmra.mxu0 %v2033
        %v2109 = vpop.f32.mrf.mxu0
        %v2110 = vadd.f32 %v2069, %v2109
        %2111 = vmatmul.f32.gmra.mxu0 %v2035
        %v2112 = vpop.f32.mrf.mxu0
        %v2113 = vadd.f32 %v2072, %v2112
        %2114 = vmatmul.f32.gmra.mxu0 %v2037
        %v2115 = vpop.f32.mrf.mxu0
        %v2116 = vadd.f32 %v2075, %v2115
        %2117 = vmatmul.f32.gmra.mxu0 %v2039
        %v2118 = vpop.f32.mrf.mxu0
        %v2119 = vadd.f32 %v2078, %v2118
        %2120 = vmatmul.f32.gmra.mxu0 %v2041
        %v2121 = vpop.f32.mrf.mxu0
        %v2122 = vadd.f32 %v2081, %v2121
        %2123 = vdwg.mxu0
        %s2124 = scalar_lea.vmem %s4, 224
        %v2125 = vld [vmem:[%s2124] sm:$0xff]
        %v2126 = vld [vmem:[%s2124 + $0x8] sm:$0xff]
        %v2127 = vld [vmem:[%s2124 + $0x10] sm:$0xff]
        %v2128 = vld [vmem:[%s2124 + $0x18] sm:$0xff]
        %v2130 = vsel %vm424, %v2101, 0
        %v2133 = vsel %vm424, %v2104, 0
        %v2136 = vsel %vm424, %v2107, 0
        %v2139 = vsel %vm424, %v2110, 0
        %v2142 = vsel %vm424, %v2113, 0
        %v2145 = vsel %vm424, %v2116, 0
        %v2148 = vsel %vm424, %v2119, 0
        %v2151 = vsel %vm424, %v2122, 0
        %2153 = vmatpush.msra.mxu0 0.0
        %2154 = vmatpush.msra.mxu0 0.0
        %2155 = vmatpush.msra.mxu0 0.0
        %2156 = vmatpush.msra.mxu0 0.0
        %2157 = vmatpush.msra.mxu0 0.0
        %2158 = vmatpush.msra.mxu0 0.0
        %2159 = vmatpush.msra.mxu0 0.0
        %2160 = vmatpush.msra.mxu0 0.0
        %2161 = vmatpush.msra.mxu0 0.0
        %2162 = vmatpush.msra.mxu0 0.0
        %2163 = vmatpush.msra.mxu0 0.0
        %2164 = vmatpush.msra.mxu0 0.0
        %2165 = vmatpush.msra.mxu0 %v2128
        %2166 = vmatpush.msra.mxu0 %v2127
        %2167 = vmatpush.msra.mxu0 %v2126
        %2168 = vmatpush.msra.mxu0 %v2125
        %2169 = vmatmul.f32.gmra.mxu0 %v2130
        %v2170 = vpop.f32.mrf.mxu0
        %v2171 = vadd.f32 0.0, %v2170
        %2172 = vmatmul.f32.gmra.mxu0 %v2133
        %v2173 = vpop.f32.mrf.mxu0
        %v2174 = vadd.f32 0.0, %v2173
        %2175 = vmatmul.f32.gmra.mxu0 %v2136
        %v2176 = vpop.f32.mrf.mxu0
        %v2177 = vadd.f32 0.0, %v2176
        %2178 = vmatmul.f32.gmra.mxu0 %v2139
        %v2179 = vpop.f32.mrf.mxu0
        %v2180 = vadd.f32 0.0, %v2179
        %2181 = vmatmul.f32.gmra.mxu0 %v2142
        %v2182 = vpop.f32.mrf.mxu0
        %v2183 = vadd.f32 0.0, %v2182
        %2184 = vmatmul.f32.gmra.mxu0 %v2145
        %v2185 = vpop.f32.mrf.mxu0
        %v2186 = vadd.f32 0.0, %v2185
        %2187 = vmatmul.f32.gmra.mxu0 %v2148
        %v2188 = vpop.f32.mrf.mxu0
        %v2189 = vadd.f32 0.0, %v2188
        %2190 = vmatmul.f32.gmra.mxu0 %v2151
        %v2191 = vpop.f32.mrf.mxu0
        %v2192 = vadd.f32 0.0, %v2191
        %2193 = vdwg.mxu0
        %v2194 = vadd.f32 %v2017, %v2171
        %v2195 = vadd.f32 %v2018, %v2174
        %v2196 = vadd.f32 %v2019, %v2177
        %v2197 = vadd.f32 %v2020, %v2180
        %v2198 = vadd.f32 %v2021, %v2183
        %v2199 = vadd.f32 %v2022, %v2186
        %v2200 = vadd.f32 %v2023, %v2189
        %v2201 = vadd.f32 %v2024, %v2192
        %s2202 = scalar_lea.vmem %s3, 1024
        %v2203 = vld [vmem:[%s2202] sm:$0xff]
        %v2204 = vld [vmem:[%s2202 + $0x8] sm:$0xff]
        %v2205 = vld [vmem:[%s2202 + $0x10] sm:$0xff]
        %v2206 = vld [vmem:[%s2202 + $0x18] sm:$0xff]
        %v2207 = vld [vmem:[%s2202 + $0x20] sm:$0xff]
        %v2208 = vld [vmem:[%s2202 + $0x28] sm:$0xff]
        %v2209 = vld [vmem:[%s2202 + $0x30] sm:$0xff]
        %v2210 = vld [vmem:[%s2202 + $0x38] sm:$0xff]
        %v2211 = vld [vmem:[%s2202 + $0x40] sm:$0xff]
        %v2212 = vld [vmem:[%s2202 + $0x48] sm:$0xff]
        %v2213 = vld [vmem:[%s2202 + $0x50] sm:$0xff]
        %v2214 = vld [vmem:[%s2202 + $0x58] sm:$0xff]
        %v2215 = vld [vmem:[%s2202 + $0x60] sm:$0xff]
        %v2216 = vld [vmem:[%s2202 + $0x68] sm:$0xff]
        %v2217 = vld [vmem:[%s2202 + $0x70] sm:$0xff]
        %v2218 = vld [vmem:[%s2202 + $0x78] sm:$0xff]
        %2219 = vmatpush.msra.mxu0 %v787
        %2220 = vmatpush.msra.mxu0 %v786
        %2221 = vmatpush.msra.mxu0 %v785
        %2222 = vmatpush.msra.mxu0 %v784
        %2223 = vmatpush.msra.mxu0 %v783
        %2224 = vmatpush.msra.mxu0 %v782
        %2225 = vmatpush.msra.mxu0 %v781
        %2226 = vmatpush.msra.mxu0 %v780
        %2227 = vmatpush.msra.mxu0 %v779
        %2228 = vmatpush.msra.mxu0 %v778
        %2229 = vmatpush.msra.mxu0 %v777
        %2230 = vmatpush.msra.mxu0 %v776
        %2231 = vmatpush.msra.mxu0 %v775
        %2232 = vmatpush.msra.mxu0 %v774
        %2233 = vmatpush.msra.mxu0 %v773
        %2234 = vmatpush.msra.mxu0 %v772
        %2235 = vmatmul.f32.gmra.mxu0 %v2203
        %v2236 = vpop.f32.mrf.mxu0
        %v2237 = vadd.f32 0.0, %v2236
        %2238 = vmatmul.f32.gmra.mxu0 %v2205
        %v2239 = vpop.f32.mrf.mxu0
        %v2240 = vadd.f32 0.0, %v2239
        %2241 = vmatmul.f32.gmra.mxu0 %v2207
        %v2242 = vpop.f32.mrf.mxu0
        %v2243 = vadd.f32 0.0, %v2242
        %2244 = vmatmul.f32.gmra.mxu0 %v2209
        %v2245 = vpop.f32.mrf.mxu0
        %v2246 = vadd.f32 0.0, %v2245
        %2247 = vmatmul.f32.gmra.mxu0 %v2211
        %v2248 = vpop.f32.mrf.mxu0
        %v2249 = vadd.f32 0.0, %v2248
        %2250 = vmatmul.f32.gmra.mxu0 %v2213
        %v2251 = vpop.f32.mrf.mxu0
        %v2252 = vadd.f32 0.0, %v2251
        %2253 = vmatmul.f32.gmra.mxu0 %v2215
        %v2254 = vpop.f32.mrf.mxu0
        %v2255 = vadd.f32 0.0, %v2254
        %2256 = vmatmul.f32.gmra.mxu0 %v2217
        %v2257 = vpop.f32.mrf.mxu0
        %v2258 = vadd.f32 0.0, %v2257
        %2259 = vdwg.mxu0
        %2260 = vmatpush.msra.mxu0 %v803
        %2261 = vmatpush.msra.mxu0 %v802
        %2262 = vmatpush.msra.mxu0 %v801
        %2263 = vmatpush.msra.mxu0 %v800
        %2264 = vmatpush.msra.mxu0 %v799
        %2265 = vmatpush.msra.mxu0 %v798
        %2266 = vmatpush.msra.mxu0 %v797
        %2267 = vmatpush.msra.mxu0 %v796
        %2268 = vmatpush.msra.mxu0 %v795
        %2269 = vmatpush.msra.mxu0 %v794
        %2270 = vmatpush.msra.mxu0 %v793
        %2271 = vmatpush.msra.mxu0 %v792
        %2272 = vmatpush.msra.mxu0 %v791
        %2273 = vmatpush.msra.mxu0 %v790
        %2274 = vmatpush.msra.mxu0 %v789
        %2275 = vmatpush.msra.mxu0 %v788
        %2276 = vmatmul.f32.gmra.mxu0 %v2204
        %v2277 = vpop.f32.mrf.mxu0
        %v2278 = vadd.f32 %v2237, %v2277
        %2279 = vmatmul.f32.gmra.mxu0 %v2206
        %v2280 = vpop.f32.mrf.mxu0
        %v2281 = vadd.f32 %v2240, %v2280
        %2282 = vmatmul.f32.gmra.mxu0 %v2208
        %v2283 = vpop.f32.mrf.mxu0
        %v2284 = vadd.f32 %v2243, %v2283
        %2285 = vmatmul.f32.gmra.mxu0 %v2210
        %v2286 = vpop.f32.mrf.mxu0
        %v2287 = vadd.f32 %v2246, %v2286
        %2288 = vmatmul.f32.gmra.mxu0 %v2212
        %v2289 = vpop.f32.mrf.mxu0
        %v2290 = vadd.f32 %v2249, %v2289
        %2291 = vmatmul.f32.gmra.mxu0 %v2214
        %v2292 = vpop.f32.mrf.mxu0
        %v2293 = vadd.f32 %v2252, %v2292
        %2294 = vmatmul.f32.gmra.mxu0 %v2216
        %v2295 = vpop.f32.mrf.mxu0
        %v2296 = vadd.f32 %v2255, %v2295
        %2297 = vmatmul.f32.gmra.mxu0 %v2218
        %v2298 = vpop.f32.mrf.mxu0
        %v2299 = vadd.f32 %v2258, %v2298
        %2300 = vdwg.mxu0
        %s2301 = scalar_lea.vmem %s4, 256
        %v2302 = vld [vmem:[%s2301] sm:$0xff]
        %v2303 = vld [vmem:[%s2301 + $0x8] sm:$0xff]
        %v2304 = vld [vmem:[%s2301 + $0x10] sm:$0xff]
        %v2305 = vld [vmem:[%s2301 + $0x18] sm:$0xff]
        %v2307 = vsel %vm424, %v2278, 0
        %v2310 = vsel %vm424, %v2281, 0
        %v2313 = vsel %vm424, %v2284, 0
        %v2316 = vsel %vm424, %v2287, 0
        %v2319 = vsel %vm424, %v2290, 0
        %v2322 = vsel %vm424, %v2293, 0
        %v2325 = vsel %vm424, %v2296, 0
        %v2328 = vsel %vm424, %v2299, 0
        %2330 = vmatpush.msra.mxu0 0.0
        %2331 = vmatpush.msra.mxu0 0.0
        %2332 = vmatpush.msra.mxu0 0.0
        %2333 = vmatpush.msra.mxu0 0.0
        %2334 = vmatpush.msra.mxu0 0.0
        %2335 = vmatpush.msra.mxu0 0.0
        %2336 = vmatpush.msra.mxu0 0.0
        %2337 = vmatpush.msra.mxu0 0.0
        %2338 = vmatpush.msra.mxu0 0.0
        %2339 = vmatpush.msra.mxu0 0.0
        %2340 = vmatpush.msra.mxu0 0.0
        %2341 = vmatpush.msra.mxu0 0.0
        %2342 = vmatpush.msra.mxu0 %v2305
        %2343 = vmatpush.msra.mxu0 %v2304
        %2344 = vmatpush.msra.mxu0 %v2303
        %2345 = vmatpush.msra.mxu0 %v2302
        %2346 = vmatmul.f32.gmra.mxu0 %v2307
        %v2347 = vpop.f32.mrf.mxu0
        %v2348 = vadd.f32 0.0, %v2347
        %2349 = vmatmul.f32.gmra.mxu0 %v2310
        %v2350 = vpop.f32.mrf.mxu0
        %v2351 = vadd.f32 0.0, %v2350
        %2352 = vmatmul.f32.gmra.mxu0 %v2313
        %v2353 = vpop.f32.mrf.mxu0
        %v2354 = vadd.f32 0.0, %v2353
        %2355 = vmatmul.f32.gmra.mxu0 %v2316
        %v2356 = vpop.f32.mrf.mxu0
        %v2357 = vadd.f32 0.0, %v2356
        %2358 = vmatmul.f32.gmra.mxu0 %v2319
        %v2359 = vpop.f32.mrf.mxu0
        %v2360 = vadd.f32 0.0, %v2359
        %2361 = vmatmul.f32.gmra.mxu0 %v2322
        %v2362 = vpop.f32.mrf.mxu0
        %v2363 = vadd.f32 0.0, %v2362
        %2364 = vmatmul.f32.gmra.mxu0 %v2325
        %v2365 = vpop.f32.mrf.mxu0
        %v2366 = vadd.f32 0.0, %v2365
        %2367 = vmatmul.f32.gmra.mxu0 %v2328
        %v2368 = vpop.f32.mrf.mxu0
        %v2369 = vadd.f32 0.0, %v2368
        %2370 = vdwg.mxu0
        %v2371 = vadd.f32 %v2194, %v2348
        %v2372 = vadd.f32 %v2195, %v2351
        %v2373 = vadd.f32 %v2196, %v2354
        %v2374 = vadd.f32 %v2197, %v2357
        %v2375 = vadd.f32 %v2198, %v2360
        %v2376 = vadd.f32 %v2199, %v2363
        %v2377 = vadd.f32 %v2200, %v2366
        %v2378 = vadd.f32 %v2201, %v2369
        %s2379 = scalar_lea.vmem %s3, 1152
        %v2380 = vld [vmem:[%s2379] sm:$0xff]
        %v2381 = vld [vmem:[%s2379 + $0x8] sm:$0xff]
        %v2382 = vld [vmem:[%s2379 + $0x10] sm:$0xff]
        %v2383 = vld [vmem:[%s2379 + $0x18] sm:$0xff]
        %v2384 = vld [vmem:[%s2379 + $0x20] sm:$0xff]
        %v2385 = vld [vmem:[%s2379 + $0x28] sm:$0xff]
        %v2386 = vld [vmem:[%s2379 + $0x30] sm:$0xff]
        %v2387 = vld [vmem:[%s2379 + $0x38] sm:$0xff]
        %v2388 = vld [vmem:[%s2379 + $0x40] sm:$0xff]
        %v2389 = vld [vmem:[%s2379 + $0x48] sm:$0xff]
        %v2390 = vld [vmem:[%s2379 + $0x50] sm:$0xff]
        %v2391 = vld [vmem:[%s2379 + $0x58] sm:$0xff]
        %v2392 = vld [vmem:[%s2379 + $0x60] sm:$0xff]
        %v2393 = vld [vmem:[%s2379 + $0x68] sm:$0xff]
        %v2394 = vld [vmem:[%s2379 + $0x70] sm:$0xff]
        %v2395 = vld [vmem:[%s2379 + $0x78] sm:$0xff]
        %2396 = vmatpush.msra.mxu0 %v787
        %2397 = vmatpush.msra.mxu0 %v786
        %2398 = vmatpush.msra.mxu0 %v785
        %2399 = vmatpush.msra.mxu0 %v784
        %2400 = vmatpush.msra.mxu0 %v783
        %2401 = vmatpush.msra.mxu0 %v782
        %2402 = vmatpush.msra.mxu0 %v781
        %2403 = vmatpush.msra.mxu0 %v780
        %2404 = vmatpush.msra.mxu0 %v779
        %2405 = vmatpush.msra.mxu0 %v778
        %2406 = vmatpush.msra.mxu0 %v777
        %2407 = vmatpush.msra.mxu0 %v776
        %2408 = vmatpush.msra.mxu0 %v775
        %2409 = vmatpush.msra.mxu0 %v774
        %2410 = vmatpush.msra.mxu0 %v773
        %2411 = vmatpush.msra.mxu0 %v772
        %2412 = vmatmul.f32.gmra.mxu0 %v2380
        %v2413 = vpop.f32.mrf.mxu0
        %v2414 = vadd.f32 0.0, %v2413
        %2415 = vmatmul.f32.gmra.mxu0 %v2382
        %v2416 = vpop.f32.mrf.mxu0
        %v2417 = vadd.f32 0.0, %v2416
        %2418 = vmatmul.f32.gmra.mxu0 %v2384
        %v2419 = vpop.f32.mrf.mxu0
        %v2420 = vadd.f32 0.0, %v2419
        %2421 = vmatmul.f32.gmra.mxu0 %v2386
        %v2422 = vpop.f32.mrf.mxu0
        %v2423 = vadd.f32 0.0, %v2422
        %2424 = vmatmul.f32.gmra.mxu0 %v2388
        %v2425 = vpop.f32.mrf.mxu0
        %v2426 = vadd.f32 0.0, %v2425
        %2427 = vmatmul.f32.gmra.mxu0 %v2390
        %v2428 = vpop.f32.mrf.mxu0
        %v2429 = vadd.f32 0.0, %v2428
        %2430 = vmatmul.f32.gmra.mxu0 %v2392
        %v2431 = vpop.f32.mrf.mxu0
        %v2432 = vadd.f32 0.0, %v2431
        %2433 = vmatmul.f32.gmra.mxu0 %v2394
        %v2434 = vpop.f32.mrf.mxu0
        %v2435 = vadd.f32 0.0, %v2434
        %2436 = vdwg.mxu0
        %2437 = vmatpush.msra.mxu0 %v803
        %2438 = vmatpush.msra.mxu0 %v802
        %2439 = vmatpush.msra.mxu0 %v801
        %2440 = vmatpush.msra.mxu0 %v800
        %2441 = vmatpush.msra.mxu0 %v799
        %2442 = vmatpush.msra.mxu0 %v798
        %2443 = vmatpush.msra.mxu0 %v797
        %2444 = vmatpush.msra.mxu0 %v796
        %2445 = vmatpush.msra.mxu0 %v795
        %2446 = vmatpush.msra.mxu0 %v794
        %2447 = vmatpush.msra.mxu0 %v793
        %2448 = vmatpush.msra.mxu0 %v792
        %2449 = vmatpush.msra.mxu0 %v791
        %2450 = vmatpush.msra.mxu0 %v790
        %2451 = vmatpush.msra.mxu0 %v789
        %2452 = vmatpush.msra.mxu0 %v788
        %2453 = vmatmul.f32.gmra.mxu0 %v2381
        %v2454 = vpop.f32.mrf.mxu0
        %v2455 = vadd.f32 %v2414, %v2454
        %2456 = vmatmul.f32.gmra.mxu0 %v2383
        %v2457 = vpop.f32.mrf.mxu0
        %v2458 = vadd.f32 %v2417, %v2457
        %2459 = vmatmul.f32.gmra.mxu0 %v2385
        %v2460 = vpop.f32.mrf.mxu0
        %v2461 = vadd.f32 %v2420, %v2460
        %2462 = vmatmul.f32.gmra.mxu0 %v2387
        %v2463 = vpop.f32.mrf.mxu0
        %v2464 = vadd.f32 %v2423, %v2463
        %2465 = vmatmul.f32.gmra.mxu0 %v2389
        %v2466 = vpop.f32.mrf.mxu0
        %v2467 = vadd.f32 %v2426, %v2466
        %2468 = vmatmul.f32.gmra.mxu0 %v2391
        %v2469 = vpop.f32.mrf.mxu0
        %v2470 = vadd.f32 %v2429, %v2469
        %2471 = vmatmul.f32.gmra.mxu0 %v2393
        %v2472 = vpop.f32.mrf.mxu0
        %v2473 = vadd.f32 %v2432, %v2472
        %2474 = vmatmul.f32.gmra.mxu0 %v2395
        %v2475 = vpop.f32.mrf.mxu0
        %v2476 = vadd.f32 %v2435, %v2475
        %2477 = vdwg.mxu0
        %s2478 = scalar_lea.vmem %s4, 288
        %v2479 = vld [vmem:[%s2478] sm:$0xff]
        %v2480 = vld [vmem:[%s2478 + $0x8] sm:$0xff]
        %v2481 = vld [vmem:[%s2478 + $0x10] sm:$0xff]
        %v2482 = vld [vmem:[%s2478 + $0x18] sm:$0xff]
        %v2484 = vsel %vm424, %v2455, 0
        %v2487 = vsel %vm424, %v2458, 0
        %v2490 = vsel %vm424, %v2461, 0
        %v2493 = vsel %vm424, %v2464, 0
        %v2496 = vsel %vm424, %v2467, 0
        %v2499 = vsel %vm424, %v2470, 0
        %v2502 = vsel %vm424, %v2473, 0
        %v2505 = vsel %vm424, %v2476, 0
        %2507 = vmatpush.msra.mxu0 0.0
        %2508 = vmatpush.msra.mxu0 0.0
        %2509 = vmatpush.msra.mxu0 0.0
        %2510 = vmatpush.msra.mxu0 0.0
        %2511 = vmatpush.msra.mxu0 0.0
        %2512 = vmatpush.msra.mxu0 0.0
        %2513 = vmatpush.msra.mxu0 0.0
        %2514 = vmatpush.msra.mxu0 0.0
        %2515 = vmatpush.msra.mxu0 0.0
        %2516 = vmatpush.msra.mxu0 0.0
        %2517 = vmatpush.msra.mxu0 0.0
        %2518 = vmatpush.msra.mxu0 0.0
        %2519 = vmatpush.msra.mxu0 %v2482
        %2520 = vmatpush.msra.mxu0 %v2481
        %2521 = vmatpush.msra.mxu0 %v2480
        %2522 = vmatpush.msra.mxu0 %v2479
        %2523 = vmatmul.f32.gmra.mxu0 %v2484
        %v2524 = vpop.f32.mrf.mxu0
        %v2525 = vadd.f32 0.0, %v2524
        %2526 = vmatmul.f32.gmra.mxu0 %v2487
        %v2527 = vpop.f32.mrf.mxu0
        %v2528 = vadd.f32 0.0, %v2527
        %2529 = vmatmul.f32.gmra.mxu0 %v2490
        %v2530 = vpop.f32.mrf.mxu0
        %v2531 = vadd.f32 0.0, %v2530
        %2532 = vmatmul.f32.gmra.mxu0 %v2493
        %v2533 = vpop.f32.mrf.mxu0
        %v2534 = vadd.f32 0.0, %v2533
        %2535 = vmatmul.f32.gmra.mxu0 %v2496
        %v2536 = vpop.f32.mrf.mxu0
        %v2537 = vadd.f32 0.0, %v2536
        %2538 = vmatmul.f32.gmra.mxu0 %v2499
        %v2539 = vpop.f32.mrf.mxu0
        %v2540 = vadd.f32 0.0, %v2539
        %2541 = vmatmul.f32.gmra.mxu0 %v2502
        %v2542 = vpop.f32.mrf.mxu0
        %v2543 = vadd.f32 0.0, %v2542
        %2544 = vmatmul.f32.gmra.mxu0 %v2505
        %v2545 = vpop.f32.mrf.mxu0
        %v2546 = vadd.f32 0.0, %v2545
        %2547 = vdwg.mxu0
        %v2548 = vadd.f32 %v2371, %v2525
        %v2549 = vadd.f32 %v2372, %v2528
        %v2550 = vadd.f32 %v2373, %v2531
        %v2551 = vadd.f32 %v2374, %v2534
        %v2552 = vadd.f32 %v2375, %v2537
        %v2553 = vadd.f32 %v2376, %v2540
        %v2554 = vadd.f32 %v2377, %v2543
        %v2555 = vadd.f32 %v2378, %v2546
        %s2556 = scalar_lea.vmem %s3, 1280
        %v2557 = vld [vmem:[%s2556] sm:$0xff]
        %v2558 = vld [vmem:[%s2556 + $0x8] sm:$0xff]
        %v2559 = vld [vmem:[%s2556 + $0x10] sm:$0xff]
        %v2560 = vld [vmem:[%s2556 + $0x18] sm:$0xff]
        %v2561 = vld [vmem:[%s2556 + $0x20] sm:$0xff]
        %v2562 = vld [vmem:[%s2556 + $0x28] sm:$0xff]
        %v2563 = vld [vmem:[%s2556 + $0x30] sm:$0xff]
        %v2564 = vld [vmem:[%s2556 + $0x38] sm:$0xff]
        %v2565 = vld [vmem:[%s2556 + $0x40] sm:$0xff]
        %v2566 = vld [vmem:[%s2556 + $0x48] sm:$0xff]
        %v2567 = vld [vmem:[%s2556 + $0x50] sm:$0xff]
        %v2568 = vld [vmem:[%s2556 + $0x58] sm:$0xff]
        %v2569 = vld [vmem:[%s2556 + $0x60] sm:$0xff]
        %v2570 = vld [vmem:[%s2556 + $0x68] sm:$0xff]
        %v2571 = vld [vmem:[%s2556 + $0x70] sm:$0xff]
        %v2572 = vld [vmem:[%s2556 + $0x78] sm:$0xff]
        %2573 = vmatpush.msra.mxu0 %v787
        %2574 = vmatpush.msra.mxu0 %v786
        %2575 = vmatpush.msra.mxu0 %v785
        %2576 = vmatpush.msra.mxu0 %v784
        %2577 = vmatpush.msra.mxu0 %v783
        %2578 = vmatpush.msra.mxu0 %v782
        %2579 = vmatpush.msra.mxu0 %v781
        %2580 = vmatpush.msra.mxu0 %v780
        %2581 = vmatpush.msra.mxu0 %v779
        %2582 = vmatpush.msra.mxu0 %v778
        %2583 = vmatpush.msra.mxu0 %v777
        %2584 = vmatpush.msra.mxu0 %v776
        %2585 = vmatpush.msra.mxu0 %v775
        %2586 = vmatpush.msra.mxu0 %v774
        %2587 = vmatpush.msra.mxu0 %v773
        %2588 = vmatpush.msra.mxu0 %v772
        %2589 = vmatmul.f32.gmra.mxu0 %v2557
        %v2590 = vpop.f32.mrf.mxu0
        %v2591 = vadd.f32 0.0, %v2590
        %2592 = vmatmul.f32.gmra.mxu0 %v2559
        %v2593 = vpop.f32.mrf.mxu0
        %v2594 = vadd.f32 0.0, %v2593
        %2595 = vmatmul.f32.gmra.mxu0 %v2561
        %v2596 = vpop.f32.mrf.mxu0
        %v2597 = vadd.f32 0.0, %v2596
        %2598 = vmatmul.f32.gmra.mxu0 %v2563
        %v2599 = vpop.f32.mrf.mxu0
        %v2600 = vadd.f32 0.0, %v2599
        %2601 = vmatmul.f32.gmra.mxu0 %v2565
        %v2602 = vpop.f32.mrf.mxu0
        %v2603 = vadd.f32 0.0, %v2602
        %2604 = vmatmul.f32.gmra.mxu0 %v2567
        %v2605 = vpop.f32.mrf.mxu0
        %v2606 = vadd.f32 0.0, %v2605
        %2607 = vmatmul.f32.gmra.mxu0 %v2569
        %v2608 = vpop.f32.mrf.mxu0
        %v2609 = vadd.f32 0.0, %v2608
        %2610 = vmatmul.f32.gmra.mxu0 %v2571
        %v2611 = vpop.f32.mrf.mxu0
        %v2612 = vadd.f32 0.0, %v2611
        %2613 = vdwg.mxu0
        %2614 = vmatpush.msra.mxu0 %v803
        %2615 = vmatpush.msra.mxu0 %v802
        %2616 = vmatpush.msra.mxu0 %v801
        %2617 = vmatpush.msra.mxu0 %v800
        %2618 = vmatpush.msra.mxu0 %v799
        %2619 = vmatpush.msra.mxu0 %v798
        %2620 = vmatpush.msra.mxu0 %v797
        %2621 = vmatpush.msra.mxu0 %v796
        %2622 = vmatpush.msra.mxu0 %v795
        %2623 = vmatpush.msra.mxu0 %v794
        %2624 = vmatpush.msra.mxu0 %v793
        %2625 = vmatpush.msra.mxu0 %v792
        %2626 = vmatpush.msra.mxu0 %v791
        %2627 = vmatpush.msra.mxu0 %v790
        %2628 = vmatpush.msra.mxu0 %v789
        %2629 = vmatpush.msra.mxu0 %v788
        %2630 = vmatmul.f32.gmra.mxu0 %v2558
        %v2631 = vpop.f32.mrf.mxu0
        %v2632 = vadd.f32 %v2591, %v2631
        %2633 = vmatmul.f32.gmra.mxu0 %v2560
        %v2634 = vpop.f32.mrf.mxu0
        %v2635 = vadd.f32 %v2594, %v2634
        %2636 = vmatmul.f32.gmra.mxu0 %v2562
        %v2637 = vpop.f32.mrf.mxu0
        %v2638 = vadd.f32 %v2597, %v2637
        %2639 = vmatmul.f32.gmra.mxu0 %v2564
        %v2640 = vpop.f32.mrf.mxu0
        %v2641 = vadd.f32 %v2600, %v2640
        %2642 = vmatmul.f32.gmra.mxu0 %v2566
        %v2643 = vpop.f32.mrf.mxu0
        %v2644 = vadd.f32 %v2603, %v2643
        %2645 = vmatmul.f32.gmra.mxu0 %v2568
        %v2646 = vpop.f32.mrf.mxu0
        %v2647 = vadd.f32 %v2606, %v2646
        %2648 = vmatmul.f32.gmra.mxu0 %v2570
        %v2649 = vpop.f32.mrf.mxu0
        %v2650 = vadd.f32 %v2609, %v2649
        %2651 = vmatmul.f32.gmra.mxu0 %v2572
        %v2652 = vpop.f32.mrf.mxu0
        %v2653 = vadd.f32 %v2612, %v2652
        %2654 = vdwg.mxu0
        %s2655 = scalar_lea.vmem %s4, 320
        %v2656 = vld [vmem:[%s2655] sm:$0xff]
        %v2657 = vld [vmem:[%s2655 + $0x8] sm:$0xff]
        %v2658 = vld [vmem:[%s2655 + $0x10] sm:$0xff]
        %v2659 = vld [vmem:[%s2655 + $0x18] sm:$0xff]
        %v2661 = vsel %vm424, %v2632, 0
        %v2664 = vsel %vm424, %v2635, 0
        %v2667 = vsel %vm424, %v2638, 0
        %v2670 = vsel %vm424, %v2641, 0
        %v2673 = vsel %vm424, %v2644, 0
        %v2676 = vsel %vm424, %v2647, 0
        %v2679 = vsel %vm424, %v2650, 0
        %v2682 = vsel %vm424, %v2653, 0
        %2684 = vmatpush.msra.mxu0 0.0
        %2685 = vmatpush.msra.mxu0 0.0
        %2686 = vmatpush.msra.mxu0 0.0
        %2687 = vmatpush.msra.mxu0 0.0
        %2688 = vmatpush.msra.mxu0 0.0
        %2689 = vmatpush.msra.mxu0 0.0
        %2690 = vmatpush.msra.mxu0 0.0
        %2691 = vmatpush.msra.mxu0 0.0
        %2692 = vmatpush.msra.mxu0 0.0
        %2693 = vmatpush.msra.mxu0 0.0
        %2694 = vmatpush.msra.mxu0 0.0
        %2695 = vmatpush.msra.mxu0 0.0
        %2696 = vmatpush.msra.mxu0 %v2659
        %2697 = vmatpush.msra.mxu0 %v2658
        %2698 = vmatpush.msra.mxu0 %v2657
        %2699 = vmatpush.msra.mxu0 %v2656
        %2700 = vmatmul.f32.gmra.mxu0 %v2661
        %v2701 = vpop.f32.mrf.mxu0
        %v2702 = vadd.f32 0.0, %v2701
        %2703 = vmatmul.f32.gmra.mxu0 %v2664
        %v2704 = vpop.f32.mrf.mxu0
        %v2705 = vadd.f32 0.0, %v2704
        %2706 = vmatmul.f32.gmra.mxu0 %v2667
        %v2707 = vpop.f32.mrf.mxu0
        %v2708 = vadd.f32 0.0, %v2707
        %2709 = vmatmul.f32.gmra.mxu0 %v2670
        %v2710 = vpop.f32.mrf.mxu0
        %v2711 = vadd.f32 0.0, %v2710
        %2712 = vmatmul.f32.gmra.mxu0 %v2673
        %v2713 = vpop.f32.mrf.mxu0
        %v2714 = vadd.f32 0.0, %v2713
        %2715 = vmatmul.f32.gmra.mxu0 %v2676
        %v2716 = vpop.f32.mrf.mxu0
        %v2717 = vadd.f32 0.0, %v2716
        %2718 = vmatmul.f32.gmra.mxu0 %v2679
        %v2719 = vpop.f32.mrf.mxu0
        %v2720 = vadd.f32 0.0, %v2719
        %2721 = vmatmul.f32.gmra.mxu0 %v2682
        %v2722 = vpop.f32.mrf.mxu0
        %v2723 = vadd.f32 0.0, %v2722
        %2724 = vdwg.mxu0
        %v2725 = vadd.f32 %v2548, %v2702
        %v2726 = vadd.f32 %v2549, %v2705
        %v2727 = vadd.f32 %v2550, %v2708
        %v2728 = vadd.f32 %v2551, %v2711
        %v2729 = vadd.f32 %v2552, %v2714
        %v2730 = vadd.f32 %v2553, %v2717
        %v2731 = vadd.f32 %v2554, %v2720
        %v2732 = vadd.f32 %v2555, %v2723
        %s2733 = scalar_lea.vmem %s3, 1408
        %v2734 = vld [vmem:[%s2733] sm:$0xff]
        %v2735 = vld [vmem:[%s2733 + $0x8] sm:$0xff]
        %v2736 = vld [vmem:[%s2733 + $0x10] sm:$0xff]
        %v2737 = vld [vmem:[%s2733 + $0x18] sm:$0xff]
        %v2738 = vld [vmem:[%s2733 + $0x20] sm:$0xff]
        %v2739 = vld [vmem:[%s2733 + $0x28] sm:$0xff]
        %v2740 = vld [vmem:[%s2733 + $0x30] sm:$0xff]
        %v2741 = vld [vmem:[%s2733 + $0x38] sm:$0xff]
        %v2742 = vld [vmem:[%s2733 + $0x40] sm:$0xff]
        %v2743 = vld [vmem:[%s2733 + $0x48] sm:$0xff]
        %v2744 = vld [vmem:[%s2733 + $0x50] sm:$0xff]
        %v2745 = vld [vmem:[%s2733 + $0x58] sm:$0xff]
        %v2746 = vld [vmem:[%s2733 + $0x60] sm:$0xff]
        %v2747 = vld [vmem:[%s2733 + $0x68] sm:$0xff]
        %v2748 = vld [vmem:[%s2733 + $0x70] sm:$0xff]
        %v2749 = vld [vmem:[%s2733 + $0x78] sm:$0xff]
        %2750 = vmatpush.msra.mxu0 %v787
        %2751 = vmatpush.msra.mxu0 %v786
        %2752 = vmatpush.msra.mxu0 %v785
        %2753 = vmatpush.msra.mxu0 %v784
        %2754 = vmatpush.msra.mxu0 %v783
        %2755 = vmatpush.msra.mxu0 %v782
        %2756 = vmatpush.msra.mxu0 %v781
        %2757 = vmatpush.msra.mxu0 %v780
        %2758 = vmatpush.msra.mxu0 %v779
        %2759 = vmatpush.msra.mxu0 %v778
        %2760 = vmatpush.msra.mxu0 %v777
        %2761 = vmatpush.msra.mxu0 %v776
        %2762 = vmatpush.msra.mxu0 %v775
        %2763 = vmatpush.msra.mxu0 %v774
        %2764 = vmatpush.msra.mxu0 %v773
        %2765 = vmatpush.msra.mxu0 %v772
        %2766 = vmatmul.f32.gmra.mxu0 %v2734
        %v2767 = vpop.f32.mrf.mxu0
        %v2768 = vadd.f32 0.0, %v2767
        %2769 = vmatmul.f32.gmra.mxu0 %v2736
        %v2770 = vpop.f32.mrf.mxu0
        %v2771 = vadd.f32 0.0, %v2770
        %2772 = vmatmul.f32.gmra.mxu0 %v2738
        %v2773 = vpop.f32.mrf.mxu0
        %v2774 = vadd.f32 0.0, %v2773
        %2775 = vmatmul.f32.gmra.mxu0 %v2740
        %v2776 = vpop.f32.mrf.mxu0
        %v2777 = vadd.f32 0.0, %v2776
        %2778 = vmatmul.f32.gmra.mxu0 %v2742
        %v2779 = vpop.f32.mrf.mxu0
        %v2780 = vadd.f32 0.0, %v2779
        %2781 = vmatmul.f32.gmra.mxu0 %v2744
        %v2782 = vpop.f32.mrf.mxu0
        %v2783 = vadd.f32 0.0, %v2782
        %2784 = vmatmul.f32.gmra.mxu0 %v2746
        %v2785 = vpop.f32.mrf.mxu0
        %v2786 = vadd.f32 0.0, %v2785
        %2787 = vmatmul.f32.gmra.mxu0 %v2748
        %v2788 = vpop.f32.mrf.mxu0
        %v2789 = vadd.f32 0.0, %v2788
        %2790 = vdwg.mxu0
        %2791 = vmatpush.msra.mxu0 %v803
        %2792 = vmatpush.msra.mxu0 %v802
        %2793 = vmatpush.msra.mxu0 %v801
        %2794 = vmatpush.msra.mxu0 %v800
        %2795 = vmatpush.msra.mxu0 %v799
        %2796 = vmatpush.msra.mxu0 %v798
        %2797 = vmatpush.msra.mxu0 %v797
        %2798 = vmatpush.msra.mxu0 %v796
        %2799 = vmatpush.msra.mxu0 %v795
        %2800 = vmatpush.msra.mxu0 %v794
        %2801 = vmatpush.msra.mxu0 %v793
        %2802 = vmatpush.msra.mxu0 %v792
        %2803 = vmatpush.msra.mxu0 %v791
        %2804 = vmatpush.msra.mxu0 %v790
        %2805 = vmatpush.msra.mxu0 %v789
        %2806 = vmatpush.msra.mxu0 %v788
        %2807 = vmatmul.f32.gmra.mxu0 %v2735
        %v2808 = vpop.f32.mrf.mxu0
        %v2809 = vadd.f32 %v2768, %v2808
        %2810 = vmatmul.f32.gmra.mxu0 %v2737
        %v2811 = vpop.f32.mrf.mxu0
        %v2812 = vadd.f32 %v2771, %v2811
        %2813 = vmatmul.f32.gmra.mxu0 %v2739
        %v2814 = vpop.f32.mrf.mxu0
        %v2815 = vadd.f32 %v2774, %v2814
        %2816 = vmatmul.f32.gmra.mxu0 %v2741
        %v2817 = vpop.f32.mrf.mxu0
        %v2818 = vadd.f32 %v2777, %v2817
        %2819 = vmatmul.f32.gmra.mxu0 %v2743
        %v2820 = vpop.f32.mrf.mxu0
        %v2821 = vadd.f32 %v2780, %v2820
        %2822 = vmatmul.f32.gmra.mxu0 %v2745
        %v2823 = vpop.f32.mrf.mxu0
        %v2824 = vadd.f32 %v2783, %v2823
        %2825 = vmatmul.f32.gmra.mxu0 %v2747
        %v2826 = vpop.f32.mrf.mxu0
        %v2827 = vadd.f32 %v2786, %v2826
        %2828 = vmatmul.f32.gmra.mxu0 %v2749
        %v2829 = vpop.f32.mrf.mxu0
        %v2830 = vadd.f32 %v2789, %v2829
        %2831 = vdwg.mxu0
        %s2832 = scalar_lea.vmem %s4, 352
        %v2833 = vld [vmem:[%s2832] sm:$0xff]
        %v2834 = vld [vmem:[%s2832 + $0x8] sm:$0xff]
        %v2835 = vld [vmem:[%s2832 + $0x10] sm:$0xff]
        %v2836 = vld [vmem:[%s2832 + $0x18] sm:$0xff]
        %v2838 = vsel %vm424, %v2809, 0
        %v2841 = vsel %vm424, %v2812, 0
        %v2844 = vsel %vm424, %v2815, 0
        %v2847 = vsel %vm424, %v2818, 0
        %v2850 = vsel %vm424, %v2821, 0
        %v2853 = vsel %vm424, %v2824, 0
        %v2856 = vsel %vm424, %v2827, 0
        %v2859 = vsel %vm424, %v2830, 0
        %2861 = vmatpush.msra.mxu0 0.0
        %2862 = vmatpush.msra.mxu0 0.0
        %2863 = vmatpush.msra.mxu0 0.0
        %2864 = vmatpush.msra.mxu0 0.0
        %2865 = vmatpush.msra.mxu0 0.0
        %2866 = vmatpush.msra.mxu0 0.0
        %2867 = vmatpush.msra.mxu0 0.0
        %2868 = vmatpush.msra.mxu0 0.0
        %2869 = vmatpush.msra.mxu0 0.0
        %2870 = vmatpush.msra.mxu0 0.0
        %2871 = vmatpush.msra.mxu0 0.0
        %2872 = vmatpush.msra.mxu0 0.0
        %2873 = vmatpush.msra.mxu0 %v2836
        %2874 = vmatpush.msra.mxu0 %v2835
        %2875 = vmatpush.msra.mxu0 %v2834
        %2876 = vmatpush.msra.mxu0 %v2833
        %2877 = vmatmul.f32.gmra.mxu0 %v2838
        %v2878 = vpop.f32.mrf.mxu0
        %v2879 = vadd.f32 0.0, %v2878
        %2880 = vmatmul.f32.gmra.mxu0 %v2841
        %v2881 = vpop.f32.mrf.mxu0
        %v2882 = vadd.f32 0.0, %v2881
        %2883 = vmatmul.f32.gmra.mxu0 %v2844
        %v2884 = vpop.f32.mrf.mxu0
        %v2885 = vadd.f32 0.0, %v2884
        %2886 = vmatmul.f32.gmra.mxu0 %v2847
        %v2887 = vpop.f32.mrf.mxu0
        %v2888 = vadd.f32 0.0, %v2887
        %2889 = vmatmul.f32.gmra.mxu0 %v2850
        %v2890 = vpop.f32.mrf.mxu0
        %v2891 = vadd.f32 0.0, %v2890
        %2892 = vmatmul.f32.gmra.mxu0 %v2853
        %v2893 = vpop.f32.mrf.mxu0
        %v2894 = vadd.f32 0.0, %v2893
        %2895 = vmatmul.f32.gmra.mxu0 %v2856
        %v2896 = vpop.f32.mrf.mxu0
        %v2897 = vadd.f32 0.0, %v2896
        %2898 = vmatmul.f32.gmra.mxu0 %v2859
        %v2899 = vpop.f32.mrf.mxu0
        %v2900 = vadd.f32 0.0, %v2899
        %2901 = vdwg.mxu0
        %v2902 = vadd.f32 %v2725, %v2879
        %v2903 = vadd.f32 %v2726, %v2882
        %v2904 = vadd.f32 %v2727, %v2885
        %v2905 = vadd.f32 %v2728, %v2888
        %v2906 = vadd.f32 %v2729, %v2891
        %v2907 = vadd.f32 %v2730, %v2894
        %v2908 = vadd.f32 %v2731, %v2897
        %v2909 = vadd.f32 %v2732, %v2900
        %s2910 = scalar_lea.vmem %s3, 1536
        %v2911 = vld [vmem:[%s2910] sm:$0xff]
        %v2912 = vld [vmem:[%s2910 + $0x8] sm:$0xff]
        %v2913 = vld [vmem:[%s2910 + $0x10] sm:$0xff]
        %v2914 = vld [vmem:[%s2910 + $0x18] sm:$0xff]
        %v2915 = vld [vmem:[%s2910 + $0x20] sm:$0xff]
        %v2916 = vld [vmem:[%s2910 + $0x28] sm:$0xff]
        %v2917 = vld [vmem:[%s2910 + $0x30] sm:$0xff]
        %v2918 = vld [vmem:[%s2910 + $0x38] sm:$0xff]
        %v2919 = vld [vmem:[%s2910 + $0x40] sm:$0xff]
        %v2920 = vld [vmem:[%s2910 + $0x48] sm:$0xff]
        %v2921 = vld [vmem:[%s2910 + $0x50] sm:$0xff]
        %v2922 = vld [vmem:[%s2910 + $0x58] sm:$0xff]
        %v2923 = vld [vmem:[%s2910 + $0x60] sm:$0xff]
        %v2924 = vld [vmem:[%s2910 + $0x68] sm:$0xff]
        %v2925 = vld [vmem:[%s2910 + $0x70] sm:$0xff]
        %v2926 = vld [vmem:[%s2910 + $0x78] sm:$0xff]
        %2927 = vmatpush.msra.mxu0 %v787
        %2928 = vmatpush.msra.mxu0 %v786
        %2929 = vmatpush.msra.mxu0 %v785
        %2930 = vmatpush.msra.mxu0 %v784
        %2931 = vmatpush.msra.mxu0 %v783
        %2932 = vmatpush.msra.mxu0 %v782
        %2933 = vmatpush.msra.mxu0 %v781
        %2934 = vmatpush.msra.mxu0 %v780
        %2935 = vmatpush.msra.mxu0 %v779
        %2936 = vmatpush.msra.mxu0 %v778
        %2937 = vmatpush.msra.mxu0 %v777
        %2938 = vmatpush.msra.mxu0 %v776
        %2939 = vmatpush.msra.mxu0 %v775
        %2940 = vmatpush.msra.mxu0 %v774
        %2941 = vmatpush.msra.mxu0 %v773
        %2942 = vmatpush.msra.mxu0 %v772
        %2943 = vmatmul.f32.gmra.mxu0 %v2911
        %v2944 = vpop.f32.mrf.mxu0
        %v2945 = vadd.f32 0.0, %v2944
        %2946 = vmatmul.f32.gmra.mxu0 %v2913
        %v2947 = vpop.f32.mrf.mxu0
        %v2948 = vadd.f32 0.0, %v2947
        %2949 = vmatmul.f32.gmra.mxu0 %v2915
        %v2950 = vpop.f32.mrf.mxu0
        %v2951 = vadd.f32 0.0, %v2950
        %2952 = vmatmul.f32.gmra.mxu0 %v2917
        %v2953 = vpop.f32.mrf.mxu0
        %v2954 = vadd.f32 0.0, %v2953
        %2955 = vmatmul.f32.gmra.mxu0 %v2919
        %v2956 = vpop.f32.mrf.mxu0
        %v2957 = vadd.f32 0.0, %v2956
        %2958 = vmatmul.f32.gmra.mxu0 %v2921
        %v2959 = vpop.f32.mrf.mxu0
        %v2960 = vadd.f32 0.0, %v2959
        %2961 = vmatmul.f32.gmra.mxu0 %v2923
        %v2962 = vpop.f32.mrf.mxu0
        %v2963 = vadd.f32 0.0, %v2962
        %2964 = vmatmul.f32.gmra.mxu0 %v2925
        %v2965 = vpop.f32.mrf.mxu0
        %v2966 = vadd.f32 0.0, %v2965
        %2967 = vdwg.mxu0
        %2968 = vmatpush.msra.mxu0 %v803
        %2969 = vmatpush.msra.mxu0 %v802
        %2970 = vmatpush.msra.mxu0 %v801
        %2971 = vmatpush.msra.mxu0 %v800
        %2972 = vmatpush.msra.mxu0 %v799
        %2973 = vmatpush.msra.mxu0 %v798
        %2974 = vmatpush.msra.mxu0 %v797
        %2975 = vmatpush.msra.mxu0 %v796
        %2976 = vmatpush.msra.mxu0 %v795
        %2977 = vmatpush.msra.mxu0 %v794
        %2978 = vmatpush.msra.mxu0 %v793
        %2979 = vmatpush.msra.mxu0 %v792
        %2980 = vmatpush.msra.mxu0 %v791
        %2981 = vmatpush.msra.mxu0 %v790
        %2982 = vmatpush.msra.mxu0 %v789
        %2983 = vmatpush.msra.mxu0 %v788
        %2984 = vmatmul.f32.gmra.mxu0 %v2912
        %v2985 = vpop.f32.mrf.mxu0
        %v2986 = vadd.f32 %v2945, %v2985
        %2987 = vmatmul.f32.gmra.mxu0 %v2914
        %v2988 = vpop.f32.mrf.mxu0
        %v2989 = vadd.f32 %v2948, %v2988
        %2990 = vmatmul.f32.gmra.mxu0 %v2916
        %v2991 = vpop.f32.mrf.mxu0
        %v2992 = vadd.f32 %v2951, %v2991
        %2993 = vmatmul.f32.gmra.mxu0 %v2918
        %v2994 = vpop.f32.mrf.mxu0
        %v2995 = vadd.f32 %v2954, %v2994
        %2996 = vmatmul.f32.gmra.mxu0 %v2920
        %v2997 = vpop.f32.mrf.mxu0
        %v2998 = vadd.f32 %v2957, %v2997
        %2999 = vmatmul.f32.gmra.mxu0 %v2922
        %v3000 = vpop.f32.mrf.mxu0
        %v3001 = vadd.f32 %v2960, %v3000
        %3002 = vmatmul.f32.gmra.mxu0 %v2924
        %v3003 = vpop.f32.mrf.mxu0
        %v3004 = vadd.f32 %v2963, %v3003
        %3005 = vmatmul.f32.gmra.mxu0 %v2926
        %v3006 = vpop.f32.mrf.mxu0
        %v3007 = vadd.f32 %v2966, %v3006
        %3008 = vdwg.mxu0
        %s3009 = scalar_lea.vmem %s4, 384
        %v3010 = vld [vmem:[%s3009] sm:$0xff]
        %v3011 = vld [vmem:[%s3009 + $0x8] sm:$0xff]
        %v3012 = vld [vmem:[%s3009 + $0x10] sm:$0xff]
        %v3013 = vld [vmem:[%s3009 + $0x18] sm:$0xff]
        %v3015 = vsel %vm424, %v2986, 0
        %v3018 = vsel %vm424, %v2989, 0
        %v3021 = vsel %vm424, %v2992, 0
        %v3024 = vsel %vm424, %v2995, 0
        %v3027 = vsel %vm424, %v2998, 0
        %v3030 = vsel %vm424, %v3001, 0
        %v3033 = vsel %vm424, %v3004, 0
        %v3036 = vsel %vm424, %v3007, 0
        %3038 = vmatpush.msra.mxu0 0.0
        %3039 = vmatpush.msra.mxu0 0.0
        %3040 = vmatpush.msra.mxu0 0.0
        %3041 = vmatpush.msra.mxu0 0.0
        %3042 = vmatpush.msra.mxu0 0.0
        %3043 = vmatpush.msra.mxu0 0.0
        %3044 = vmatpush.msra.mxu0 0.0
        %3045 = vmatpush.msra.mxu0 0.0
        %3046 = vmatpush.msra.mxu0 0.0
        %3047 = vmatpush.msra.mxu0 0.0
        %3048 = vmatpush.msra.mxu0 0.0
        %3049 = vmatpush.msra.mxu0 0.0
        %3050 = vmatpush.msra.mxu0 %v3013
        %3051 = vmatpush.msra.mxu0 %v3012
        %3052 = vmatpush.msra.mxu0 %v3011
        %3053 = vmatpush.msra.mxu0 %v3010
        %3054 = vmatmul.f32.gmra.mxu0 %v3015
        %v3055 = vpop.f32.mrf.mxu0
        %v3056 = vadd.f32 0.0, %v3055
        %3057 = vmatmul.f32.gmra.mxu0 %v3018
        %v3058 = vpop.f32.mrf.mxu0
        %v3059 = vadd.f32 0.0, %v3058
        %3060 = vmatmul.f32.gmra.mxu0 %v3021
        %v3061 = vpop.f32.mrf.mxu0
        %v3062 = vadd.f32 0.0, %v3061
        %3063 = vmatmul.f32.gmra.mxu0 %v3024
        %v3064 = vpop.f32.mrf.mxu0
        %v3065 = vadd.f32 0.0, %v3064
        %3066 = vmatmul.f32.gmra.mxu0 %v3027
        %v3067 = vpop.f32.mrf.mxu0
        %v3068 = vadd.f32 0.0, %v3067
        %3069 = vmatmul.f32.gmra.mxu0 %v3030
        %v3070 = vpop.f32.mrf.mxu0
        %v3071 = vadd.f32 0.0, %v3070
        %3072 = vmatmul.f32.gmra.mxu0 %v3033
        %v3073 = vpop.f32.mrf.mxu0
        %v3074 = vadd.f32 0.0, %v3073
        %3075 = vmatmul.f32.gmra.mxu0 %v3036
        %v3076 = vpop.f32.mrf.mxu0
        %v3077 = vadd.f32 0.0, %v3076
        %3078 = vdwg.mxu0
        %v3079 = vadd.f32 %v2902, %v3056
        %v3080 = vadd.f32 %v2903, %v3059
        %v3081 = vadd.f32 %v2904, %v3062
        %v3082 = vadd.f32 %v2905, %v3065
        %v3083 = vadd.f32 %v2906, %v3068
        %v3084 = vadd.f32 %v2907, %v3071
        %v3085 = vadd.f32 %v2908, %v3074
        %v3086 = vadd.f32 %v2909, %v3077
        %s3087 = scalar_lea.vmem %s3, 1664
        %v3088 = vld [vmem:[%s3087] sm:$0xff]
        %v3089 = vld [vmem:[%s3087 + $0x8] sm:$0xff]
        %v3090 = vld [vmem:[%s3087 + $0x10] sm:$0xff]
        %v3091 = vld [vmem:[%s3087 + $0x18] sm:$0xff]
        %v3092 = vld [vmem:[%s3087 + $0x20] sm:$0xff]
        %v3093 = vld [vmem:[%s3087 + $0x28] sm:$0xff]
        %v3094 = vld [vmem:[%s3087 + $0x30] sm:$0xff]
        %v3095 = vld [vmem:[%s3087 + $0x38] sm:$0xff]
        %v3096 = vld [vmem:[%s3087 + $0x40] sm:$0xff]
        %v3097 = vld [vmem:[%s3087 + $0x48] sm:$0xff]
        %v3098 = vld [vmem:[%s3087 + $0x50] sm:$0xff]
        %v3099 = vld [vmem:[%s3087 + $0x58] sm:$0xff]
        %v3100 = vld [vmem:[%s3087 + $0x60] sm:$0xff]
        %v3101 = vld [vmem:[%s3087 + $0x68] sm:$0xff]
        %v3102 = vld [vmem:[%s3087 + $0x70] sm:$0xff]
        %v3103 = vld [vmem:[%s3087 + $0x78] sm:$0xff]
        %3104 = vmatpush.msra.mxu0 %v787
        %3105 = vmatpush.msra.mxu0 %v786
        %3106 = vmatpush.msra.mxu0 %v785
        %3107 = vmatpush.msra.mxu0 %v784
        %3108 = vmatpush.msra.mxu0 %v783
        %3109 = vmatpush.msra.mxu0 %v782
        %3110 = vmatpush.msra.mxu0 %v781
        %3111 = vmatpush.msra.mxu0 %v780
        %3112 = vmatpush.msra.mxu0 %v779
        %3113 = vmatpush.msra.mxu0 %v778
        %3114 = vmatpush.msra.mxu0 %v777
        %3115 = vmatpush.msra.mxu0 %v776
        %3116 = vmatpush.msra.mxu0 %v775
        %3117 = vmatpush.msra.mxu0 %v774
        %3118 = vmatpush.msra.mxu0 %v773
        %3119 = vmatpush.msra.mxu0 %v772
        %3120 = vmatmul.f32.gmra.mxu0 %v3088
        %v3121 = vpop.f32.mrf.mxu0
        %v3122 = vadd.f32 0.0, %v3121
        %3123 = vmatmul.f32.gmra.mxu0 %v3090
        %v3124 = vpop.f32.mrf.mxu0
        %v3125 = vadd.f32 0.0, %v3124
        %3126 = vmatmul.f32.gmra.mxu0 %v3092
        %v3127 = vpop.f32.mrf.mxu0
        %v3128 = vadd.f32 0.0, %v3127
        %3129 = vmatmul.f32.gmra.mxu0 %v3094
        %v3130 = vpop.f32.mrf.mxu0
        %v3131 = vadd.f32 0.0, %v3130
        %3132 = vmatmul.f32.gmra.mxu0 %v3096
        %v3133 = vpop.f32.mrf.mxu0
        %v3134 = vadd.f32 0.0, %v3133
        %3135 = vmatmul.f32.gmra.mxu0 %v3098
        %v3136 = vpop.f32.mrf.mxu0
        %v3137 = vadd.f32 0.0, %v3136
        %3138 = vmatmul.f32.gmra.mxu0 %v3100
        %v3139 = vpop.f32.mrf.mxu0
        %v3140 = vadd.f32 0.0, %v3139
        %3141 = vmatmul.f32.gmra.mxu0 %v3102
        %v3142 = vpop.f32.mrf.mxu0
        %v3143 = vadd.f32 0.0, %v3142
        %3144 = vdwg.mxu0
        %3145 = vmatpush.msra.mxu0 %v803
        %3146 = vmatpush.msra.mxu0 %v802
        %3147 = vmatpush.msra.mxu0 %v801
        %3148 = vmatpush.msra.mxu0 %v800
        %3149 = vmatpush.msra.mxu0 %v799
        %3150 = vmatpush.msra.mxu0 %v798
        %3151 = vmatpush.msra.mxu0 %v797
        %3152 = vmatpush.msra.mxu0 %v796
        %3153 = vmatpush.msra.mxu0 %v795
        %3154 = vmatpush.msra.mxu0 %v794
        %3155 = vmatpush.msra.mxu0 %v793
        %3156 = vmatpush.msra.mxu0 %v792
        %3157 = vmatpush.msra.mxu0 %v791
        %3158 = vmatpush.msra.mxu0 %v790
        %3159 = vmatpush.msra.mxu0 %v789
        %3160 = vmatpush.msra.mxu0 %v788
        %3161 = vmatmul.f32.gmra.mxu0 %v3089
        %v3162 = vpop.f32.mrf.mxu0
        %v3163 = vadd.f32 %v3122, %v3162
        %3164 = vmatmul.f32.gmra.mxu0 %v3091
        %v3165 = vpop.f32.mrf.mxu0
        %v3166 = vadd.f32 %v3125, %v3165
        %3167 = vmatmul.f32.gmra.mxu0 %v3093
        %v3168 = vpop.f32.mrf.mxu0
        %v3169 = vadd.f32 %v3128, %v3168
        %3170 = vmatmul.f32.gmra.mxu0 %v3095
        %v3171 = vpop.f32.mrf.mxu0
        %v3172 = vadd.f32 %v3131, %v3171
        %3173 = vmatmul.f32.gmra.mxu0 %v3097
        %v3174 = vpop.f32.mrf.mxu0
        %v3175 = vadd.f32 %v3134, %v3174
        %3176 = vmatmul.f32.gmra.mxu0 %v3099
        %v3177 = vpop.f32.mrf.mxu0
        %v3178 = vadd.f32 %v3137, %v3177
        %3179 = vmatmul.f32.gmra.mxu0 %v3101
        %v3180 = vpop.f32.mrf.mxu0
        %v3181 = vadd.f32 %v3140, %v3180
        %3182 = vmatmul.f32.gmra.mxu0 %v3103
        %v3183 = vpop.f32.mrf.mxu0
        %v3184 = vadd.f32 %v3143, %v3183
        %3185 = vdwg.mxu0
        %s3186 = scalar_lea.vmem %s4, 416
        %v3187 = vld [vmem:[%s3186] sm:$0xff]
        %v3188 = vld [vmem:[%s3186 + $0x8] sm:$0xff]
        %v3189 = vld [vmem:[%s3186 + $0x10] sm:$0xff]
        %v3190 = vld [vmem:[%s3186 + $0x18] sm:$0xff]
        %v3192 = vsel %vm424, %v3163, 0
        %v3195 = vsel %vm424, %v3166, 0
        %v3198 = vsel %vm424, %v3169, 0
        %v3201 = vsel %vm424, %v3172, 0
        %v3204 = vsel %vm424, %v3175, 0
        %v3207 = vsel %vm424, %v3178, 0
        %v3210 = vsel %vm424, %v3181, 0
        %v3213 = vsel %vm424, %v3184, 0
        %3215 = vmatpush.msra.mxu0 0.0
        %3216 = vmatpush.msra.mxu0 0.0
        %3217 = vmatpush.msra.mxu0 0.0
        %3218 = vmatpush.msra.mxu0 0.0
        %3219 = vmatpush.msra.mxu0 0.0
        %3220 = vmatpush.msra.mxu0 0.0
        %3221 = vmatpush.msra.mxu0 0.0
        %3222 = vmatpush.msra.mxu0 0.0
        %3223 = vmatpush.msra.mxu0 0.0
        %3224 = vmatpush.msra.mxu0 0.0
        %3225 = vmatpush.msra.mxu0 0.0
        %3226 = vmatpush.msra.mxu0 0.0
        %3227 = vmatpush.msra.mxu0 %v3190
        %3228 = vmatpush.msra.mxu0 %v3189
        %3229 = vmatpush.msra.mxu0 %v3188
        %3230 = vmatpush.msra.mxu0 %v3187
        %3231 = vmatmul.f32.gmra.mxu0 %v3192
        %v3232 = vpop.f32.mrf.mxu0
        %v3233 = vadd.f32 0.0, %v3232
        %3234 = vmatmul.f32.gmra.mxu0 %v3195
        %v3235 = vpop.f32.mrf.mxu0
        %v3236 = vadd.f32 0.0, %v3235
        %3237 = vmatmul.f32.gmra.mxu0 %v3198
        %v3238 = vpop.f32.mrf.mxu0
        %v3239 = vadd.f32 0.0, %v3238
        %3240 = vmatmul.f32.gmra.mxu0 %v3201
        %v3241 = vpop.f32.mrf.mxu0
        %v3242 = vadd.f32 0.0, %v3241
        %3243 = vmatmul.f32.gmra.mxu0 %v3204
        %v3244 = vpop.f32.mrf.mxu0
        %v3245 = vadd.f32 0.0, %v3244
        %3246 = vmatmul.f32.gmra.mxu0 %v3207
        %v3247 = vpop.f32.mrf.mxu0
        %v3248 = vadd.f32 0.0, %v3247
        %3249 = vmatmul.f32.gmra.mxu0 %v3210
        %v3250 = vpop.f32.mrf.mxu0
        %v3251 = vadd.f32 0.0, %v3250
        %3252 = vmatmul.f32.gmra.mxu0 %v3213
        %v3253 = vpop.f32.mrf.mxu0
        %v3254 = vadd.f32 0.0, %v3253
        %3255 = vdwg.mxu0
        %v3256 = vadd.f32 %v3079, %v3233
        %v3257 = vadd.f32 %v3080, %v3236
        %v3258 = vadd.f32 %v3081, %v3239
        %v3259 = vadd.f32 %v3082, %v3242
        %v3260 = vadd.f32 %v3083, %v3245
        %v3261 = vadd.f32 %v3084, %v3248
        %v3262 = vadd.f32 %v3085, %v3251
        %v3263 = vadd.f32 %v3086, %v3254
        %s3264 = scalar_lea.vmem %s3, 1792
        %v3265 = vld [vmem:[%s3264] sm:$0xff]
        %v3266 = vld [vmem:[%s3264 + $0x8] sm:$0xff]
        %v3267 = vld [vmem:[%s3264 + $0x10] sm:$0xff]
        %v3268 = vld [vmem:[%s3264 + $0x18] sm:$0xff]
        %v3269 = vld [vmem:[%s3264 + $0x20] sm:$0xff]
        %v3270 = vld [vmem:[%s3264 + $0x28] sm:$0xff]
        %v3271 = vld [vmem:[%s3264 + $0x30] sm:$0xff]
        %v3272 = vld [vmem:[%s3264 + $0x38] sm:$0xff]
        %v3273 = vld [vmem:[%s3264 + $0x40] sm:$0xff]
        %v3274 = vld [vmem:[%s3264 + $0x48] sm:$0xff]
        %v3275 = vld [vmem:[%s3264 + $0x50] sm:$0xff]
        %v3276 = vld [vmem:[%s3264 + $0x58] sm:$0xff]
        %v3277 = vld [vmem:[%s3264 + $0x60] sm:$0xff]
        %v3278 = vld [vmem:[%s3264 + $0x68] sm:$0xff]
        %v3279 = vld [vmem:[%s3264 + $0x70] sm:$0xff]
        %v3280 = vld [vmem:[%s3264 + $0x78] sm:$0xff]
        %3281 = vmatpush.msra.mxu0 %v787
        %3282 = vmatpush.msra.mxu0 %v786
        %3283 = vmatpush.msra.mxu0 %v785
        %3284 = vmatpush.msra.mxu0 %v784
        %3285 = vmatpush.msra.mxu0 %v783
        %3286 = vmatpush.msra.mxu0 %v782
        %3287 = vmatpush.msra.mxu0 %v781
        %3288 = vmatpush.msra.mxu0 %v780
        %3289 = vmatpush.msra.mxu0 %v779
        %3290 = vmatpush.msra.mxu0 %v778
        %3291 = vmatpush.msra.mxu0 %v777
        %3292 = vmatpush.msra.mxu0 %v776
        %3293 = vmatpush.msra.mxu0 %v775
        %3294 = vmatpush.msra.mxu0 %v774
        %3295 = vmatpush.msra.mxu0 %v773
        %3296 = vmatpush.msra.mxu0 %v772
        %3297 = vmatmul.f32.gmra.mxu0 %v3265
        %v3298 = vpop.f32.mrf.mxu0
        %v3299 = vadd.f32 0.0, %v3298
        %3300 = vmatmul.f32.gmra.mxu0 %v3267
        %v3301 = vpop.f32.mrf.mxu0
        %v3302 = vadd.f32 0.0, %v3301
        %3303 = vmatmul.f32.gmra.mxu0 %v3269
        %v3304 = vpop.f32.mrf.mxu0
        %v3305 = vadd.f32 0.0, %v3304
        %3306 = vmatmul.f32.gmra.mxu0 %v3271
        %v3307 = vpop.f32.mrf.mxu0
        %v3308 = vadd.f32 0.0, %v3307
        %3309 = vmatmul.f32.gmra.mxu0 %v3273
        %v3310 = vpop.f32.mrf.mxu0
        %v3311 = vadd.f32 0.0, %v3310
        %3312 = vmatmul.f32.gmra.mxu0 %v3275
        %v3313 = vpop.f32.mrf.mxu0
        %v3314 = vadd.f32 0.0, %v3313
        %3315 = vmatmul.f32.gmra.mxu0 %v3277
        %v3316 = vpop.f32.mrf.mxu0
        %v3317 = vadd.f32 0.0, %v3316
        %3318 = vmatmul.f32.gmra.mxu0 %v3279
        %v3319 = vpop.f32.mrf.mxu0
        %v3320 = vadd.f32 0.0, %v3319
        %3321 = vdwg.mxu0
        %3322 = vmatpush.msra.mxu0 %v803
        %3323 = vmatpush.msra.mxu0 %v802
        %3324 = vmatpush.msra.mxu0 %v801
        %3325 = vmatpush.msra.mxu0 %v800
        %3326 = vmatpush.msra.mxu0 %v799
        %3327 = vmatpush.msra.mxu0 %v798
        %3328 = vmatpush.msra.mxu0 %v797
        %3329 = vmatpush.msra.mxu0 %v796
        %3330 = vmatpush.msra.mxu0 %v795
        %3331 = vmatpush.msra.mxu0 %v794
        %3332 = vmatpush.msra.mxu0 %v793
        %3333 = vmatpush.msra.mxu0 %v792
        %3334 = vmatpush.msra.mxu0 %v791
        %3335 = vmatpush.msra.mxu0 %v790
        %3336 = vmatpush.msra.mxu0 %v789
        %3337 = vmatpush.msra.mxu0 %v788
        %3338 = vmatmul.f32.gmra.mxu0 %v3266
        %v3339 = vpop.f32.mrf.mxu0
        %v3340 = vadd.f32 %v3299, %v3339
        %3341 = vmatmul.f32.gmra.mxu0 %v3268
        %v3342 = vpop.f32.mrf.mxu0
        %v3343 = vadd.f32 %v3302, %v3342
        %3344 = vmatmul.f32.gmra.mxu0 %v3270
        %v3345 = vpop.f32.mrf.mxu0
        %v3346 = vadd.f32 %v3305, %v3345
        %3347 = vmatmul.f32.gmra.mxu0 %v3272
        %v3348 = vpop.f32.mrf.mxu0
        %v3349 = vadd.f32 %v3308, %v3348
        %3350 = vmatmul.f32.gmra.mxu0 %v3274
        %v3351 = vpop.f32.mrf.mxu0
        %v3352 = vadd.f32 %v3311, %v3351
        %3353 = vmatmul.f32.gmra.mxu0 %v3276
        %v3354 = vpop.f32.mrf.mxu0
        %v3355 = vadd.f32 %v3314, %v3354
        %3356 = vmatmul.f32.gmra.mxu0 %v3278
        %v3357 = vpop.f32.mrf.mxu0
        %v3358 = vadd.f32 %v3317, %v3357
        %3359 = vmatmul.f32.gmra.mxu0 %v3280
        %v3360 = vpop.f32.mrf.mxu0
        %v3361 = vadd.f32 %v3320, %v3360
        %3362 = vdwg.mxu0
        %s3363 = scalar_lea.vmem %s4, 448
        %v3364 = vld [vmem:[%s3363] sm:$0xff]
        %v3365 = vld [vmem:[%s3363 + $0x8] sm:$0xff]
        %v3366 = vld [vmem:[%s3363 + $0x10] sm:$0xff]
        %v3367 = vld [vmem:[%s3363 + $0x18] sm:$0xff]
        %v3369 = vsel %vm424, %v3340, 0
        %v3372 = vsel %vm424, %v3343, 0
        %v3375 = vsel %vm424, %v3346, 0
        %v3378 = vsel %vm424, %v3349, 0
        %v3381 = vsel %vm424, %v3352, 0
        %v3384 = vsel %vm424, %v3355, 0
        %v3387 = vsel %vm424, %v3358, 0
        %v3390 = vsel %vm424, %v3361, 0
        %3392 = vmatpush.msra.mxu0 0.0
        %3393 = vmatpush.msra.mxu0 0.0
        %3394 = vmatpush.msra.mxu0 0.0
        %3395 = vmatpush.msra.mxu0 0.0
        %3396 = vmatpush.msra.mxu0 0.0
        %3397 = vmatpush.msra.mxu0 0.0
        %3398 = vmatpush.msra.mxu0 0.0
        %3399 = vmatpush.msra.mxu0 0.0
        %3400 = vmatpush.msra.mxu0 0.0
        %3401 = vmatpush.msra.mxu0 0.0
        %3402 = vmatpush.msra.mxu0 0.0
        %3403 = vmatpush.msra.mxu0 0.0
        %3404 = vmatpush.msra.mxu0 %v3367
        %3405 = vmatpush.msra.mxu0 %v3366
        %3406 = vmatpush.msra.mxu0 %v3365
        %3407 = vmatpush.msra.mxu0 %v3364
        %3408 = vmatmul.f32.gmra.mxu0 %v3369
        %v3409 = vpop.f32.mrf.mxu0
        %v3410 = vadd.f32 0.0, %v3409
        %3411 = vmatmul.f32.gmra.mxu0 %v3372
        %v3412 = vpop.f32.mrf.mxu0
        %v3413 = vadd.f32 0.0, %v3412
        %3414 = vmatmul.f32.gmra.mxu0 %v3375
        %v3415 = vpop.f32.mrf.mxu0
        %v3416 = vadd.f32 0.0, %v3415
        %3417 = vmatmul.f32.gmra.mxu0 %v3378
        %v3418 = vpop.f32.mrf.mxu0
        %v3419 = vadd.f32 0.0, %v3418
        %3420 = vmatmul.f32.gmra.mxu0 %v3381
        %v3421 = vpop.f32.mrf.mxu0
        %v3422 = vadd.f32 0.0, %v3421
        %3423 = vmatmul.f32.gmra.mxu0 %v3384
        %v3424 = vpop.f32.mrf.mxu0
        %v3425 = vadd.f32 0.0, %v3424
        %3426 = vmatmul.f32.gmra.mxu0 %v3387
        %v3427 = vpop.f32.mrf.mxu0
        %v3428 = vadd.f32 0.0, %v3427
        %3429 = vmatmul.f32.gmra.mxu0 %v3390
        %v3430 = vpop.f32.mrf.mxu0
        %v3431 = vadd.f32 0.0, %v3430
        %3432 = vdwg.mxu0
        %v3433 = vadd.f32 %v3256, %v3410
        %v3434 = vadd.f32 %v3257, %v3413
        %v3435 = vadd.f32 %v3258, %v3416
        %v3436 = vadd.f32 %v3259, %v3419
        %v3437 = vadd.f32 %v3260, %v3422
        %v3438 = vadd.f32 %v3261, %v3425
        %v3439 = vadd.f32 %v3262, %v3428
        %v3440 = vadd.f32 %v3263, %v3431
        %s3441 = scalar_lea.vmem %s3, 1920
        %v3442 = vld [vmem:[%s3441] sm:$0xff]
        %v3443 = vld [vmem:[%s3441 + $0x8] sm:$0xff]
        %v3444 = vld [vmem:[%s3441 + $0x10] sm:$0xff]
        %v3445 = vld [vmem:[%s3441 + $0x18] sm:$0xff]
        %v3446 = vld [vmem:[%s3441 + $0x20] sm:$0xff]
        %v3447 = vld [vmem:[%s3441 + $0x28] sm:$0xff]
        %v3448 = vld [vmem:[%s3441 + $0x30] sm:$0xff]
        %v3449 = vld [vmem:[%s3441 + $0x38] sm:$0xff]
        %v3450 = vld [vmem:[%s3441 + $0x40] sm:$0xff]
        %v3451 = vld [vmem:[%s3441 + $0x48] sm:$0xff]
        %v3452 = vld [vmem:[%s3441 + $0x50] sm:$0xff]
        %v3453 = vld [vmem:[%s3441 + $0x58] sm:$0xff]
        %v3454 = vld [vmem:[%s3441 + $0x60] sm:$0xff]
        %v3455 = vld [vmem:[%s3441 + $0x68] sm:$0xff]
        %v3456 = vld [vmem:[%s3441 + $0x70] sm:$0xff]
        %v3457 = vld [vmem:[%s3441 + $0x78] sm:$0xff]
        %3458 = vmatpush.msra.mxu0 %v787
        %3459 = vmatpush.msra.mxu0 %v786
        %3460 = vmatpush.msra.mxu0 %v785
        %3461 = vmatpush.msra.mxu0 %v784
        %3462 = vmatpush.msra.mxu0 %v783
        %3463 = vmatpush.msra.mxu0 %v782
        %3464 = vmatpush.msra.mxu0 %v781
        %3465 = vmatpush.msra.mxu0 %v780
        %3466 = vmatpush.msra.mxu0 %v779
        %3467 = vmatpush.msra.mxu0 %v778
        %3468 = vmatpush.msra.mxu0 %v777
        %3469 = vmatpush.msra.mxu0 %v776
        %3470 = vmatpush.msra.mxu0 %v775
        %3471 = vmatpush.msra.mxu0 %v774
        %3472 = vmatpush.msra.mxu0 %v773
        %3473 = vmatpush.msra.mxu0 %v772
        %3474 = vmatmul.f32.gmra.mxu0 %v3442
        %v3475 = vpop.f32.mrf.mxu0
        %v3476 = vadd.f32 0.0, %v3475
        %3477 = vmatmul.f32.gmra.mxu0 %v3444
        %v3478 = vpop.f32.mrf.mxu0
        %v3479 = vadd.f32 0.0, %v3478
        %3480 = vmatmul.f32.gmra.mxu0 %v3446
        %v3481 = vpop.f32.mrf.mxu0
        %v3482 = vadd.f32 0.0, %v3481
        %3483 = vmatmul.f32.gmra.mxu0 %v3448
        %v3484 = vpop.f32.mrf.mxu0
        %v3485 = vadd.f32 0.0, %v3484
        %3486 = vmatmul.f32.gmra.mxu0 %v3450
        %v3487 = vpop.f32.mrf.mxu0
        %v3488 = vadd.f32 0.0, %v3487
        %3489 = vmatmul.f32.gmra.mxu0 %v3452
        %v3490 = vpop.f32.mrf.mxu0
        %v3491 = vadd.f32 0.0, %v3490
        %3492 = vmatmul.f32.gmra.mxu0 %v3454
        %v3493 = vpop.f32.mrf.mxu0
        %v3494 = vadd.f32 0.0, %v3493
        %3495 = vmatmul.f32.gmra.mxu0 %v3456
        %v3496 = vpop.f32.mrf.mxu0
        %v3497 = vadd.f32 0.0, %v3496
        %3498 = vdwg.mxu0
        %3499 = vmatpush.msra.mxu0 %v803
        %3500 = vmatpush.msra.mxu0 %v802
        %3501 = vmatpush.msra.mxu0 %v801
        %3502 = vmatpush.msra.mxu0 %v800
        %3503 = vmatpush.msra.mxu0 %v799
        %3504 = vmatpush.msra.mxu0 %v798
        %3505 = vmatpush.msra.mxu0 %v797
        %3506 = vmatpush.msra.mxu0 %v796
        %3507 = vmatpush.msra.mxu0 %v795
        %3508 = vmatpush.msra.mxu0 %v794
        %3509 = vmatpush.msra.mxu0 %v793
        %3510 = vmatpush.msra.mxu0 %v792
        %3511 = vmatpush.msra.mxu0 %v791
        %3512 = vmatpush.msra.mxu0 %v790
        %3513 = vmatpush.msra.mxu0 %v789
        %3514 = vmatpush.msra.mxu0 %v788
        %3515 = vmatmul.f32.gmra.mxu0 %v3443
        %v3516 = vpop.f32.mrf.mxu0
        %v3517 = vadd.f32 %v3476, %v3516
        %3518 = vmatmul.f32.gmra.mxu0 %v3445
        %v3519 = vpop.f32.mrf.mxu0
        %v3520 = vadd.f32 %v3479, %v3519
        %3521 = vmatmul.f32.gmra.mxu0 %v3447
        %v3522 = vpop.f32.mrf.mxu0
        %v3523 = vadd.f32 %v3482, %v3522
        %3524 = vmatmul.f32.gmra.mxu0 %v3449
        %v3525 = vpop.f32.mrf.mxu0
        %v3526 = vadd.f32 %v3485, %v3525
        %3527 = vmatmul.f32.gmra.mxu0 %v3451
        %v3528 = vpop.f32.mrf.mxu0
        %v3529 = vadd.f32 %v3488, %v3528
        %3530 = vmatmul.f32.gmra.mxu0 %v3453
        %v3531 = vpop.f32.mrf.mxu0
        %v3532 = vadd.f32 %v3491, %v3531
        %3533 = vmatmul.f32.gmra.mxu0 %v3455
        %v3534 = vpop.f32.mrf.mxu0
        %v3535 = vadd.f32 %v3494, %v3534
        %3536 = vmatmul.f32.gmra.mxu0 %v3457
        %v3537 = vpop.f32.mrf.mxu0
        %v3538 = vadd.f32 %v3497, %v3537
        %3539 = vdwg.mxu0
        %s3540 = scalar_lea.vmem %s4, 480
        %v3541 = vld [vmem:[%s3540] sm:$0xff]
        %v3542 = vld [vmem:[%s3540 + $0x8] sm:$0xff]
        %v3543 = vld [vmem:[%s3540 + $0x10] sm:$0xff]
        %v3544 = vld [vmem:[%s3540 + $0x18] sm:$0xff]
        %v3546 = vsel %vm424, %v3517, 0
        %v3549 = vsel %vm424, %v3520, 0
        %v3552 = vsel %vm424, %v3523, 0
        %v3555 = vsel %vm424, %v3526, 0
        %v3558 = vsel %vm424, %v3529, 0
        %v3561 = vsel %vm424, %v3532, 0
        %v3564 = vsel %vm424, %v3535, 0
        %v3567 = vsel %vm424, %v3538, 0
        %3569 = vmatpush.msra.mxu0 0.0
        %3570 = vmatpush.msra.mxu0 0.0
        %3571 = vmatpush.msra.mxu0 0.0
        %3572 = vmatpush.msra.mxu0 0.0
        %3573 = vmatpush.msra.mxu0 0.0
        %3574 = vmatpush.msra.mxu0 0.0
        %3575 = vmatpush.msra.mxu0 0.0
        %3576 = vmatpush.msra.mxu0 0.0
        %3577 = vmatpush.msra.mxu0 0.0
        %3578 = vmatpush.msra.mxu0 0.0
        %3579 = vmatpush.msra.mxu0 0.0
        %3580 = vmatpush.msra.mxu0 0.0
        %3581 = vmatpush.msra.mxu0 %v3544
        %3582 = vmatpush.msra.mxu0 %v3543
        %3583 = vmatpush.msra.mxu0 %v3542
        %3584 = vmatpush.msra.mxu0 %v3541
        %3585 = vmatmul.f32.gmra.mxu0 %v3546
        %v3586 = vpop.f32.mrf.mxu0
        %v3587 = vadd.f32 0.0, %v3586
        %3588 = vmatmul.f32.gmra.mxu0 %v3549
        %v3589 = vpop.f32.mrf.mxu0
        %v3590 = vadd.f32 0.0, %v3589
        %3591 = vmatmul.f32.gmra.mxu0 %v3552
        %v3592 = vpop.f32.mrf.mxu0
        %v3593 = vadd.f32 0.0, %v3592
        %3594 = vmatmul.f32.gmra.mxu0 %v3555
        %v3595 = vpop.f32.mrf.mxu0
        %v3596 = vadd.f32 0.0, %v3595
        %3597 = vmatmul.f32.gmra.mxu0 %v3558
        %v3598 = vpop.f32.mrf.mxu0
        %v3599 = vadd.f32 0.0, %v3598
        %3600 = vmatmul.f32.gmra.mxu0 %v3561
        %v3601 = vpop.f32.mrf.mxu0
        %v3602 = vadd.f32 0.0, %v3601
        %3603 = vmatmul.f32.gmra.mxu0 %v3564
        %v3604 = vpop.f32.mrf.mxu0
        %v3605 = vadd.f32 0.0, %v3604
        %3606 = vmatmul.f32.gmra.mxu0 %v3567
        %v3607 = vpop.f32.mrf.mxu0
        %v3608 = vadd.f32 0.0, %v3607
        %3609 = vdwg.mxu0
        %v3610 = vadd.f32 %v3433, %v3587
        %v3611 = vadd.f32 %v3434, %v3590
        %v3612 = vadd.f32 %v3435, %v3593
        %v3613 = vadd.f32 %v3436, %v3596
        %v3614 = vadd.f32 %v3437, %v3599
        %v3615 = vadd.f32 %v3438, %v3602
        %v3616 = vadd.f32 %v3439, %v3605
        %v3617 = vadd.f32 %v3440, %v3608
        %s3618 = scalar_lea.vmem %s3, 2048
        %v3619 = vld [vmem:[%s3618] sm:$0xff]
        %v3620 = vld [vmem:[%s3618 + $0x8] sm:$0xff]
        %v3621 = vld [vmem:[%s3618 + $0x10] sm:$0xff]
        %v3622 = vld [vmem:[%s3618 + $0x18] sm:$0xff]
        %v3623 = vld [vmem:[%s3618 + $0x20] sm:$0xff]
        %v3624 = vld [vmem:[%s3618 + $0x28] sm:$0xff]
        %v3625 = vld [vmem:[%s3618 + $0x30] sm:$0xff]
        %v3626 = vld [vmem:[%s3618 + $0x38] sm:$0xff]
        %v3627 = vld [vmem:[%s3618 + $0x40] sm:$0xff]
        %v3628 = vld [vmem:[%s3618 + $0x48] sm:$0xff]
        %v3629 = vld [vmem:[%s3618 + $0x50] sm:$0xff]
        %v3630 = vld [vmem:[%s3618 + $0x58] sm:$0xff]
        %v3631 = vld [vmem:[%s3618 + $0x60] sm:$0xff]
        %v3632 = vld [vmem:[%s3618 + $0x68] sm:$0xff]
        %v3633 = vld [vmem:[%s3618 + $0x70] sm:$0xff]
        %v3634 = vld [vmem:[%s3618 + $0x78] sm:$0xff]
        %3635 = vmatpush.msra.mxu0 %v787
        %3636 = vmatpush.msra.mxu0 %v786
        %3637 = vmatpush.msra.mxu0 %v785
        %3638 = vmatpush.msra.mxu0 %v784
        %3639 = vmatpush.msra.mxu0 %v783
        %3640 = vmatpush.msra.mxu0 %v782
        %3641 = vmatpush.msra.mxu0 %v781
        %3642 = vmatpush.msra.mxu0 %v780
        %3643 = vmatpush.msra.mxu0 %v779
        %3644 = vmatpush.msra.mxu0 %v778
        %3645 = vmatpush.msra.mxu0 %v777
        %3646 = vmatpush.msra.mxu0 %v776
        %3647 = vmatpush.msra.mxu0 %v775
        %3648 = vmatpush.msra.mxu0 %v774
        %3649 = vmatpush.msra.mxu0 %v773
        %3650 = vmatpush.msra.mxu0 %v772
        %3651 = vmatmul.f32.gmra.mxu0 %v3619
        %v3652 = vpop.f32.mrf.mxu0
        %v3653 = vadd.f32 0.0, %v3652
        %3654 = vmatmul.f32.gmra.mxu0 %v3621
        %v3655 = vpop.f32.mrf.mxu0
        %v3656 = vadd.f32 0.0, %v3655
        %3657 = vmatmul.f32.gmra.mxu0 %v3623
        %v3658 = vpop.f32.mrf.mxu0
        %v3659 = vadd.f32 0.0, %v3658
        %3660 = vmatmul.f32.gmra.mxu0 %v3625
        %v3661 = vpop.f32.mrf.mxu0
        %v3662 = vadd.f32 0.0, %v3661
        %3663 = vmatmul.f32.gmra.mxu0 %v3627
        %v3664 = vpop.f32.mrf.mxu0
        %v3665 = vadd.f32 0.0, %v3664
        %3666 = vmatmul.f32.gmra.mxu0 %v3629
        %v3667 = vpop.f32.mrf.mxu0
        %v3668 = vadd.f32 0.0, %v3667
        %3669 = vmatmul.f32.gmra.mxu0 %v3631
        %v3670 = vpop.f32.mrf.mxu0
        %v3671 = vadd.f32 0.0, %v3670
        %3672 = vmatmul.f32.gmra.mxu0 %v3633
        %v3673 = vpop.f32.mrf.mxu0
        %v3674 = vadd.f32 0.0, %v3673
        %3675 = vdwg.mxu0
        %3676 = vmatpush.msra.mxu0 %v803
        %3677 = vmatpush.msra.mxu0 %v802
        %3678 = vmatpush.msra.mxu0 %v801
        %3679 = vmatpush.msra.mxu0 %v800
        %3680 = vmatpush.msra.mxu0 %v799
        %3681 = vmatpush.msra.mxu0 %v798
        %3682 = vmatpush.msra.mxu0 %v797
        %3683 = vmatpush.msra.mxu0 %v796
        %3684 = vmatpush.msra.mxu0 %v795
        %3685 = vmatpush.msra.mxu0 %v794
        %3686 = vmatpush.msra.mxu0 %v793
        %3687 = vmatpush.msra.mxu0 %v792
        %3688 = vmatpush.msra.mxu0 %v791
        %3689 = vmatpush.msra.mxu0 %v790
        %3690 = vmatpush.msra.mxu0 %v789
        %3691 = vmatpush.msra.mxu0 %v788
        %3692 = vmatmul.f32.gmra.mxu0 %v3620
        %v3693 = vpop.f32.mrf.mxu0
        %v3694 = vadd.f32 %v3653, %v3693
        %3695 = vmatmul.f32.gmra.mxu0 %v3622
        %v3696 = vpop.f32.mrf.mxu0
        %v3697 = vadd.f32 %v3656, %v3696
        %3698 = vmatmul.f32.gmra.mxu0 %v3624
        %v3699 = vpop.f32.mrf.mxu0
        %v3700 = vadd.f32 %v3659, %v3699
        %3701 = vmatmul.f32.gmra.mxu0 %v3626
        %v3702 = vpop.f32.mrf.mxu0
        %v3703 = vadd.f32 %v3662, %v3702
        %3704 = vmatmul.f32.gmra.mxu0 %v3628
        %v3705 = vpop.f32.mrf.mxu0
        %v3706 = vadd.f32 %v3665, %v3705
        %3707 = vmatmul.f32.gmra.mxu0 %v3630
        %v3708 = vpop.f32.mrf.mxu0
        %v3709 = vadd.f32 %v3668, %v3708
        %3710 = vmatmul.f32.gmra.mxu0 %v3632
        %v3711 = vpop.f32.mrf.mxu0
        %v3712 = vadd.f32 %v3671, %v3711
        %3713 = vmatmul.f32.gmra.mxu0 %v3634
        %v3714 = vpop.f32.mrf.mxu0
        %v3715 = vadd.f32 %v3674, %v3714
        %3716 = vdwg.mxu0
        %s3717 = scalar_lea.vmem %s4, 512
        %v3718 = vld [vmem:[%s3717] sm:$0xff]
        %v3719 = vld [vmem:[%s3717 + $0x8] sm:$0xff]
        %v3720 = vld [vmem:[%s3717 + $0x10] sm:$0xff]
        %v3721 = vld [vmem:[%s3717 + $0x18] sm:$0xff]
        %v3723 = vsel %vm424, %v3694, 0
        %v3726 = vsel %vm424, %v3697, 0
        %v3729 = vsel %vm424, %v3700, 0
        %v3732 = vsel %vm424, %v3703, 0
        %v3735 = vsel %vm424, %v3706, 0
        %v3738 = vsel %vm424, %v3709, 0
        %v3741 = vsel %vm424, %v3712, 0
        %v3744 = vsel %vm424, %v3715, 0
        %3746 = vmatpush.msra.mxu0 0.0
        %3747 = vmatpush.msra.mxu0 0.0
        %3748 = vmatpush.msra.mxu0 0.0
        %3749 = vmatpush.msra.mxu0 0.0
        %3750 = vmatpush.msra.mxu0 0.0
        %3751 = vmatpush.msra.mxu0 0.0
        %3752 = vmatpush.msra.mxu0 0.0
        %3753 = vmatpush.msra.mxu0 0.0
        %3754 = vmatpush.msra.mxu0 0.0
        %3755 = vmatpush.msra.mxu0 0.0
        %3756 = vmatpush.msra.mxu0 0.0
        %3757 = vmatpush.msra.mxu0 0.0
        %3758 = vmatpush.msra.mxu0 %v3721
        %3759 = vmatpush.msra.mxu0 %v3720
        %3760 = vmatpush.msra.mxu0 %v3719
        %3761 = vmatpush.msra.mxu0 %v3718
        %3762 = vmatmul.f32.gmra.mxu0 %v3723
        %v3763 = vpop.f32.mrf.mxu0
        %v3764 = vadd.f32 0.0, %v3763
        %3765 = vmatmul.f32.gmra.mxu0 %v3726
        %v3766 = vpop.f32.mrf.mxu0
        %v3767 = vadd.f32 0.0, %v3766
        %3768 = vmatmul.f32.gmra.mxu0 %v3729
        %v3769 = vpop.f32.mrf.mxu0
        %v3770 = vadd.f32 0.0, %v3769
        %3771 = vmatmul.f32.gmra.mxu0 %v3732
        %v3772 = vpop.f32.mrf.mxu0
        %v3773 = vadd.f32 0.0, %v3772
        %3774 = vmatmul.f32.gmra.mxu0 %v3735
        %v3775 = vpop.f32.mrf.mxu0
        %v3776 = vadd.f32 0.0, %v3775
        %3777 = vmatmul.f32.gmra.mxu0 %v3738
        %v3778 = vpop.f32.mrf.mxu0
        %v3779 = vadd.f32 0.0, %v3778
        %3780 = vmatmul.f32.gmra.mxu0 %v3741
        %v3781 = vpop.f32.mrf.mxu0
        %v3782 = vadd.f32 0.0, %v3781
        %3783 = vmatmul.f32.gmra.mxu0 %v3744
        %v3784 = vpop.f32.mrf.mxu0
        %v3785 = vadd.f32 0.0, %v3784
        %3786 = vdwg.mxu0
        %v3787 = vadd.f32 %v3610, %v3764
        %v3788 = vadd.f32 %v3611, %v3767
        %v3789 = vadd.f32 %v3612, %v3770
        %v3790 = vadd.f32 %v3613, %v3773
        %v3791 = vadd.f32 %v3614, %v3776
        %v3792 = vadd.f32 %v3615, %v3779
        %v3793 = vadd.f32 %v3616, %v3782
        %v3794 = vadd.f32 %v3617, %v3785
        %s3795 = scalar_lea.vmem %s3, 2176
        %v3796 = vld [vmem:[%s3795] sm:$0xff]
        %v3797 = vld [vmem:[%s3795 + $0x8] sm:$0xff]
        %v3798 = vld [vmem:[%s3795 + $0x10] sm:$0xff]
        %v3799 = vld [vmem:[%s3795 + $0x18] sm:$0xff]
        %v3800 = vld [vmem:[%s3795 + $0x20] sm:$0xff]
        %v3801 = vld [vmem:[%s3795 + $0x28] sm:$0xff]
        %v3802 = vld [vmem:[%s3795 + $0x30] sm:$0xff]
        %v3803 = vld [vmem:[%s3795 + $0x38] sm:$0xff]
        %v3804 = vld [vmem:[%s3795 + $0x40] sm:$0xff]
        %v3805 = vld [vmem:[%s3795 + $0x48] sm:$0xff]
        %v3806 = vld [vmem:[%s3795 + $0x50] sm:$0xff]
        %v3807 = vld [vmem:[%s3795 + $0x58] sm:$0xff]
        %v3808 = vld [vmem:[%s3795 + $0x60] sm:$0xff]
        %v3809 = vld [vmem:[%s3795 + $0x68] sm:$0xff]
        %v3810 = vld [vmem:[%s3795 + $0x70] sm:$0xff]
        %v3811 = vld [vmem:[%s3795 + $0x78] sm:$0xff]
        %3812 = vmatpush.msra.mxu0 %v787
        %3813 = vmatpush.msra.mxu0 %v786
        %3814 = vmatpush.msra.mxu0 %v785
        %3815 = vmatpush.msra.mxu0 %v784
        %3816 = vmatpush.msra.mxu0 %v783
        %3817 = vmatpush.msra.mxu0 %v782
        %3818 = vmatpush.msra.mxu0 %v781
        %3819 = vmatpush.msra.mxu0 %v780
        %3820 = vmatpush.msra.mxu0 %v779
        %3821 = vmatpush.msra.mxu0 %v778
        %3822 = vmatpush.msra.mxu0 %v777
        %3823 = vmatpush.msra.mxu0 %v776
        %3824 = vmatpush.msra.mxu0 %v775
        %3825 = vmatpush.msra.mxu0 %v774
        %3826 = vmatpush.msra.mxu0 %v773
        %3827 = vmatpush.msra.mxu0 %v772
        %3828 = vmatmul.f32.gmra.mxu0 %v3796
        %v3829 = vpop.f32.mrf.mxu0
        %v3830 = vadd.f32 0.0, %v3829
        %3831 = vmatmul.f32.gmra.mxu0 %v3798
        %v3832 = vpop.f32.mrf.mxu0
        %v3833 = vadd.f32 0.0, %v3832
        %3834 = vmatmul.f32.gmra.mxu0 %v3800
        %v3835 = vpop.f32.mrf.mxu0
        %v3836 = vadd.f32 0.0, %v3835
        %3837 = vmatmul.f32.gmra.mxu0 %v3802
        %v3838 = vpop.f32.mrf.mxu0
        %v3839 = vadd.f32 0.0, %v3838
        %3840 = vmatmul.f32.gmra.mxu0 %v3804
        %v3841 = vpop.f32.mrf.mxu0
        %v3842 = vadd.f32 0.0, %v3841
        %3843 = vmatmul.f32.gmra.mxu0 %v3806
        %v3844 = vpop.f32.mrf.mxu0
        %v3845 = vadd.f32 0.0, %v3844
        %3846 = vmatmul.f32.gmra.mxu0 %v3808
        %v3847 = vpop.f32.mrf.mxu0
        %v3848 = vadd.f32 0.0, %v3847
        %3849 = vmatmul.f32.gmra.mxu0 %v3810
        %v3850 = vpop.f32.mrf.mxu0
        %v3851 = vadd.f32 0.0, %v3850
        %3852 = vdwg.mxu0
        %3853 = vmatpush.msra.mxu0 %v803
        %3854 = vmatpush.msra.mxu0 %v802
        %3855 = vmatpush.msra.mxu0 %v801
        %3856 = vmatpush.msra.mxu0 %v800
        %3857 = vmatpush.msra.mxu0 %v799
        %3858 = vmatpush.msra.mxu0 %v798
        %3859 = vmatpush.msra.mxu0 %v797
        %3860 = vmatpush.msra.mxu0 %v796
        %3861 = vmatpush.msra.mxu0 %v795
        %3862 = vmatpush.msra.mxu0 %v794
        %3863 = vmatpush.msra.mxu0 %v793
        %3864 = vmatpush.msra.mxu0 %v792
        %3865 = vmatpush.msra.mxu0 %v791
        %3866 = vmatpush.msra.mxu0 %v790
        %3867 = vmatpush.msra.mxu0 %v789
        %3868 = vmatpush.msra.mxu0 %v788
        %3869 = vmatmul.f32.gmra.mxu0 %v3797
        %v3870 = vpop.f32.mrf.mxu0
        %v3871 = vadd.f32 %v3830, %v3870
        %3872 = vmatmul.f32.gmra.mxu0 %v3799
        %v3873 = vpop.f32.mrf.mxu0
        %v3874 = vadd.f32 %v3833, %v3873
        %3875 = vmatmul.f32.gmra.mxu0 %v3801
        %v3876 = vpop.f32.mrf.mxu0
        %v3877 = vadd.f32 %v3836, %v3876
        %3878 = vmatmul.f32.gmra.mxu0 %v3803
        %v3879 = vpop.f32.mrf.mxu0
        %v3880 = vadd.f32 %v3839, %v3879
        %3881 = vmatmul.f32.gmra.mxu0 %v3805
        %v3882 = vpop.f32.mrf.mxu0
        %v3883 = vadd.f32 %v3842, %v3882
        %3884 = vmatmul.f32.gmra.mxu0 %v3807
        %v3885 = vpop.f32.mrf.mxu0
        %v3886 = vadd.f32 %v3845, %v3885
        %3887 = vmatmul.f32.gmra.mxu0 %v3809
        %v3888 = vpop.f32.mrf.mxu0
        %v3889 = vadd.f32 %v3848, %v3888
        %3890 = vmatmul.f32.gmra.mxu0 %v3811
        %v3891 = vpop.f32.mrf.mxu0
        %v3892 = vadd.f32 %v3851, %v3891
        %3893 = vdwg.mxu0
        %s3894 = scalar_lea.vmem %s4, 544
        %v3895 = vld [vmem:[%s3894] sm:$0xff]
        %v3896 = vld [vmem:[%s3894 + $0x8] sm:$0xff]
        %v3897 = vld [vmem:[%s3894 + $0x10] sm:$0xff]
        %v3898 = vld [vmem:[%s3894 + $0x18] sm:$0xff]
        %v3900 = vsel %vm424, %v3871, 0
        %v3903 = vsel %vm424, %v3874, 0
        %v3906 = vsel %vm424, %v3877, 0
        %v3909 = vsel %vm424, %v3880, 0
        %v3912 = vsel %vm424, %v3883, 0
        %v3915 = vsel %vm424, %v3886, 0
        %v3918 = vsel %vm424, %v3889, 0
        %v3921 = vsel %vm424, %v3892, 0
        %3923 = vmatpush.msra.mxu0 0.0
        %3924 = vmatpush.msra.mxu0 0.0
        %3925 = vmatpush.msra.mxu0 0.0
        %3926 = vmatpush.msra.mxu0 0.0
        %3927 = vmatpush.msra.mxu0 0.0
        %3928 = vmatpush.msra.mxu0 0.0
        %3929 = vmatpush.msra.mxu0 0.0
        %3930 = vmatpush.msra.mxu0 0.0
        %3931 = vmatpush.msra.mxu0 0.0
        %3932 = vmatpush.msra.mxu0 0.0
        %3933 = vmatpush.msra.mxu0 0.0
        %3934 = vmatpush.msra.mxu0 0.0
        %3935 = vmatpush.msra.mxu0 %v3898
        %3936 = vmatpush.msra.mxu0 %v3897
        %3937 = vmatpush.msra.mxu0 %v3896
        %3938 = vmatpush.msra.mxu0 %v3895
        %3939 = vmatmul.f32.gmra.mxu0 %v3900
        %v3940 = vpop.f32.mrf.mxu0
        %v3941 = vadd.f32 0.0, %v3940
        %3942 = vmatmul.f32.gmra.mxu0 %v3903
        %v3943 = vpop.f32.mrf.mxu0
        %v3944 = vadd.f32 0.0, %v3943
        %3945 = vmatmul.f32.gmra.mxu0 %v3906
        %v3946 = vpop.f32.mrf.mxu0
        %v3947 = vadd.f32 0.0, %v3946
        %3948 = vmatmul.f32.gmra.mxu0 %v3909
        %v3949 = vpop.f32.mrf.mxu0
        %v3950 = vadd.f32 0.0, %v3949
        %3951 = vmatmul.f32.gmra.mxu0 %v3912
        %v3952 = vpop.f32.mrf.mxu0
        %v3953 = vadd.f32 0.0, %v3952
        %3954 = vmatmul.f32.gmra.mxu0 %v3915
        %v3955 = vpop.f32.mrf.mxu0
        %v3956 = vadd.f32 0.0, %v3955
        %3957 = vmatmul.f32.gmra.mxu0 %v3918
        %v3958 = vpop.f32.mrf.mxu0
        %v3959 = vadd.f32 0.0, %v3958
        %3960 = vmatmul.f32.gmra.mxu0 %v3921
        %v3961 = vpop.f32.mrf.mxu0
        %v3962 = vadd.f32 0.0, %v3961
        %3963 = vdwg.mxu0
        %v3964 = vadd.f32 %v3787, %v3941
        %v3965 = vadd.f32 %v3788, %v3944
        %v3966 = vadd.f32 %v3789, %v3947
        %v3967 = vadd.f32 %v3790, %v3950
        %v3968 = vadd.f32 %v3791, %v3953
        %v3969 = vadd.f32 %v3792, %v3956
        %v3970 = vadd.f32 %v3793, %v3959
        %v3971 = vadd.f32 %v3794, %v3962
        %s3972 = scalar_lea.vmem %s3, 2304
        %v3973 = vld [vmem:[%s3972] sm:$0xff]
        %v3974 = vld [vmem:[%s3972 + $0x8] sm:$0xff]
        %v3975 = vld [vmem:[%s3972 + $0x10] sm:$0xff]
        %v3976 = vld [vmem:[%s3972 + $0x18] sm:$0xff]
        %v3977 = vld [vmem:[%s3972 + $0x20] sm:$0xff]
        %v3978 = vld [vmem:[%s3972 + $0x28] sm:$0xff]
        %v3979 = vld [vmem:[%s3972 + $0x30] sm:$0xff]
        %v3980 = vld [vmem:[%s3972 + $0x38] sm:$0xff]
        %v3981 = vld [vmem:[%s3972 + $0x40] sm:$0xff]
        %v3982 = vld [vmem:[%s3972 + $0x48] sm:$0xff]
        %v3983 = vld [vmem:[%s3972 + $0x50] sm:$0xff]
        %v3984 = vld [vmem:[%s3972 + $0x58] sm:$0xff]
        %v3985 = vld [vmem:[%s3972 + $0x60] sm:$0xff]
        %v3986 = vld [vmem:[%s3972 + $0x68] sm:$0xff]
        %v3987 = vld [vmem:[%s3972 + $0x70] sm:$0xff]
        %v3988 = vld [vmem:[%s3972 + $0x78] sm:$0xff]
        %3989 = vmatpush.msra.mxu0 %v787
        %3990 = vmatpush.msra.mxu0 %v786
        %3991 = vmatpush.msra.mxu0 %v785
        %3992 = vmatpush.msra.mxu0 %v784
        %3993 = vmatpush.msra.mxu0 %v783
        %3994 = vmatpush.msra.mxu0 %v782
        %3995 = vmatpush.msra.mxu0 %v781
        %3996 = vmatpush.msra.mxu0 %v780
        %3997 = vmatpush.msra.mxu0 %v779
        %3998 = vmatpush.msra.mxu0 %v778
        %3999 = vmatpush.msra.mxu0 %v777
        %4000 = vmatpush.msra.mxu0 %v776
        %4001 = vmatpush.msra.mxu0 %v775
        %4002 = vmatpush.msra.mxu0 %v774
        %4003 = vmatpush.msra.mxu0 %v773
        %4004 = vmatpush.msra.mxu0 %v772
        %4005 = vmatmul.f32.gmra.mxu0 %v3973
        %v4006 = vpop.f32.mrf.mxu0
        %v4007 = vadd.f32 0.0, %v4006
        %4008 = vmatmul.f32.gmra.mxu0 %v3975
        %v4009 = vpop.f32.mrf.mxu0
        %v4010 = vadd.f32 0.0, %v4009
        %4011 = vmatmul.f32.gmra.mxu0 %v3977
        %v4012 = vpop.f32.mrf.mxu0
        %v4013 = vadd.f32 0.0, %v4012
        %4014 = vmatmul.f32.gmra.mxu0 %v3979
        %v4015 = vpop.f32.mrf.mxu0
        %v4016 = vadd.f32 0.0, %v4015
        %4017 = vmatmul.f32.gmra.mxu0 %v3981
        %v4018 = vpop.f32.mrf.mxu0
        %v4019 = vadd.f32 0.0, %v4018
        %4020 = vmatmul.f32.gmra.mxu0 %v3983
        %v4021 = vpop.f32.mrf.mxu0
        %v4022 = vadd.f32 0.0, %v4021
        %4023 = vmatmul.f32.gmra.mxu0 %v3985
        %v4024 = vpop.f32.mrf.mxu0
        %v4025 = vadd.f32 0.0, %v4024
        %4026 = vmatmul.f32.gmra.mxu0 %v3987
        %v4027 = vpop.f32.mrf.mxu0
        %v4028 = vadd.f32 0.0, %v4027
        %4029 = vdwg.mxu0
        %4030 = vmatpush.msra.mxu0 %v803
        %4031 = vmatpush.msra.mxu0 %v802
        %4032 = vmatpush.msra.mxu0 %v801
        %4033 = vmatpush.msra.mxu0 %v800
        %4034 = vmatpush.msra.mxu0 %v799
        %4035 = vmatpush.msra.mxu0 %v798
        %4036 = vmatpush.msra.mxu0 %v797
        %4037 = vmatpush.msra.mxu0 %v796
        %4038 = vmatpush.msra.mxu0 %v795
        %4039 = vmatpush.msra.mxu0 %v794
        %4040 = vmatpush.msra.mxu0 %v793
        %4041 = vmatpush.msra.mxu0 %v792
        %4042 = vmatpush.msra.mxu0 %v791
        %4043 = vmatpush.msra.mxu0 %v790
        %4044 = vmatpush.msra.mxu0 %v789
        %4045 = vmatpush.msra.mxu0 %v788
        %4046 = vmatmul.f32.gmra.mxu0 %v3974
        %v4047 = vpop.f32.mrf.mxu0
        %v4048 = vadd.f32 %v4007, %v4047
        %4049 = vmatmul.f32.gmra.mxu0 %v3976
        %v4050 = vpop.f32.mrf.mxu0
        %v4051 = vadd.f32 %v4010, %v4050
        %4052 = vmatmul.f32.gmra.mxu0 %v3978
        %v4053 = vpop.f32.mrf.mxu0
        %v4054 = vadd.f32 %v4013, %v4053
        %4055 = vmatmul.f32.gmra.mxu0 %v3980
        %v4056 = vpop.f32.mrf.mxu0
        %v4057 = vadd.f32 %v4016, %v4056
        %4058 = vmatmul.f32.gmra.mxu0 %v3982
        %v4059 = vpop.f32.mrf.mxu0
        %v4060 = vadd.f32 %v4019, %v4059
        %4061 = vmatmul.f32.gmra.mxu0 %v3984
        %v4062 = vpop.f32.mrf.mxu0
        %v4063 = vadd.f32 %v4022, %v4062
        %4064 = vmatmul.f32.gmra.mxu0 %v3986
        %v4065 = vpop.f32.mrf.mxu0
        %v4066 = vadd.f32 %v4025, %v4065
        %4067 = vmatmul.f32.gmra.mxu0 %v3988
        %v4068 = vpop.f32.mrf.mxu0
        %v4069 = vadd.f32 %v4028, %v4068
        %4070 = vdwg.mxu0
        %s4071 = scalar_lea.vmem %s4, 576
        %v4072 = vld [vmem:[%s4071] sm:$0xff]
        %v4073 = vld [vmem:[%s4071 + $0x8] sm:$0xff]
        %v4074 = vld [vmem:[%s4071 + $0x10] sm:$0xff]
        %v4075 = vld [vmem:[%s4071 + $0x18] sm:$0xff]
        %v4077 = vsel %vm424, %v4048, 0
        %v4080 = vsel %vm424, %v4051, 0
        %v4083 = vsel %vm424, %v4054, 0
        %v4086 = vsel %vm424, %v4057, 0
        %v4089 = vsel %vm424, %v4060, 0
        %v4092 = vsel %vm424, %v4063, 0
        %v4095 = vsel %vm424, %v4066, 0
        %v4098 = vsel %vm424, %v4069, 0
        %4100 = vmatpush.msra.mxu0 0.0
        %4101 = vmatpush.msra.mxu0 0.0
        %4102 = vmatpush.msra.mxu0 0.0
        %4103 = vmatpush.msra.mxu0 0.0
        %4104 = vmatpush.msra.mxu0 0.0
        %4105 = vmatpush.msra.mxu0 0.0
        %4106 = vmatpush.msra.mxu0 0.0
        %4107 = vmatpush.msra.mxu0 0.0
        %4108 = vmatpush.msra.mxu0 0.0
        %4109 = vmatpush.msra.mxu0 0.0
        %4110 = vmatpush.msra.mxu0 0.0
        %4111 = vmatpush.msra.mxu0 0.0
        %4112 = vmatpush.msra.mxu0 %v4075
        %4113 = vmatpush.msra.mxu0 %v4074
        %4114 = vmatpush.msra.mxu0 %v4073
        %4115 = vmatpush.msra.mxu0 %v4072
        %4116 = vmatmul.f32.gmra.mxu0 %v4077
        %v4117 = vpop.f32.mrf.mxu0
        %v4118 = vadd.f32 0.0, %v4117
        %4119 = vmatmul.f32.gmra.mxu0 %v4080
        %v4120 = vpop.f32.mrf.mxu0
        %v4121 = vadd.f32 0.0, %v4120
        %4122 = vmatmul.f32.gmra.mxu0 %v4083
        %v4123 = vpop.f32.mrf.mxu0
        %v4124 = vadd.f32 0.0, %v4123
        %4125 = vmatmul.f32.gmra.mxu0 %v4086
        %v4126 = vpop.f32.mrf.mxu0
        %v4127 = vadd.f32 0.0, %v4126
        %4128 = vmatmul.f32.gmra.mxu0 %v4089
        %v4129 = vpop.f32.mrf.mxu0
        %v4130 = vadd.f32 0.0, %v4129
        %4131 = vmatmul.f32.gmra.mxu0 %v4092
        %v4132 = vpop.f32.mrf.mxu0
        %v4133 = vadd.f32 0.0, %v4132
        %4134 = vmatmul.f32.gmra.mxu0 %v4095
        %v4135 = vpop.f32.mrf.mxu0
        %v4136 = vadd.f32 0.0, %v4135
        %4137 = vmatmul.f32.gmra.mxu0 %v4098
        %v4138 = vpop.f32.mrf.mxu0
        %v4139 = vadd.f32 0.0, %v4138
        %4140 = vdwg.mxu0
        %v4141 = vadd.f32 %v3964, %v4118
        %v4142 = vadd.f32 %v3965, %v4121
        %v4143 = vadd.f32 %v3966, %v4124
        %v4144 = vadd.f32 %v3967, %v4127
        %v4145 = vadd.f32 %v3968, %v4130
        %v4146 = vadd.f32 %v3969, %v4133
        %v4147 = vadd.f32 %v3970, %v4136
        %v4148 = vadd.f32 %v3971, %v4139
        %s4149 = scalar_lea.vmem %s3, 2432
        %v4150 = vld [vmem:[%s4149] sm:$0xff]
        %v4151 = vld [vmem:[%s4149 + $0x8] sm:$0xff]
        %v4152 = vld [vmem:[%s4149 + $0x10] sm:$0xff]
        %v4153 = vld [vmem:[%s4149 + $0x18] sm:$0xff]
        %v4154 = vld [vmem:[%s4149 + $0x20] sm:$0xff]
        %v4155 = vld [vmem:[%s4149 + $0x28] sm:$0xff]
        %v4156 = vld [vmem:[%s4149 + $0x30] sm:$0xff]
        %v4157 = vld [vmem:[%s4149 + $0x38] sm:$0xff]
        %v4158 = vld [vmem:[%s4149 + $0x40] sm:$0xff]
        %v4159 = vld [vmem:[%s4149 + $0x48] sm:$0xff]
        %v4160 = vld [vmem:[%s4149 + $0x50] sm:$0xff]
        %v4161 = vld [vmem:[%s4149 + $0x58] sm:$0xff]
        %v4162 = vld [vmem:[%s4149 + $0x60] sm:$0xff]
        %v4163 = vld [vmem:[%s4149 + $0x68] sm:$0xff]
        %v4164 = vld [vmem:[%s4149 + $0x70] sm:$0xff]
        %v4165 = vld [vmem:[%s4149 + $0x78] sm:$0xff]
        %4166 = vmatpush.msra.mxu0 %v787
        %4167 = vmatpush.msra.mxu0 %v786
        %4168 = vmatpush.msra.mxu0 %v785
        %4169 = vmatpush.msra.mxu0 %v784
        %4170 = vmatpush.msra.mxu0 %v783
        %4171 = vmatpush.msra.mxu0 %v782
        %4172 = vmatpush.msra.mxu0 %v781
        %4173 = vmatpush.msra.mxu0 %v780
        %4174 = vmatpush.msra.mxu0 %v779
        %4175 = vmatpush.msra.mxu0 %v778
        %4176 = vmatpush.msra.mxu0 %v777
        %4177 = vmatpush.msra.mxu0 %v776
        %4178 = vmatpush.msra.mxu0 %v775
        %4179 = vmatpush.msra.mxu0 %v774
        %4180 = vmatpush.msra.mxu0 %v773
        %4181 = vmatpush.msra.mxu0 %v772
        %4182 = vmatmul.f32.gmra.mxu0 %v4150
        %v4183 = vpop.f32.mrf.mxu0
        %v4184 = vadd.f32 0.0, %v4183
        %4185 = vmatmul.f32.gmra.mxu0 %v4152
        %v4186 = vpop.f32.mrf.mxu0
        %v4187 = vadd.f32 0.0, %v4186
        %4188 = vmatmul.f32.gmra.mxu0 %v4154
        %v4189 = vpop.f32.mrf.mxu0
        %v4190 = vadd.f32 0.0, %v4189
        %4191 = vmatmul.f32.gmra.mxu0 %v4156
        %v4192 = vpop.f32.mrf.mxu0
        %v4193 = vadd.f32 0.0, %v4192
        %4194 = vmatmul.f32.gmra.mxu0 %v4158
        %v4195 = vpop.f32.mrf.mxu0
        %v4196 = vadd.f32 0.0, %v4195
        %4197 = vmatmul.f32.gmra.mxu0 %v4160
        %v4198 = vpop.f32.mrf.mxu0
        %v4199 = vadd.f32 0.0, %v4198
        %4200 = vmatmul.f32.gmra.mxu0 %v4162
        %v4201 = vpop.f32.mrf.mxu0
        %v4202 = vadd.f32 0.0, %v4201
        %4203 = vmatmul.f32.gmra.mxu0 %v4164
        %v4204 = vpop.f32.mrf.mxu0
        %v4205 = vadd.f32 0.0, %v4204
        %4206 = vdwg.mxu0
        %4207 = vmatpush.msra.mxu0 %v803
        %4208 = vmatpush.msra.mxu0 %v802
        %4209 = vmatpush.msra.mxu0 %v801
        %4210 = vmatpush.msra.mxu0 %v800
        %4211 = vmatpush.msra.mxu0 %v799
        %4212 = vmatpush.msra.mxu0 %v798
        %4213 = vmatpush.msra.mxu0 %v797
        %4214 = vmatpush.msra.mxu0 %v796
        %4215 = vmatpush.msra.mxu0 %v795
        %4216 = vmatpush.msra.mxu0 %v794
        %4217 = vmatpush.msra.mxu0 %v793
        %4218 = vmatpush.msra.mxu0 %v792
        %4219 = vmatpush.msra.mxu0 %v791
        %4220 = vmatpush.msra.mxu0 %v790
        %4221 = vmatpush.msra.mxu0 %v789
        %4222 = vmatpush.msra.mxu0 %v788
        %4223 = vmatmul.f32.gmra.mxu0 %v4151
        %v4224 = vpop.f32.mrf.mxu0
        %v4225 = vadd.f32 %v4184, %v4224
        %4226 = vmatmul.f32.gmra.mxu0 %v4153
        %v4227 = vpop.f32.mrf.mxu0
        %v4228 = vadd.f32 %v4187, %v4227
        %4229 = vmatmul.f32.gmra.mxu0 %v4155
        %v4230 = vpop.f32.mrf.mxu0
        %v4231 = vadd.f32 %v4190, %v4230
        %4232 = vmatmul.f32.gmra.mxu0 %v4157
        %v4233 = vpop.f32.mrf.mxu0
        %v4234 = vadd.f32 %v4193, %v4233
        %4235 = vmatmul.f32.gmra.mxu0 %v4159
        %v4236 = vpop.f32.mrf.mxu0
        %v4237 = vadd.f32 %v4196, %v4236
        %4238 = vmatmul.f32.gmra.mxu0 %v4161
        %v4239 = vpop.f32.mrf.mxu0
        %v4240 = vadd.f32 %v4199, %v4239
        %4241 = vmatmul.f32.gmra.mxu0 %v4163
        %v4242 = vpop.f32.mrf.mxu0
        %v4243 = vadd.f32 %v4202, %v4242
        %4244 = vmatmul.f32.gmra.mxu0 %v4165
        %v4245 = vpop.f32.mrf.mxu0
        %v4246 = vadd.f32 %v4205, %v4245
        %4247 = vdwg.mxu0
        %s4248 = scalar_lea.vmem %s4, 608
        %v4249 = vld [vmem:[%s4248] sm:$0xff]
        %v4250 = vld [vmem:[%s4248 + $0x8] sm:$0xff]
        %v4251 = vld [vmem:[%s4248 + $0x10] sm:$0xff]
        %v4252 = vld [vmem:[%s4248 + $0x18] sm:$0xff]
        %v4254 = vsel %vm424, %v4225, 0
        %v4257 = vsel %vm424, %v4228, 0
        %v4260 = vsel %vm424, %v4231, 0
        %v4263 = vsel %vm424, %v4234, 0
        %v4266 = vsel %vm424, %v4237, 0
        %v4269 = vsel %vm424, %v4240, 0
        %v4272 = vsel %vm424, %v4243, 0
        %v4275 = vsel %vm424, %v4246, 0
        %4277 = vmatpush.msra.mxu0 0.0
        %4278 = vmatpush.msra.mxu0 0.0
        %4279 = vmatpush.msra.mxu0 0.0
        %4280 = vmatpush.msra.mxu0 0.0
        %4281 = vmatpush.msra.mxu0 0.0
        %4282 = vmatpush.msra.mxu0 0.0
        %4283 = vmatpush.msra.mxu0 0.0
        %4284 = vmatpush.msra.mxu0 0.0
        %4285 = vmatpush.msra.mxu0 0.0
        %4286 = vmatpush.msra.mxu0 0.0
        %4287 = vmatpush.msra.mxu0 0.0
        %4288 = vmatpush.msra.mxu0 0.0
        %4289 = vmatpush.msra.mxu0 %v4252
        %4290 = vmatpush.msra.mxu0 %v4251
        %4291 = vmatpush.msra.mxu0 %v4250
        %4292 = vmatpush.msra.mxu0 %v4249
        %4293 = vmatmul.f32.gmra.mxu0 %v4254
        %v4294 = vpop.f32.mrf.mxu0
        %v4295 = vadd.f32 0.0, %v4294
        %4296 = vmatmul.f32.gmra.mxu0 %v4257
        %v4297 = vpop.f32.mrf.mxu0
        %v4298 = vadd.f32 0.0, %v4297
        %4299 = vmatmul.f32.gmra.mxu0 %v4260
        %v4300 = vpop.f32.mrf.mxu0
        %v4301 = vadd.f32 0.0, %v4300
        %4302 = vmatmul.f32.gmra.mxu0 %v4263
        %v4303 = vpop.f32.mrf.mxu0
        %v4304 = vadd.f32 0.0, %v4303
        %4305 = vmatmul.f32.gmra.mxu0 %v4266
        %v4306 = vpop.f32.mrf.mxu0
        %v4307 = vadd.f32 0.0, %v4306
        %4308 = vmatmul.f32.gmra.mxu0 %v4269
        %v4309 = vpop.f32.mrf.mxu0
        %v4310 = vadd.f32 0.0, %v4309
        %4311 = vmatmul.f32.gmra.mxu0 %v4272
        %v4312 = vpop.f32.mrf.mxu0
        %v4313 = vadd.f32 0.0, %v4312
        %4314 = vmatmul.f32.gmra.mxu0 %v4275
        %v4315 = vpop.f32.mrf.mxu0
        %v4316 = vadd.f32 0.0, %v4315
        %4317 = vdwg.mxu0
        %v4318 = vadd.f32 %v4141, %v4295
        %v4319 = vadd.f32 %v4142, %v4298
        %v4320 = vadd.f32 %v4143, %v4301
        %v4321 = vadd.f32 %v4144, %v4304
        %v4322 = vadd.f32 %v4145, %v4307
        %v4323 = vadd.f32 %v4146, %v4310
        %v4324 = vadd.f32 %v4147, %v4313
        %v4325 = vadd.f32 %v4148, %v4316
        %s4326 = scalar_lea.vmem %s3, 2560
        %v4327 = vld [vmem:[%s4326] sm:$0xff]
        %v4328 = vld [vmem:[%s4326 + $0x8] sm:$0xff]
        %v4329 = vld [vmem:[%s4326 + $0x10] sm:$0xff]
        %v4330 = vld [vmem:[%s4326 + $0x18] sm:$0xff]
        %v4331 = vld [vmem:[%s4326 + $0x20] sm:$0xff]
        %v4332 = vld [vmem:[%s4326 + $0x28] sm:$0xff]
        %v4333 = vld [vmem:[%s4326 + $0x30] sm:$0xff]
        %v4334 = vld [vmem:[%s4326 + $0x38] sm:$0xff]
        %v4335 = vld [vmem:[%s4326 + $0x40] sm:$0xff]
        %v4336 = vld [vmem:[%s4326 + $0x48] sm:$0xff]
        %v4337 = vld [vmem:[%s4326 + $0x50] sm:$0xff]
        %v4338 = vld [vmem:[%s4326 + $0x58] sm:$0xff]
        %v4339 = vld [vmem:[%s4326 + $0x60] sm:$0xff]
        %v4340 = vld [vmem:[%s4326 + $0x68] sm:$0xff]
        %v4341 = vld [vmem:[%s4326 + $0x70] sm:$0xff]
        %v4342 = vld [vmem:[%s4326 + $0x78] sm:$0xff]
        %4343 = vmatpush.msra.mxu0 %v787
        %4344 = vmatpush.msra.mxu0 %v786
        %4345 = vmatpush.msra.mxu0 %v785
        %4346 = vmatpush.msra.mxu0 %v784
        %4347 = vmatpush.msra.mxu0 %v783
        %4348 = vmatpush.msra.mxu0 %v782
        %4349 = vmatpush.msra.mxu0 %v781
        %4350 = vmatpush.msra.mxu0 %v780
        %4351 = vmatpush.msra.mxu0 %v779
        %4352 = vmatpush.msra.mxu0 %v778
        %4353 = vmatpush.msra.mxu0 %v777
        %4354 = vmatpush.msra.mxu0 %v776
        %4355 = vmatpush.msra.mxu0 %v775
        %4356 = vmatpush.msra.mxu0 %v774
        %4357 = vmatpush.msra.mxu0 %v773
        %4358 = vmatpush.msra.mxu0 %v772
        %4359 = vmatmul.f32.gmra.mxu0 %v4327
        %v4360 = vpop.f32.mrf.mxu0
        %v4361 = vadd.f32 0.0, %v4360
        %4362 = vmatmul.f32.gmra.mxu0 %v4329
        %v4363 = vpop.f32.mrf.mxu0
        %v4364 = vadd.f32 0.0, %v4363
        %4365 = vmatmul.f32.gmra.mxu0 %v4331
        %v4366 = vpop.f32.mrf.mxu0
        %v4367 = vadd.f32 0.0, %v4366
        %4368 = vmatmul.f32.gmra.mxu0 %v4333
        %v4369 = vpop.f32.mrf.mxu0
        %v4370 = vadd.f32 0.0, %v4369
        %4371 = vmatmul.f32.gmra.mxu0 %v4335
        %v4372 = vpop.f32.mrf.mxu0
        %v4373 = vadd.f32 0.0, %v4372
        %4374 = vmatmul.f32.gmra.mxu0 %v4337
        %v4375 = vpop.f32.mrf.mxu0
        %v4376 = vadd.f32 0.0, %v4375
        %4377 = vmatmul.f32.gmra.mxu0 %v4339
        %v4378 = vpop.f32.mrf.mxu0
        %v4379 = vadd.f32 0.0, %v4378
        %4380 = vmatmul.f32.gmra.mxu0 %v4341
        %v4381 = vpop.f32.mrf.mxu0
        %v4382 = vadd.f32 0.0, %v4381
        %4383 = vdwg.mxu0
        %4384 = vmatpush.msra.mxu0 %v803
        %4385 = vmatpush.msra.mxu0 %v802
        %4386 = vmatpush.msra.mxu0 %v801
        %4387 = vmatpush.msra.mxu0 %v800
        %4388 = vmatpush.msra.mxu0 %v799
        %4389 = vmatpush.msra.mxu0 %v798
        %4390 = vmatpush.msra.mxu0 %v797
        %4391 = vmatpush.msra.mxu0 %v796
        %4392 = vmatpush.msra.mxu0 %v795
        %4393 = vmatpush.msra.mxu0 %v794
        %4394 = vmatpush.msra.mxu0 %v793
        %4395 = vmatpush.msra.mxu0 %v792
        %4396 = vmatpush.msra.mxu0 %v791
        %4397 = vmatpush.msra.mxu0 %v790
        %4398 = vmatpush.msra.mxu0 %v789
        %4399 = vmatpush.msra.mxu0 %v788
        %4400 = vmatmul.f32.gmra.mxu0 %v4328
        %v4401 = vpop.f32.mrf.mxu0
        %v4402 = vadd.f32 %v4361, %v4401
        %4403 = vmatmul.f32.gmra.mxu0 %v4330
        %v4404 = vpop.f32.mrf.mxu0
        %v4405 = vadd.f32 %v4364, %v4404
        %4406 = vmatmul.f32.gmra.mxu0 %v4332
        %v4407 = vpop.f32.mrf.mxu0
        %v4408 = vadd.f32 %v4367, %v4407
        %4409 = vmatmul.f32.gmra.mxu0 %v4334
        %v4410 = vpop.f32.mrf.mxu0
        %v4411 = vadd.f32 %v4370, %v4410
        %4412 = vmatmul.f32.gmra.mxu0 %v4336
        %v4413 = vpop.f32.mrf.mxu0
        %v4414 = vadd.f32 %v4373, %v4413
        %4415 = vmatmul.f32.gmra.mxu0 %v4338
        %v4416 = vpop.f32.mrf.mxu0
        %v4417 = vadd.f32 %v4376, %v4416
        %4418 = vmatmul.f32.gmra.mxu0 %v4340
        %v4419 = vpop.f32.mrf.mxu0
        %v4420 = vadd.f32 %v4379, %v4419
        %4421 = vmatmul.f32.gmra.mxu0 %v4342
        %v4422 = vpop.f32.mrf.mxu0
        %v4423 = vadd.f32 %v4382, %v4422
        %4424 = vdwg.mxu0
        %s4425 = scalar_lea.vmem %s4, 640
        %v4426 = vld [vmem:[%s4425] sm:$0xff]
        %v4427 = vld [vmem:[%s4425 + $0x8] sm:$0xff]
        %v4428 = vld [vmem:[%s4425 + $0x10] sm:$0xff]
        %v4429 = vld [vmem:[%s4425 + $0x18] sm:$0xff]
        %v4431 = vsel %vm424, %v4402, 0
        %v4434 = vsel %vm424, %v4405, 0
        %v4437 = vsel %vm424, %v4408, 0
        %v4440 = vsel %vm424, %v4411, 0
        %v4443 = vsel %vm424, %v4414, 0
        %v4446 = vsel %vm424, %v4417, 0
        %v4449 = vsel %vm424, %v4420, 0
        %v4452 = vsel %vm424, %v4423, 0
        %4454 = vmatpush.msra.mxu0 0.0
        %4455 = vmatpush.msra.mxu0 0.0
        %4456 = vmatpush.msra.mxu0 0.0
        %4457 = vmatpush.msra.mxu0 0.0
        %4458 = vmatpush.msra.mxu0 0.0
        %4459 = vmatpush.msra.mxu0 0.0
        %4460 = vmatpush.msra.mxu0 0.0
        %4461 = vmatpush.msra.mxu0 0.0
        %4462 = vmatpush.msra.mxu0 0.0
        %4463 = vmatpush.msra.mxu0 0.0
        %4464 = vmatpush.msra.mxu0 0.0
        %4465 = vmatpush.msra.mxu0 0.0
        %4466 = vmatpush.msra.mxu0 %v4429
        %4467 = vmatpush.msra.mxu0 %v4428
        %4468 = vmatpush.msra.mxu0 %v4427
        %4469 = vmatpush.msra.mxu0 %v4426
        %4470 = vmatmul.f32.gmra.mxu0 %v4431
        %v4471 = vpop.f32.mrf.mxu0
        %v4472 = vadd.f32 0.0, %v4471
        %4473 = vmatmul.f32.gmra.mxu0 %v4434
        %v4474 = vpop.f32.mrf.mxu0
        %v4475 = vadd.f32 0.0, %v4474
        %4476 = vmatmul.f32.gmra.mxu0 %v4437
        %v4477 = vpop.f32.mrf.mxu0
        %v4478 = vadd.f32 0.0, %v4477
        %4479 = vmatmul.f32.gmra.mxu0 %v4440
        %v4480 = vpop.f32.mrf.mxu0
        %v4481 = vadd.f32 0.0, %v4480
        %4482 = vmatmul.f32.gmra.mxu0 %v4443
        %v4483 = vpop.f32.mrf.mxu0
        %v4484 = vadd.f32 0.0, %v4483
        %4485 = vmatmul.f32.gmra.mxu0 %v4446
        %v4486 = vpop.f32.mrf.mxu0
        %v4487 = vadd.f32 0.0, %v4486
        %4488 = vmatmul.f32.gmra.mxu0 %v4449
        %v4489 = vpop.f32.mrf.mxu0
        %v4490 = vadd.f32 0.0, %v4489
        %4491 = vmatmul.f32.gmra.mxu0 %v4452
        %v4492 = vpop.f32.mrf.mxu0
        %v4493 = vadd.f32 0.0, %v4492
        %4494 = vdwg.mxu0
        %v4495 = vadd.f32 %v4318, %v4472
        %v4496 = vadd.f32 %v4319, %v4475
        %v4497 = vadd.f32 %v4320, %v4478
        %v4498 = vadd.f32 %v4321, %v4481
        %v4499 = vadd.f32 %v4322, %v4484
        %v4500 = vadd.f32 %v4323, %v4487
        %v4501 = vadd.f32 %v4324, %v4490
        %v4502 = vadd.f32 %v4325, %v4493
        %s4503 = scalar_lea.vmem %s3, 2688
        %v4504 = vld [vmem:[%s4503] sm:$0xff]
        %v4505 = vld [vmem:[%s4503 + $0x8] sm:$0xff]
        %v4506 = vld [vmem:[%s4503 + $0x10] sm:$0xff]
        %v4507 = vld [vmem:[%s4503 + $0x18] sm:$0xff]
        %v4508 = vld [vmem:[%s4503 + $0x20] sm:$0xff]
        %v4509 = vld [vmem:[%s4503 + $0x28] sm:$0xff]
        %v4510 = vld [vmem:[%s4503 + $0x30] sm:$0xff]
        %v4511 = vld [vmem:[%s4503 + $0x38] sm:$0xff]
        %v4512 = vld [vmem:[%s4503 + $0x40] sm:$0xff]
        %v4513 = vld [vmem:[%s4503 + $0x48] sm:$0xff]
        %v4514 = vld [vmem:[%s4503 + $0x50] sm:$0xff]
        %v4515 = vld [vmem:[%s4503 + $0x58] sm:$0xff]
        %v4516 = vld [vmem:[%s4503 + $0x60] sm:$0xff]
        %v4517 = vld [vmem:[%s4503 + $0x68] sm:$0xff]
        %v4518 = vld [vmem:[%s4503 + $0x70] sm:$0xff]
        %v4519 = vld [vmem:[%s4503 + $0x78] sm:$0xff]
        %4520 = vmatpush.msra.mxu0 %v787
        %4521 = vmatpush.msra.mxu0 %v786
        %4522 = vmatpush.msra.mxu0 %v785
        %4523 = vmatpush.msra.mxu0 %v784
        %4524 = vmatpush.msra.mxu0 %v783
        %4525 = vmatpush.msra.mxu0 %v782
        %4526 = vmatpush.msra.mxu0 %v781
        %4527 = vmatpush.msra.mxu0 %v780
        %4528 = vmatpush.msra.mxu0 %v779
        %4529 = vmatpush.msra.mxu0 %v778
        %4530 = vmatpush.msra.mxu0 %v777
        %4531 = vmatpush.msra.mxu0 %v776
        %4532 = vmatpush.msra.mxu0 %v775
        %4533 = vmatpush.msra.mxu0 %v774
        %4534 = vmatpush.msra.mxu0 %v773
        %4535 = vmatpush.msra.mxu0 %v772
        %4536 = vmatmul.f32.gmra.mxu0 %v4504
        %v4537 = vpop.f32.mrf.mxu0
        %v4538 = vadd.f32 0.0, %v4537
        %4539 = vmatmul.f32.gmra.mxu0 %v4506
        %v4540 = vpop.f32.mrf.mxu0
        %v4541 = vadd.f32 0.0, %v4540
        %4542 = vmatmul.f32.gmra.mxu0 %v4508
        %v4543 = vpop.f32.mrf.mxu0
        %v4544 = vadd.f32 0.0, %v4543
        %4545 = vmatmul.f32.gmra.mxu0 %v4510
        %v4546 = vpop.f32.mrf.mxu0
        %v4547 = vadd.f32 0.0, %v4546
        %4548 = vmatmul.f32.gmra.mxu0 %v4512
        %v4549 = vpop.f32.mrf.mxu0
        %v4550 = vadd.f32 0.0, %v4549
        %4551 = vmatmul.f32.gmra.mxu0 %v4514
        %v4552 = vpop.f32.mrf.mxu0
        %v4553 = vadd.f32 0.0, %v4552
        %4554 = vmatmul.f32.gmra.mxu0 %v4516
        %v4555 = vpop.f32.mrf.mxu0
        %v4556 = vadd.f32 0.0, %v4555
        %4557 = vmatmul.f32.gmra.mxu0 %v4518
        %v4558 = vpop.f32.mrf.mxu0
        %v4559 = vadd.f32 0.0, %v4558
        %4560 = vdwg.mxu0
        %4561 = vmatpush.msra.mxu0 %v803
        %4562 = vmatpush.msra.mxu0 %v802
        %4563 = vmatpush.msra.mxu0 %v801
        %4564 = vmatpush.msra.mxu0 %v800
        %4565 = vmatpush.msra.mxu0 %v799
        %4566 = vmatpush.msra.mxu0 %v798
        %4567 = vmatpush.msra.mxu0 %v797
        %4568 = vmatpush.msra.mxu0 %v796
        %4569 = vmatpush.msra.mxu0 %v795
        %4570 = vmatpush.msra.mxu0 %v794
        %4571 = vmatpush.msra.mxu0 %v793
        %4572 = vmatpush.msra.mxu0 %v792
        %4573 = vmatpush.msra.mxu0 %v791
        %4574 = vmatpush.msra.mxu0 %v790
        %4575 = vmatpush.msra.mxu0 %v789
        %4576 = vmatpush.msra.mxu0 %v788
        %4577 = vmatmul.f32.gmra.mxu0 %v4505
        %v4578 = vpop.f32.mrf.mxu0
        %v4579 = vadd.f32 %v4538, %v4578
        %4580 = vmatmul.f32.gmra.mxu0 %v4507
        %v4581 = vpop.f32.mrf.mxu0
        %v4582 = vadd.f32 %v4541, %v4581
        %4583 = vmatmul.f32.gmra.mxu0 %v4509
        %v4584 = vpop.f32.mrf.mxu0
        %v4585 = vadd.f32 %v4544, %v4584
        %4586 = vmatmul.f32.gmra.mxu0 %v4511
        %v4587 = vpop.f32.mrf.mxu0
        %v4588 = vadd.f32 %v4547, %v4587
        %4589 = vmatmul.f32.gmra.mxu0 %v4513
        %v4590 = vpop.f32.mrf.mxu0
        %v4591 = vadd.f32 %v4550, %v4590
        %4592 = vmatmul.f32.gmra.mxu0 %v4515
        %v4593 = vpop.f32.mrf.mxu0
        %v4594 = vadd.f32 %v4553, %v4593
        %4595 = vmatmul.f32.gmra.mxu0 %v4517
        %v4596 = vpop.f32.mrf.mxu0
        %v4597 = vadd.f32 %v4556, %v4596
        %4598 = vmatmul.f32.gmra.mxu0 %v4519
        %v4599 = vpop.f32.mrf.mxu0
        %v4600 = vadd.f32 %v4559, %v4599
        %4601 = vdwg.mxu0
        %s4602 = scalar_lea.vmem %s4, 672
        %v4603 = vld [vmem:[%s4602] sm:$0xff]
        %v4604 = vld [vmem:[%s4602 + $0x8] sm:$0xff]
        %v4605 = vld [vmem:[%s4602 + $0x10] sm:$0xff]
        %v4606 = vld [vmem:[%s4602 + $0x18] sm:$0xff]
        %v4608 = vsel %vm424, %v4579, 0
        %v4611 = vsel %vm424, %v4582, 0
        %v4614 = vsel %vm424, %v4585, 0
        %v4617 = vsel %vm424, %v4588, 0
        %v4620 = vsel %vm424, %v4591, 0
        %v4623 = vsel %vm424, %v4594, 0
        %v4626 = vsel %vm424, %v4597, 0
        %v4629 = vsel %vm424, %v4600, 0
        %4631 = vmatpush.msra.mxu0 0.0
        %4632 = vmatpush.msra.mxu0 0.0
        %4633 = vmatpush.msra.mxu0 0.0
        %4634 = vmatpush.msra.mxu0 0.0
        %4635 = vmatpush.msra.mxu0 0.0
        %4636 = vmatpush.msra.mxu0 0.0
        %4637 = vmatpush.msra.mxu0 0.0
        %4638 = vmatpush.msra.mxu0 0.0
        %4639 = vmatpush.msra.mxu0 0.0
        %4640 = vmatpush.msra.mxu0 0.0
        %4641 = vmatpush.msra.mxu0 0.0
        %4642 = vmatpush.msra.mxu0 0.0
        %4643 = vmatpush.msra.mxu0 %v4606
        %4644 = vmatpush.msra.mxu0 %v4605
        %4645 = vmatpush.msra.mxu0 %v4604
        %4646 = vmatpush.msra.mxu0 %v4603
        %4647 = vmatmul.f32.gmra.mxu0 %v4608
        %v4648 = vpop.f32.mrf.mxu0
        %v4649 = vadd.f32 0.0, %v4648
        %4650 = vmatmul.f32.gmra.mxu0 %v4611
        %v4651 = vpop.f32.mrf.mxu0
        %v4652 = vadd.f32 0.0, %v4651
        %4653 = vmatmul.f32.gmra.mxu0 %v4614
        %v4654 = vpop.f32.mrf.mxu0
        %v4655 = vadd.f32 0.0, %v4654
        %4656 = vmatmul.f32.gmra.mxu0 %v4617
        %v4657 = vpop.f32.mrf.mxu0
        %v4658 = vadd.f32 0.0, %v4657
        %4659 = vmatmul.f32.gmra.mxu0 %v4620
        %v4660 = vpop.f32.mrf.mxu0
        %v4661 = vadd.f32 0.0, %v4660
        %4662 = vmatmul.f32.gmra.mxu0 %v4623
        %v4663 = vpop.f32.mrf.mxu0
        %v4664 = vadd.f32 0.0, %v4663
        %4665 = vmatmul.f32.gmra.mxu0 %v4626
        %v4666 = vpop.f32.mrf.mxu0
        %v4667 = vadd.f32 0.0, %v4666
        %4668 = vmatmul.f32.gmra.mxu0 %v4629
        %v4669 = vpop.f32.mrf.mxu0
        %v4670 = vadd.f32 0.0, %v4669
        %4671 = vdwg.mxu0
        %v4672 = vadd.f32 %v4495, %v4649
        %v4673 = vadd.f32 %v4496, %v4652
        %v4674 = vadd.f32 %v4497, %v4655
        %v4675 = vadd.f32 %v4498, %v4658
        %v4676 = vadd.f32 %v4499, %v4661
        %v4677 = vadd.f32 %v4500, %v4664
        %v4678 = vadd.f32 %v4501, %v4667
        %v4679 = vadd.f32 %v4502, %v4670
        %s4680 = scalar_lea.vmem %s3, 2816
        %v4681 = vld [vmem:[%s4680] sm:$0xff]
        %v4682 = vld [vmem:[%s4680 + $0x8] sm:$0xff]
        %v4683 = vld [vmem:[%s4680 + $0x10] sm:$0xff]
        %v4684 = vld [vmem:[%s4680 + $0x18] sm:$0xff]
        %v4685 = vld [vmem:[%s4680 + $0x20] sm:$0xff]
        %v4686 = vld [vmem:[%s4680 + $0x28] sm:$0xff]
        %v4687 = vld [vmem:[%s4680 + $0x30] sm:$0xff]
        %v4688 = vld [vmem:[%s4680 + $0x38] sm:$0xff]
        %v4689 = vld [vmem:[%s4680 + $0x40] sm:$0xff]
        %v4690 = vld [vmem:[%s4680 + $0x48] sm:$0xff]
        %v4691 = vld [vmem:[%s4680 + $0x50] sm:$0xff]
        %v4692 = vld [vmem:[%s4680 + $0x58] sm:$0xff]
        %v4693 = vld [vmem:[%s4680 + $0x60] sm:$0xff]
        %v4694 = vld [vmem:[%s4680 + $0x68] sm:$0xff]
        %v4695 = vld [vmem:[%s4680 + $0x70] sm:$0xff]
        %v4696 = vld [vmem:[%s4680 + $0x78] sm:$0xff]
        %4697 = vmatpush.msra.mxu0 %v787
        %4698 = vmatpush.msra.mxu0 %v786
        %4699 = vmatpush.msra.mxu0 %v785
        %4700 = vmatpush.msra.mxu0 %v784
        %4701 = vmatpush.msra.mxu0 %v783
        %4702 = vmatpush.msra.mxu0 %v782
        %4703 = vmatpush.msra.mxu0 %v781
        %4704 = vmatpush.msra.mxu0 %v780
        %4705 = vmatpush.msra.mxu0 %v779
        %4706 = vmatpush.msra.mxu0 %v778
        %4707 = vmatpush.msra.mxu0 %v777
        %4708 = vmatpush.msra.mxu0 %v776
        %4709 = vmatpush.msra.mxu0 %v775
        %4710 = vmatpush.msra.mxu0 %v774
        %4711 = vmatpush.msra.mxu0 %v773
        %4712 = vmatpush.msra.mxu0 %v772
        %4713 = vmatmul.f32.gmra.mxu0 %v4681
        %v4714 = vpop.f32.mrf.mxu0
        %v4715 = vadd.f32 0.0, %v4714
        %4716 = vmatmul.f32.gmra.mxu0 %v4683
        %v4717 = vpop.f32.mrf.mxu0
        %v4718 = vadd.f32 0.0, %v4717
        %4719 = vmatmul.f32.gmra.mxu0 %v4685
        %v4720 = vpop.f32.mrf.mxu0
        %v4721 = vadd.f32 0.0, %v4720
        %4722 = vmatmul.f32.gmra.mxu0 %v4687
        %v4723 = vpop.f32.mrf.mxu0
        %v4724 = vadd.f32 0.0, %v4723
        %4725 = vmatmul.f32.gmra.mxu0 %v4689
        %v4726 = vpop.f32.mrf.mxu0
        %v4727 = vadd.f32 0.0, %v4726
        %4728 = vmatmul.f32.gmra.mxu0 %v4691
        %v4729 = vpop.f32.mrf.mxu0
        %v4730 = vadd.f32 0.0, %v4729
        %4731 = vmatmul.f32.gmra.mxu0 %v4693
        %v4732 = vpop.f32.mrf.mxu0
        %v4733 = vadd.f32 0.0, %v4732
        %4734 = vmatmul.f32.gmra.mxu0 %v4695
        %v4735 = vpop.f32.mrf.mxu0
        %v4736 = vadd.f32 0.0, %v4735
        %4737 = vdwg.mxu0
        %4738 = vmatpush.msra.mxu0 %v803
        %4739 = vmatpush.msra.mxu0 %v802
        %4740 = vmatpush.msra.mxu0 %v801
        %4741 = vmatpush.msra.mxu0 %v800
        %4742 = vmatpush.msra.mxu0 %v799
        %4743 = vmatpush.msra.mxu0 %v798
        %4744 = vmatpush.msra.mxu0 %v797
        %4745 = vmatpush.msra.mxu0 %v796
        %4746 = vmatpush.msra.mxu0 %v795
        %4747 = vmatpush.msra.mxu0 %v794
        %4748 = vmatpush.msra.mxu0 %v793
        %4749 = vmatpush.msra.mxu0 %v792
        %4750 = vmatpush.msra.mxu0 %v791
        %4751 = vmatpush.msra.mxu0 %v790
        %4752 = vmatpush.msra.mxu0 %v789
        %4753 = vmatpush.msra.mxu0 %v788
        %4754 = vmatmul.f32.gmra.mxu0 %v4682
        %v4755 = vpop.f32.mrf.mxu0
        %v4756 = vadd.f32 %v4715, %v4755
        %4757 = vmatmul.f32.gmra.mxu0 %v4684
        %v4758 = vpop.f32.mrf.mxu0
        %v4759 = vadd.f32 %v4718, %v4758
        %4760 = vmatmul.f32.gmra.mxu0 %v4686
        %v4761 = vpop.f32.mrf.mxu0
        %v4762 = vadd.f32 %v4721, %v4761
        %4763 = vmatmul.f32.gmra.mxu0 %v4688
        %v4764 = vpop.f32.mrf.mxu0
        %v4765 = vadd.f32 %v4724, %v4764
        %4766 = vmatmul.f32.gmra.mxu0 %v4690
        %v4767 = vpop.f32.mrf.mxu0
        %v4768 = vadd.f32 %v4727, %v4767
        %4769 = vmatmul.f32.gmra.mxu0 %v4692
        %v4770 = vpop.f32.mrf.mxu0
        %v4771 = vadd.f32 %v4730, %v4770
        %4772 = vmatmul.f32.gmra.mxu0 %v4694
        %v4773 = vpop.f32.mrf.mxu0
        %v4774 = vadd.f32 %v4733, %v4773
        %4775 = vmatmul.f32.gmra.mxu0 %v4696
        %v4776 = vpop.f32.mrf.mxu0
        %v4777 = vadd.f32 %v4736, %v4776
        %4778 = vdwg.mxu0
        %s4779 = scalar_lea.vmem %s4, 704
        %v4780 = vld [vmem:[%s4779] sm:$0xff]
        %v4781 = vld [vmem:[%s4779 + $0x8] sm:$0xff]
        %v4782 = vld [vmem:[%s4779 + $0x10] sm:$0xff]
        %v4783 = vld [vmem:[%s4779 + $0x18] sm:$0xff]
        %v4785 = vsel %vm424, %v4756, 0
        %v4788 = vsel %vm424, %v4759, 0
        %v4791 = vsel %vm424, %v4762, 0
        %v4794 = vsel %vm424, %v4765, 0
        %v4797 = vsel %vm424, %v4768, 0
        %v4800 = vsel %vm424, %v4771, 0
        %v4803 = vsel %vm424, %v4774, 0
        %v4806 = vsel %vm424, %v4777, 0
        %4808 = vmatpush.msra.mxu0 0.0
        %4809 = vmatpush.msra.mxu0 0.0
        %4810 = vmatpush.msra.mxu0 0.0
        %4811 = vmatpush.msra.mxu0 0.0
        %4812 = vmatpush.msra.mxu0 0.0
        %4813 = vmatpush.msra.mxu0 0.0
        %4814 = vmatpush.msra.mxu0 0.0
        %4815 = vmatpush.msra.mxu0 0.0
        %4816 = vmatpush.msra.mxu0 0.0
        %4817 = vmatpush.msra.mxu0 0.0
        %4818 = vmatpush.msra.mxu0 0.0
        %4819 = vmatpush.msra.mxu0 0.0
        %4820 = vmatpush.msra.mxu0 %v4783
        %4821 = vmatpush.msra.mxu0 %v4782
        %4822 = vmatpush.msra.mxu0 %v4781
        %4823 = vmatpush.msra.mxu0 %v4780
        %4824 = vmatmul.f32.gmra.mxu0 %v4785
        %v4825 = vpop.f32.mrf.mxu0
        %v4826 = vadd.f32 0.0, %v4825
        %4827 = vmatmul.f32.gmra.mxu0 %v4788
        %v4828 = vpop.f32.mrf.mxu0
        %v4829 = vadd.f32 0.0, %v4828
        %4830 = vmatmul.f32.gmra.mxu0 %v4791
        %v4831 = vpop.f32.mrf.mxu0
        %v4832 = vadd.f32 0.0, %v4831
        %4833 = vmatmul.f32.gmra.mxu0 %v4794
        %v4834 = vpop.f32.mrf.mxu0
        %v4835 = vadd.f32 0.0, %v4834
        %4836 = vmatmul.f32.gmra.mxu0 %v4797
        %v4837 = vpop.f32.mrf.mxu0
        %v4838 = vadd.f32 0.0, %v4837
        %4839 = vmatmul.f32.gmra.mxu0 %v4800
        %v4840 = vpop.f32.mrf.mxu0
        %v4841 = vadd.f32 0.0, %v4840
        %4842 = vmatmul.f32.gmra.mxu0 %v4803
        %v4843 = vpop.f32.mrf.mxu0
        %v4844 = vadd.f32 0.0, %v4843
        %4845 = vmatmul.f32.gmra.mxu0 %v4806
        %v4846 = vpop.f32.mrf.mxu0
        %v4847 = vadd.f32 0.0, %v4846
        %4848 = vdwg.mxu0
        %v4849 = vadd.f32 %v4672, %v4826
        %v4850 = vadd.f32 %v4673, %v4829
        %v4851 = vadd.f32 %v4674, %v4832
        %v4852 = vadd.f32 %v4675, %v4835
        %v4853 = vadd.f32 %v4676, %v4838
        %v4854 = vadd.f32 %v4677, %v4841
        %v4855 = vadd.f32 %v4678, %v4844
        %v4856 = vadd.f32 %v4679, %v4847
        %s4857 = scalar_lea.vmem %s3, 2944
        %v4858 = vld [vmem:[%s4857] sm:$0xff]
        %v4859 = vld [vmem:[%s4857 + $0x8] sm:$0xff]
        %v4860 = vld [vmem:[%s4857 + $0x10] sm:$0xff]
        %v4861 = vld [vmem:[%s4857 + $0x18] sm:$0xff]
        %v4862 = vld [vmem:[%s4857 + $0x20] sm:$0xff]
        %v4863 = vld [vmem:[%s4857 + $0x28] sm:$0xff]
        %v4864 = vld [vmem:[%s4857 + $0x30] sm:$0xff]
        %v4865 = vld [vmem:[%s4857 + $0x38] sm:$0xff]
        %v4866 = vld [vmem:[%s4857 + $0x40] sm:$0xff]
        %v4867 = vld [vmem:[%s4857 + $0x48] sm:$0xff]
        %v4868 = vld [vmem:[%s4857 + $0x50] sm:$0xff]
        %v4869 = vld [vmem:[%s4857 + $0x58] sm:$0xff]
        %v4870 = vld [vmem:[%s4857 + $0x60] sm:$0xff]
        %v4871 = vld [vmem:[%s4857 + $0x68] sm:$0xff]
        %v4872 = vld [vmem:[%s4857 + $0x70] sm:$0xff]
        %v4873 = vld [vmem:[%s4857 + $0x78] sm:$0xff]
        %4874 = vmatpush.msra.mxu0 %v787
        %4875 = vmatpush.msra.mxu0 %v786
        %4876 = vmatpush.msra.mxu0 %v785
        %4877 = vmatpush.msra.mxu0 %v784
        %4878 = vmatpush.msra.mxu0 %v783
        %4879 = vmatpush.msra.mxu0 %v782
        %4880 = vmatpush.msra.mxu0 %v781
        %4881 = vmatpush.msra.mxu0 %v780
        %4882 = vmatpush.msra.mxu0 %v779
        %4883 = vmatpush.msra.mxu0 %v778
        %4884 = vmatpush.msra.mxu0 %v777
        %4885 = vmatpush.msra.mxu0 %v776
        %4886 = vmatpush.msra.mxu0 %v775
        %4887 = vmatpush.msra.mxu0 %v774
        %4888 = vmatpush.msra.mxu0 %v773
        %4889 = vmatpush.msra.mxu0 %v772
        %4890 = vmatmul.f32.gmra.mxu0 %v4858
        %v4891 = vpop.f32.mrf.mxu0
        %v4892 = vadd.f32 0.0, %v4891
        %4893 = vmatmul.f32.gmra.mxu0 %v4860
        %v4894 = vpop.f32.mrf.mxu0
        %v4895 = vadd.f32 0.0, %v4894
        %4896 = vmatmul.f32.gmra.mxu0 %v4862
        %v4897 = vpop.f32.mrf.mxu0
        %v4898 = vadd.f32 0.0, %v4897
        %4899 = vmatmul.f32.gmra.mxu0 %v4864
        %v4900 = vpop.f32.mrf.mxu0
        %v4901 = vadd.f32 0.0, %v4900
        %4902 = vmatmul.f32.gmra.mxu0 %v4866
        %v4903 = vpop.f32.mrf.mxu0
        %v4904 = vadd.f32 0.0, %v4903
        %4905 = vmatmul.f32.gmra.mxu0 %v4868
        %v4906 = vpop.f32.mrf.mxu0
        %v4907 = vadd.f32 0.0, %v4906
        %4908 = vmatmul.f32.gmra.mxu0 %v4870
        %v4909 = vpop.f32.mrf.mxu0
        %v4910 = vadd.f32 0.0, %v4909
        %4911 = vmatmul.f32.gmra.mxu0 %v4872
        %v4912 = vpop.f32.mrf.mxu0
        %v4913 = vadd.f32 0.0, %v4912
        %4914 = vdwg.mxu0
        %4915 = vmatpush.msra.mxu0 %v803
        %4916 = vmatpush.msra.mxu0 %v802
        %4917 = vmatpush.msra.mxu0 %v801
        %4918 = vmatpush.msra.mxu0 %v800
        %4919 = vmatpush.msra.mxu0 %v799
        %4920 = vmatpush.msra.mxu0 %v798
        %4921 = vmatpush.msra.mxu0 %v797
        %4922 = vmatpush.msra.mxu0 %v796
        %4923 = vmatpush.msra.mxu0 %v795
        %4924 = vmatpush.msra.mxu0 %v794
        %4925 = vmatpush.msra.mxu0 %v793
        %4926 = vmatpush.msra.mxu0 %v792
        %4927 = vmatpush.msra.mxu0 %v791
        %4928 = vmatpush.msra.mxu0 %v790
        %4929 = vmatpush.msra.mxu0 %v789
        %4930 = vmatpush.msra.mxu0 %v788
        %4931 = vmatmul.f32.gmra.mxu0 %v4859
        %v4932 = vpop.f32.mrf.mxu0
        %v4933 = vadd.f32 %v4892, %v4932
        %4934 = vmatmul.f32.gmra.mxu0 %v4861
        %v4935 = vpop.f32.mrf.mxu0
        %v4936 = vadd.f32 %v4895, %v4935
        %4937 = vmatmul.f32.gmra.mxu0 %v4863
        %v4938 = vpop.f32.mrf.mxu0
        %v4939 = vadd.f32 %v4898, %v4938
        %4940 = vmatmul.f32.gmra.mxu0 %v4865
        %v4941 = vpop.f32.mrf.mxu0
        %v4942 = vadd.f32 %v4901, %v4941
        %4943 = vmatmul.f32.gmra.mxu0 %v4867
        %v4944 = vpop.f32.mrf.mxu0
        %v4945 = vadd.f32 %v4904, %v4944
        %4946 = vmatmul.f32.gmra.mxu0 %v4869
        %v4947 = vpop.f32.mrf.mxu0
        %v4948 = vadd.f32 %v4907, %v4947
        %4949 = vmatmul.f32.gmra.mxu0 %v4871
        %v4950 = vpop.f32.mrf.mxu0
        %v4951 = vadd.f32 %v4910, %v4950
        %4952 = vmatmul.f32.gmra.mxu0 %v4873
        %v4953 = vpop.f32.mrf.mxu0
        %v4954 = vadd.f32 %v4913, %v4953
        %4955 = vdwg.mxu0
        %s4956 = scalar_lea.vmem %s4, 736
        %v4957 = vld [vmem:[%s4956] sm:$0xff]
        %v4958 = vld [vmem:[%s4956 + $0x8] sm:$0xff]
        %v4959 = vld [vmem:[%s4956 + $0x10] sm:$0xff]
        %v4960 = vld [vmem:[%s4956 + $0x18] sm:$0xff]
        %v4962 = vsel %vm424, %v4933, 0
        %v4965 = vsel %vm424, %v4936, 0
        %v4968 = vsel %vm424, %v4939, 0
        %v4971 = vsel %vm424, %v4942, 0
        %v4974 = vsel %vm424, %v4945, 0
        %v4977 = vsel %vm424, %v4948, 0
        %v4980 = vsel %vm424, %v4951, 0
        %v4983 = vsel %vm424, %v4954, 0
        %4985 = vmatpush.msra.mxu0 0.0
        %4986 = vmatpush.msra.mxu0 0.0
        %4987 = vmatpush.msra.mxu0 0.0
        %4988 = vmatpush.msra.mxu0 0.0
        %4989 = vmatpush.msra.mxu0 0.0
        %4990 = vmatpush.msra.mxu0 0.0
        %4991 = vmatpush.msra.mxu0 0.0
        %4992 = vmatpush.msra.mxu0 0.0
        %4993 = vmatpush.msra.mxu0 0.0
        %4994 = vmatpush.msra.mxu0 0.0
        %4995 = vmatpush.msra.mxu0 0.0
        %4996 = vmatpush.msra.mxu0 0.0
        %4997 = vmatpush.msra.mxu0 %v4960
        %4998 = vmatpush.msra.mxu0 %v4959
        %4999 = vmatpush.msra.mxu0 %v4958
        %5000 = vmatpush.msra.mxu0 %v4957
        %5001 = vmatmul.f32.gmra.mxu0 %v4962
        %v5002 = vpop.f32.mrf.mxu0
        %v5003 = vadd.f32 0.0, %v5002
        %5004 = vmatmul.f32.gmra.mxu0 %v4965
        %v5005 = vpop.f32.mrf.mxu0
        %v5006 = vadd.f32 0.0, %v5005
        %5007 = vmatmul.f32.gmra.mxu0 %v4968
        %v5008 = vpop.f32.mrf.mxu0
        %v5009 = vadd.f32 0.0, %v5008
        %5010 = vmatmul.f32.gmra.mxu0 %v4971
        %v5011 = vpop.f32.mrf.mxu0
        %v5012 = vadd.f32 0.0, %v5011
        %5013 = vmatmul.f32.gmra.mxu0 %v4974
        %v5014 = vpop.f32.mrf.mxu0
        %v5015 = vadd.f32 0.0, %v5014
        %5016 = vmatmul.f32.gmra.mxu0 %v4977
        %v5017 = vpop.f32.mrf.mxu0
        %v5018 = vadd.f32 0.0, %v5017
        %5019 = vmatmul.f32.gmra.mxu0 %v4980
        %v5020 = vpop.f32.mrf.mxu0
        %v5021 = vadd.f32 0.0, %v5020
        %5022 = vmatmul.f32.gmra.mxu0 %v4983
        %v5023 = vpop.f32.mrf.mxu0
        %v5024 = vadd.f32 0.0, %v5023
        %5025 = vdwg.mxu0
        %v5026 = vadd.f32 %v4849, %v5003
        %v5027 = vadd.f32 %v4850, %v5006
        %v5028 = vadd.f32 %v4851, %v5009
        %v5029 = vadd.f32 %v4852, %v5012
        %v5030 = vadd.f32 %v4853, %v5015
        %v5031 = vadd.f32 %v4854, %v5018
        %v5032 = vadd.f32 %v4855, %v5021
        %v5033 = vadd.f32 %v4856, %v5024
        %s5034 = scalar_lea.vmem %s3, 3072
        %v5035 = vld [vmem:[%s5034] sm:$0xff]
        %v5036 = vld [vmem:[%s5034 + $0x8] sm:$0xff]
        %v5037 = vld [vmem:[%s5034 + $0x10] sm:$0xff]
        %v5038 = vld [vmem:[%s5034 + $0x18] sm:$0xff]
        %v5039 = vld [vmem:[%s5034 + $0x20] sm:$0xff]
        %v5040 = vld [vmem:[%s5034 + $0x28] sm:$0xff]
        %v5041 = vld [vmem:[%s5034 + $0x30] sm:$0xff]
        %v5042 = vld [vmem:[%s5034 + $0x38] sm:$0xff]
        %v5043 = vld [vmem:[%s5034 + $0x40] sm:$0xff]
        %v5044 = vld [vmem:[%s5034 + $0x48] sm:$0xff]
        %v5045 = vld [vmem:[%s5034 + $0x50] sm:$0xff]
        %v5046 = vld [vmem:[%s5034 + $0x58] sm:$0xff]
        %v5047 = vld [vmem:[%s5034 + $0x60] sm:$0xff]
        %v5048 = vld [vmem:[%s5034 + $0x68] sm:$0xff]
        %v5049 = vld [vmem:[%s5034 + $0x70] sm:$0xff]
        %v5050 = vld [vmem:[%s5034 + $0x78] sm:$0xff]
        %5051 = vmatpush.msra.mxu0 %v787
        %5052 = vmatpush.msra.mxu0 %v786
        %5053 = vmatpush.msra.mxu0 %v785
        %5054 = vmatpush.msra.mxu0 %v784
        %5055 = vmatpush.msra.mxu0 %v783
        %5056 = vmatpush.msra.mxu0 %v782
        %5057 = vmatpush.msra.mxu0 %v781
        %5058 = vmatpush.msra.mxu0 %v780
        %5059 = vmatpush.msra.mxu0 %v779
        %5060 = vmatpush.msra.mxu0 %v778
        %5061 = vmatpush.msra.mxu0 %v777
        %5062 = vmatpush.msra.mxu0 %v776
        %5063 = vmatpush.msra.mxu0 %v775
        %5064 = vmatpush.msra.mxu0 %v774
        %5065 = vmatpush.msra.mxu0 %v773
        %5066 = vmatpush.msra.mxu0 %v772
        %5067 = vmatmul.f32.gmra.mxu0 %v5035
        %v5068 = vpop.f32.mrf.mxu0
        %v5069 = vadd.f32 0.0, %v5068
        %5070 = vmatmul.f32.gmra.mxu0 %v5037
        %v5071 = vpop.f32.mrf.mxu0
        %v5072 = vadd.f32 0.0, %v5071
        %5073 = vmatmul.f32.gmra.mxu0 %v5039
        %v5074 = vpop.f32.mrf.mxu0
        %v5075 = vadd.f32 0.0, %v5074
        %5076 = vmatmul.f32.gmra.mxu0 %v5041
        %v5077 = vpop.f32.mrf.mxu0
        %v5078 = vadd.f32 0.0, %v5077
        %5079 = vmatmul.f32.gmra.mxu0 %v5043
        %v5080 = vpop.f32.mrf.mxu0
        %v5081 = vadd.f32 0.0, %v5080
        %5082 = vmatmul.f32.gmra.mxu0 %v5045
        %v5083 = vpop.f32.mrf.mxu0
        %v5084 = vadd.f32 0.0, %v5083
        %5085 = vmatmul.f32.gmra.mxu0 %v5047
        %v5086 = vpop.f32.mrf.mxu0
        %v5087 = vadd.f32 0.0, %v5086
        %5088 = vmatmul.f32.gmra.mxu0 %v5049
        %v5089 = vpop.f32.mrf.mxu0
        %v5090 = vadd.f32 0.0, %v5089
        %5091 = vdwg.mxu0
        %5092 = vmatpush.msra.mxu0 %v803
        %5093 = vmatpush.msra.mxu0 %v802
        %5094 = vmatpush.msra.mxu0 %v801
        %5095 = vmatpush.msra.mxu0 %v800
        %5096 = vmatpush.msra.mxu0 %v799
        %5097 = vmatpush.msra.mxu0 %v798
        %5098 = vmatpush.msra.mxu0 %v797
        %5099 = vmatpush.msra.mxu0 %v796
        %5100 = vmatpush.msra.mxu0 %v795
        %5101 = vmatpush.msra.mxu0 %v794
        %5102 = vmatpush.msra.mxu0 %v793
        %5103 = vmatpush.msra.mxu0 %v792
        %5104 = vmatpush.msra.mxu0 %v791
        %5105 = vmatpush.msra.mxu0 %v790
        %5106 = vmatpush.msra.mxu0 %v789
        %5107 = vmatpush.msra.mxu0 %v788
        %5108 = vmatmul.f32.gmra.mxu0 %v5036
        %v5109 = vpop.f32.mrf.mxu0
        %v5110 = vadd.f32 %v5069, %v5109
        %5111 = vmatmul.f32.gmra.mxu0 %v5038
        %v5112 = vpop.f32.mrf.mxu0
        %v5113 = vadd.f32 %v5072, %v5112
        %5114 = vmatmul.f32.gmra.mxu0 %v5040
        %v5115 = vpop.f32.mrf.mxu0
        %v5116 = vadd.f32 %v5075, %v5115
        %5117 = vmatmul.f32.gmra.mxu0 %v5042
        %v5118 = vpop.f32.mrf.mxu0
        %v5119 = vadd.f32 %v5078, %v5118
        %5120 = vmatmul.f32.gmra.mxu0 %v5044
        %v5121 = vpop.f32.mrf.mxu0
        %v5122 = vadd.f32 %v5081, %v5121
        %5123 = vmatmul.f32.gmra.mxu0 %v5046
        %v5124 = vpop.f32.mrf.mxu0
        %v5125 = vadd.f32 %v5084, %v5124
        %5126 = vmatmul.f32.gmra.mxu0 %v5048
        %v5127 = vpop.f32.mrf.mxu0
        %v5128 = vadd.f32 %v5087, %v5127
        %5129 = vmatmul.f32.gmra.mxu0 %v5050
        %v5130 = vpop.f32.mrf.mxu0
        %v5131 = vadd.f32 %v5090, %v5130
        %5132 = vdwg.mxu0
        %s5133 = scalar_lea.vmem %s4, 768
        %v5134 = vld [vmem:[%s5133] sm:$0xff]
        %v5135 = vld [vmem:[%s5133 + $0x8] sm:$0xff]
        %v5136 = vld [vmem:[%s5133 + $0x10] sm:$0xff]
        %v5137 = vld [vmem:[%s5133 + $0x18] sm:$0xff]
        %v5139 = vsel %vm424, %v5110, 0
        %v5142 = vsel %vm424, %v5113, 0
        %v5145 = vsel %vm424, %v5116, 0
        %v5148 = vsel %vm424, %v5119, 0
        %v5151 = vsel %vm424, %v5122, 0
        %v5154 = vsel %vm424, %v5125, 0
        %v5157 = vsel %vm424, %v5128, 0
        %v5160 = vsel %vm424, %v5131, 0
        %5162 = vmatpush.msra.mxu0 0.0
        %5163 = vmatpush.msra.mxu0 0.0
        %5164 = vmatpush.msra.mxu0 0.0
        %5165 = vmatpush.msra.mxu0 0.0
        %5166 = vmatpush.msra.mxu0 0.0
        %5167 = vmatpush.msra.mxu0 0.0
        %5168 = vmatpush.msra.mxu0 0.0
        %5169 = vmatpush.msra.mxu0 0.0
        %5170 = vmatpush.msra.mxu0 0.0
        %5171 = vmatpush.msra.mxu0 0.0
        %5172 = vmatpush.msra.mxu0 0.0
        %5173 = vmatpush.msra.mxu0 0.0
        %5174 = vmatpush.msra.mxu0 %v5137
        %5175 = vmatpush.msra.mxu0 %v5136
        %5176 = vmatpush.msra.mxu0 %v5135
        %5177 = vmatpush.msra.mxu0 %v5134
        %5178 = vmatmul.f32.gmra.mxu0 %v5139
        %v5179 = vpop.f32.mrf.mxu0
        %v5180 = vadd.f32 0.0, %v5179
        %5181 = vmatmul.f32.gmra.mxu0 %v5142
        %v5182 = vpop.f32.mrf.mxu0
        %v5183 = vadd.f32 0.0, %v5182
        %5184 = vmatmul.f32.gmra.mxu0 %v5145
        %v5185 = vpop.f32.mrf.mxu0
        %v5186 = vadd.f32 0.0, %v5185
        %5187 = vmatmul.f32.gmra.mxu0 %v5148
        %v5188 = vpop.f32.mrf.mxu0
        %v5189 = vadd.f32 0.0, %v5188
        %5190 = vmatmul.f32.gmra.mxu0 %v5151
        %v5191 = vpop.f32.mrf.mxu0
        %v5192 = vadd.f32 0.0, %v5191
        %5193 = vmatmul.f32.gmra.mxu0 %v5154
        %v5194 = vpop.f32.mrf.mxu0
        %v5195 = vadd.f32 0.0, %v5194
        %5196 = vmatmul.f32.gmra.mxu0 %v5157
        %v5197 = vpop.f32.mrf.mxu0
        %v5198 = vadd.f32 0.0, %v5197
        %5199 = vmatmul.f32.gmra.mxu0 %v5160
        %v5200 = vpop.f32.mrf.mxu0
        %v5201 = vadd.f32 0.0, %v5200
        %5202 = vdwg.mxu0
        %v5203 = vadd.f32 %v5026, %v5180
        %v5204 = vadd.f32 %v5027, %v5183
        %v5205 = vadd.f32 %v5028, %v5186
        %v5206 = vadd.f32 %v5029, %v5189
        %v5207 = vadd.f32 %v5030, %v5192
        %v5208 = vadd.f32 %v5031, %v5195
        %v5209 = vadd.f32 %v5032, %v5198
        %v5210 = vadd.f32 %v5033, %v5201
        %v5211 = vld [vmem:[%s5] sm:$0x1]
        %v5213 = vperm.slane %v5211, 0
        %v5215 = vadd.f32 %v5203, %v5213
        %v5216 = vadd.f32 %v5204, %v5213
        %v5217 = vadd.f32 %v5205, %v5213
        %v5218 = vadd.f32 %v5206, %v5213
        %v5219 = vadd.f32 %v5207, %v5213
        %v5220 = vadd.f32 %v5208, %v5213
        %v5221 = vadd.f32 %v5209, %v5213
        %v5222 = vadd.f32 %v5210, %v5213
        %vm5223 = vcmp.ge.f32.partialorder %v5215, 0.0
        %vm5224 = vcmp.ge.f32.partialorder %v5216, 0.0
        %vm5225 = vcmp.ge.f32.partialorder %v5217, 0.0
        %vm5226 = vcmp.ge.f32.partialorder %v5218, 0.0
        %vm5227 = vcmp.ge.f32.partialorder %v5219, 0.0
        %vm5228 = vcmp.ge.f32.partialorder %v5220, 0.0
        %vm5229 = vcmp.ge.f32.partialorder %v5221, 0.0
        %vm5230 = vcmp.ge.f32.partialorder %v5222, 0.0
        %v5231 = vmul.f32 %v5215, 0.2
        %v5232 = vmul.f32 %v5216, 0.2
        %v5233 = vmul.f32 %v5217, 0.2
        %v5234 = vmul.f32 %v5218, 0.2
        %v5235 = vmul.f32 %v5219, 0.2
        %v5236 = vmul.f32 %v5220, 0.2
        %v5237 = vmul.f32 %v5221, 0.2
        %v5238 = vmul.f32 %v5222, 0.2
        %v5239 = vsel %vm5223, %v5215, %v5231
        %v5240 = vsel %vm5224, %v5216, %v5232
        %v5241 = vsel %vm5225, %v5217, %v5233
        %v5242 = vsel %vm5226, %v5218, %v5234
        %v5243 = vsel %vm5227, %v5219, %v5235
        %v5244 = vsel %vm5228, %v5220, %v5236
        %v5245 = vsel %vm5229, %v5221, %v5237
        %v5246 = vsel %vm5230, %v5222, %v5238
        %s5247 = scalar_lea.vmem %s5, 1
        %v5248 = vld [vmem:[%s5247] sm:$0x1]
        %v5250 = vperm.slane %v5248, 0
        %v5252 = vmul.f32 %v5239, %v5250
        %v5253 = vmul.f32 %v5240, %v5250
        %v5254 = vmul.f32 %v5241, %v5250
        %v5255 = vmul.f32 %v5242, %v5250
        %v5256 = vmul.f32 %v5243, %v5250
        %v5257 = vmul.f32 %v5244, %v5250
        %v5258 = vmul.f32 %v5245, %v5250
        %v5259 = vmul.f32 %v5246, %v5250
        %s5260 = scalar_lea.vmem %s5, 2
        %v5261 = vld [vmem:[%s5260] sm:$0x1]
        %v5263 = vperm.slane %v5261, 0
        %v5265 = vadd.f32 %v5252, %v5263
        %v5266 = vadd.f32 %v5253, %v5263
        %v5267 = vadd.f32 %v5254, %v5263
        %v5268 = vadd.f32 %v5255, %v5263
        %v5269 = vadd.f32 %v5256, %v5263
        %v5270 = vadd.f32 %v5257, %v5263
        %v5271 = vadd.f32 %v5258, %v5263
        %v5272 = vadd.f32 %v5259, %v5263
        %v5273 = vld [vmem:[%s6] sm:$0xff]
        %v5274 = vld [vmem:[%s6 + $0x8] sm:$0xff]
        %vm5275 = vcmask 523264
        %v5277 = vsel %vm5275, %v5273, 0
        %v5280 = vsel %vm5275, %v5274, 0
        %5282 = vmatpush.msra.mxu0 0.0
        %5283 = vmatpush.msra.mxu0 0.0
        %5284 = vmatpush.msra.mxu0 0.0
        %5285 = vmatpush.msra.mxu0 0.0
        %5286 = vmatpush.msra.mxu0 0.0
        %5287 = vmatpush.msra.mxu0 0.0
        %5288 = vmatpush.msra.mxu0 0.0
        %5289 = vmatpush.msra.mxu0 0.0
        %5290 = vmatpush.msra.mxu0 %v5272
        %5291 = vmatpush.msra.mxu0 %v5271
        %5292 = vmatpush.msra.mxu0 %v5270
        %5293 = vmatpush.msra.mxu0 %v5269
        %5294 = vmatpush.msra.mxu0 %v5268
        %5295 = vmatpush.msra.mxu0 %v5267
        %5296 = vmatpush.msra.mxu0 %v5266
        %5297 = vmatpush.msra.mxu0 %v5265
        %5298 = vmatmul.f32.gmra.mxu0 %v5277
        %v5299 = vpop.f32.mrf.mxu0
        %v5300 = vadd.f32 0.0, %v5299
        %5301 = vmatmul.f32.gmra.mxu0 %v5280
        %v5302 = vpop.f32.mrf.mxu0
        %v5303 = vadd.f32 0.0, %v5302
        %5304 = vdwg.mxu0
        %v5305 = vld [vmem:[%s7] sm:$0xff]
        %v5306 = vld [vmem:[%s7 + $0x8] sm:$0xff]
        %v5307 = vld [vmem:[%s7 + $0x10] sm:$0xff]
        %v5308 = vld [vmem:[%s7 + $0x18] sm:$0xff]
        %v5309 = vld [vmem:[%s7 + $0x20] sm:$0xff]
        %v5310 = vld [vmem:[%s7 + $0x28] sm:$0xff]
        %v5311 = vld [vmem:[%s7 + $0x30] sm:$0xff]
        %v5312 = vld [vmem:[%s7 + $0x38] sm:$0xff]
        %s5313 = scalar_lea.vmem %s6, 16
        %v5314 = vld [vmem:[%s5313] sm:$0xff]
        %v5315 = vld [vmem:[%s5313 + $0x8] sm:$0xff]
        %v5317 = vsel %vm5275, %v5314, 0
        %v5320 = vsel %vm5275, %v5315, 0
        %5322 = vmatpush.msra.mxu0 0.0
        %5323 = vmatpush.msra.mxu0 0.0
        %5324 = vmatpush.msra.mxu0 0.0
        %5325 = vmatpush.msra.mxu0 0.0
        %5326 = vmatpush.msra.mxu0 0.0
        %5327 = vmatpush.msra.mxu0 0.0
        %5328 = vmatpush.msra.mxu0 0.0
        %5329 = vmatpush.msra.mxu0 0.0
        %5330 = vmatpush.msra.mxu0 %v5272
        %5331 = vmatpush.msra.mxu0 %v5271
        %5332 = vmatpush.msra.mxu0 %v5270
        %5333 = vmatpush.msra.mxu0 %v5269
        %5334 = vmatpush.msra.mxu0 %v5268
        %5335 = vmatpush.msra.mxu0 %v5267
        %5336 = vmatpush.msra.mxu0 %v5266
        %5337 = vmatpush.msra.mxu0 %v5265
        %5338 = vmatmul.f32.gmra.mxu0 %v5317
        %v5339 = vpop.f32.mrf.mxu0
        %v5340 = vadd.f32 0.0, %v5339
        %5341 = vmatmul.f32.gmra.mxu0 %v5320
        %v5342 = vpop.f32.mrf.mxu0
        %v5343 = vadd.f32 0.0, %v5342
        %5344 = vdwg.mxu0
        %s5345 = scalar_lea.vmem %s7, 64
        %v5346 = vld [vmem:[%s5345] sm:$0xff]
        %v5347 = vld [vmem:[%s5345 + $0x8] sm:$0xff]
        %v5348 = vld [vmem:[%s5345 + $0x10] sm:$0xff]
        %v5349 = vld [vmem:[%s5345 + $0x18] sm:$0xff]
        %v5350 = vld [vmem:[%s5345 + $0x20] sm:$0xff]
        %v5351 = vld [vmem:[%s5345 + $0x28] sm:$0xff]
        %v5352 = vld [vmem:[%s5345 + $0x30] sm:$0xff]
        %v5353 = vld [vmem:[%s5345 + $0x38] sm:$0xff]
        %v5355 = vsel %vm5275, %v5340, 0
        %v5358 = vsel %vm5275, %v5343, 0
        %5360 = vmatpush.msra.mxu0 0.0
        %5361 = vmatpush.msra.mxu0 0.0
        %5362 = vmatpush.msra.mxu0 0.0
        %5363 = vmatpush.msra.mxu0 0.0
        %5364 = vmatpush.msra.mxu0 0.0
        %5365 = vmatpush.msra.mxu0 0.0
        %5366 = vmatpush.msra.mxu0 0.0
        %5367 = vmatpush.msra.mxu0 0.0
        %5368 = vmatpush.msra.mxu0 %v5353
        %5369 = vmatpush.msra.mxu0 %v5352
        %5370 = vmatpush.msra.mxu0 %v5351
        %5371 = vmatpush.msra.mxu0 %v5350
        %5372 = vmatpush.msra.mxu0 %v5349
        %5373 = vmatpush.msra.mxu0 %v5348
        %5374 = vmatpush.msra.mxu0 %v5347
        %5375 = vmatpush.msra.mxu0 %v5346
        %5376 = vmatmul.f32.gmra.mxu0 %v5355
        %v5377 = vpop.f32.mrf.mxu0
        %v5378 = vadd.f32 0.0, %v5377
        %5379 = vmatmul.f32.gmra.mxu0 %v5358
        %v5380 = vpop.f32.mrf.mxu0
        %v5381 = vadd.f32 0.0, %v5380
        %5382 = vdwg.mxu0
        %v5384 = vsel %vm5275, %v5300, 0
        %v5387 = vsel %vm5275, %v5303, 0
        %5389 = vmatpush.msra.mxu0 0.0
        %5390 = vmatpush.msra.mxu0 0.0
        %5391 = vmatpush.msra.mxu0 0.0
        %5392 = vmatpush.msra.mxu0 0.0
        %5393 = vmatpush.msra.mxu0 0.0
        %5394 = vmatpush.msra.mxu0 0.0
        %5395 = vmatpush.msra.mxu0 0.0
        %5396 = vmatpush.msra.mxu0 0.0
        %5397 = vmatpush.msra.mxu0 %v5312
        %5398 = vmatpush.msra.mxu0 %v5311
        %5399 = vmatpush.msra.mxu0 %v5310
        %5400 = vmatpush.msra.mxu0 %v5309
        %5401 = vmatpush.msra.mxu0 %v5308
        %5402 = vmatpush.msra.mxu0 %v5307
        %5403 = vmatpush.msra.mxu0 %v5306
        %5404 = vmatpush.msra.mxu0 %v5305
        %5405 = vmatmul.f32.gmra.mxu0 %v5384
        %v5406 = vpop.f32.mrf.mxu0
        %v5407 = vadd.f32 %v5378, %v5406
        %5408 = vmatmul.f32.gmra.mxu0 %v5387
        %v5409 = vpop.f32.mrf.mxu0
        %v5410 = vadd.f32 %v5381, %v5409
        %5411 = vdwg.mxu0
        %s5412 = scalar_lea.vmem %s6, 32
        %v5413 = vld [vmem:[%s5412] sm:$0xff]
        %v5414 = vld [vmem:[%s5412 + $0x8] sm:$0xff]
        %v5416 = vsel %vm5275, %v5413, 0
        %v5419 = vsel %vm5275, %v5414, 0
        %5421 = vmatpush.msra.mxu0 0.0
        %5422 = vmatpush.msra.mxu0 0.0
        %5423 = vmatpush.msra.mxu0 0.0
        %5424 = vmatpush.msra.mxu0 0.0
        %5425 = vmatpush.msra.mxu0 0.0
        %5426 = vmatpush.msra.mxu0 0.0
        %5427 = vmatpush.msra.mxu0 0.0
        %5428 = vmatpush.msra.mxu0 0.0
        %5429 = vmatpush.msra.mxu0 %v5272
        %5430 = vmatpush.msra.mxu0 %v5271
        %5431 = vmatpush.msra.mxu0 %v5270
        %5432 = vmatpush.msra.mxu0 %v5269
        %5433 = vmatpush.msra.mxu0 %v5268
        %5434 = vmatpush.msra.mxu0 %v5267
        %5435 = vmatpush.msra.mxu0 %v5266
        %5436 = vmatpush.msra.mxu0 %v5265
        %5437 = vmatmul.f32.gmra.mxu0 %v5416
        %v5438 = vpop.f32.mrf.mxu0
        %v5439 = vadd.f32 0.0, %v5438
        %5440 = vmatmul.f32.gmra.mxu0 %v5419
        %v5441 = vpop.f32.mrf.mxu0
        %v5442 = vadd.f32 0.0, %v5441
        %5443 = vdwg.mxu0
        %s5444 = scalar_lea.vmem %s7, 128
        %v5445 = vld [vmem:[%s5444] sm:$0xff]
        %v5446 = vld [vmem:[%s5444 + $0x8] sm:$0xff]
        %v5447 = vld [vmem:[%s5444 + $0x10] sm:$0xff]
        %v5448 = vld [vmem:[%s5444 + $0x18] sm:$0xff]
        %v5449 = vld [vmem:[%s5444 + $0x20] sm:$0xff]
        %v5450 = vld [vmem:[%s5444 + $0x28] sm:$0xff]
        %v5451 = vld [vmem:[%s5444 + $0x30] sm:$0xff]
        %v5452 = vld [vmem:[%s5444 + $0x38] sm:$0xff]
        %v5454 = vsel %vm5275, %v5439, 0
        %v5457 = vsel %vm5275, %v5442, 0
        %5459 = vmatpush.msra.mxu0 0.0
        %5460 = vmatpush.msra.mxu0 0.0
        %5461 = vmatpush.msra.mxu0 0.0
        %5462 = vmatpush.msra.mxu0 0.0
        %5463 = vmatpush.msra.mxu0 0.0
        %5464 = vmatpush.msra.mxu0 0.0
        %5465 = vmatpush.msra.mxu0 0.0
        %5466 = vmatpush.msra.mxu0 0.0
        %5467 = vmatpush.msra.mxu0 %v5452
        %5468 = vmatpush.msra.mxu0 %v5451
        %5469 = vmatpush.msra.mxu0 %v5450
        %5470 = vmatpush.msra.mxu0 %v5449
        %5471 = vmatpush.msra.mxu0 %v5448
        %5472 = vmatpush.msra.mxu0 %v5447
        %5473 = vmatpush.msra.mxu0 %v5446
        %5474 = vmatpush.msra.mxu0 %v5445
        %5475 = vmatmul.f32.gmra.mxu0 %v5454
        %v5476 = vpop.f32.mrf.mxu0
        %v5477 = vadd.f32 0.0, %v5476
        %5478 = vmatmul.f32.gmra.mxu0 %v5457
        %v5479 = vpop.f32.mrf.mxu0
        %v5480 = vadd.f32 0.0, %v5479
        %5481 = vdwg.mxu0
        %v5482 = vadd.f32 %v5407, %v5477
        %v5483 = vadd.f32 %v5410, %v5480
        %s5484 = scalar_lea.vmem %s6, 48
        %v5485 = vld [vmem:[%s5484] sm:$0xff]
        %v5486 = vld [vmem:[%s5484 + $0x8] sm:$0xff]
        %v5488 = vsel %vm5275, %v5485, 0
        %v5491 = vsel %vm5275, %v5486, 0
        %5493 = vmatpush.msra.mxu0 0.0
        %5494 = vmatpush.msra.mxu0 0.0
        %5495 = vmatpush.msra.mxu0 0.0
        %5496 = vmatpush.msra.mxu0 0.0
        %5497 = vmatpush.msra.mxu0 0.0
        %5498 = vmatpush.msra.mxu0 0.0
        %5499 = vmatpush.msra.mxu0 0.0
        %5500 = vmatpush.msra.mxu0 0.0
        %5501 = vmatpush.msra.mxu0 %v5272
        %5502 = vmatpush.msra.mxu0 %v5271
        %5503 = vmatpush.msra.mxu0 %v5270
        %5504 = vmatpush.msra.mxu0 %v5269
        %5505 = vmatpush.msra.mxu0 %v5268
        %5506 = vmatpush.msra.mxu0 %v5267
        %5507 = vmatpush.msra.mxu0 %v5266
        %5508 = vmatpush.msra.mxu0 %v5265
        %5509 = vmatmul.f32.gmra.mxu0 %v5488
        %v5510 = vpop.f32.mrf.mxu0
        %v5511 = vadd.f32 0.0, %v5510
        %5512 = vmatmul.f32.gmra.mxu0 %v5491
        %v5513 = vpop.f32.mrf.mxu0
        %v5514 = vadd.f32 0.0, %v5513
        %5515 = vdwg.mxu0
        %s5516 = scalar_lea.vmem %s7, 192
        %v5517 = vld [vmem:[%s5516] sm:$0xff]
        %v5518 = vld [vmem:[%s5516 + $0x8] sm:$0xff]
        %v5519 = vld [vmem:[%s5516 + $0x10] sm:$0xff]
        %v5520 = vld [vmem:[%s5516 + $0x18] sm:$0xff]
        %v5521 = vld [vmem:[%s5516 + $0x20] sm:$0xff]
        %v5522 = vld [vmem:[%s5516 + $0x28] sm:$0xff]
        %v5523 = vld [vmem:[%s5516 + $0x30] sm:$0xff]
        %v5524 = vld [vmem:[%s5516 + $0x38] sm:$0xff]
        %v5526 = vsel %vm5275, %v5511, 0
        %v5529 = vsel %vm5275, %v5514, 0
        %5531 = vmatpush.msra.mxu0 0.0
        %5532 = vmatpush.msra.mxu0 0.0
        %5533 = vmatpush.msra.mxu0 0.0
        %5534 = vmatpush.msra.mxu0 0.0
        %5535 = vmatpush.msra.mxu0 0.0
        %5536 = vmatpush.msra.mxu0 0.0
        %5537 = vmatpush.msra.mxu0 0.0
        %5538 = vmatpush.msra.mxu0 0.0
        %5539 = vmatpush.msra.mxu0 %v5524
        %5540 = vmatpush.msra.mxu0 %v5523
        %5541 = vmatpush.msra.mxu0 %v5522
        %5542 = vmatpush.msra.mxu0 %v5521
        %5543 = vmatpush.msra.mxu0 %v5520
        %5544 = vmatpush.msra.mxu0 %v5519
        %5545 = vmatpush.msra.mxu0 %v5518
        %5546 = vmatpush.msra.mxu0 %v5517
        %5547 = vmatmul.f32.gmra.mxu0 %v5526
        %v5548 = vpop.f32.mrf.mxu0
        %v5549 = vadd.f32 0.0, %v5548
        %5550 = vmatmul.f32.gmra.mxu0 %v5529
        %v5551 = vpop.f32.mrf.mxu0
        %v5552 = vadd.f32 0.0, %v5551
        %5553 = vdwg.mxu0
        %v5554 = vadd.f32 %v5482, %v5549
        %v5555 = vadd.f32 %v5483, %v5552
        %s5556 = scalar_lea.vmem %s6, 64
        %v5557 = vld [vmem:[%s5556] sm:$0xff]
        %v5558 = vld [vmem:[%s5556 + $0x8] sm:$0xff]
        %v5560 = vsel %vm5275, %v5557, 0
        %v5563 = vsel %vm5275, %v5558, 0
        %5565 = vmatpush.msra.mxu0 0.0
        %5566 = vmatpush.msra.mxu0 0.0
        %5567 = vmatpush.msra.mxu0 0.0
        %5568 = vmatpush.msra.mxu0 0.0
        %5569 = vmatpush.msra.mxu0 0.0
        %5570 = vmatpush.msra.mxu0 0.0
        %5571 = vmatpush.msra.mxu0 0.0
        %5572 = vmatpush.msra.mxu0 0.0
        %5573 = vmatpush.msra.mxu0 %v5272
        %5574 = vmatpush.msra.mxu0 %v5271
        %5575 = vmatpush.msra.mxu0 %v5270
        %5576 = vmatpush.msra.mxu0 %v5269
        %5577 = vmatpush.msra.mxu0 %v5268
        %5578 = vmatpush.msra.mxu0 %v5267
        %5579 = vmatpush.msra.mxu0 %v5266
        %5580 = vmatpush.msra.mxu0 %v5265
        %5581 = vmatmul.f32.gmra.mxu0 %v5560
        %v5582 = vpop.f32.mrf.mxu0
        %v5583 = vadd.f32 0.0, %v5582
        %5584 = vmatmul.f32.gmra.mxu0 %v5563
        %v5585 = vpop.f32.mrf.mxu0
        %v5586 = vadd.f32 0.0, %v5585
        %5587 = vdwg.mxu0
        %s5588 = scalar_lea.vmem %s7, 256
        %v5589 = vld [vmem:[%s5588] sm:$0xff]
        %v5590 = vld [vmem:[%s5588 + $0x8] sm:$0xff]
        %v5591 = vld [vmem:[%s5588 + $0x10] sm:$0xff]
        %v5592 = vld [vmem:[%s5588 + $0x18] sm:$0xff]
        %v5593 = vld [vmem:[%s5588 + $0x20] sm:$0xff]
        %v5594 = vld [vmem:[%s5588 + $0x28] sm:$0xff]
        %v5595 = vld [vmem:[%s5588 + $0x30] sm:$0xff]
        %v5596 = vld [vmem:[%s5588 + $0x38] sm:$0xff]
        %v5598 = vsel %vm5275, %v5583, 0
        %v5601 = vsel %vm5275, %v5586, 0
        %5603 = vmatpush.msra.mxu0 0.0
        %5604 = vmatpush.msra.mxu0 0.0
        %5605 = vmatpush.msra.mxu0 0.0
        %5606 = vmatpush.msra.mxu0 0.0
        %5607 = vmatpush.msra.mxu0 0.0
        %5608 = vmatpush.msra.mxu0 0.0
        %5609 = vmatpush.msra.mxu0 0.0
        %5610 = vmatpush.msra.mxu0 0.0
        %5611 = vmatpush.msra.mxu0 %v5596
        %5612 = vmatpush.msra.mxu0 %v5595
        %5613 = vmatpush.msra.mxu0 %v5594
        %5614 = vmatpush.msra.mxu0 %v5593
        %5615 = vmatpush.msra.mxu0 %v5592
        %5616 = vmatpush.msra.mxu0 %v5591
        %5617 = vmatpush.msra.mxu0 %v5590
        %5618 = vmatpush.msra.mxu0 %v5589
        %5619 = vmatmul.f32.gmra.mxu0 %v5598
        %v5620 = vpop.f32.mrf.mxu0
        %v5621 = vadd.f32 0.0, %v5620
        %5622 = vmatmul.f32.gmra.mxu0 %v5601
        %v5623 = vpop.f32.mrf.mxu0
        %v5624 = vadd.f32 0.0, %v5623
        %5625 = vdwg.mxu0
        %v5626 = vadd.f32 %v5554, %v5621
        %v5627 = vadd.f32 %v5555, %v5624
        %s5628 = scalar_lea.vmem %s6, 80
        %v5629 = vld [vmem:[%s5628] sm:$0xff]
        %v5630 = vld [vmem:[%s5628 + $0x8] sm:$0xff]
        %v5632 = vsel %vm5275, %v5629, 0
        %v5635 = vsel %vm5275, %v5630, 0
        %5637 = vmatpush.msra.mxu0 0.0
        %5638 = vmatpush.msra.mxu0 0.0
        %5639 = vmatpush.msra.mxu0 0.0
        %5640 = vmatpush.msra.mxu0 0.0
        %5641 = vmatpush.msra.mxu0 0.0
        %5642 = vmatpush.msra.mxu0 0.0
        %5643 = vmatpush.msra.mxu0 0.0
        %5644 = vmatpush.msra.mxu0 0.0
        %5645 = vmatpush.msra.mxu0 %v5272
        %5646 = vmatpush.msra.mxu0 %v5271
        %5647 = vmatpush.msra.mxu0 %v5270
        %5648 = vmatpush.msra.mxu0 %v5269
        %5649 = vmatpush.msra.mxu0 %v5268
        %5650 = vmatpush.msra.mxu0 %v5267
        %5651 = vmatpush.msra.mxu0 %v5266
        %5652 = vmatpush.msra.mxu0 %v5265
        %5653 = vmatmul.f32.gmra.mxu0 %v5632
        %v5654 = vpop.f32.mrf.mxu0
        %v5655 = vadd.f32 0.0, %v5654
        %5656 = vmatmul.f32.gmra.mxu0 %v5635
        %v5657 = vpop.f32.mrf.mxu0
        %v5658 = vadd.f32 0.0, %v5657
        %5659 = vdwg.mxu0
        %s5660 = scalar_lea.vmem %s7, 320
        %v5661 = vld [vmem:[%s5660] sm:$0xff]
        %v5662 = vld [vmem:[%s5660 + $0x8] sm:$0xff]
        %v5663 = vld [vmem:[%s5660 + $0x10] sm:$0xff]
        %v5664 = vld [vmem:[%s5660 + $0x18] sm:$0xff]
        %v5665 = vld [vmem:[%s5660 + $0x20] sm:$0xff]
        %v5666 = vld [vmem:[%s5660 + $0x28] sm:$0xff]
        %v5667 = vld [vmem:[%s5660 + $0x30] sm:$0xff]
        %v5668 = vld [vmem:[%s5660 + $0x38] sm:$0xff]
        %v5670 = vsel %vm5275, %v5655, 0
        %v5673 = vsel %vm5275, %v5658, 0
        %5675 = vmatpush.msra.mxu0 0.0
        %5676 = vmatpush.msra.mxu0 0.0
        %5677 = vmatpush.msra.mxu0 0.0
        %5678 = vmatpush.msra.mxu0 0.0
        %5679 = vmatpush.msra.mxu0 0.0
        %5680 = vmatpush.msra.mxu0 0.0
        %5681 = vmatpush.msra.mxu0 0.0
        %5682 = vmatpush.msra.mxu0 0.0
        %5683 = vmatpush.msra.mxu0 %v5668
        %5684 = vmatpush.msra.mxu0 %v5667
        %5685 = vmatpush.msra.mxu0 %v5666
        %5686 = vmatpush.msra.mxu0 %v5665
        %5687 = vmatpush.msra.mxu0 %v5664
        %5688 = vmatpush.msra.mxu0 %v5663
        %5689 = vmatpush.msra.mxu0 %v5662
        %5690 = vmatpush.msra.mxu0 %v5661
        %5691 = vmatmul.f32.gmra.mxu0 %v5670
        %v5692 = vpop.f32.mrf.mxu0
        %v5693 = vadd.f32 0.0, %v5692
        %5694 = vmatmul.f32.gmra.mxu0 %v5673
        %v5695 = vpop.f32.mrf.mxu0
        %v5696 = vadd.f32 0.0, %v5695
        %5697 = vdwg.mxu0
        %v5698 = vadd.f32 %v5626, %v5693
        %v5699 = vadd.f32 %v5627, %v5696
        %s5700 = scalar_lea.vmem %s6, 96
        %v5701 = vld [vmem:[%s5700] sm:$0xff]
        %v5702 = vld [vmem:[%s5700 + $0x8] sm:$0xff]
        %v5704 = vsel %vm5275, %v5701, 0
        %v5707 = vsel %vm5275, %v5702, 0
        %5709 = vmatpush.msra.mxu0 0.0
        %5710 = vmatpush.msra.mxu0 0.0
        %5711 = vmatpush.msra.mxu0 0.0
        %5712 = vmatpush.msra.mxu0 0.0
        %5713 = vmatpush.msra.mxu0 0.0
        %5714 = vmatpush.msra.mxu0 0.0
        %5715 = vmatpush.msra.mxu0 0.0
        %5716 = vmatpush.msra.mxu0 0.0
        %5717 = vmatpush.msra.mxu0 %v5272
        %5718 = vmatpush.msra.mxu0 %v5271
        %5719 = vmatpush.msra.mxu0 %v5270
        %5720 = vmatpush.msra.mxu0 %v5269
        %5721 = vmatpush.msra.mxu0 %v5268
        %5722 = vmatpush.msra.mxu0 %v5267
        %5723 = vmatpush.msra.mxu0 %v5266
        %5724 = vmatpush.msra.mxu0 %v5265
        %5725 = vmatmul.f32.gmra.mxu0 %v5704
        %v5726 = vpop.f32.mrf.mxu0
        %v5727 = vadd.f32 0.0, %v5726
        %5728 = vmatmul.f32.gmra.mxu0 %v5707
        %v5729 = vpop.f32.mrf.mxu0
        %v5730 = vadd.f32 0.0, %v5729
        %5731 = vdwg.mxu0
        %s5732 = scalar_lea.vmem %s7, 384
        %v5733 = vld [vmem:[%s5732] sm:$0xff]
        %v5734 = vld [vmem:[%s5732 + $0x8] sm:$0xff]
        %v5735 = vld [vmem:[%s5732 + $0x10] sm:$0xff]
        %v5736 = vld [vmem:[%s5732 + $0x18] sm:$0xff]
        %v5737 = vld [vmem:[%s5732 + $0x20] sm:$0xff]
        %v5738 = vld [vmem:[%s5732 + $0x28] sm:$0xff]
        %v5739 = vld [vmem:[%s5732 + $0x30] sm:$0xff]
        %v5740 = vld [vmem:[%s5732 + $0x38] sm:$0xff]
        %v5742 = vsel %vm5275, %v5727, 0
        %v5745 = vsel %vm5275, %v5730, 0
        %5747 = vmatpush.msra.mxu0 0.0
        %5748 = vmatpush.msra.mxu0 0.0
        %5749 = vmatpush.msra.mxu0 0.0
        %5750 = vmatpush.msra.mxu0 0.0
        %5751 = vmatpush.msra.mxu0 0.0
        %5752 = vmatpush.msra.mxu0 0.0
        %5753 = vmatpush.msra.mxu0 0.0
        %5754 = vmatpush.msra.mxu0 0.0
        %5755 = vmatpush.msra.mxu0 %v5740
        %5756 = vmatpush.msra.mxu0 %v5739
        %5757 = vmatpush.msra.mxu0 %v5738
        %5758 = vmatpush.msra.mxu0 %v5737
        %5759 = vmatpush.msra.mxu0 %v5736
        %5760 = vmatpush.msra.mxu0 %v5735
        %5761 = vmatpush.msra.mxu0 %v5734
        %5762 = vmatpush.msra.mxu0 %v5733
        %5763 = vmatmul.f32.gmra.mxu0 %v5742
        %v5764 = vpop.f32.mrf.mxu0
        %v5765 = vadd.f32 0.0, %v5764
        %5766 = vmatmul.f32.gmra.mxu0 %v5745
        %v5767 = vpop.f32.mrf.mxu0
        %v5768 = vadd.f32 0.0, %v5767
        %5769 = vdwg.mxu0
        %v5770 = vadd.f32 %v5698, %v5765
        %v5771 = vadd.f32 %v5699, %v5768
        %s5772 = scalar_lea.vmem %s6, 112
        %v5773 = vld [vmem:[%s5772] sm:$0xff]
        %v5774 = vld [vmem:[%s5772 + $0x8] sm:$0xff]
        %v5776 = vsel %vm5275, %v5773, 0
        %v5779 = vsel %vm5275, %v5774, 0
        %5781 = vmatpush.msra.mxu0 0.0
        %5782 = vmatpush.msra.mxu0 0.0
        %5783 = vmatpush.msra.mxu0 0.0
        %5784 = vmatpush.msra.mxu0 0.0
        %5785 = vmatpush.msra.mxu0 0.0
        %5786 = vmatpush.msra.mxu0 0.0
        %5787 = vmatpush.msra.mxu0 0.0
        %5788 = vmatpush.msra.mxu0 0.0
        %5789 = vmatpush.msra.mxu0 %v5272
        %5790 = vmatpush.msra.mxu0 %v5271
        %5791 = vmatpush.msra.mxu0 %v5270
        %5792 = vmatpush.msra.mxu0 %v5269
        %5793 = vmatpush.msra.mxu0 %v5268
        %5794 = vmatpush.msra.mxu0 %v5267
        %5795 = vmatpush.msra.mxu0 %v5266
        %5796 = vmatpush.msra.mxu0 %v5265
        %5797 = vmatmul.f32.gmra.mxu0 %v5776
        %v5798 = vpop.f32.mrf.mxu0
        %v5799 = vadd.f32 0.0, %v5798
        %5800 = vmatmul.f32.gmra.mxu0 %v5779
        %v5801 = vpop.f32.mrf.mxu0
        %v5802 = vadd.f32 0.0, %v5801
        %5803 = vdwg.mxu0
        %s5804 = scalar_lea.vmem %s7, 448
        %v5805 = vld [vmem:[%s5804] sm:$0xff]
        %v5806 = vld [vmem:[%s5804 + $0x8] sm:$0xff]
        %v5807 = vld [vmem:[%s5804 + $0x10] sm:$0xff]
        %v5808 = vld [vmem:[%s5804 + $0x18] sm:$0xff]
        %v5809 = vld [vmem:[%s5804 + $0x20] sm:$0xff]
        %v5810 = vld [vmem:[%s5804 + $0x28] sm:$0xff]
        %v5811 = vld [vmem:[%s5804 + $0x30] sm:$0xff]
        %v5812 = vld [vmem:[%s5804 + $0x38] sm:$0xff]
        %v5814 = vsel %vm5275, %v5799, 0
        %v5817 = vsel %vm5275, %v5802, 0
        %5819 = vmatpush.msra.mxu0 0.0
        %5820 = vmatpush.msra.mxu0 0.0
        %5821 = vmatpush.msra.mxu0 0.0
        %5822 = vmatpush.msra.mxu0 0.0
        %5823 = vmatpush.msra.mxu0 0.0
        %5824 = vmatpush.msra.mxu0 0.0
        %5825 = vmatpush.msra.mxu0 0.0
        %5826 = vmatpush.msra.mxu0 0.0
        %5827 = vmatpush.msra.mxu0 %v5812
        %5828 = vmatpush.msra.mxu0 %v5811
        %5829 = vmatpush.msra.mxu0 %v5810
        %5830 = vmatpush.msra.mxu0 %v5809
        %5831 = vmatpush.msra.mxu0 %v5808
        %5832 = vmatpush.msra.mxu0 %v5807
        %5833 = vmatpush.msra.mxu0 %v5806
        %5834 = vmatpush.msra.mxu0 %v5805
        %5835 = vmatmul.f32.gmra.mxu0 %v5814
        %v5836 = vpop.f32.mrf.mxu0
        %v5837 = vadd.f32 0.0, %v5836
        %5838 = vmatmul.f32.gmra.mxu0 %v5817
        %v5839 = vpop.f32.mrf.mxu0
        %v5840 = vadd.f32 0.0, %v5839
        %5841 = vdwg.mxu0
        %v5842 = vadd.f32 %v5770, %v5837
        %v5843 = vadd.f32 %v5771, %v5840
        %s5844 = scalar_lea.vmem %s6, 128
        %v5845 = vld [vmem:[%s5844] sm:$0xff]
        %v5846 = vld [vmem:[%s5844 + $0x8] sm:$0xff]
        %v5848 = vsel %vm5275, %v5845, 0
        %v5851 = vsel %vm5275, %v5846, 0
        %5853 = vmatpush.msra.mxu0 0.0
        %5854 = vmatpush.msra.mxu0 0.0
        %5855 = vmatpush.msra.mxu0 0.0
        %5856 = vmatpush.msra.mxu0 0.0
        %5857 = vmatpush.msra.mxu0 0.0
        %5858 = vmatpush.msra.mxu0 0.0
        %5859 = vmatpush.msra.mxu0 0.0
        %5860 = vmatpush.msra.mxu0 0.0
        %5861 = vmatpush.msra.mxu0 %v5272
        %5862 = vmatpush.msra.mxu0 %v5271
        %5863 = vmatpush.msra.mxu0 %v5270
        %5864 = vmatpush.msra.mxu0 %v5269
        %5865 = vmatpush.msra.mxu0 %v5268
        %5866 = vmatpush.msra.mxu0 %v5267
        %5867 = vmatpush.msra.mxu0 %v5266
        %5868 = vmatpush.msra.mxu0 %v5265
        %5869 = vmatmul.f32.gmra.mxu0 %v5848
        %v5870 = vpop.f32.mrf.mxu0
        %v5871 = vadd.f32 0.0, %v5870
        %5872 = vmatmul.f32.gmra.mxu0 %v5851
        %v5873 = vpop.f32.mrf.mxu0
        %v5874 = vadd.f32 0.0, %v5873
        %5875 = vdwg.mxu0
        %s5876 = scalar_lea.vmem %s7, 512
        %v5877 = vld [vmem:[%s5876] sm:$0xff]
        %v5878 = vld [vmem:[%s5876 + $0x8] sm:$0xff]
        %v5879 = vld [vmem:[%s5876 + $0x10] sm:$0xff]
        %v5880 = vld [vmem:[%s5876 + $0x18] sm:$0xff]
        %v5881 = vld [vmem:[%s5876 + $0x20] sm:$0xff]
        %v5882 = vld [vmem:[%s5876 + $0x28] sm:$0xff]
        %v5883 = vld [vmem:[%s5876 + $0x30] sm:$0xff]
        %v5884 = vld [vmem:[%s5876 + $0x38] sm:$0xff]
        %v5886 = vsel %vm5275, %v5871, 0
        %v5889 = vsel %vm5275, %v5874, 0
        %5891 = vmatpush.msra.mxu0 0.0
        %5892 = vmatpush.msra.mxu0 0.0
        %5893 = vmatpush.msra.mxu0 0.0
        %5894 = vmatpush.msra.mxu0 0.0
        %5895 = vmatpush.msra.mxu0 0.0
        %5896 = vmatpush.msra.mxu0 0.0
        %5897 = vmatpush.msra.mxu0 0.0
        %5898 = vmatpush.msra.mxu0 0.0
        %5899 = vmatpush.msra.mxu0 %v5884
        %5900 = vmatpush.msra.mxu0 %v5883
        %5901 = vmatpush.msra.mxu0 %v5882
        %5902 = vmatpush.msra.mxu0 %v5881
        %5903 = vmatpush.msra.mxu0 %v5880
        %5904 = vmatpush.msra.mxu0 %v5879
        %5905 = vmatpush.msra.mxu0 %v5878
        %5906 = vmatpush.msra.mxu0 %v5877
        %5907 = vmatmul.f32.gmra.mxu0 %v5886
        %v5908 = vpop.f32.mrf.mxu0
        %v5909 = vadd.f32 0.0, %v5908
        %5910 = vmatmul.f32.gmra.mxu0 %v5889
        %v5911 = vpop.f32.mrf.mxu0
        %v5912 = vadd.f32 0.0, %v5911
        %5913 = vdwg.mxu0
        %v5914 = vadd.f32 %v5842, %v5909
        %v5915 = vadd.f32 %v5843, %v5912
        %s5916 = scalar_lea.vmem %s6, 144
        %v5917 = vld [vmem:[%s5916] sm:$0xff]
        %v5918 = vld [vmem:[%s5916 + $0x8] sm:$0xff]
        %v5920 = vsel %vm5275, %v5917, 0
        %v5923 = vsel %vm5275, %v5918, 0
        %5925 = vmatpush.msra.mxu0 0.0
        %5926 = vmatpush.msra.mxu0 0.0
        %5927 = vmatpush.msra.mxu0 0.0
        %5928 = vmatpush.msra.mxu0 0.0
        %5929 = vmatpush.msra.mxu0 0.0
        %5930 = vmatpush.msra.mxu0 0.0
        %5931 = vmatpush.msra.mxu0 0.0
        %5932 = vmatpush.msra.mxu0 0.0
        %5933 = vmatpush.msra.mxu0 %v5272
        %5934 = vmatpush.msra.mxu0 %v5271
        %5935 = vmatpush.msra.mxu0 %v5270
        %5936 = vmatpush.msra.mxu0 %v5269
        %5937 = vmatpush.msra.mxu0 %v5268
        %5938 = vmatpush.msra.mxu0 %v5267
        %5939 = vmatpush.msra.mxu0 %v5266
        %5940 = vmatpush.msra.mxu0 %v5265
        %5941 = vmatmul.f32.gmra.mxu0 %v5920
        %v5942 = vpop.f32.mrf.mxu0
        %v5943 = vadd.f32 0.0, %v5942
        %5944 = vmatmul.f32.gmra.mxu0 %v5923
        %v5945 = vpop.f32.mrf.mxu0
        %v5946 = vadd.f32 0.0, %v5945
        %5947 = vdwg.mxu0
        %s5948 = scalar_lea.vmem %s7, 576
        %v5949 = vld [vmem:[%s5948] sm:$0xff]
        %v5950 = vld [vmem:[%s5948 + $0x8] sm:$0xff]
        %v5951 = vld [vmem:[%s5948 + $0x10] sm:$0xff]
        %v5952 = vld [vmem:[%s5948 + $0x18] sm:$0xff]
        %v5953 = vld [vmem:[%s5948 + $0x20] sm:$0xff]
        %v5954 = vld [vmem:[%s5948 + $0x28] sm:$0xff]
        %v5955 = vld [vmem:[%s5948 + $0x30] sm:$0xff]
        %v5956 = vld [vmem:[%s5948 + $0x38] sm:$0xff]
        %v5958 = vsel %vm5275, %v5943, 0
        %v5961 = vsel %vm5275, %v5946, 0
        %5963 = vmatpush.msra.mxu0 0.0
        %5964 = vmatpush.msra.mxu0 0.0
        %5965 = vmatpush.msra.mxu0 0.0
        %5966 = vmatpush.msra.mxu0 0.0
        %5967 = vmatpush.msra.mxu0 0.0
        %5968 = vmatpush.msra.mxu0 0.0
        %5969 = vmatpush.msra.mxu0 0.0
        %5970 = vmatpush.msra.mxu0 0.0
        %5971 = vmatpush.msra.mxu0 %v5956
        %5972 = vmatpush.msra.mxu0 %v5955
        %5973 = vmatpush.msra.mxu0 %v5954
        %5974 = vmatpush.msra.mxu0 %v5953
        %5975 = vmatpush.msra.mxu0 %v5952
        %5976 = vmatpush.msra.mxu0 %v5951
        %5977 = vmatpush.msra.mxu0 %v5950
        %5978 = vmatpush.msra.mxu0 %v5949
        %5979 = vmatmul.f32.gmra.mxu0 %v5958
        %v5980 = vpop.f32.mrf.mxu0
        %v5981 = vadd.f32 0.0, %v5980
        %5982 = vmatmul.f32.gmra.mxu0 %v5961
        %v5983 = vpop.f32.mrf.mxu0
        %v5984 = vadd.f32 0.0, %v5983
        %5985 = vdwg.mxu0
        %v5986 = vadd.f32 %v5914, %v5981
        %v5987 = vadd.f32 %v5915, %v5984
        %s5988 = scalar_lea.vmem %s6, 160
        %v5989 = vld [vmem:[%s5988] sm:$0xff]
        %v5990 = vld [vmem:[%s5988 + $0x8] sm:$0xff]
        %v5992 = vsel %vm5275, %v5989, 0
        %v5995 = vsel %vm5275, %v5990, 0
        %5997 = vmatpush.msra.mxu0 0.0
        %5998 = vmatpush.msra.mxu0 0.0
        %5999 = vmatpush.msra.mxu0 0.0
        %6000 = vmatpush.msra.mxu0 0.0
        %6001 = vmatpush.msra.mxu0 0.0
        %6002 = vmatpush.msra.mxu0 0.0
        %6003 = vmatpush.msra.mxu0 0.0
        %6004 = vmatpush.msra.mxu0 0.0
        %6005 = vmatpush.msra.mxu0 %v5272
        %6006 = vmatpush.msra.mxu0 %v5271
        %6007 = vmatpush.msra.mxu0 %v5270
        %6008 = vmatpush.msra.mxu0 %v5269
        %6009 = vmatpush.msra.mxu0 %v5268
        %6010 = vmatpush.msra.mxu0 %v5267
        %6011 = vmatpush.msra.mxu0 %v5266
        %6012 = vmatpush.msra.mxu0 %v5265
        %6013 = vmatmul.f32.gmra.mxu0 %v5992
        %v6014 = vpop.f32.mrf.mxu0
        %v6015 = vadd.f32 0.0, %v6014
        %6016 = vmatmul.f32.gmra.mxu0 %v5995
        %v6017 = vpop.f32.mrf.mxu0
        %v6018 = vadd.f32 0.0, %v6017
        %6019 = vdwg.mxu0
        %s6020 = scalar_lea.vmem %s7, 640
        %v6021 = vld [vmem:[%s6020] sm:$0xff]
        %v6022 = vld [vmem:[%s6020 + $0x8] sm:$0xff]
        %v6023 = vld [vmem:[%s6020 + $0x10] sm:$0xff]
        %v6024 = vld [vmem:[%s6020 + $0x18] sm:$0xff]
        %v6025 = vld [vmem:[%s6020 + $0x20] sm:$0xff]
        %v6026 = vld [vmem:[%s6020 + $0x28] sm:$0xff]
        %v6027 = vld [vmem:[%s6020 + $0x30] sm:$0xff]
        %v6028 = vld [vmem:[%s6020 + $0x38] sm:$0xff]
        %v6030 = vsel %vm5275, %v6015, 0
        %v6033 = vsel %vm5275, %v6018, 0
        %6035 = vmatpush.msra.mxu0 0.0
        %6036 = vmatpush.msra.mxu0 0.0
        %6037 = vmatpush.msra.mxu0 0.0
        %6038 = vmatpush.msra.mxu0 0.0
        %6039 = vmatpush.msra.mxu0 0.0
        %6040 = vmatpush.msra.mxu0 0.0
        %6041 = vmatpush.msra.mxu0 0.0
        %6042 = vmatpush.msra.mxu0 0.0
        %6043 = vmatpush.msra.mxu0 %v6028
        %6044 = vmatpush.msra.mxu0 %v6027
        %6045 = vmatpush.msra.mxu0 %v6026
        %6046 = vmatpush.msra.mxu0 %v6025
        %6047 = vmatpush.msra.mxu0 %v6024
        %6048 = vmatpush.msra.mxu0 %v6023
        %6049 = vmatpush.msra.mxu0 %v6022
        %6050 = vmatpush.msra.mxu0 %v6021
        %6051 = vmatmul.f32.gmra.mxu0 %v6030
        %v6052 = vpop.f32.mrf.mxu0
        %v6053 = vadd.f32 0.0, %v6052
        %6054 = vmatmul.f32.gmra.mxu0 %v6033
        %v6055 = vpop.f32.mrf.mxu0
        %v6056 = vadd.f32 0.0, %v6055
        %6057 = vdwg.mxu0
        %v6058 = vadd.f32 %v5986, %v6053
        %v6059 = vadd.f32 %v5987, %v6056
        %s6060 = scalar_lea.vmem %s6, 176
        %v6061 = vld [vmem:[%s6060] sm:$0xff]
        %v6062 = vld [vmem:[%s6060 + $0x8] sm:$0xff]
        %v6064 = vsel %vm5275, %v6061, 0
        %v6067 = vsel %vm5275, %v6062, 0
        %6069 = vmatpush.msra.mxu0 0.0
        %6070 = vmatpush.msra.mxu0 0.0
        %6071 = vmatpush.msra.mxu0 0.0
        %6072 = vmatpush.msra.mxu0 0.0
        %6073 = vmatpush.msra.mxu0 0.0
        %6074 = vmatpush.msra.mxu0 0.0
        %6075 = vmatpush.msra.mxu0 0.0
        %6076 = vmatpush.msra.mxu0 0.0
        %6077 = vmatpush.msra.mxu0 %v5272
        %6078 = vmatpush.msra.mxu0 %v5271
        %6079 = vmatpush.msra.mxu0 %v5270
        %6080 = vmatpush.msra.mxu0 %v5269
        %6081 = vmatpush.msra.mxu0 %v5268
        %6082 = vmatpush.msra.mxu0 %v5267
        %6083 = vmatpush.msra.mxu0 %v5266
        %6084 = vmatpush.msra.mxu0 %v5265
        %6085 = vmatmul.f32.gmra.mxu0 %v6064
        %v6086 = vpop.f32.mrf.mxu0
        %v6087 = vadd.f32 0.0, %v6086
        %6088 = vmatmul.f32.gmra.mxu0 %v6067
        %v6089 = vpop.f32.mrf.mxu0
        %v6090 = vadd.f32 0.0, %v6089
        %6091 = vdwg.mxu0
        %s6092 = scalar_lea.vmem %s7, 704
        %v6093 = vld [vmem:[%s6092] sm:$0xff]
        %v6094 = vld [vmem:[%s6092 + $0x8] sm:$0xff]
        %v6095 = vld [vmem:[%s6092 + $0x10] sm:$0xff]
        %v6096 = vld [vmem:[%s6092 + $0x18] sm:$0xff]
        %v6097 = vld [vmem:[%s6092 + $0x20] sm:$0xff]
        %v6098 = vld [vmem:[%s6092 + $0x28] sm:$0xff]
        %v6099 = vld [vmem:[%s6092 + $0x30] sm:$0xff]
        %v6100 = vld [vmem:[%s6092 + $0x38] sm:$0xff]
        %v6102 = vsel %vm5275, %v6087, 0
        %v6105 = vsel %vm5275, %v6090, 0
        %6107 = vmatpush.msra.mxu0 0.0
        %6108 = vmatpush.msra.mxu0 0.0
        %6109 = vmatpush.msra.mxu0 0.0
        %6110 = vmatpush.msra.mxu0 0.0
        %6111 = vmatpush.msra.mxu0 0.0
        %6112 = vmatpush.msra.mxu0 0.0
        %6113 = vmatpush.msra.mxu0 0.0
        %6114 = vmatpush.msra.mxu0 0.0
        %6115 = vmatpush.msra.mxu0 %v6100
        %6116 = vmatpush.msra.mxu0 %v6099
        %6117 = vmatpush.msra.mxu0 %v6098
        %6118 = vmatpush.msra.mxu0 %v6097
        %6119 = vmatpush.msra.mxu0 %v6096
        %6120 = vmatpush.msra.mxu0 %v6095
        %6121 = vmatpush.msra.mxu0 %v6094
        %6122 = vmatpush.msra.mxu0 %v6093
        %6123 = vmatmul.f32.gmra.mxu0 %v6102
        %v6124 = vpop.f32.mrf.mxu0
        %v6125 = vadd.f32 0.0, %v6124
        %6126 = vmatmul.f32.gmra.mxu0 %v6105
        %v6127 = vpop.f32.mrf.mxu0
        %v6128 = vadd.f32 0.0, %v6127
        %6129 = vdwg.mxu0
        %v6130 = vadd.f32 %v6058, %v6125
        %v6131 = vadd.f32 %v6059, %v6128
        %s6132 = scalar_lea.vmem %s6, 192
        %v6133 = vld [vmem:[%s6132] sm:$0xff]
        %v6134 = vld [vmem:[%s6132 + $0x8] sm:$0xff]
        %v6136 = vsel %vm5275, %v6133, 0
        %v6139 = vsel %vm5275, %v6134, 0
        %6141 = vmatpush.msra.mxu0 0.0
        %6142 = vmatpush.msra.mxu0 0.0
        %6143 = vmatpush.msra.mxu0 0.0
        %6144 = vmatpush.msra.mxu0 0.0
        %6145 = vmatpush.msra.mxu0 0.0
        %6146 = vmatpush.msra.mxu0 0.0
        %6147 = vmatpush.msra.mxu0 0.0
        %6148 = vmatpush.msra.mxu0 0.0
        %6149 = vmatpush.msra.mxu0 %v5272
        %6150 = vmatpush.msra.mxu0 %v5271
        %6151 = vmatpush.msra.mxu0 %v5270
        %6152 = vmatpush.msra.mxu0 %v5269
        %6153 = vmatpush.msra.mxu0 %v5268
        %6154 = vmatpush.msra.mxu0 %v5267
        %6155 = vmatpush.msra.mxu0 %v5266
        %6156 = vmatpush.msra.mxu0 %v5265
        %6157 = vmatmul.f32.gmra.mxu0 %v6136
        %v6158 = vpop.f32.mrf.mxu0
        %v6159 = vadd.f32 0.0, %v6158
        %6160 = vmatmul.f32.gmra.mxu0 %v6139
        %v6161 = vpop.f32.mrf.mxu0
        %v6162 = vadd.f32 0.0, %v6161
        %6163 = vdwg.mxu0
        %s6164 = scalar_lea.vmem %s7, 768
        %v6165 = vld [vmem:[%s6164] sm:$0xff]
        %v6166 = vld [vmem:[%s6164 + $0x8] sm:$0xff]
        %v6167 = vld [vmem:[%s6164 + $0x10] sm:$0xff]
        %v6168 = vld [vmem:[%s6164 + $0x18] sm:$0xff]
        %v6169 = vld [vmem:[%s6164 + $0x20] sm:$0xff]
        %v6170 = vld [vmem:[%s6164 + $0x28] sm:$0xff]
        %v6171 = vld [vmem:[%s6164 + $0x30] sm:$0xff]
        %v6172 = vld [vmem:[%s6164 + $0x38] sm:$0xff]
        %v6174 = vsel %vm5275, %v6159, 0
        %v6177 = vsel %vm5275, %v6162, 0
        %6179 = vmatpush.msra.mxu0 0.0
        %6180 = vmatpush.msra.mxu0 0.0
        %6181 = vmatpush.msra.mxu0 0.0
        %6182 = vmatpush.msra.mxu0 0.0
        %6183 = vmatpush.msra.mxu0 0.0
        %6184 = vmatpush.msra.mxu0 0.0
        %6185 = vmatpush.msra.mxu0 0.0
        %6186 = vmatpush.msra.mxu0 0.0
        %6187 = vmatpush.msra.mxu0 %v6172
        %6188 = vmatpush.msra.mxu0 %v6171
        %6189 = vmatpush.msra.mxu0 %v6170
        %6190 = vmatpush.msra.mxu0 %v6169
        %6191 = vmatpush.msra.mxu0 %v6168
        %6192 = vmatpush.msra.mxu0 %v6167
        %6193 = vmatpush.msra.mxu0 %v6166
        %6194 = vmatpush.msra.mxu0 %v6165
        %6195 = vmatmul.f32.gmra.mxu0 %v6174
        %v6196 = vpop.f32.mrf.mxu0
        %v6197 = vadd.f32 0.0, %v6196
        %6198 = vmatmul.f32.gmra.mxu0 %v6177
        %v6199 = vpop.f32.mrf.mxu0
        %v6200 = vadd.f32 0.0, %v6199
        %6201 = vdwg.mxu0
        %v6202 = vadd.f32 %v6130, %v6197
        %v6203 = vadd.f32 %v6131, %v6200
        %s6204 = scalar_lea.vmem %s6, 208
        %v6205 = vld [vmem:[%s6204] sm:$0xff]
        %v6206 = vld [vmem:[%s6204 + $0x8] sm:$0xff]
        %v6208 = vsel %vm5275, %v6205, 0
        %v6211 = vsel %vm5275, %v6206, 0
        %6213 = vmatpush.msra.mxu0 0.0
        %6214 = vmatpush.msra.mxu0 0.0
        %6215 = vmatpush.msra.mxu0 0.0
        %6216 = vmatpush.msra.mxu0 0.0
        %6217 = vmatpush.msra.mxu0 0.0
        %6218 = vmatpush.msra.mxu0 0.0
        %6219 = vmatpush.msra.mxu0 0.0
        %6220 = vmatpush.msra.mxu0 0.0
        %6221 = vmatpush.msra.mxu0 %v5272
        %6222 = vmatpush.msra.mxu0 %v5271
        %6223 = vmatpush.msra.mxu0 %v5270
        %6224 = vmatpush.msra.mxu0 %v5269
        %6225 = vmatpush.msra.mxu0 %v5268
        %6226 = vmatpush.msra.mxu0 %v5267
        %6227 = vmatpush.msra.mxu0 %v5266
        %6228 = vmatpush.msra.mxu0 %v5265
        %6229 = vmatmul.f32.gmra.mxu0 %v6208
        %v6230 = vpop.f32.mrf.mxu0
        %v6231 = vadd.f32 0.0, %v6230
        %6232 = vmatmul.f32.gmra.mxu0 %v6211
        %v6233 = vpop.f32.mrf.mxu0
        %v6234 = vadd.f32 0.0, %v6233
        %6235 = vdwg.mxu0
        %s6236 = scalar_lea.vmem %s7, 832
        %v6237 = vld [vmem:[%s6236] sm:$0xff]
        %v6238 = vld [vmem:[%s6236 + $0x8] sm:$0xff]
        %v6239 = vld [vmem:[%s6236 + $0x10] sm:$0xff]
        %v6240 = vld [vmem:[%s6236 + $0x18] sm:$0xff]
        %v6241 = vld [vmem:[%s6236 + $0x20] sm:$0xff]
        %v6242 = vld [vmem:[%s6236 + $0x28] sm:$0xff]
        %v6243 = vld [vmem:[%s6236 + $0x30] sm:$0xff]
        %v6244 = vld [vmem:[%s6236 + $0x38] sm:$0xff]
        %v6246 = vsel %vm5275, %v6231, 0
        %v6249 = vsel %vm5275, %v6234, 0
        %6251 = vmatpush.msra.mxu0 0.0
        %6252 = vmatpush.msra.mxu0 0.0
        %6253 = vmatpush.msra.mxu0 0.0
        %6254 = vmatpush.msra.mxu0 0.0
        %6255 = vmatpush.msra.mxu0 0.0
        %6256 = vmatpush.msra.mxu0 0.0
        %6257 = vmatpush.msra.mxu0 0.0
        %6258 = vmatpush.msra.mxu0 0.0
        %6259 = vmatpush.msra.mxu0 %v6244
        %6260 = vmatpush.msra.mxu0 %v6243
        %6261 = vmatpush.msra.mxu0 %v6242
        %6262 = vmatpush.msra.mxu0 %v6241
        %6263 = vmatpush.msra.mxu0 %v6240
        %6264 = vmatpush.msra.mxu0 %v6239
        %6265 = vmatpush.msra.mxu0 %v6238
        %6266 = vmatpush.msra.mxu0 %v6237
        %6267 = vmatmul.f32.gmra.mxu0 %v6246
        %v6268 = vpop.f32.mrf.mxu0
        %v6269 = vadd.f32 0.0, %v6268
        %6270 = vmatmul.f32.gmra.mxu0 %v6249
        %v6271 = vpop.f32.mrf.mxu0
        %v6272 = vadd.f32 0.0, %v6271
        %6273 = vdwg.mxu0
        %v6274 = vadd.f32 %v6202, %v6269
        %v6275 = vadd.f32 %v6203, %v6272
        %s6276 = scalar_lea.vmem %s6, 224
        %v6277 = vld [vmem:[%s6276] sm:$0xff]
        %v6278 = vld [vmem:[%s6276 + $0x8] sm:$0xff]
        %v6280 = vsel %vm5275, %v6277, 0
        %v6283 = vsel %vm5275, %v6278, 0
        %6285 = vmatpush.msra.mxu0 0.0
        %6286 = vmatpush.msra.mxu0 0.0
        %6287 = vmatpush.msra.mxu0 0.0
        %6288 = vmatpush.msra.mxu0 0.0
        %6289 = vmatpush.msra.mxu0 0.0
        %6290 = vmatpush.msra.mxu0 0.0
        %6291 = vmatpush.msra.mxu0 0.0
        %6292 = vmatpush.msra.mxu0 0.0
        %6293 = vmatpush.msra.mxu0 %v5272
        %6294 = vmatpush.msra.mxu0 %v5271
        %6295 = vmatpush.msra.mxu0 %v5270
        %6296 = vmatpush.msra.mxu0 %v5269
        %6297 = vmatpush.msra.mxu0 %v5268
        %6298 = vmatpush.msra.mxu0 %v5267
        %6299 = vmatpush.msra.mxu0 %v5266
        %6300 = vmatpush.msra.mxu0 %v5265
        %6301 = vmatmul.f32.gmra.mxu0 %v6280
        %v6302 = vpop.f32.mrf.mxu0
        %v6303 = vadd.f32 0.0, %v6302
        %6304 = vmatmul.f32.gmra.mxu0 %v6283
        %v6305 = vpop.f32.mrf.mxu0
        %v6306 = vadd.f32 0.0, %v6305
        %6307 = vdwg.mxu0
        %s6308 = scalar_lea.vmem %s7, 896
        %v6309 = vld [vmem:[%s6308] sm:$0xff]
        %v6310 = vld [vmem:[%s6308 + $0x8] sm:$0xff]
        %v6311 = vld [vmem:[%s6308 + $0x10] sm:$0xff]
        %v6312 = vld [vmem:[%s6308 + $0x18] sm:$0xff]
        %v6313 = vld [vmem:[%s6308 + $0x20] sm:$0xff]
        %v6314 = vld [vmem:[%s6308 + $0x28] sm:$0xff]
        %v6315 = vld [vmem:[%s6308 + $0x30] sm:$0xff]
        %v6316 = vld [vmem:[%s6308 + $0x38] sm:$0xff]
        %v6318 = vsel %vm5275, %v6303, 0
        %v6321 = vsel %vm5275, %v6306, 0
        %6323 = vmatpush.msra.mxu0 0.0
        %6324 = vmatpush.msra.mxu0 0.0
        %6325 = vmatpush.msra.mxu0 0.0
        %6326 = vmatpush.msra.mxu0 0.0
        %6327 = vmatpush.msra.mxu0 0.0
        %6328 = vmatpush.msra.mxu0 0.0
        %6329 = vmatpush.msra.mxu0 0.0
        %6330 = vmatpush.msra.mxu0 0.0
        %6331 = vmatpush.msra.mxu0 %v6316
        %6332 = vmatpush.msra.mxu0 %v6315
        %6333 = vmatpush.msra.mxu0 %v6314
        %6334 = vmatpush.msra.mxu0 %v6313
        %6335 = vmatpush.msra.mxu0 %v6312
        %6336 = vmatpush.msra.mxu0 %v6311
        %6337 = vmatpush.msra.mxu0 %v6310
        %6338 = vmatpush.msra.mxu0 %v6309
        %6339 = vmatmul.f32.gmra.mxu0 %v6318
        %v6340 = vpop.f32.mrf.mxu0
        %v6341 = vadd.f32 0.0, %v6340
        %6342 = vmatmul.f32.gmra.mxu0 %v6321
        %v6343 = vpop.f32.mrf.mxu0
        %v6344 = vadd.f32 0.0, %v6343
        %6345 = vdwg.mxu0
        %v6346 = vadd.f32 %v6274, %v6341
        %v6347 = vadd.f32 %v6275, %v6344
        %s6348 = scalar_lea.vmem %s6, 240
        %v6349 = vld [vmem:[%s6348] sm:$0xff]
        %v6350 = vld [vmem:[%s6348 + $0x8] sm:$0xff]
        %v6352 = vsel %vm5275, %v6349, 0
        %v6355 = vsel %vm5275, %v6350, 0
        %6357 = vmatpush.msra.mxu0 0.0
        %6358 = vmatpush.msra.mxu0 0.0
        %6359 = vmatpush.msra.mxu0 0.0
        %6360 = vmatpush.msra.mxu0 0.0
        %6361 = vmatpush.msra.mxu0 0.0
        %6362 = vmatpush.msra.mxu0 0.0
        %6363 = vmatpush.msra.mxu0 0.0
        %6364 = vmatpush.msra.mxu0 0.0
        %6365 = vmatpush.msra.mxu0 %v5272
        %6366 = vmatpush.msra.mxu0 %v5271
        %6367 = vmatpush.msra.mxu0 %v5270
        %6368 = vmatpush.msra.mxu0 %v5269
        %6369 = vmatpush.msra.mxu0 %v5268
        %6370 = vmatpush.msra.mxu0 %v5267
        %6371 = vmatpush.msra.mxu0 %v5266
        %6372 = vmatpush.msra.mxu0 %v5265
        %6373 = vmatmul.f32.gmra.mxu0 %v6352
        %v6374 = vpop.f32.mrf.mxu0
        %v6375 = vadd.f32 0.0, %v6374
        %6376 = vmatmul.f32.gmra.mxu0 %v6355
        %v6377 = vpop.f32.mrf.mxu0
        %v6378 = vadd.f32 0.0, %v6377
        %6379 = vdwg.mxu0
        %s6380 = scalar_lea.vmem %s7, 960
        %v6381 = vld [vmem:[%s6380] sm:$0xff]
        %v6382 = vld [vmem:[%s6380 + $0x8] sm:$0xff]
        %v6383 = vld [vmem:[%s6380 + $0x10] sm:$0xff]
        %v6384 = vld [vmem:[%s6380 + $0x18] sm:$0xff]
        %v6385 = vld [vmem:[%s6380 + $0x20] sm:$0xff]
        %v6386 = vld [vmem:[%s6380 + $0x28] sm:$0xff]
        %v6387 = vld [vmem:[%s6380 + $0x30] sm:$0xff]
        %v6388 = vld [vmem:[%s6380 + $0x38] sm:$0xff]
        %v6390 = vsel %vm5275, %v6375, 0
        %v6393 = vsel %vm5275, %v6378, 0
        %6395 = vmatpush.msra.mxu0 0.0
        %6396 = vmatpush.msra.mxu0 0.0
        %6397 = vmatpush.msra.mxu0 0.0
        %6398 = vmatpush.msra.mxu0 0.0
        %6399 = vmatpush.msra.mxu0 0.0
        %6400 = vmatpush.msra.mxu0 0.0
        %6401 = vmatpush.msra.mxu0 0.0
        %6402 = vmatpush.msra.mxu0 0.0
        %6403 = vmatpush.msra.mxu0 %v6388
        %6404 = vmatpush.msra.mxu0 %v6387
        %6405 = vmatpush.msra.mxu0 %v6386
        %6406 = vmatpush.msra.mxu0 %v6385
        %6407 = vmatpush.msra.mxu0 %v6384
        %6408 = vmatpush.msra.mxu0 %v6383
        %6409 = vmatpush.msra.mxu0 %v6382
        %6410 = vmatpush.msra.mxu0 %v6381
        %6411 = vmatmul.f32.gmra.mxu0 %v6390
        %v6412 = vpop.f32.mrf.mxu0
        %v6413 = vadd.f32 0.0, %v6412
        %6414 = vmatmul.f32.gmra.mxu0 %v6393
        %v6415 = vpop.f32.mrf.mxu0
        %v6416 = vadd.f32 0.0, %v6415
        %6417 = vdwg.mxu0
        %v6418 = vadd.f32 %v6346, %v6413
        %v6419 = vadd.f32 %v6347, %v6416
        %s6420 = scalar_lea.vmem %s6, 256
        %v6421 = vld [vmem:[%s6420] sm:$0xff]
        %v6422 = vld [vmem:[%s6420 + $0x8] sm:$0xff]
        %v6424 = vsel %vm5275, %v6421, 0
        %v6427 = vsel %vm5275, %v6422, 0
        %6429 = vmatpush.msra.mxu0 0.0
        %6430 = vmatpush.msra.mxu0 0.0
        %6431 = vmatpush.msra.mxu0 0.0
        %6432 = vmatpush.msra.mxu0 0.0
        %6433 = vmatpush.msra.mxu0 0.0
        %6434 = vmatpush.msra.mxu0 0.0
        %6435 = vmatpush.msra.mxu0 0.0
        %6436 = vmatpush.msra.mxu0 0.0
        %6437 = vmatpush.msra.mxu0 %v5272
        %6438 = vmatpush.msra.mxu0 %v5271
        %6439 = vmatpush.msra.mxu0 %v5270
        %6440 = vmatpush.msra.mxu0 %v5269
        %6441 = vmatpush.msra.mxu0 %v5268
        %6442 = vmatpush.msra.mxu0 %v5267
        %6443 = vmatpush.msra.mxu0 %v5266
        %6444 = vmatpush.msra.mxu0 %v5265
        %6445 = vmatmul.f32.gmra.mxu0 %v6424
        %v6446 = vpop.f32.mrf.mxu0
        %v6447 = vadd.f32 0.0, %v6446
        %6448 = vmatmul.f32.gmra.mxu0 %v6427
        %v6449 = vpop.f32.mrf.mxu0
        %v6450 = vadd.f32 0.0, %v6449
        %6451 = vdwg.mxu0
        %s6452 = scalar_lea.vmem %s7, 1024
        %v6453 = vld [vmem:[%s6452] sm:$0xff]
        %v6454 = vld [vmem:[%s6452 + $0x8] sm:$0xff]
        %v6455 = vld [vmem:[%s6452 + $0x10] sm:$0xff]
        %v6456 = vld [vmem:[%s6452 + $0x18] sm:$0xff]
        %v6457 = vld [vmem:[%s6452 + $0x20] sm:$0xff]
        %v6458 = vld [vmem:[%s6452 + $0x28] sm:$0xff]
        %v6459 = vld [vmem:[%s6452 + $0x30] sm:$0xff]
        %v6460 = vld [vmem:[%s6452 + $0x38] sm:$0xff]
        %v6462 = vsel %vm5275, %v6447, 0
        %v6465 = vsel %vm5275, %v6450, 0
        %6467 = vmatpush.msra.mxu0 0.0
        %6468 = vmatpush.msra.mxu0 0.0
        %6469 = vmatpush.msra.mxu0 0.0
        %6470 = vmatpush.msra.mxu0 0.0
        %6471 = vmatpush.msra.mxu0 0.0
        %6472 = vmatpush.msra.mxu0 0.0
        %6473 = vmatpush.msra.mxu0 0.0
        %6474 = vmatpush.msra.mxu0 0.0
        %6475 = vmatpush.msra.mxu0 %v6460
        %6476 = vmatpush.msra.mxu0 %v6459
        %6477 = vmatpush.msra.mxu0 %v6458
        %6478 = vmatpush.msra.mxu0 %v6457
        %6479 = vmatpush.msra.mxu0 %v6456
        %6480 = vmatpush.msra.mxu0 %v6455
        %6481 = vmatpush.msra.mxu0 %v6454
        %6482 = vmatpush.msra.mxu0 %v6453
        %6483 = vmatmul.f32.gmra.mxu0 %v6462
        %v6484 = vpop.f32.mrf.mxu0
        %v6485 = vadd.f32 0.0, %v6484
        %6486 = vmatmul.f32.gmra.mxu0 %v6465
        %v6487 = vpop.f32.mrf.mxu0
        %v6488 = vadd.f32 0.0, %v6487
        %6489 = vdwg.mxu0
        %v6490 = vadd.f32 %v6418, %v6485
        %v6491 = vadd.f32 %v6419, %v6488
        %s6492 = scalar_lea.vmem %s6, 272
        %v6493 = vld [vmem:[%s6492] sm:$0xff]
        %v6494 = vld [vmem:[%s6492 + $0x8] sm:$0xff]
        %v6496 = vsel %vm5275, %v6493, 0
        %v6499 = vsel %vm5275, %v6494, 0
        %6501 = vmatpush.msra.mxu0 0.0
        %6502 = vmatpush.msra.mxu0 0.0
        %6503 = vmatpush.msra.mxu0 0.0
        %6504 = vmatpush.msra.mxu0 0.0
        %6505 = vmatpush.msra.mxu0 0.0
        %6506 = vmatpush.msra.mxu0 0.0
        %6507 = vmatpush.msra.mxu0 0.0
        %6508 = vmatpush.msra.mxu0 0.0
        %6509 = vmatpush.msra.mxu0 %v5272
        %6510 = vmatpush.msra.mxu0 %v5271
        %6511 = vmatpush.msra.mxu0 %v5270
        %6512 = vmatpush.msra.mxu0 %v5269
        %6513 = vmatpush.msra.mxu0 %v5268
        %6514 = vmatpush.msra.mxu0 %v5267
        %6515 = vmatpush.msra.mxu0 %v5266
        %6516 = vmatpush.msra.mxu0 %v5265
        %6517 = vmatmul.f32.gmra.mxu0 %v6496
        %v6518 = vpop.f32.mrf.mxu0
        %v6519 = vadd.f32 0.0, %v6518
        %6520 = vmatmul.f32.gmra.mxu0 %v6499
        %v6521 = vpop.f32.mrf.mxu0
        %v6522 = vadd.f32 0.0, %v6521
        %6523 = vdwg.mxu0
        %s6524 = scalar_lea.vmem %s7, 1088
        %v6525 = vld [vmem:[%s6524] sm:$0xff]
        %v6526 = vld [vmem:[%s6524 + $0x8] sm:$0xff]
        %v6527 = vld [vmem:[%s6524 + $0x10] sm:$0xff]
        %v6528 = vld [vmem:[%s6524 + $0x18] sm:$0xff]
        %v6529 = vld [vmem:[%s6524 + $0x20] sm:$0xff]
        %v6530 = vld [vmem:[%s6524 + $0x28] sm:$0xff]
        %v6531 = vld [vmem:[%s6524 + $0x30] sm:$0xff]
        %v6532 = vld [vmem:[%s6524 + $0x38] sm:$0xff]
        %v6534 = vsel %vm5275, %v6519, 0
        %v6537 = vsel %vm5275, %v6522, 0
        %6539 = vmatpush.msra.mxu0 0.0
        %6540 = vmatpush.msra.mxu0 0.0
        %6541 = vmatpush.msra.mxu0 0.0
        %6542 = vmatpush.msra.mxu0 0.0
        %6543 = vmatpush.msra.mxu0 0.0
        %6544 = vmatpush.msra.mxu0 0.0
        %6545 = vmatpush.msra.mxu0 0.0
        %6546 = vmatpush.msra.mxu0 0.0
        %6547 = vmatpush.msra.mxu0 %v6532
        %6548 = vmatpush.msra.mxu0 %v6531
        %6549 = vmatpush.msra.mxu0 %v6530
        %6550 = vmatpush.msra.mxu0 %v6529
        %6551 = vmatpush.msra.mxu0 %v6528
        %6552 = vmatpush.msra.mxu0 %v6527
        %6553 = vmatpush.msra.mxu0 %v6526
        %6554 = vmatpush.msra.mxu0 %v6525
        %6555 = vmatmul.f32.gmra.mxu0 %v6534
        %v6556 = vpop.f32.mrf.mxu0
        %v6557 = vadd.f32 0.0, %v6556
        %6558 = vmatmul.f32.gmra.mxu0 %v6537
        %v6559 = vpop.f32.mrf.mxu0
        %v6560 = vadd.f32 0.0, %v6559
        %6561 = vdwg.mxu0
        %v6562 = vadd.f32 %v6490, %v6557
        %v6563 = vadd.f32 %v6491, %v6560
        %s6564 = scalar_lea.vmem %s6, 288
        %v6565 = vld [vmem:[%s6564] sm:$0xff]
        %v6566 = vld [vmem:[%s6564 + $0x8] sm:$0xff]
        %v6568 = vsel %vm5275, %v6565, 0
        %v6571 = vsel %vm5275, %v6566, 0
        %6573 = vmatpush.msra.mxu0 0.0
        %6574 = vmatpush.msra.mxu0 0.0
        %6575 = vmatpush.msra.mxu0 0.0
        %6576 = vmatpush.msra.mxu0 0.0
        %6577 = vmatpush.msra.mxu0 0.0
        %6578 = vmatpush.msra.mxu0 0.0
        %6579 = vmatpush.msra.mxu0 0.0
        %6580 = vmatpush.msra.mxu0 0.0
        %6581 = vmatpush.msra.mxu0 %v5272
        %6582 = vmatpush.msra.mxu0 %v5271
        %6583 = vmatpush.msra.mxu0 %v5270
        %6584 = vmatpush.msra.mxu0 %v5269
        %6585 = vmatpush.msra.mxu0 %v5268
        %6586 = vmatpush.msra.mxu0 %v5267
        %6587 = vmatpush.msra.mxu0 %v5266
        %6588 = vmatpush.msra.mxu0 %v5265
        %6589 = vmatmul.f32.gmra.mxu0 %v6568
        %v6590 = vpop.f32.mrf.mxu0
        %v6591 = vadd.f32 0.0, %v6590
        %6592 = vmatmul.f32.gmra.mxu0 %v6571
        %v6593 = vpop.f32.mrf.mxu0
        %v6594 = vadd.f32 0.0, %v6593
        %6595 = vdwg.mxu0
        %s6596 = scalar_lea.vmem %s7, 1152
        %v6597 = vld [vmem:[%s6596] sm:$0xff]
        %v6598 = vld [vmem:[%s6596 + $0x8] sm:$0xff]
        %v6599 = vld [vmem:[%s6596 + $0x10] sm:$0xff]
        %v6600 = vld [vmem:[%s6596 + $0x18] sm:$0xff]
        %v6601 = vld [vmem:[%s6596 + $0x20] sm:$0xff]
        %v6602 = vld [vmem:[%s6596 + $0x28] sm:$0xff]
        %v6603 = vld [vmem:[%s6596 + $0x30] sm:$0xff]
        %v6604 = vld [vmem:[%s6596 + $0x38] sm:$0xff]
        %v6606 = vsel %vm5275, %v6591, 0
        %v6609 = vsel %vm5275, %v6594, 0
        %6611 = vmatpush.msra.mxu0 0.0
        %6612 = vmatpush.msra.mxu0 0.0
        %6613 = vmatpush.msra.mxu0 0.0
        %6614 = vmatpush.msra.mxu0 0.0
        %6615 = vmatpush.msra.mxu0 0.0
        %6616 = vmatpush.msra.mxu0 0.0
        %6617 = vmatpush.msra.mxu0 0.0
        %6618 = vmatpush.msra.mxu0 0.0
        %6619 = vmatpush.msra.mxu0 %v6604
        %6620 = vmatpush.msra.mxu0 %v6603
        %6621 = vmatpush.msra.mxu0 %v6602
        %6622 = vmatpush.msra.mxu0 %v6601
        %6623 = vmatpush.msra.mxu0 %v6600
        %6624 = vmatpush.msra.mxu0 %v6599
        %6625 = vmatpush.msra.mxu0 %v6598
        %6626 = vmatpush.msra.mxu0 %v6597
        %6627 = vmatmul.f32.gmra.mxu0 %v6606
        %v6628 = vpop.f32.mrf.mxu0
        %v6629 = vadd.f32 0.0, %v6628
        %6630 = vmatmul.f32.gmra.mxu0 %v6609
        %v6631 = vpop.f32.mrf.mxu0
        %v6632 = vadd.f32 0.0, %v6631
        %6633 = vdwg.mxu0
        %v6634 = vadd.f32 %v6562, %v6629
        %v6635 = vadd.f32 %v6563, %v6632
        %s6636 = scalar_lea.vmem %s6, 304
        %v6637 = vld [vmem:[%s6636] sm:$0xff]
        %v6638 = vld [vmem:[%s6636 + $0x8] sm:$0xff]
        %v6640 = vsel %vm5275, %v6637, 0
        %v6643 = vsel %vm5275, %v6638, 0
        %6645 = vmatpush.msra.mxu0 0.0
        %6646 = vmatpush.msra.mxu0 0.0
        %6647 = vmatpush.msra.mxu0 0.0
        %6648 = vmatpush.msra.mxu0 0.0
        %6649 = vmatpush.msra.mxu0 0.0
        %6650 = vmatpush.msra.mxu0 0.0
        %6651 = vmatpush.msra.mxu0 0.0
        %6652 = vmatpush.msra.mxu0 0.0
        %6653 = vmatpush.msra.mxu0 %v5272
        %6654 = vmatpush.msra.mxu0 %v5271
        %6655 = vmatpush.msra.mxu0 %v5270
        %6656 = vmatpush.msra.mxu0 %v5269
        %6657 = vmatpush.msra.mxu0 %v5268
        %6658 = vmatpush.msra.mxu0 %v5267
        %6659 = vmatpush.msra.mxu0 %v5266
        %6660 = vmatpush.msra.mxu0 %v5265
        %6661 = vmatmul.f32.gmra.mxu0 %v6640
        %v6662 = vpop.f32.mrf.mxu0
        %v6663 = vadd.f32 0.0, %v6662
        %6664 = vmatmul.f32.gmra.mxu0 %v6643
        %v6665 = vpop.f32.mrf.mxu0
        %v6666 = vadd.f32 0.0, %v6665
        %6667 = vdwg.mxu0
        %s6668 = scalar_lea.vmem %s7, 1216
        %v6669 = vld [vmem:[%s6668] sm:$0xff]
        %v6670 = vld [vmem:[%s6668 + $0x8] sm:$0xff]
        %v6671 = vld [vmem:[%s6668 + $0x10] sm:$0xff]
        %v6672 = vld [vmem:[%s6668 + $0x18] sm:$0xff]
        %v6673 = vld [vmem:[%s6668 + $0x20] sm:$0xff]
        %v6674 = vld [vmem:[%s6668 + $0x28] sm:$0xff]
        %v6675 = vld [vmem:[%s6668 + $0x30] sm:$0xff]
        %v6676 = vld [vmem:[%s6668 + $0x38] sm:$0xff]
        %v6678 = vsel %vm5275, %v6663, 0
        %v6681 = vsel %vm5275, %v6666, 0
        %6683 = vmatpush.msra.mxu0 0.0
        %6684 = vmatpush.msra.mxu0 0.0
        %6685 = vmatpush.msra.mxu0 0.0
        %6686 = vmatpush.msra.mxu0 0.0
        %6687 = vmatpush.msra.mxu0 0.0
        %6688 = vmatpush.msra.mxu0 0.0
        %6689 = vmatpush.msra.mxu0 0.0
        %6690 = vmatpush.msra.mxu0 0.0
        %6691 = vmatpush.msra.mxu0 %v6676
        %6692 = vmatpush.msra.mxu0 %v6675
        %6693 = vmatpush.msra.mxu0 %v6674
        %6694 = vmatpush.msra.mxu0 %v6673
        %6695 = vmatpush.msra.mxu0 %v6672
        %6696 = vmatpush.msra.mxu0 %v6671
        %6697 = vmatpush.msra.mxu0 %v6670
        %6698 = vmatpush.msra.mxu0 %v6669
        %6699 = vmatmul.f32.gmra.mxu0 %v6678
        %v6700 = vpop.f32.mrf.mxu0
        %v6701 = vadd.f32 0.0, %v6700
        %6702 = vmatmul.f32.gmra.mxu0 %v6681
        %v6703 = vpop.f32.mrf.mxu0
        %v6704 = vadd.f32 0.0, %v6703
        %6705 = vdwg.mxu0
        %v6706 = vadd.f32 %v6634, %v6701
        %v6707 = vadd.f32 %v6635, %v6704
        %s6708 = scalar_lea.vmem %s6, 320
        %v6709 = vld [vmem:[%s6708] sm:$0xff]
        %v6710 = vld [vmem:[%s6708 + $0x8] sm:$0xff]
        %v6712 = vsel %vm5275, %v6709, 0
        %v6715 = vsel %vm5275, %v6710, 0
        %6717 = vmatpush.msra.mxu0 0.0
        %6718 = vmatpush.msra.mxu0 0.0
        %6719 = vmatpush.msra.mxu0 0.0
        %6720 = vmatpush.msra.mxu0 0.0
        %6721 = vmatpush.msra.mxu0 0.0
        %6722 = vmatpush.msra.mxu0 0.0
        %6723 = vmatpush.msra.mxu0 0.0
        %6724 = vmatpush.msra.mxu0 0.0
        %6725 = vmatpush.msra.mxu0 %v5272
        %6726 = vmatpush.msra.mxu0 %v5271
        %6727 = vmatpush.msra.mxu0 %v5270
        %6728 = vmatpush.msra.mxu0 %v5269
        %6729 = vmatpush.msra.mxu0 %v5268
        %6730 = vmatpush.msra.mxu0 %v5267
        %6731 = vmatpush.msra.mxu0 %v5266
        %6732 = vmatpush.msra.mxu0 %v5265
        %6733 = vmatmul.f32.gmra.mxu0 %v6712
        %v6734 = vpop.f32.mrf.mxu0
        %v6735 = vadd.f32 0.0, %v6734
        %6736 = vmatmul.f32.gmra.mxu0 %v6715
        %v6737 = vpop.f32.mrf.mxu0
        %v6738 = vadd.f32 0.0, %v6737
        %6739 = vdwg.mxu0
        %s6740 = scalar_lea.vmem %s7, 1280
        %v6741 = vld [vmem:[%s6740] sm:$0xff]
        %v6742 = vld [vmem:[%s6740 + $0x8] sm:$0xff]
        %v6743 = vld [vmem:[%s6740 + $0x10] sm:$0xff]
        %v6744 = vld [vmem:[%s6740 + $0x18] sm:$0xff]
        %v6745 = vld [vmem:[%s6740 + $0x20] sm:$0xff]
        %v6746 = vld [vmem:[%s6740 + $0x28] sm:$0xff]
        %v6747 = vld [vmem:[%s6740 + $0x30] sm:$0xff]
        %v6748 = vld [vmem:[%s6740 + $0x38] sm:$0xff]
        %v6750 = vsel %vm5275, %v6735, 0
        %v6753 = vsel %vm5275, %v6738, 0
        %6755 = vmatpush.msra.mxu0 0.0
        %6756 = vmatpush.msra.mxu0 0.0
        %6757 = vmatpush.msra.mxu0 0.0
        %6758 = vmatpush.msra.mxu0 0.0
        %6759 = vmatpush.msra.mxu0 0.0
        %6760 = vmatpush.msra.mxu0 0.0
        %6761 = vmatpush.msra.mxu0 0.0
        %6762 = vmatpush.msra.mxu0 0.0
        %6763 = vmatpush.msra.mxu0 %v6748
        %6764 = vmatpush.msra.mxu0 %v6747
        %6765 = vmatpush.msra.mxu0 %v6746
        %6766 = vmatpush.msra.mxu0 %v6745
        %6767 = vmatpush.msra.mxu0 %v6744
        %6768 = vmatpush.msra.mxu0 %v6743
        %6769 = vmatpush.msra.mxu0 %v6742
        %6770 = vmatpush.msra.mxu0 %v6741
        %6771 = vmatmul.f32.gmra.mxu0 %v6750
        %v6772 = vpop.f32.mrf.mxu0
        %v6773 = vadd.f32 0.0, %v6772
        %6774 = vmatmul.f32.gmra.mxu0 %v6753
        %v6775 = vpop.f32.mrf.mxu0
        %v6776 = vadd.f32 0.0, %v6775
        %6777 = vdwg.mxu0
        %v6778 = vadd.f32 %v6706, %v6773
        %v6779 = vadd.f32 %v6707, %v6776
        %s6780 = scalar_lea.vmem %s6, 336
        %v6781 = vld [vmem:[%s6780] sm:$0xff]
        %v6782 = vld [vmem:[%s6780 + $0x8] sm:$0xff]
        %v6784 = vsel %vm5275, %v6781, 0
        %v6787 = vsel %vm5275, %v6782, 0
        %6789 = vmatpush.msra.mxu0 0.0
        %6790 = vmatpush.msra.mxu0 0.0
        %6791 = vmatpush.msra.mxu0 0.0
        %6792 = vmatpush.msra.mxu0 0.0
        %6793 = vmatpush.msra.mxu0 0.0
        %6794 = vmatpush.msra.mxu0 0.0
        %6795 = vmatpush.msra.mxu0 0.0
        %6796 = vmatpush.msra.mxu0 0.0
        %6797 = vmatpush.msra.mxu0 %v5272
        %6798 = vmatpush.msra.mxu0 %v5271
        %6799 = vmatpush.msra.mxu0 %v5270
        %6800 = vmatpush.msra.mxu0 %v5269
        %6801 = vmatpush.msra.mxu0 %v5268
        %6802 = vmatpush.msra.mxu0 %v5267
        %6803 = vmatpush.msra.mxu0 %v5266
        %6804 = vmatpush.msra.mxu0 %v5265
        %6805 = vmatmul.f32.gmra.mxu0 %v6784
        %v6806 = vpop.f32.mrf.mxu0
        %v6807 = vadd.f32 0.0, %v6806
        %6808 = vmatmul.f32.gmra.mxu0 %v6787
        %v6809 = vpop.f32.mrf.mxu0
        %v6810 = vadd.f32 0.0, %v6809
        %6811 = vdwg.mxu0
        %s6812 = scalar_lea.vmem %s7, 1344
        %v6813 = vld [vmem:[%s6812] sm:$0xff]
        %v6814 = vld [vmem:[%s6812 + $0x8] sm:$0xff]
        %v6815 = vld [vmem:[%s6812 + $0x10] sm:$0xff]
        %v6816 = vld [vmem:[%s6812 + $0x18] sm:$0xff]
        %v6817 = vld [vmem:[%s6812 + $0x20] sm:$0xff]
        %v6818 = vld [vmem:[%s6812 + $0x28] sm:$0xff]
        %v6819 = vld [vmem:[%s6812 + $0x30] sm:$0xff]
        %v6820 = vld [vmem:[%s6812 + $0x38] sm:$0xff]
        %v6822 = vsel %vm5275, %v6807, 0
        %v6825 = vsel %vm5275, %v6810, 0
        %6827 = vmatpush.msra.mxu0 0.0
        %6828 = vmatpush.msra.mxu0 0.0
        %6829 = vmatpush.msra.mxu0 0.0
        %6830 = vmatpush.msra.mxu0 0.0
        %6831 = vmatpush.msra.mxu0 0.0
        %6832 = vmatpush.msra.mxu0 0.0
        %6833 = vmatpush.msra.mxu0 0.0
        %6834 = vmatpush.msra.mxu0 0.0
        %6835 = vmatpush.msra.mxu0 %v6820
        %6836 = vmatpush.msra.mxu0 %v6819
        %6837 = vmatpush.msra.mxu0 %v6818
        %6838 = vmatpush.msra.mxu0 %v6817
        %6839 = vmatpush.msra.mxu0 %v6816
        %6840 = vmatpush.msra.mxu0 %v6815
        %6841 = vmatpush.msra.mxu0 %v6814
        %6842 = vmatpush.msra.mxu0 %v6813
        %6843 = vmatmul.f32.gmra.mxu0 %v6822
        %v6844 = vpop.f32.mrf.mxu0
        %v6845 = vadd.f32 0.0, %v6844
        %6846 = vmatmul.f32.gmra.mxu0 %v6825
        %v6847 = vpop.f32.mrf.mxu0
        %v6848 = vadd.f32 0.0, %v6847
        %6849 = vdwg.mxu0
        %v6850 = vadd.f32 %v6778, %v6845
        %v6851 = vadd.f32 %v6779, %v6848
        %s6852 = scalar_lea.vmem %s6, 352
        %v6853 = vld [vmem:[%s6852] sm:$0xff]
        %v6854 = vld [vmem:[%s6852 + $0x8] sm:$0xff]
        %v6856 = vsel %vm5275, %v6853, 0
        %v6859 = vsel %vm5275, %v6854, 0
        %6861 = vmatpush.msra.mxu0 0.0
        %6862 = vmatpush.msra.mxu0 0.0
        %6863 = vmatpush.msra.mxu0 0.0
        %6864 = vmatpush.msra.mxu0 0.0
        %6865 = vmatpush.msra.mxu0 0.0
        %6866 = vmatpush.msra.mxu0 0.0
        %6867 = vmatpush.msra.mxu0 0.0
        %6868 = vmatpush.msra.mxu0 0.0
        %6869 = vmatpush.msra.mxu0 %v5272
        %6870 = vmatpush.msra.mxu0 %v5271
        %6871 = vmatpush.msra.mxu0 %v5270
        %6872 = vmatpush.msra.mxu0 %v5269
        %6873 = vmatpush.msra.mxu0 %v5268
        %6874 = vmatpush.msra.mxu0 %v5267
        %6875 = vmatpush.msra.mxu0 %v5266
        %6876 = vmatpush.msra.mxu0 %v5265
        %6877 = vmatmul.f32.gmra.mxu0 %v6856
        %v6878 = vpop.f32.mrf.mxu0
        %v6879 = vadd.f32 0.0, %v6878
        %6880 = vmatmul.f32.gmra.mxu0 %v6859
        %v6881 = vpop.f32.mrf.mxu0
        %v6882 = vadd.f32 0.0, %v6881
        %6883 = vdwg.mxu0
        %s6884 = scalar_lea.vmem %s7, 1408
        %v6885 = vld [vmem:[%s6884] sm:$0xff]
        %v6886 = vld [vmem:[%s6884 + $0x8] sm:$0xff]
        %v6887 = vld [vmem:[%s6884 + $0x10] sm:$0xff]
        %v6888 = vld [vmem:[%s6884 + $0x18] sm:$0xff]
        %v6889 = vld [vmem:[%s6884 + $0x20] sm:$0xff]
        %v6890 = vld [vmem:[%s6884 + $0x28] sm:$0xff]
        %v6891 = vld [vmem:[%s6884 + $0x30] sm:$0xff]
        %v6892 = vld [vmem:[%s6884 + $0x38] sm:$0xff]
        %v6894 = vsel %vm5275, %v6879, 0
        %v6897 = vsel %vm5275, %v6882, 0
        %6899 = vmatpush.msra.mxu0 0.0
        %6900 = vmatpush.msra.mxu0 0.0
        %6901 = vmatpush.msra.mxu0 0.0
        %6902 = vmatpush.msra.mxu0 0.0
        %6903 = vmatpush.msra.mxu0 0.0
        %6904 = vmatpush.msra.mxu0 0.0
        %6905 = vmatpush.msra.mxu0 0.0
        %6906 = vmatpush.msra.mxu0 0.0
        %6907 = vmatpush.msra.mxu0 %v6892
        %6908 = vmatpush.msra.mxu0 %v6891
        %6909 = vmatpush.msra.mxu0 %v6890
        %6910 = vmatpush.msra.mxu0 %v6889
        %6911 = vmatpush.msra.mxu0 %v6888
        %6912 = vmatpush.msra.mxu0 %v6887
        %6913 = vmatpush.msra.mxu0 %v6886
        %6914 = vmatpush.msra.mxu0 %v6885
        %6915 = vmatmul.f32.gmra.mxu0 %v6894
        %v6916 = vpop.f32.mrf.mxu0
        %v6917 = vadd.f32 0.0, %v6916
        %6918 = vmatmul.f32.gmra.mxu0 %v6897
        %v6919 = vpop.f32.mrf.mxu0
        %v6920 = vadd.f32 0.0, %v6919
        %6921 = vdwg.mxu0
        %v6922 = vadd.f32 %v6850, %v6917
        %v6923 = vadd.f32 %v6851, %v6920
        %s6924 = scalar_lea.vmem %s6, 368
        %v6925 = vld [vmem:[%s6924] sm:$0xff]
        %v6926 = vld [vmem:[%s6924 + $0x8] sm:$0xff]
        %v6928 = vsel %vm5275, %v6925, 0
        %v6931 = vsel %vm5275, %v6926, 0
        %6933 = vmatpush.msra.mxu0 0.0
        %6934 = vmatpush.msra.mxu0 0.0
        %6935 = vmatpush.msra.mxu0 0.0
        %6936 = vmatpush.msra.mxu0 0.0
        %6937 = vmatpush.msra.mxu0 0.0
        %6938 = vmatpush.msra.mxu0 0.0
        %6939 = vmatpush.msra.mxu0 0.0
        %6940 = vmatpush.msra.mxu0 0.0
        %6941 = vmatpush.msra.mxu0 %v5272
        %6942 = vmatpush.msra.mxu0 %v5271
        %6943 = vmatpush.msra.mxu0 %v5270
        %6944 = vmatpush.msra.mxu0 %v5269
        %6945 = vmatpush.msra.mxu0 %v5268
        %6946 = vmatpush.msra.mxu0 %v5267
        %6947 = vmatpush.msra.mxu0 %v5266
        %6948 = vmatpush.msra.mxu0 %v5265
        %6949 = vmatmul.f32.gmra.mxu0 %v6928
        %v6950 = vpop.f32.mrf.mxu0
        %v6951 = vadd.f32 0.0, %v6950
        %6952 = vmatmul.f32.gmra.mxu0 %v6931
        %v6953 = vpop.f32.mrf.mxu0
        %v6954 = vadd.f32 0.0, %v6953
        %6955 = vdwg.mxu0
        %s6956 = scalar_lea.vmem %s7, 1472
        %v6957 = vld [vmem:[%s6956] sm:$0xff]
        %v6958 = vld [vmem:[%s6956 + $0x8] sm:$0xff]
        %v6959 = vld [vmem:[%s6956 + $0x10] sm:$0xff]
        %v6960 = vld [vmem:[%s6956 + $0x18] sm:$0xff]
        %v6961 = vld [vmem:[%s6956 + $0x20] sm:$0xff]
        %v6962 = vld [vmem:[%s6956 + $0x28] sm:$0xff]
        %v6963 = vld [vmem:[%s6956 + $0x30] sm:$0xff]
        %v6964 = vld [vmem:[%s6956 + $0x38] sm:$0xff]
        %v6966 = vsel %vm5275, %v6951, 0
        %v6969 = vsel %vm5275, %v6954, 0
        %6971 = vmatpush.msra.mxu0 0.0
        %6972 = vmatpush.msra.mxu0 0.0
        %6973 = vmatpush.msra.mxu0 0.0
        %6974 = vmatpush.msra.mxu0 0.0
        %6975 = vmatpush.msra.mxu0 0.0
        %6976 = vmatpush.msra.mxu0 0.0
        %6977 = vmatpush.msra.mxu0 0.0
        %6978 = vmatpush.msra.mxu0 0.0
        %6979 = vmatpush.msra.mxu0 %v6964
        %6980 = vmatpush.msra.mxu0 %v6963
        %6981 = vmatpush.msra.mxu0 %v6962
        %6982 = vmatpush.msra.mxu0 %v6961
        %6983 = vmatpush.msra.mxu0 %v6960
        %6984 = vmatpush.msra.mxu0 %v6959
        %6985 = vmatpush.msra.mxu0 %v6958
        %6986 = vmatpush.msra.mxu0 %v6957
        %6987 = vmatmul.f32.gmra.mxu0 %v6966
        %v6988 = vpop.f32.mrf.mxu0
        %v6989 = vadd.f32 0.0, %v6988
        %6990 = vmatmul.f32.gmra.mxu0 %v6969
        %v6991 = vpop.f32.mrf.mxu0
        %v6992 = vadd.f32 0.0, %v6991
        %6993 = vdwg.mxu0
        %v6994 = vadd.f32 %v6922, %v6989
        %v6995 = vadd.f32 %v6923, %v6992
        %s6996 = scalar_lea.vmem %s6, 384
        %v6997 = vld [vmem:[%s6996] sm:$0xff]
        %v6998 = vld [vmem:[%s6996 + $0x8] sm:$0xff]
        %v7000 = vsel %vm5275, %v6997, 0
        %v7003 = vsel %vm5275, %v6998, 0
        %7005 = vmatpush.msra.mxu0 0.0
        %7006 = vmatpush.msra.mxu0 0.0
        %7007 = vmatpush.msra.mxu0 0.0
        %7008 = vmatpush.msra.mxu0 0.0
        %7009 = vmatpush.msra.mxu0 0.0
        %7010 = vmatpush.msra.mxu0 0.0
        %7011 = vmatpush.msra.mxu0 0.0
        %7012 = vmatpush.msra.mxu0 0.0
        %7013 = vmatpush.msra.mxu0 %v5272
        %7014 = vmatpush.msra.mxu0 %v5271
        %7015 = vmatpush.msra.mxu0 %v5270
        %7016 = vmatpush.msra.mxu0 %v5269
        %7017 = vmatpush.msra.mxu0 %v5268
        %7018 = vmatpush.msra.mxu0 %v5267
        %7019 = vmatpush.msra.mxu0 %v5266
        %7020 = vmatpush.msra.mxu0 %v5265
        %7021 = vmatmul.f32.gmra.mxu0 %v7000
        %v7022 = vpop.f32.mrf.mxu0
        %v7023 = vadd.f32 0.0, %v7022
        %7024 = vmatmul.f32.gmra.mxu0 %v7003
        %v7025 = vpop.f32.mrf.mxu0
        %v7026 = vadd.f32 0.0, %v7025
        %7027 = vdwg.mxu0
        %s7028 = scalar_lea.vmem %s7, 1536
        %v7029 = vld [vmem:[%s7028] sm:$0xff]
        %v7030 = vld [vmem:[%s7028 + $0x8] sm:$0xff]
        %v7031 = vld [vmem:[%s7028 + $0x10] sm:$0xff]
        %v7032 = vld [vmem:[%s7028 + $0x18] sm:$0xff]
        %v7033 = vld [vmem:[%s7028 + $0x20] sm:$0xff]
        %v7034 = vld [vmem:[%s7028 + $0x28] sm:$0xff]
        %v7035 = vld [vmem:[%s7028 + $0x30] sm:$0xff]
        %v7036 = vld [vmem:[%s7028 + $0x38] sm:$0xff]
        %v7038 = vsel %vm5275, %v7023, 0
        %v7041 = vsel %vm5275, %v7026, 0
        %7043 = vmatpush.msra.mxu0 0.0
        %7044 = vmatpush.msra.mxu0 0.0
        %7045 = vmatpush.msra.mxu0 0.0
        %7046 = vmatpush.msra.mxu0 0.0
        %7047 = vmatpush.msra.mxu0 0.0
        %7048 = vmatpush.msra.mxu0 0.0
        %7049 = vmatpush.msra.mxu0 0.0
        %7050 = vmatpush.msra.mxu0 0.0
        %7051 = vmatpush.msra.mxu0 %v7036
        %7052 = vmatpush.msra.mxu0 %v7035
        %7053 = vmatpush.msra.mxu0 %v7034
        %7054 = vmatpush.msra.mxu0 %v7033
        %7055 = vmatpush.msra.mxu0 %v7032
        %7056 = vmatpush.msra.mxu0 %v7031
        %7057 = vmatpush.msra.mxu0 %v7030
        %7058 = vmatpush.msra.mxu0 %v7029
        %7059 = vmatmul.f32.gmra.mxu0 %v7038
        %v7060 = vpop.f32.mrf.mxu0
        %v7061 = vadd.f32 0.0, %v7060
        %7062 = vmatmul.f32.gmra.mxu0 %v7041
        %v7063 = vpop.f32.mrf.mxu0
        %v7064 = vadd.f32 0.0, %v7063
        %7065 = vdwg.mxu0
        %v7066 = vadd.f32 %v6994, %v7061
        %v7067 = vadd.f32 %v6995, %v7064
        %v7068 = vld [vmem:[%s8] sm:$0x1]
        %v7070 = vperm.slane %v7068, 0
        %v7072 = vadd.f32 %v7066, %v7070
        %v7073 = vadd.f32 %v7067, %v7070
        %vm7074 = vcmp.ge.f32.partialorder %v7072, 0.0
        %vm7075 = vcmp.ge.f32.partialorder %v7073, 0.0
        %v7076 = vmul.f32 %v7072, 0.2
        %v7077 = vmul.f32 %v7073, 0.2
        %v7078 = vsel %vm7074, %v7072, %v7076
        %v7079 = vsel %vm7075, %v7073, %v7077
        %s7080 = scalar_lea.vmem %s8, 1
        %v7081 = vld [vmem:[%s7080] sm:$0x1]
        %v7083 = vperm.slane %v7081, 0
        %v7085 = vmul.f32 %v7078, %v7083
        %v7086 = vmul.f32 %v7079, %v7083
        %s7087 = scalar_lea.vmem %s8, 2
        %v7088 = vld [vmem:[%s7087] sm:$0x1]
        %v7090 = vperm.slane %v7088, 0
        %v7092 = vadd.f32 %v7085, %v7090
        %v7093 = vadd.f32 %v7086, %v7090
        %v7094 = vld [vmem:[%s10] sm:$0x1]
        %v7095 = vld [vmem:[%s9] sm:$0xff]
        %v7096 = vld [vmem:[%s9 + $0x8] sm:$0xff]
        %v7097 = vld [vmem:[%s9 + $0x10] sm:$0xff]
        %v7098 = vld [vmem:[%s9 + $0x18] sm:$0xff]
        %v7099 = vld [vmem:[%s9 + $0x20] sm:$0xff]
        %v7100 = vld [vmem:[%s9 + $0x28] sm:$0xff]
        %v7101 = vld [vmem:[%s9 + $0x30] sm:$0xff]
        %v7102 = vld [vmem:[%s9 + $0x38] sm:$0xff]
        %v7103 = vld [vmem:[%s9 + $0x40] sm:$0xff]
        %v7104 = vld [vmem:[%s9 + $0x48] sm:$0xff]
        %v7105 = vld [vmem:[%s9 + $0x50] sm:$0xff]
        %v7106 = vld [vmem:[%s9 + $0x58] sm:$0xff]
        %v7107 = vld [vmem:[%s9 + $0x60] sm:$0xff]
        %v7108 = vld [vmem:[%s9 + $0x68] sm:$0xff]
        %v7109 = vld [vmem:[%s9 + $0x70] sm:$0xff]
        %v7110 = vld [vmem:[%s9 + $0x78] sm:$0xff]
        %7111 = vmatpush.msra.mxu0 %v7110
        %7112 = vmatpush.msra.mxu0 %v7109
        %7113 = vmatpush.msra.mxu0 %v7108
        %7114 = vmatpush.msra.mxu0 %v7107
        %7115 = vmatpush.msra.mxu0 %v7106
        %7116 = vmatpush.msra.mxu0 %v7105
        %7117 = vmatpush.msra.mxu0 %v7104
        %7118 = vmatpush.msra.mxu0 %v7103
        %7119 = vmatpush.msra.mxu0 %v7102
        %7120 = vmatpush.msra.mxu0 %v7101
        %7121 = vmatpush.msra.mxu0 %v7100
        %7122 = vmatpush.msra.mxu0 %v7099
        %7123 = vmatpush.msra.mxu0 %v7098
        %7124 = vmatpush.msra.mxu0 %v7097
        %7125 = vmatpush.msra.mxu0 %v7096
        %7126 = vmatpush.msra.mxu0 %v7095
        %7127 = vmatmul.f32.gmra.mxu0 %v7092
        %v7128 = vpop.f32.mrf.mxu0
        %v7129 = vadd.f32 0.0, %v7128
        %7130 = vdwg.mxu0
        %v7131 = vadd.f32 %v7094, %v7129
        %s7132 = scalar_lea.vmem %s9, 128
        %v7133 = vld [vmem:[%s7132] sm:$0xff]
        %v7134 = vld [vmem:[%s7132 + $0x8] sm:$0xff]
        %v7135 = vld [vmem:[%s7132 + $0x10] sm:$0xff]
        %v7136 = vld [vmem:[%s7132 + $0x18] sm:$0xff]
        %v7137 = vld [vmem:[%s7132 + $0x20] sm:$0xff]
        %v7138 = vld [vmem:[%s7132 + $0x28] sm:$0xff]
        %v7139 = vld [vmem:[%s7132 + $0x30] sm:$0xff]
        %v7140 = vld [vmem:[%s7132 + $0x38] sm:$0xff]
        %v7141 = vld [vmem:[%s7132 + $0x40] sm:$0xff]
        %v7142 = vld [vmem:[%s7132 + $0x48] sm:$0xff]
        %v7143 = vld [vmem:[%s7132 + $0x50] sm:$0xff]
        %v7144 = vld [vmem:[%s7132 + $0x58] sm:$0xff]
        %v7145 = vld [vmem:[%s7132 + $0x60] sm:$0xff]
        %v7146 = vld [vmem:[%s7132 + $0x68] sm:$0xff]
        %v7147 = vld [vmem:[%s7132 + $0x70] sm:$0xff]
        %v7148 = vld [vmem:[%s7132 + $0x78] sm:$0xff]
        %v7150 = vrot.slane %v7092, 1
        %7152 = vmatpush.msra.mxu0 %v7148
        %7153 = vmatpush.msra.mxu0 %v7147
        %7154 = vmatpush.msra.mxu0 %v7146
        %7155 = vmatpush.msra.mxu0 %v7145
        %7156 = vmatpush.msra.mxu0 %v7144
        %7157 = vmatpush.msra.mxu0 %v7143
        %7158 = vmatpush.msra.mxu0 %v7142
        %7159 = vmatpush.msra.mxu0 %v7141
        %7160 = vmatpush.msra.mxu0 %v7140
        %7161 = vmatpush.msra.mxu0 %v7139
        %7162 = vmatpush.msra.mxu0 %v7138
        %7163 = vmatpush.msra.mxu0 %v7137
        %7164 = vmatpush.msra.mxu0 %v7136
        %7165 = vmatpush.msra.mxu0 %v7135
        %7166 = vmatpush.msra.mxu0 %v7134
        %7167 = vmatpush.msra.mxu0 %v7133
        %7168 = vmatmul.f32.gmra.mxu0 %v7150
        %v7169 = vpop.f32.mrf.mxu0
        %v7170 = vadd.f32 0.0, %v7169
        %7171 = vdwg.mxu0
        %v7172 = vadd.f32 %v7131, %v7170
        %s7173 = scalar_lea.vmem %s9, 256
        %v7174 = vld [vmem:[%s7173] sm:$0xff]
        %v7175 = vld [vmem:[%s7173 + $0x8] sm:$0xff]
        %v7176 = vld [vmem:[%s7173 + $0x10] sm:$0xff]
        %v7177 = vld [vmem:[%s7173 + $0x18] sm:$0xff]
        %v7178 = vld [vmem:[%s7173 + $0x20] sm:$0xff]
        %v7179 = vld [vmem:[%s7173 + $0x28] sm:$0xff]
        %v7180 = vld [vmem:[%s7173 + $0x30] sm:$0xff]
        %v7181 = vld [vmem:[%s7173 + $0x38] sm:$0xff]
        %v7182 = vld [vmem:[%s7173 + $0x40] sm:$0xff]
        %v7183 = vld [vmem:[%s7173 + $0x48] sm:$0xff]
        %v7184 = vld [vmem:[%s7173 + $0x50] sm:$0xff]
        %v7185 = vld [vmem:[%s7173 + $0x58] sm:$0xff]
        %v7186 = vld [vmem:[%s7173 + $0x60] sm:$0xff]
        %v7187 = vld [vmem:[%s7173 + $0x68] sm:$0xff]
        %v7188 = vld [vmem:[%s7173 + $0x70] sm:$0xff]
        %v7189 = vld [vmem:[%s7173 + $0x78] sm:$0xff]
        %v7190 = vrot.slane %v7092, 2
        %7192 = vmatpush.msra.mxu0 %v7189
        %7193 = vmatpush.msra.mxu0 %v7188
        %7194 = vmatpush.msra.mxu0 %v7187
        %7195 = vmatpush.msra.mxu0 %v7186
        %7196 = vmatpush.msra.mxu0 %v7185
        %7197 = vmatpush.msra.mxu0 %v7184
        %7198 = vmatpush.msra.mxu0 %v7183
        %7199 = vmatpush.msra.mxu0 %v7182
        %7200 = vmatpush.msra.mxu0 %v7181
        %7201 = vmatpush.msra.mxu0 %v7180
        %7202 = vmatpush.msra.mxu0 %v7179
        %7203 = vmatpush.msra.mxu0 %v7178
        %7204 = vmatpush.msra.mxu0 %v7177
        %7205 = vmatpush.msra.mxu0 %v7176
        %7206 = vmatpush.msra.mxu0 %v7175
        %7207 = vmatpush.msra.mxu0 %v7174
        %7208 = vmatmul.f32.gmra.mxu0 %v7190
        %v7209 = vpop.f32.mrf.mxu0
        %v7210 = vadd.f32 0.0, %v7209
        %7211 = vdwg.mxu0
        %v7212 = vadd.f32 %v7172, %v7210
        %s7213 = scalar_lea.vmem %s9, 384
        %v7214 = vld [vmem:[%s7213] sm:$0xff]
        %v7215 = vld [vmem:[%s7213 + $0x8] sm:$0xff]
        %v7216 = vld [vmem:[%s7213 + $0x10] sm:$0xff]
        %v7217 = vld [vmem:[%s7213 + $0x18] sm:$0xff]
        %v7218 = vld [vmem:[%s7213 + $0x20] sm:$0xff]
        %v7219 = vld [vmem:[%s7213 + $0x28] sm:$0xff]
        %v7220 = vld [vmem:[%s7213 + $0x30] sm:$0xff]
        %v7221 = vld [vmem:[%s7213 + $0x38] sm:$0xff]
        %v7222 = vld [vmem:[%s7213 + $0x40] sm:$0xff]
        %v7223 = vld [vmem:[%s7213 + $0x48] sm:$0xff]
        %v7224 = vld [vmem:[%s7213 + $0x50] sm:$0xff]
        %v7225 = vld [vmem:[%s7213 + $0x58] sm:$0xff]
        %v7226 = vld [vmem:[%s7213 + $0x60] sm:$0xff]
        %v7227 = vld [vmem:[%s7213 + $0x68] sm:$0xff]
        %v7228 = vld [vmem:[%s7213 + $0x70] sm:$0xff]
        %v7229 = vld [vmem:[%s7213 + $0x78] sm:$0xff]
        %v7230 = vrot.slane %v7092, 3
        %7232 = vmatpush.msra.mxu0 %v7229
        %7233 = vmatpush.msra.mxu0 %v7228
        %7234 = vmatpush.msra.mxu0 %v7227
        %7235 = vmatpush.msra.mxu0 %v7226
        %7236 = vmatpush.msra.mxu0 %v7225
        %7237 = vmatpush.msra.mxu0 %v7224
        %7238 = vmatpush.msra.mxu0 %v7223
        %7239 = vmatpush.msra.mxu0 %v7222
        %7240 = vmatpush.msra.mxu0 %v7221
        %7241 = vmatpush.msra.mxu0 %v7220
        %7242 = vmatpush.msra.mxu0 %v7219
        %7243 = vmatpush.msra.mxu0 %v7218
        %7244 = vmatpush.msra.mxu0 %v7217
        %7245 = vmatpush.msra.mxu0 %v7216
        %7246 = vmatpush.msra.mxu0 %v7215
        %7247 = vmatpush.msra.mxu0 %v7214
        %7248 = vmatmul.f32.gmra.mxu0 %v7230
        %v7249 = vpop.f32.mrf.mxu0
        %v7250 = vadd.f32 0.0, %v7249
        %7251 = vdwg.mxu0
        %v7252 = vadd.f32 %v7212, %v7250
        %s7253 = scalar_lea.vmem %s9, 512
        %v7254 = vld [vmem:[%s7253] sm:$0xff]
        %v7255 = vld [vmem:[%s7253 + $0x8] sm:$0xff]
        %v7256 = vld [vmem:[%s7253 + $0x10] sm:$0xff]
        %v7257 = vld [vmem:[%s7253 + $0x18] sm:$0xff]
        %v7258 = vld [vmem:[%s7253 + $0x20] sm:$0xff]
        %v7259 = vld [vmem:[%s7253 + $0x28] sm:$0xff]
        %v7260 = vld [vmem:[%s7253 + $0x30] sm:$0xff]
        %v7261 = vld [vmem:[%s7253 + $0x38] sm:$0xff]
        %v7262 = vld [vmem:[%s7253 + $0x40] sm:$0xff]
        %v7263 = vld [vmem:[%s7253 + $0x48] sm:$0xff]
        %v7264 = vld [vmem:[%s7253 + $0x50] sm:$0xff]
        %v7265 = vld [vmem:[%s7253 + $0x58] sm:$0xff]
        %v7266 = vld [vmem:[%s7253 + $0x60] sm:$0xff]
        %v7267 = vld [vmem:[%s7253 + $0x68] sm:$0xff]
        %v7268 = vld [vmem:[%s7253 + $0x70] sm:$0xff]
        %v7269 = vld [vmem:[%s7253 + $0x78] sm:$0xff]
        %v7270 = vrot.slane %v7092, 4
        %7272 = vmatpush.msra.mxu0 %v7269
        %7273 = vmatpush.msra.mxu0 %v7268
        %7274 = vmatpush.msra.mxu0 %v7267
        %7275 = vmatpush.msra.mxu0 %v7266
        %7276 = vmatpush.msra.mxu0 %v7265
        %7277 = vmatpush.msra.mxu0 %v7264
        %7278 = vmatpush.msra.mxu0 %v7263
        %7279 = vmatpush.msra.mxu0 %v7262
        %7280 = vmatpush.msra.mxu0 %v7261
        %7281 = vmatpush.msra.mxu0 %v7260
        %7282 = vmatpush.msra.mxu0 %v7259
        %7283 = vmatpush.msra.mxu0 %v7258
        %7284 = vmatpush.msra.mxu0 %v7257
        %7285 = vmatpush.msra.mxu0 %v7256
        %7286 = vmatpush.msra.mxu0 %v7255
        %7287 = vmatpush.msra.mxu0 %v7254
        %7288 = vmatmul.f32.gmra.mxu0 %v7270
        %v7289 = vpop.f32.mrf.mxu0
        %v7290 = vadd.f32 0.0, %v7289
        %7291 = vdwg.mxu0
        %v7292 = vadd.f32 %v7252, %v7290
        %s7293 = scalar_lea.vmem %s9, 640
        %v7294 = vld [vmem:[%s7293] sm:$0xff]
        %v7295 = vld [vmem:[%s7293 + $0x8] sm:$0xff]
        %v7296 = vld [vmem:[%s7293 + $0x10] sm:$0xff]
        %v7297 = vld [vmem:[%s7293 + $0x18] sm:$0xff]
        %v7298 = vld [vmem:[%s7293 + $0x20] sm:$0xff]
        %v7299 = vld [vmem:[%s7293 + $0x28] sm:$0xff]
        %v7300 = vld [vmem:[%s7293 + $0x30] sm:$0xff]
        %v7301 = vld [vmem:[%s7293 + $0x38] sm:$0xff]
        %v7302 = vld [vmem:[%s7293 + $0x40] sm:$0xff]
        %v7303 = vld [vmem:[%s7293 + $0x48] sm:$0xff]
        %v7304 = vld [vmem:[%s7293 + $0x50] sm:$0xff]
        %v7305 = vld [vmem:[%s7293 + $0x58] sm:$0xff]
        %v7306 = vld [vmem:[%s7293 + $0x60] sm:$0xff]
        %v7307 = vld [vmem:[%s7293 + $0x68] sm:$0xff]
        %v7308 = vld [vmem:[%s7293 + $0x70] sm:$0xff]
        %v7309 = vld [vmem:[%s7293 + $0x78] sm:$0xff]
        %v7310 = vrot.slane %v7092, 5
        %7312 = vmatpush.msra.mxu0 %v7309
        %7313 = vmatpush.msra.mxu0 %v7308
        %7314 = vmatpush.msra.mxu0 %v7307
        %7315 = vmatpush.msra.mxu0 %v7306
        %7316 = vmatpush.msra.mxu0 %v7305
        %7317 = vmatpush.msra.mxu0 %v7304
        %7318 = vmatpush.msra.mxu0 %v7303
        %7319 = vmatpush.msra.mxu0 %v7302
        %7320 = vmatpush.msra.mxu0 %v7301
        %7321 = vmatpush.msra.mxu0 %v7300
        %7322 = vmatpush.msra.mxu0 %v7299
        %7323 = vmatpush.msra.mxu0 %v7298
        %7324 = vmatpush.msra.mxu0 %v7297
        %7325 = vmatpush.msra.mxu0 %v7296
        %7326 = vmatpush.msra.mxu0 %v7295
        %7327 = vmatpush.msra.mxu0 %v7294
        %7328 = vmatmul.f32.gmra.mxu0 %v7310
        %v7329 = vpop.f32.mrf.mxu0
        %v7330 = vadd.f32 0.0, %v7329
        %7331 = vdwg.mxu0
        %v7332 = vadd.f32 %v7292, %v7330
        %s7333 = scalar_lea.vmem %s9, 768
        %v7334 = vld [vmem:[%s7333] sm:$0xff]
        %v7335 = vld [vmem:[%s7333 + $0x8] sm:$0xff]
        %v7336 = vld [vmem:[%s7333 + $0x10] sm:$0xff]
        %v7337 = vld [vmem:[%s7333 + $0x18] sm:$0xff]
        %v7338 = vld [vmem:[%s7333 + $0x20] sm:$0xff]
        %v7339 = vld [vmem:[%s7333 + $0x28] sm:$0xff]
        %v7340 = vld [vmem:[%s7333 + $0x30] sm:$0xff]
        %v7341 = vld [vmem:[%s7333 + $0x38] sm:$0xff]
        %v7342 = vld [vmem:[%s7333 + $0x40] sm:$0xff]
        %v7343 = vld [vmem:[%s7333 + $0x48] sm:$0xff]
        %v7344 = vld [vmem:[%s7333 + $0x50] sm:$0xff]
        %v7345 = vld [vmem:[%s7333 + $0x58] sm:$0xff]
        %v7346 = vld [vmem:[%s7333 + $0x60] sm:$0xff]
        %v7347 = vld [vmem:[%s7333 + $0x68] sm:$0xff]
        %v7348 = vld [vmem:[%s7333 + $0x70] sm:$0xff]
        %v7349 = vld [vmem:[%s7333 + $0x78] sm:$0xff]
        %v7350 = vrot.slane %v7092, 6
        %7352 = vmatpush.msra.mxu0 %v7349
        %7353 = vmatpush.msra.mxu0 %v7348
        %7354 = vmatpush.msra.mxu0 %v7347
        %7355 = vmatpush.msra.mxu0 %v7346
        %7356 = vmatpush.msra.mxu0 %v7345
        %7357 = vmatpush.msra.mxu0 %v7344
        %7358 = vmatpush.msra.mxu0 %v7343
        %7359 = vmatpush.msra.mxu0 %v7342
        %7360 = vmatpush.msra.mxu0 %v7341
        %7361 = vmatpush.msra.mxu0 %v7340
        %7362 = vmatpush.msra.mxu0 %v7339
        %7363 = vmatpush.msra.mxu0 %v7338
        %7364 = vmatpush.msra.mxu0 %v7337
        %7365 = vmatpush.msra.mxu0 %v7336
        %7366 = vmatpush.msra.mxu0 %v7335
        %7367 = vmatpush.msra.mxu0 %v7334
        %7368 = vmatmul.f32.gmra.mxu0 %v7350
        %v7369 = vpop.f32.mrf.mxu0
        %v7370 = vadd.f32 0.0, %v7369
        %7371 = vdwg.mxu0
        %v7372 = vadd.f32 %v7332, %v7370
        %s7373 = scalar_lea.vmem %s9, 896
        %v7374 = vld [vmem:[%s7373] sm:$0xff]
        %v7375 = vld [vmem:[%s7373 + $0x8] sm:$0xff]
        %v7376 = vld [vmem:[%s7373 + $0x10] sm:$0xff]
        %v7377 = vld [vmem:[%s7373 + $0x18] sm:$0xff]
        %v7378 = vld [vmem:[%s7373 + $0x20] sm:$0xff]
        %v7379 = vld [vmem:[%s7373 + $0x28] sm:$0xff]
        %v7380 = vld [vmem:[%s7373 + $0x30] sm:$0xff]
        %v7381 = vld [vmem:[%s7373 + $0x38] sm:$0xff]
        %v7382 = vld [vmem:[%s7373 + $0x40] sm:$0xff]
        %v7383 = vld [vmem:[%s7373 + $0x48] sm:$0xff]
        %v7384 = vld [vmem:[%s7373 + $0x50] sm:$0xff]
        %v7385 = vld [vmem:[%s7373 + $0x58] sm:$0xff]
        %v7386 = vld [vmem:[%s7373 + $0x60] sm:$0xff]
        %v7387 = vld [vmem:[%s7373 + $0x68] sm:$0xff]
        %v7388 = vld [vmem:[%s7373 + $0x70] sm:$0xff]
        %v7389 = vld [vmem:[%s7373 + $0x78] sm:$0xff]
        %v7390 = vrot.slane %v7092, 7
        %7392 = vmatpush.msra.mxu0 %v7389
        %7393 = vmatpush.msra.mxu0 %v7388
        %7394 = vmatpush.msra.mxu0 %v7387
        %7395 = vmatpush.msra.mxu0 %v7386
        %7396 = vmatpush.msra.mxu0 %v7385
        %7397 = vmatpush.msra.mxu0 %v7384
        %7398 = vmatpush.msra.mxu0 %v7383
        %7399 = vmatpush.msra.mxu0 %v7382
        %7400 = vmatpush.msra.mxu0 %v7381
        %7401 = vmatpush.msra.mxu0 %v7380
        %7402 = vmatpush.msra.mxu0 %v7379
        %7403 = vmatpush.msra.mxu0 %v7378
        %7404 = vmatpush.msra.mxu0 %v7377
        %7405 = vmatpush.msra.mxu0 %v7376
        %7406 = vmatpush.msra.mxu0 %v7375
        %7407 = vmatpush.msra.mxu0 %v7374
        %7408 = vmatmul.f32.gmra.mxu0 %v7390
        %v7409 = vpop.f32.mrf.mxu0
        %v7410 = vadd.f32 0.0, %v7409
        %7411 = vdwg.mxu0
        %v7412 = vadd.f32 %v7372, %v7410
        %s7413 = scalar_lea.vmem %s9, 1024
        %v7414 = vld [vmem:[%s7413] sm:$0xff]
        %v7415 = vld [vmem:[%s7413 + $0x8] sm:$0xff]
        %v7416 = vld [vmem:[%s7413 + $0x10] sm:$0xff]
        %v7417 = vld [vmem:[%s7413 + $0x18] sm:$0xff]
        %v7418 = vld [vmem:[%s7413 + $0x20] sm:$0xff]
        %v7419 = vld [vmem:[%s7413 + $0x28] sm:$0xff]
        %v7420 = vld [vmem:[%s7413 + $0x30] sm:$0xff]
        %v7421 = vld [vmem:[%s7413 + $0x38] sm:$0xff]
        %v7422 = vld [vmem:[%s7413 + $0x40] sm:$0xff]
        %v7423 = vld [vmem:[%s7413 + $0x48] sm:$0xff]
        %v7424 = vld [vmem:[%s7413 + $0x50] sm:$0xff]
        %v7425 = vld [vmem:[%s7413 + $0x58] sm:$0xff]
        %v7426 = vld [vmem:[%s7413 + $0x60] sm:$0xff]
        %v7427 = vld [vmem:[%s7413 + $0x68] sm:$0xff]
        %v7428 = vld [vmem:[%s7413 + $0x70] sm:$0xff]
        %v7429 = vld [vmem:[%s7413 + $0x78] sm:$0xff]
        %7430 = vmatpush.msra.mxu0 %v7429
        %7431 = vmatpush.msra.mxu0 %v7428
        %7432 = vmatpush.msra.mxu0 %v7427
        %7433 = vmatpush.msra.mxu0 %v7426
        %7434 = vmatpush.msra.mxu0 %v7425
        %7435 = vmatpush.msra.mxu0 %v7424
        %7436 = vmatpush.msra.mxu0 %v7423
        %7437 = vmatpush.msra.mxu0 %v7422
        %7438 = vmatpush.msra.mxu0 %v7421
        %7439 = vmatpush.msra.mxu0 %v7420
        %7440 = vmatpush.msra.mxu0 %v7419
        %7441 = vmatpush.msra.mxu0 %v7418
        %7442 = vmatpush.msra.mxu0 %v7417
        %7443 = vmatpush.msra.mxu0 %v7416
        %7444 = vmatpush.msra.mxu0 %v7415
        %7445 = vmatpush.msra.mxu0 %v7414
        %7446 = vmatmul.f32.gmra.mxu0 %v7093
        %v7447 = vpop.f32.mrf.mxu0
        %v7448 = vadd.f32 0.0, %v7447
        %7449 = vdwg.mxu0
        %v7450 = vadd.f32 %v7412, %v7448
        %s7451 = scalar_lea.vmem %s9, 1152
        %v7452 = vld [vmem:[%s7451] sm:$0xff]
        %v7453 = vld [vmem:[%s7451 + $0x8] sm:$0xff]
        %v7454 = vld [vmem:[%s7451 + $0x10] sm:$0xff]
        %v7455 = vld [vmem:[%s7451 + $0x18] sm:$0xff]
        %v7456 = vld [vmem:[%s7451 + $0x20] sm:$0xff]
        %v7457 = vld [vmem:[%s7451 + $0x28] sm:$0xff]
        %v7458 = vld [vmem:[%s7451 + $0x30] sm:$0xff]
        %v7459 = vld [vmem:[%s7451 + $0x38] sm:$0xff]
        %v7460 = vld [vmem:[%s7451 + $0x40] sm:$0xff]
        %v7461 = vld [vmem:[%s7451 + $0x48] sm:$0xff]
        %v7462 = vld [vmem:[%s7451 + $0x50] sm:$0xff]
        %v7463 = vld [vmem:[%s7451 + $0x58] sm:$0xff]
        %v7464 = vld [vmem:[%s7451 + $0x60] sm:$0xff]
        %v7465 = vld [vmem:[%s7451 + $0x68] sm:$0xff]
        %v7466 = vld [vmem:[%s7451 + $0x70] sm:$0xff]
        %v7467 = vld [vmem:[%s7451 + $0x78] sm:$0xff]
        %v7469 = vrot.slane %v7093, 1
        %7471 = vmatpush.msra.mxu0 %v7467
        %7472 = vmatpush.msra.mxu0 %v7466
        %7473 = vmatpush.msra.mxu0 %v7465
        %7474 = vmatpush.msra.mxu0 %v7464
        %7475 = vmatpush.msra.mxu0 %v7463
        %7476 = vmatpush.msra.mxu0 %v7462
        %7477 = vmatpush.msra.mxu0 %v7461
        %7478 = vmatpush.msra.mxu0 %v7460
        %7479 = vmatpush.msra.mxu0 %v7459
        %7480 = vmatpush.msra.mxu0 %v7458
        %7481 = vmatpush.msra.mxu0 %v7457
        %7482 = vmatpush.msra.mxu0 %v7456
        %7483 = vmatpush.msra.mxu0 %v7455
        %7484 = vmatpush.msra.mxu0 %v7454
        %7485 = vmatpush.msra.mxu0 %v7453
        %7486 = vmatpush.msra.mxu0 %v7452
        %7487 = vmatmul.f32.gmra.mxu0 %v7469
        %v7488 = vpop.f32.mrf.mxu0
        %v7489 = vadd.f32 0.0, %v7488
        %7490 = vdwg.mxu0
        %v7491 = vadd.f32 %v7450, %v7489
        %s7492 = scalar_lea.vmem %s9, 1280
        %v7493 = vld [vmem:[%s7492] sm:$0xff]
        %v7494 = vld [vmem:[%s7492 + $0x8] sm:$0xff]
        %v7495 = vld [vmem:[%s7492 + $0x10] sm:$0xff]
        %v7496 = vld [vmem:[%s7492 + $0x18] sm:$0xff]
        %v7497 = vld [vmem:[%s7492 + $0x20] sm:$0xff]
        %v7498 = vld [vmem:[%s7492 + $0x28] sm:$0xff]
        %v7499 = vld [vmem:[%s7492 + $0x30] sm:$0xff]
        %v7500 = vld [vmem:[%s7492 + $0x38] sm:$0xff]
        %v7501 = vld [vmem:[%s7492 + $0x40] sm:$0xff]
        %v7502 = vld [vmem:[%s7492 + $0x48] sm:$0xff]
        %v7503 = vld [vmem:[%s7492 + $0x50] sm:$0xff]
        %v7504 = vld [vmem:[%s7492 + $0x58] sm:$0xff]
        %v7505 = vld [vmem:[%s7492 + $0x60] sm:$0xff]
        %v7506 = vld [vmem:[%s7492 + $0x68] sm:$0xff]
        %v7507 = vld [vmem:[%s7492 + $0x70] sm:$0xff]
        %v7508 = vld [vmem:[%s7492 + $0x78] sm:$0xff]
        %v7509 = vrot.slane %v7093, 2
        %7511 = vmatpush.msra.mxu0 %v7508
        %7512 = vmatpush.msra.mxu0 %v7507
        %7513 = vmatpush.msra.mxu0 %v7506
        %7514 = vmatpush.msra.mxu0 %v7505
        %7515 = vmatpush.msra.mxu0 %v7504
        %7516 = vmatpush.msra.mxu0 %v7503
        %7517 = vmatpush.msra.mxu0 %v7502
        %7518 = vmatpush.msra.mxu0 %v7501
        %7519 = vmatpush.msra.mxu0 %v7500
        %7520 = vmatpush.msra.mxu0 %v7499
        %7521 = vmatpush.msra.mxu0 %v7498
        %7522 = vmatpush.msra.mxu0 %v7497
        %7523 = vmatpush.msra.mxu0 %v7496
        %7524 = vmatpush.msra.mxu0 %v7495
        %7525 = vmatpush.msra.mxu0 %v7494
        %7526 = vmatpush.msra.mxu0 %v7493
        %7527 = vmatmul.f32.gmra.mxu0 %v7509
        %v7528 = vpop.f32.mrf.mxu0
        %v7529 = vadd.f32 0.0, %v7528
        %7530 = vdwg.mxu0
        %v7531 = vadd.f32 %v7491, %v7529
        %s7532 = scalar_lea.vmem %s9, 1408
        %v7533 = vld [vmem:[%s7532] sm:$0xff]
        %v7534 = vld [vmem:[%s7532 + $0x8] sm:$0xff]
        %v7535 = vld [vmem:[%s7532 + $0x10] sm:$0xff]
        %v7536 = vld [vmem:[%s7532 + $0x18] sm:$0xff]
        %v7537 = vld [vmem:[%s7532 + $0x20] sm:$0xff]
        %v7538 = vld [vmem:[%s7532 + $0x28] sm:$0xff]
        %v7539 = vld [vmem:[%s7532 + $0x30] sm:$0xff]
        %v7540 = vld [vmem:[%s7532 + $0x38] sm:$0xff]
        %v7541 = vld [vmem:[%s7532 + $0x40] sm:$0xff]
        %v7542 = vld [vmem:[%s7532 + $0x48] sm:$0xff]
        %v7543 = vld [vmem:[%s7532 + $0x50] sm:$0xff]
        %v7544 = vld [vmem:[%s7532 + $0x58] sm:$0xff]
        %v7545 = vld [vmem:[%s7532 + $0x60] sm:$0xff]
        %v7546 = vld [vmem:[%s7532 + $0x68] sm:$0xff]
        %v7547 = vld [vmem:[%s7532 + $0x70] sm:$0xff]
        %v7548 = vld [vmem:[%s7532 + $0x78] sm:$0xff]
        %v7549 = vrot.slane %v7093, 3
        %7551 = vmatpush.msra.mxu0 %v7548
        %7552 = vmatpush.msra.mxu0 %v7547
        %7553 = vmatpush.msra.mxu0 %v7546
        %7554 = vmatpush.msra.mxu0 %v7545
        %7555 = vmatpush.msra.mxu0 %v7544
        %7556 = vmatpush.msra.mxu0 %v7543
        %7557 = vmatpush.msra.mxu0 %v7542
        %7558 = vmatpush.msra.mxu0 %v7541
        %7559 = vmatpush.msra.mxu0 %v7540
        %7560 = vmatpush.msra.mxu0 %v7539
        %7561 = vmatpush.msra.mxu0 %v7538
        %7562 = vmatpush.msra.mxu0 %v7537
        %7563 = vmatpush.msra.mxu0 %v7536
        %7564 = vmatpush.msra.mxu0 %v7535
        %7565 = vmatpush.msra.mxu0 %v7534
        %7566 = vmatpush.msra.mxu0 %v7533
        %7567 = vmatmul.f32.gmra.mxu0 %v7549
        %v7568 = vpop.f32.mrf.mxu0
        %v7569 = vadd.f32 0.0, %v7568
        %7570 = vdwg.mxu0
        %v7571 = vadd.f32 %v7531, %v7569
        %s7572 = scalar_lea.vmem %s9, 1536
        %v7573 = vld [vmem:[%s7572] sm:$0xff]
        %v7574 = vld [vmem:[%s7572 + $0x8] sm:$0xff]
        %v7575 = vld [vmem:[%s7572 + $0x10] sm:$0xff]
        %v7576 = vld [vmem:[%s7572 + $0x18] sm:$0xff]
        %v7577 = vld [vmem:[%s7572 + $0x20] sm:$0xff]
        %v7578 = vld [vmem:[%s7572 + $0x28] sm:$0xff]
        %v7579 = vld [vmem:[%s7572 + $0x30] sm:$0xff]
        %v7580 = vld [vmem:[%s7572 + $0x38] sm:$0xff]
        %v7581 = vld [vmem:[%s7572 + $0x40] sm:$0xff]
        %v7582 = vld [vmem:[%s7572 + $0x48] sm:$0xff]
        %v7583 = vld [vmem:[%s7572 + $0x50] sm:$0xff]
        %v7584 = vld [vmem:[%s7572 + $0x58] sm:$0xff]
        %v7585 = vld [vmem:[%s7572 + $0x60] sm:$0xff]
        %v7586 = vld [vmem:[%s7572 + $0x68] sm:$0xff]
        %v7587 = vld [vmem:[%s7572 + $0x70] sm:$0xff]
        %v7588 = vld [vmem:[%s7572 + $0x78] sm:$0xff]
        %v7589 = vrot.slane %v7093, 4
        %7591 = vmatpush.msra.mxu0 %v7588
        %7592 = vmatpush.msra.mxu0 %v7587
        %7593 = vmatpush.msra.mxu0 %v7586
        %7594 = vmatpush.msra.mxu0 %v7585
        %7595 = vmatpush.msra.mxu0 %v7584
        %7596 = vmatpush.msra.mxu0 %v7583
        %7597 = vmatpush.msra.mxu0 %v7582
        %7598 = vmatpush.msra.mxu0 %v7581
        %7599 = vmatpush.msra.mxu0 %v7580
        %7600 = vmatpush.msra.mxu0 %v7579
        %7601 = vmatpush.msra.mxu0 %v7578
        %7602 = vmatpush.msra.mxu0 %v7577
        %7603 = vmatpush.msra.mxu0 %v7576
        %7604 = vmatpush.msra.mxu0 %v7575
        %7605 = vmatpush.msra.mxu0 %v7574
        %7606 = vmatpush.msra.mxu0 %v7573
        %7607 = vmatmul.f32.gmra.mxu0 %v7589
        %v7608 = vpop.f32.mrf.mxu0
        %v7609 = vadd.f32 0.0, %v7608
        %7610 = vdwg.mxu0
        %v7611 = vadd.f32 %v7571, %v7609
        %s7612 = scalar_lea.vmem %s9, 1664
        %v7613 = vld [vmem:[%s7612] sm:$0xff]
        %v7614 = vld [vmem:[%s7612 + $0x8] sm:$0xff]
        %v7615 = vld [vmem:[%s7612 + $0x10] sm:$0xff]
        %v7616 = vld [vmem:[%s7612 + $0x18] sm:$0xff]
        %v7617 = vld [vmem:[%s7612 + $0x20] sm:$0xff]
        %v7618 = vld [vmem:[%s7612 + $0x28] sm:$0xff]
        %v7619 = vld [vmem:[%s7612 + $0x30] sm:$0xff]
        %v7620 = vld [vmem:[%s7612 + $0x38] sm:$0xff]
        %v7621 = vld [vmem:[%s7612 + $0x40] sm:$0xff]
        %v7622 = vld [vmem:[%s7612 + $0x48] sm:$0xff]
        %v7623 = vld [vmem:[%s7612 + $0x50] sm:$0xff]
        %v7624 = vld [vmem:[%s7612 + $0x58] sm:$0xff]
        %v7625 = vld [vmem:[%s7612 + $0x60] sm:$0xff]
        %v7626 = vld [vmem:[%s7612 + $0x68] sm:$0xff]
        %v7627 = vld [vmem:[%s7612 + $0x70] sm:$0xff]
        %v7628 = vld [vmem:[%s7612 + $0x78] sm:$0xff]
        %v7629 = vrot.slane %v7093, 5
        %7631 = vmatpush.msra.mxu0 %v7628
        %7632 = vmatpush.msra.mxu0 %v7627
        %7633 = vmatpush.msra.mxu0 %v7626
        %7634 = vmatpush.msra.mxu0 %v7625
        %7635 = vmatpush.msra.mxu0 %v7624
        %7636 = vmatpush.msra.mxu0 %v7623
        %7637 = vmatpush.msra.mxu0 %v7622
        %7638 = vmatpush.msra.mxu0 %v7621
        %7639 = vmatpush.msra.mxu0 %v7620
        %7640 = vmatpush.msra.mxu0 %v7619
        %7641 = vmatpush.msra.mxu0 %v7618
        %7642 = vmatpush.msra.mxu0 %v7617
        %7643 = vmatpush.msra.mxu0 %v7616
        %7644 = vmatpush.msra.mxu0 %v7615
        %7645 = vmatpush.msra.mxu0 %v7614
        %7646 = vmatpush.msra.mxu0 %v7613
        %7647 = vmatmul.f32.gmra.mxu0 %v7629
        %v7648 = vpop.f32.mrf.mxu0
        %v7649 = vadd.f32 0.0, %v7648
        %7650 = vdwg.mxu0
        %v7651 = vadd.f32 %v7611, %v7649
        %s7652 = scalar_lea.vmem %s9, 1792
        %v7653 = vld [vmem:[%s7652] sm:$0xff]
        %v7654 = vld [vmem:[%s7652 + $0x8] sm:$0xff]
        %v7655 = vld [vmem:[%s7652 + $0x10] sm:$0xff]
        %v7656 = vld [vmem:[%s7652 + $0x18] sm:$0xff]
        %v7657 = vld [vmem:[%s7652 + $0x20] sm:$0xff]
        %v7658 = vld [vmem:[%s7652 + $0x28] sm:$0xff]
        %v7659 = vld [vmem:[%s7652 + $0x30] sm:$0xff]
        %v7660 = vld [vmem:[%s7652 + $0x38] sm:$0xff]
        %v7661 = vld [vmem:[%s7652 + $0x40] sm:$0xff]
        %v7662 = vld [vmem:[%s7652 + $0x48] sm:$0xff]
        %v7663 = vld [vmem:[%s7652 + $0x50] sm:$0xff]
        %v7664 = vld [vmem:[%s7652 + $0x58] sm:$0xff]
        %v7665 = vld [vmem:[%s7652 + $0x60] sm:$0xff]
        %v7666 = vld [vmem:[%s7652 + $0x68] sm:$0xff]
        %v7667 = vld [vmem:[%s7652 + $0x70] sm:$0xff]
        %v7668 = vld [vmem:[%s7652 + $0x78] sm:$0xff]
        %v7669 = vrot.slane %v7093, 6
        %7671 = vmatpush.msra.mxu0 %v7668
        %7672 = vmatpush.msra.mxu0 %v7667
        %7673 = vmatpush.msra.mxu0 %v7666
        %7674 = vmatpush.msra.mxu0 %v7665
        %7675 = vmatpush.msra.mxu0 %v7664
        %7676 = vmatpush.msra.mxu0 %v7663
        %7677 = vmatpush.msra.mxu0 %v7662
        %7678 = vmatpush.msra.mxu0 %v7661
        %7679 = vmatpush.msra.mxu0 %v7660
        %7680 = vmatpush.msra.mxu0 %v7659
        %7681 = vmatpush.msra.mxu0 %v7658
        %7682 = vmatpush.msra.mxu0 %v7657
        %7683 = vmatpush.msra.mxu0 %v7656
        %7684 = vmatpush.msra.mxu0 %v7655
        %7685 = vmatpush.msra.mxu0 %v7654
        %7686 = vmatpush.msra.mxu0 %v7653
        %7687 = vmatmul.f32.gmra.mxu0 %v7669
        %v7688 = vpop.f32.mrf.mxu0
        %v7689 = vadd.f32 0.0, %v7688
        %7690 = vdwg.mxu0
        %v7691 = vadd.f32 %v7651, %v7689
        %s7692 = scalar_lea.vmem %s9, 1920
        %v7693 = vld [vmem:[%s7692] sm:$0xff]
        %v7694 = vld [vmem:[%s7692 + $0x8] sm:$0xff]
        %v7695 = vld [vmem:[%s7692 + $0x10] sm:$0xff]
        %v7696 = vld [vmem:[%s7692 + $0x18] sm:$0xff]
        %v7697 = vld [vmem:[%s7692 + $0x20] sm:$0xff]
        %v7698 = vld [vmem:[%s7692 + $0x28] sm:$0xff]
        %v7699 = vld [vmem:[%s7692 + $0x30] sm:$0xff]
        %v7700 = vld [vmem:[%s7692 + $0x38] sm:$0xff]
        %v7701 = vld [vmem:[%s7692 + $0x40] sm:$0xff]
        %v7702 = vld [vmem:[%s7692 + $0x48] sm:$0xff]
        %v7703 = vld [vmem:[%s7692 + $0x50] sm:$0xff]
        %v7704 = vld [vmem:[%s7692 + $0x58] sm:$0xff]
        %v7705 = vld [vmem:[%s7692 + $0x60] sm:$0xff]
        %v7706 = vld [vmem:[%s7692 + $0x68] sm:$0xff]
        %v7707 = vld [vmem:[%s7692 + $0x70] sm:$0xff]
        %v7708 = vld [vmem:[%s7692 + $0x78] sm:$0xff]
        %v7709 = vrot.slane %v7093, 7
        %7711 = vmatpush.msra.mxu0 %v7708
        %7712 = vmatpush.msra.mxu0 %v7707
        %7713 = vmatpush.msra.mxu0 %v7706
        %7714 = vmatpush.msra.mxu0 %v7705
        %7715 = vmatpush.msra.mxu0 %v7704
        %7716 = vmatpush.msra.mxu0 %v7703
        %7717 = vmatpush.msra.mxu0 %v7702
        %7718 = vmatpush.msra.mxu0 %v7701
        %7719 = vmatpush.msra.mxu0 %v7700
        %7720 = vmatpush.msra.mxu0 %v7699
        %7721 = vmatpush.msra.mxu0 %v7698
        %7722 = vmatpush.msra.mxu0 %v7697
        %7723 = vmatpush.msra.mxu0 %v7696
        %7724 = vmatpush.msra.mxu0 %v7695
        %7725 = vmatpush.msra.mxu0 %v7694
        %7726 = vmatpush.msra.mxu0 %v7693
        %7727 = vmatmul.f32.gmra.mxu0 %v7709
        %v7728 = vpop.f32.mrf.mxu0
        %v7729 = vadd.f32 0.0, %v7728
        %7730 = vdwg.mxu0
        %v7731 = vadd.f32 %v7691, %v7729
        %7732 = vst [vmem:[%s378] sm:$0x1] %v7731
        %s7733 = sand.u32 %s269, 1
        %s7734 = scalar_lea.sflag [#allocation3], %s7733
        %s7735 = sand.u32 %s269, 1
        %s7736 = scalar_lea.vmem [#allocation2], %s7735
        // Predicated region
        $region65: #{classifier_forward.1} parent=63 // pred_check
          %p7737 = pneg %p279
        $region66: #{classifier_forward.1} parent=63 // pred_check_branch
          %7739 = sbr.rel (%p7737) target = $region68
        $region67: #{classifier_forward.1} parent=63 // pred_region
          %7741 = vsyncadd %s7734, 0
          %s7742 = scalar_lea.hbm %s11, %s25
          %s7744 = sshll.u32 %s7736, 4
          %s7745 = int_to_ptr.vmem [resolvable:$true] %s7744
          %s7746 = sshll.u32 %s7742, 4
          %s7747 = int_to_ptr.hbm [resolvable:$true] %s7746
          %7749 = dma.vmem_to_hbm [thread:$0]  %s7745, 16, %s7747, %s7734
        $region68: #{classifier_forward.1} parent=63 // pred_fallthru
          _
      $region64: #{classifier_forward.1} parent=5 // pred_fallthru
        _
      %p7750 = scmp.le.s32.totalorder 2, %s20
      // Predicated region
      $region69: #{classifier_forward.1} parent=5 // pred_check
        %p7751 = pneg %p7750
      $region70: #{classifier_forward.1} parent=5 // pred_check_branch
        %7753 = sbr.rel (%p7751) target = $region72
      $region71: #{classifier_forward.1} parent=5 // pred_region
        %s7754 = ssub.s32 %s20, 2
        // Predicated region
        $region73: #{classifier_forward.1} parent=71 // pred_check
          %p7755 = pneg %p285
        $region74: #{classifier_forward.1} parent=71 // pred_check_branch
          %7757 = sbr.rel (%p7755) target = $region76
        $region75: #{classifier_forward.1} parent=71 // pred_region
          %s7758 = sand.u32 %s270, 1
          %s7759 = scalar_lea.sflag [#allocation3], %s7758
          %s7760 = sand.u32 %s270, 1
          %s7761 = scalar_lea.vmem [#allocation2], %s7760
          %7763 = dma.done %s7759, 16
        $region76: #{classifier_forward.1} parent=71 // pred_fallthru
          _
      $region72: #{classifier_forward.1} parent=5 // pred_fallthru
        _
    $region6: #{classifier_forward.1} parent=1 // loop_footer
      %s24 = sadd.s32 1, %s20
    $region7: #{classifier_forward.1} parent=1 // loop_footer_branch
      %19 = sbr.rel target = $region3
    $region8: #{classifier_forward.1} parent=1 // loop_exit
      _
    %7764 = vsyncpa [#allocation3], 1
    %s7765 = scalar_lea.sflag [#allocation3], 1
    %7766 = vsyncpa %s7765, 1

</llo_original>
